<compile_context>
chip_gen: v7x
topology: tpu7x:2x2x1
jax: 0.10.0
libtpu: 0.0.40
codegen_flags: <defaults>
</compile_context>

<pallas_src>
import functools

import jax
import jax.numpy as jnp
from jax import lax
from jax.experimental import pallas as pl
from jax.experimental.pallas import tpu as pltpu

_LANES = 128
_LPAD = 8                        # left W-halo rounded up to 8 sublanes (aligned interior store)
_ACC_F32_ELEMS = 16 * 8 * 128    # ~16 vregs of fp32 accumulator per row-chunk


def _cpe_kernel(x_ref, w_ref, b_ref, o_ref, xpad_ref, *, H, W, KH, KW, RC, NB):
    """One (batch_block, channel_block) tile of depthwise KHxKW conv + bias + x.

    x_ref   : (NB, H, W, Cb)              activation tile (input dtype)
    w_ref   : (KH*KW, 1, Cb)  float32     depthwise taps, un-replicated
    b_ref   : (1, Cb)         float32     bias
    o_ref   : (NB, H, W, Cb)              output tile
    xpad_ref: (H+KH-1, _LPAD+W+KW//2, Cb) VMEM scratch, zero-padded image
    """
    pad_h, pad_w = KH // 2, KW // 2
    Cb = x_ref.shape[-1]
    Wp = _LPAD + W + pad_w
    dt = xpad_ref.dtype

    # ---- zero only the halo of the scratch (interior is fully overwritten) --
    xpad_ref[0:pad_h, :, :] = jnp.zeros((pad_h, Wp, Cb), dt)
    xpad_ref[pad_h + H:, :, :] = jnp.zeros((pad_h, Wp, Cb), dt)
    xpad_ref[pad_h:pad_h + H, 0:_LPAD, :] = jnp.zeros((H, _LPAD, Cb), dt)
    xpad_ref[pad_h:pad_h + H, _LPAD + W:, :] = jnp.zeros((H, pad_w, Cb), dt)

    bias = b_ref[...]                                   # (1, Cb) fp32
    n_chunks = (H + RC - 1) // RC

    for bb in range(NB):
        # Interior copy: sublane offset _LPAD == 8 -> aligned, unmasked stores.
        xpad_ref[pad_h:pad_h + H, _LPAD:_LPAD + W, :] = x_ref[bb]

        for ci in range(n_chunks):
            h0 = ci * RC
            rc = min(RC, H - h0)
            # Residual + bias folded into the fp32 accumulator init; the whole
            # KH*KW reduction for this row chunk stays in SSA values (vregs).
            acc = x_ref[bb, h0:h0 + rc, :, :].astype(jnp.float32) + bias
            for i in range(KH):                         # kernel rows: leading-dim slice (free)
                for j in range(KW):                     # kernel cols: small shifted load per tap
                    wt = w_ref[i * KW + j]              # (1, Cb) fp32, sublane-splat in the mul
                    slab = xpad_ref[h0 + i:h0 + i + rc,
                                    _LPAD - pad_w + j:_LPAD - pad_w + j + W, :]
                    acc = acc + slab * wt               # promoted to fp32
            o_ref[bb, h0:h0 + rc, :, :] = acc.astype(o_ref.dtype)


def _pick_c_block(C, H, W, KH, KW, itemsize, requested=None):
    """Channel-block width.  Multiples of 128 get lane-dense blocking; other
    widths use one full-extent block (no activation channel-pad round trip)."""
    if C % _LANES != 0:
        return C
    budget = 20 * 1024 * 1024            # stay well inside the 32 MiB scoped VMEM
    cands = []
    if requested is not None and requested % _LANES == 0 and C % requested == 0:
        cands.append(requested)
    cands += [c for c in (512, 384, 256, 128) if c <= C and C % c == 0]
    for cb in cands:
        est = (4 * H * W * cb                                   # 2x in + 2x out buffers
               + (H + KH - 1) * (_LPAD + W + KW // 2) * cb) * itemsize
        if est <= budget:
            return cb
    return _LANES


def rep_conditional_pos_enc_nhwc(x, weight, bias, spatial_shape=(7, 7),
                                 c_block=None, row_chunk=None, batch_block=None):
    """depthwise_conv(x) + bias + x, with x in NHWC layout.

    Args:
        x:      (B, H, W, C) input.
        weight: (C, 1, KH, KW) depthwise conv weight (PyTorch layout).
        bias:   (C,) conv bias.
    Returns:
        (B, H, W, C) output, dtype of x.
    """
    KH, KW = spatial_shape
    B, H, W, C = x.shape
    pad_w = KW // 2
    itemsize = jnp.dtype(x.dtype).itemsize

    C_blk = _pick_c_block(C, H, W, KH, KW, itemsize, requested=c_block)
    CB = C // C_blk

    # Depthwise taps (KH*KW, 1, C): w_flat[i*KW + j, 0, c] == weight[c, 0, i, j].
    w_flat = jnp.transpose(weight[:, 0, :, :], (1, 2, 0)).reshape(KH * KW, 1, C)
    w_flat = w_flat.astype(jnp.float32)
    b2 = bias.reshape(1, C).astype(jnp.float32)

    # Fold several images per step only when the spatial plane is small, and
    # keep >= 2 grid steps so both v7x TensorCores have work.
    tile_bytes = H * W * C_blk * itemsize
    if batch_block is None:
        batch_block = 1
        while (batch_block * 2 <= B and B % (batch_block * 2) == 0
               and tile_bytes * (batch_block * 2) <= (1 << 20)
               and (B // (batch_block * 2)) * CB >= 2):
            batch_block *= 2
    NB = batch_block
    assert B % NB == 0, "batch_block must divide batch"

    # Row-chunk size: keep the fp32 accumulator around <= 16 vregs so the tap
    # reduction stays register-resident (the key fix vs. the previous version).
    if row_chunk is None:
        row_chunk = max(1, min(H, _ACC_F32_ELEMS // max(1, W * C_blk)))
    RC = row_chunk

    kernel = functools.partial(_cpe_kernel, H=H, W=W, KH=KH, KW=KW, RC=RC, NB=NB)

    # TODO(synk): stages where a full (H, W, C_blk) plane approaches the scoped
    # VMEM limit (esp. v7x's 64 MiB physical) need an H-tiled grid axis with a
    # (KH-1)-row halo; FastViT stage sizes do not require it.
    out = pl.pallas_call(
        kernel,
        out_shape=jax.ShapeDtypeStruct((B, H, W, C), x.dtype),
        grid=(CB, B // NB),              # channel block OUTERMOST: weight/bias
                                         # block index is constant -> no re-DMA
        in_specs=[
            pl.BlockSpec((NB, H, W, C_blk), lambda cb, b: (b, 0, 0, cb)),
            pl.BlockSpec((KH * KW, 1, C_blk), lambda cb, b: (0, 0, cb)),
            pl.BlockSpec((1, C_blk), lambda cb, b: (0, cb)),
        ],
        out_specs=pl.BlockSpec((NB, H, W, C_blk), lambda cb, b: (b, 0, 0, cb)),
        scratch_shapes=[
            pltpu.VMEM((H + KH - 1, _LPAD + W + pad_w, C_blk), x.dtype)],
        compiler_params=pltpu.CompilerParams(
            dimension_semantics=("parallel", "parallel")),
    )(x, w_flat, b2)
    return out


def rep_conditional_pos_enc(x_nchw, weight, bias, spatial_shape=(7, 7)):
    """PyTorch-compatible NCHW entry point.

    In an NHWC model pipeline call `rep_conditional_pos_enc_nhwc` directly and
    skip these two full-tensor layout transposes.
    """
    x = jnp.transpose(x_nchw, (0, 2, 3, 1))             # NCHW -> NHWC
    y = rep_conditional_pos_enc_nhwc(x, weight, bias, spatial_shape)
    return jnp.transpose(y, (0, 3, 1, 2))               # NHWC -> NCHW


def _reference(x_nchw, weight, bias, spatial_shape=(7, 7)):
    """Pure-JAX reference: depthwise conv (groups=C) + bias + skip connection."""
    KH, KW = spatial_shape
    C = x_nchw.shape[1]
    x = jnp.transpose(x_nchw, (0, 2, 3, 1))             # NHWC
    rhs = jnp.transpose(weight, (2, 3, 1, 0))            # HWIO, I=1
    y = lax.conv_general_dilated(
        x, rhs,
        window_strides=(1, 1),
        padding=((KH // 2, KH // 2), (KW // 2, KW // 2)),
        dimension_numbers=("NHWC", "HWIO", "NHWC"),
        feature_group_count=C,
    )
    y = y + bias[None, None, None, :] + x
    return jnp.transpose(y, (0, 3, 1, 2))


if __name__ == "__main__":
    # Small synthetic config mirroring RepConditionalPosEnc(dim=4, spatial_shape=(7,7)).
    B, C, H, W = 2, 4, 16, 16
    KH, KW = 7, 7

    key = jax.random.PRNGKey(0)
    kx, kw, kb = jax.random.split(key, 3)
    x = jax.random.normal(kx, (B, C, H, W), dtype=jnp.float32)
    # Conv2d(dim, dim, (7,7), groups=dim) -> weight (C, 1, KH, KW), bias (C,)
    weight = jax.random.normal(kw, (C, 1, KH, KW), dtype=jnp.float32) * 0.1
    bias = jax.random.normal(kb, (C,), dtype=jnp.float32) * 0.1

    out = rep_conditional_pos_enc(x, weight, bias, (KH, KW))
    out = jax.block_until_ready(out)

    ref = _reference(x, weight, bias, (KH, KW))
    assert out.shape == (B, C, H, W)
    assert jnp.allclose(out, ref, atol=1e-4, rtol=1e-4), "mismatch vs reference"

    print("KERNEL_OK")
</pallas_src>

<mosaic_0001>
module attributes {stable_mosaic.version = 11 : i64} {
  func.func @_cpe_kernel(%arg0: i32, %arg1: i32, %arg2: memref<1x16x16x4xf32, #tpu.memory_space<vmem>>, %arg3: memref<49x1x4xf32, #tpu.memory_space<vmem>>, %arg4: memref<1x4xf32, #tpu.memory_space<vmem>>, %arg5: memref<1x16x16x4xf32, #tpu.memory_space<vmem>>, %arg6: memref<22x27x4xf32, #tpu.memory_space<vmem>>) attributes {dimension_semantics = [#tpu.dimension_semantics<parallel>, #tpu.dimension_semantics<parallel>], iteration_bounds = array<i64: 1, 2>, scalar_prefetch = 0 : i64, scratch_operands = 1 : i64, tpu.core_type = #tpu.core_type<tc>, window_params = [{transform_indices = @transform_0, window_bounds = array<i64: 1, 16, 16, 4>}, {transform_indices = @transform_1, window_bounds = array<i64: 49, 1, 4>}, {transform_indices = @transform_2, window_bounds = array<i64: 1, 4>}, {transform_indices = @transform_3, window_bounds = array<i64: 1, 16, 16, 4>}]} {
    %cst = arith.constant 0.000000e+00 : f32
    %0 = vector.broadcast %cst : f32 to vector<3x27x4xf32>
    %c0 = arith.constant 0 : index
    %c0_0 = arith.constant 0 : index
    %c0_1 = arith.constant 0 : index
    %1 = vector.load %arg6[%c0, %c0_0, %c0_1] : memref<22x27x4xf32, #tpu.memory_space<vmem>>, vector<3x27x4xf32>
    tpu.vector_store %arg6[%c0, %c0_0, %c0_1], %0 {strides = array<i32>} : memref<22x27x4xf32, #tpu.memory_space<vmem>>, vector<3x27x4xf32>,
    %cst_2 = arith.constant 0.000000e+00 : f32
    %2 = vector.broadcast %cst_2 : f32 to vector<3x27x4xf32>
    %c19 = arith.constant 19 : index
    %c0_3 = arith.constant 0 : index
    %c0_4 = arith.constant 0 : index
    %3 = vector.load %arg6[%c19, %c0_3, %c0_4] : memref<22x27x4xf32, #tpu.memory_space<vmem>>, vector<3x27x4xf32>
    tpu.vector_store %arg6[%c19, %c0_3, %c0_4], %2 {strides = array<i32>} : memref<22x27x4xf32, #tpu.memory_space<vmem>>, vector<3x27x4xf32>,
    %cst_5 = arith.constant 0.000000e+00 : f32
    %4 = vector.broadcast %cst_5 : f32 to vector<16x8x4xf32>
    %c3 = arith.constant 3 : index
    %c0_6 = arith.constant 0 : index
    %c0_7 = arith.constant 0 : index
    %5 = vector.load %arg6[%c3, %c0_6, %c0_7] : memref<22x27x4xf32, #tpu.memory_space<vmem>>, vector<16x8x4xf32>
    tpu.vector_store %arg6[%c3, %c0_6, %c0_7], %4 {strides = array<i32>} : memref<22x27x4xf32, #tpu.memory_space<vmem>>, vector<16x8x4xf32>,
    %cst_8 = arith.constant 0.000000e+00 : f32
    %6 = vector.broadcast %cst_8 : f32 to vector<16x3x4xf32>
    %c3_9 = arith.constant 3 : index
    %c24 = arith.constant 24 : index
    %c0_10 = arith.constant 0 : index
    %7 = vector.load %arg6[%c3_9, %c24, %c0_10] : memref<22x27x4xf32, #tpu.memory_space<vmem>>, vector<16x3x4xf32>
    tpu.vector_store %arg6[%c3_9, %c24, %c0_10], %6 {strides = array<i32>} : memref<22x27x4xf32, #tpu.memory_space<vmem>>, vector<16x3x4xf32>,
    %c0_11 = arith.constant 0 : index
    %c0_12 = arith.constant 0 : index
    %8 = vector.load %arg4[%c0_11, %c0_12] : memref<1x4xf32, #tpu.memory_space<vmem>>, vector<1x4xf32>
    %c0_13 = arith.constant 0 : index
    %c0_14 = arith.constant 0 : index
    %c0_15 = arith.constant 0 : index
    %c0_16 = arith.constant 0 : index
    %9 = vector.load %arg2[%c0_13, %c0_14, %c0_15, %c0_16] : memref<1x16x16x4xf32, #tpu.memory_space<vmem>>, vector<1x16x16x4xf32>
    %10 = vector.shape_cast %9 : vector<1x16x16x4xf32> to vector<16x16x4xf32>
    %c3_17 = arith.constant 3 : index
    %c8 = arith.constant 8 : index
    %c0_18 = arith.constant 0 : index
    %11 = vector.load %arg6[%c3_17, %c8, %c0_18] : memref<22x27x4xf32, #tpu.memory_space<vmem>>, vector<16x16x4xf32>
    tpu.vector_store %arg6[%c3_17, %c8, %c0_18], %10 {strides = array<i32>} : memref<22x27x4xf32, #tpu.memory_space<vmem>>, vector<16x16x4xf32>,
    %c0_19 = arith.constant 0 : index
    %c0_20 = arith.constant 0 : index
    %c0_21 = arith.constant 0 : index
    %c0_22 = arith.constant 0 : index
    %12 = vector.load %arg2[%c0_19, %c0_20, %c0_21, %c0_22] : memref<1x16x16x4xf32, #tpu.memory_space<vmem>>, vector<1x16x16x4xf32>
    %13 = vector.shape_cast %12 : vector<1x16x16x4xf32> to vector<16x16x4xf32>
    %14 = vector.shape_cast %8 : vector<1x4xf32> to vector<1x1x4xf32>
    %15 = vector.broadcast %14 : vector<1x1x4xf32> to vector<16x16x4xf32>
    %16 = arith.addf %13, %15 : vector<16x16x4xf32>
    %c0_23 = arith.constant 0 : index
    %c0_24 = arith.constant 0 : index
    %c0_25 = arith.constant 0 : index
    %17 = vector.load %arg3[%c0_23, %c0_24, %c0_25] : memref<49x1x4xf32, #tpu.memory_space<vmem>>, vector<1x1x4xf32>
    %18 = vector.shape_cast %17 : vector<1x1x4xf32> to vector<1x4xf32>
    %c0_26 = arith.constant 0 : index
    %c5 = arith.constant 5 : index
    %c0_27 = arith.constant 0 : index
    %19 = vector.load %arg6[%c0_26, %c5, %c0_27] : memref<22x27x4xf32, #tpu.memory_space<vmem>>, vector<16x16x4xf32>
    %20 = vector.shape_cast %18 : vector<1x4xf32> to vector<1x1x4xf32>
    %21 = vector.broadcast %20 : vector<1x1x4xf32> to vector<16x16x4xf32>
    %22 = arith.mulf %19, %21 : vector<16x16x4xf32>
    %23 = arith.addf %16, %22 : vector<16x16x4xf32>
    %c1 = arith.constant 1 : index
    %c0_28 = arith.constant 0 : index
    %c0_29 = arith.constant 0 : index
    %24 = vector.load %arg3[%c1, %c0_28, %c0_29] : memref<49x1x4xf32, #tpu.memory_space<vmem>>, vector<1x1x4xf32>
    %25 = vector.shape_cast %24 : vector<1x1x4xf32> to vector<1x4xf32>
    %c0_30 = arith.constant 0 : index
    %c6 = arith.constant 6 : index
    %c0_31 = arith.constant 0 : index
    %26 = vector.load %arg6[%c0_30, %c6, %c0_31] : memref<22x27x4xf32, #tpu.memory_space<vmem>>, vector<16x16x4xf32>
    %27 = vector.shape_cast %25 : vector<1x4xf32> to vector<1x1x4xf32>
    %28 = vector.broadcast %27 : vector<1x1x4xf32> to vector<16x16x4xf32>
    %29 = arith.mulf %26, %28 : vector<16x16x4xf32>
    %30 = arith.addf %23, %29 : vector<16x16x4xf32>
    %c2 = arith.constant 2 : index
    %c0_32 = arith.constant 0 : index
    %c0_33 = arith.constant 0 : index
    %31 = vector.load %arg3[%c2, %c0_32, %c0_33] : memref<49x1x4xf32, #tpu.memory_space<vmem>>, vector<1x1x4xf32>
    %32 = vector.shape_cast %31 : vector<1x1x4xf32> to vector<1x4xf32>
    %c0_34 = arith.constant 0 : index
    %c7 = arith.constant 7 : index
    %c0_35 = arith.constant 0 : index
    %33 = vector.load %arg6[%c0_34, %c7, %c0_35] : memref<22x27x4xf32, #tpu.memory_space<vmem>>, vector<16x16x4xf32>
    %34 = vector.shape_cast %32 : vector<1x4xf32> to vector<1x1x4xf32>
    %35 = vector.broadcast %34 : vector<1x1x4xf32> to vector<16x16x4xf32>
    %36 = arith.mulf %33, %35 : vector<16x16x4xf32>
    %37 = arith.addf %30, %36 : vector<16x16x4xf32>
    %c3_36 = arith.constant 3 : index
    %c0_37 = arith.constant 0 : index
    %c0_38 = arith.constant 0 : index
    %38 = vector.load %arg3[%c3_36, %c0_37, %c0_38] : memref<49x1x4xf32, #tpu.memory_space<vmem>>, vector<1x1x4xf32>
    %39 = vector.shape_cast %38 : vector<1x1x4xf32> to vector<1x4xf32>
    %c0_39 = arith.constant 0 : index
    %c8_40 = arith.constant 8 : index
    %c0_41 = arith.constant 0 : index
    %40 = vector.load %arg6[%c0_39, %c8_40, %c0_41] : memref<22x27x4xf32, #tpu.memory_space<vmem>>, vector<16x16x4xf32>
    %41 = vector.shape_cast %39 : vector<1x4xf32> to vector<1x1x4xf32>
    %42 = vector.broadcast %41 : vector<1x1x4xf32> to vector<16x16x4xf32>
    %43 = arith.mulf %40, %42 : vector<16x16x4xf32>
    %44 = arith.addf %37, %43 : vector<16x16x4xf32>
    %c4 = arith.constant 4 : index
    %c0_42 = arith.constant 0 : index
    %c0_43 = arith.constant 0 : index
    %45 = vector.load %arg3[%c4, %c0_42, %c0_43] : memref<49x1x4xf32, #tpu.memory_space<vmem>>, vector<1x1x4xf32>
    %46 = vector.shape_cast %45 : vector<1x1x4xf32> to vector<1x4xf32>
    %c0_44 = arith.constant 0 : index
    %c9 = arith.constant 9 : index
    %c0_45 = arith.constant 0 : index
    %47 = vector.load %arg6[%c0_44, %c9, %c0_45] : memref<22x27x4xf32, #tpu.memory_space<vmem>>, vector<16x16x4xf32>
    %48 = vector.shape_cast %46 : vector<1x4xf32> to vector<1x1x4xf32>
    %49 = vector.broadcast %48 : vector<1x1x4xf32> to vector<16x16x4xf32>
    %50 = arith.mulf %47, %49 : vector<16x16x4xf32>
    %51 = arith.addf %44, %50 : vector<16x16x4xf32>
    %c5_46 = arith.constant 5 : index
    %c0_47 = arith.constant 0 : index
    %c0_48 = arith.constant 0 : index
    %52 = vector.load %arg3[%c5_46, %c0_47, %c0_48] : memref<49x1x4xf32, #tpu.memory_space<vmem>>, vector<1x1x4xf32>
    %53 = vector.shape_cast %52 : vector<1x1x4xf32> to vector<1x4xf32>
    %c0_49 = arith.constant 0 : index
    %c10 = arith.constant 10 : index
    %c0_50 = arith.constant 0 : index
    %54 = vector.load %arg6[%c0_49, %c10, %c0_50] : memref<22x27x4xf32, #tpu.memory_space<vmem>>, vector<16x16x4xf32>
    %55 = vector.shape_cast %53 : vector<1x4xf32> to vector<1x1x4xf32>
    %56 = vector.broadcast %55 : vector<1x1x4xf32> to vector<16x16x4xf32>
    %57 = arith.mulf %54, %56 : vector<16x16x4xf32>
    %58 = arith.addf %51, %57 : vector<16x16x4xf32>
    %c6_51 = arith.constant 6 : index
    %c0_52 = arith.constant 0 : index
    %c0_53 = arith.constant 0 : index
    %59 = vector.load %arg3[%c6_51, %c0_52, %c0_53] : memref<49x1x4xf32, #tpu.memory_space<vmem>>, vector<1x1x4xf32>
    %60 = vector.shape_cast %59 : vector<1x1x4xf32> to vector<1x4xf32>
    %c0_54 = arith.constant 0 : index
    %c11 = arith.constant 11 : index
    %c0_55 = arith.constant 0 : index
    %61 = vector.load %arg6[%c0_54, %c11, %c0_55] : memref<22x27x4xf32, #tpu.memory_space<vmem>>, vector<16x16x4xf32>
    %62 = vector.shape_cast %60 : vector<1x4xf32> to vector<1x1x4xf32>
    %63 = vector.broadcast %62 : vector<1x1x4xf32> to vector<16x16x4xf32>
    %64 = arith.mulf %61, %63 : vector<16x16x4xf32>
    %65 = arith.addf %58, %64 : vector<16x16x4xf32>
    %c7_56 = arith.constant 7 : index
    %c0_57 = arith.constant 0 : index
    %c0_58 = arith.constant 0 : index
    %66 = vector.load %arg3[%c7_56, %c0_57, %c0_58] : memref<49x1x4xf32, #tpu.memory_space<vmem>>, vector<1x1x4xf32>
    %67 = vector.shape_cast %66 : vector<1x1x4xf32> to vector<1x4xf32>
    %c1_59 = arith.constant 1 : index
    %c5_60 = arith.constant 5 : index
    %c0_61 = arith.constant 0 : index
    %68 = vector.load %arg6[%c1_59, %c5_60, %c0_61] : memref<22x27x4xf32, #tpu.memory_space<vmem>>, vector<16x16x4xf32>
    %69 = vector.shape_cast %67 : vector<1x4xf32> to vector<1x1x4xf32>
    %70 = vector.broadcast %69 : vector<1x1x4xf32> to vector<16x16x4xf32>
    %71 = arith.mulf %68, %70 : vector<16x16x4xf32>
    %72 = arith.addf %65, %71 : vector<16x16x4xf32>
    %c8_62 = arith.constant 8 : index
    %c0_63 = arith.constant 0 : index
    %c0_64 = arith.constant 0 : index
    %73 = vector.load %arg3[%c8_62, %c0_63, %c0_64] : memref<49x1x4xf32, #tpu.memory_space<vmem>>, vector<1x1x4xf32>
    %74 = vector.shape_cast %73 : vector<1x1x4xf32> to vector<1x4xf32>
    %c1_65 = arith.constant 1 : index
    %c6_66 = arith.constant 6 : index
    %c0_67 = arith.constant 0 : index
    %75 = vector.load %arg6[%c1_65, %c6_66, %c0_67] : memref<22x27x4xf32, #tpu.memory_space<vmem>>, vector<16x16x4xf32>
    %76 = vector.shape_cast %74 : vector<1x4xf32> to vector<1x1x4xf32>
    %77 = vector.broadcast %76 : vector<1x1x4xf32> to vector<16x16x4xf32>
    %78 = arith.mulf %75, %77 : vector<16x16x4xf32>
    %79 = arith.addf %72, %78 : vector<16x16x4xf32>
    %c9_68 = arith.constant 9 : index
    %c0_69 = arith.constant 0 : index
    %c0_70 = arith.constant 0 : index
    %80 = vector.load %arg3[%c9_68, %c0_69, %c0_70] : memref<49x1x4xf32, #tpu.memory_space<vmem>>, vector<1x1x4xf32>
    %81 = vector.shape_cast %80 : vector<1x1x4xf32> to vector<1x4xf32>
    %c1_71 = arith.constant 1 : index
    %c7_72 = arith.constant 7 : index
    %c0_73 = arith.constant 0 : index
    %82 = vector.load %arg6[%c1_71, %c7_72, %c0_73] : memref<22x27x4xf32, #tpu.memory_space<vmem>>, vector<16x16x4xf32>
    %83 = vector.shape_cast %81 : vector<1x4xf32> to vector<1x1x4xf32>
    %84 = vector.broadcast %83 : vector<1x1x4xf32> to vector<16x16x4xf32>
    %85 = arith.mulf %82, %84 : vector<16x16x4xf32>
    %86 = arith.addf %79, %85 : vector<16x16x4xf32>
    %c10_74 = arith.constant 10 : index
    %c0_75 = arith.constant 0 : index
    %c0_76 = arith.constant 0 : index
    %87 = vector.load %arg3[%c10_74, %c0_75, %c0_76] : memref<49x1x4xf32, #tpu.memory_space<vmem>>, vector<1x1x4xf32>
    %88 = vector.shape_cast %87 : vector<1x1x4xf32> to vector<1x4xf32>
    %c1_77 = arith.constant 1 : index
    %c8_78 = arith.constant 8 : index
    %c0_79 = arith.constant 0 : index
    %89 = vector.load %arg6[%c1_77, %c8_78, %c0_79] : memref<22x27x4xf32, #tpu.memory_space<vmem>>, vector<16x16x4xf32>
    %90 = vector.shape_cast %88 : vector<1x4xf32> to vector<1x1x4xf32>
    %91 = vector.broadcast %90 : vector<1x1x4xf32> to vector<16x16x4xf32>
    %92 = arith.mulf %89, %91 : vector<16x16x4xf32>
    %93 = arith.addf %86, %92 : vector<16x16x4xf32>
    %c11_80 = arith.constant 11 : index
    %c0_81 = arith.constant 0 : index
    %c0_82 = arith.constant 0 : index
    %94 = vector.load %arg3[%c11_80, %c0_81, %c0_82] : memref<49x1x4xf32, #tpu.memory_space<vmem>>, vector<1x1x4xf32>
    %95 = vector.shape_cast %94 : vector<1x1x4xf32> to vector<1x4xf32>
    %c1_83 = arith.constant 1 : index
    %c9_84 = arith.constant 9 : index
    %c0_85 = arith.constant 0 : index
    %96 = vector.load %arg6[%c1_83, %c9_84, %c0_85] : memref<22x27x4xf32, #tpu.memory_space<vmem>>, vector<16x16x4xf32>
    %97 = vector.shape_cast %95 : vector<1x4xf32> to vector<1x1x4xf32>
    %98 = vector.broadcast %97 : vector<1x1x4xf32> to vector<16x16x4xf32>
    %99 = arith.mulf %96, %98 : vector<16x16x4xf32>
    %100 = arith.addf %93, %99 : vector<16x16x4xf32>
    %c12 = arith.constant 12 : index
    %c0_86 = arith.constant 0 : index
    %c0_87 = arith.constant 0 : index
    %101 = vector.load %arg3[%c12, %c0_86, %c0_87] : memref<49x1x4xf32, #tpu.memory_space<vmem>>, vector<1x1x4xf32>
    %102 = vector.shape_cast %101 : vector<1x1x4xf32> to vector<1x4xf32>
    %c1_88 = arith.constant 1 : index
    %c10_89 = arith.constant 10 : index
    %c0_90 = arith.constant 0 : index
    %103 = vector.load %arg6[%c1_88, %c10_89, %c0_90] : memref<22x27x4xf32, #tpu.memory_space<vmem>>, vector<16x16x4xf32>
    %104 = vector.shape_cast %102 : vector<1x4xf32> to vector<1x1x4xf32>
    %105 = vector.broadcast %104 : vector<1x1x4xf32> to vector<16x16x4xf32>
    %106 = arith.mulf %103, %105 : vector<16x16x4xf32>
    %107 = arith.addf %100, %106 : vector<16x16x4xf32>
    %c13 = arith.constant 13 : index
    %c0_91 = arith.constant 0 : index
    %c0_92 = arith.constant 0 : index
    %108 = vector.load %arg3[%c13, %c0_91, %c0_92] : memref<49x1x4xf32, #tpu.memory_space<vmem>>, vector<1x1x4xf32>
    %109 = vector.shape_cast %108 : vector<1x1x4xf32> to vector<1x4xf32>
    %c1_93 = arith.constant 1 : index
    %c11_94 = arith.constant 11 : index
    %c0_95 = arith.constant 0 : index
    %110 = vector.load %arg6[%c1_93, %c11_94, %c0_95] : memref<22x27x4xf32, #tpu.memory_space<vmem>>, vector<16x16x4xf32>
    %111 = vector.shape_cast %109 : vector<1x4xf32> to vector<1x1x4xf32>
    %112 = vector.broadcast %111 : vector<1x1x4xf32> to vector<16x16x4xf32>
    %113 = arith.mulf %110, %112 : vector<16x16x4xf32>
    %114 = arith.addf %107, %113 : vector<16x16x4xf32>
    %c14 = arith.constant 14 : index
    %c0_96 = arith.constant 0 : index
    %c0_97 = arith.constant 0 : index
    %115 = vector.load %arg3[%c14, %c0_96, %c0_97] : memref<49x1x4xf32, #tpu.memory_space<vmem>>, vector<1x1x4xf32>
    %116 = vector.shape_cast %115 : vector<1x1x4xf32> to vector<1x4xf32>
    %c2_98 = arith.constant 2 : index
    %c5_99 = arith.constant 5 : index
    %c0_100 = arith.constant 0 : index
    %117 = vector.load %arg6[%c2_98, %c5_99, %c0_100] : memref<22x27x4xf32, #tpu.memory_space<vmem>>, vector<16x16x4xf32>
    %118 = vector.shape_cast %116 : vector<1x4xf32> to vector<1x1x4xf32>
    %119 = vector.broadcast %118 : vector<1x1x4xf32> to vector<16x16x4xf32>
    %120 = arith.mulf %117, %119 : vector<16x16x4xf32>
    %121 = arith.addf %114, %120 : vector<16x16x4xf32>
    %c15 = arith.constant 15 : index
    %c0_101 = arith.constant 0 : index
    %c0_102 = arith.constant 0 : index
    %122 = vector.load %arg3[%c15, %c0_101, %c0_102] : memref<49x1x4xf32, #tpu.memory_space<vmem>>, vector<1x1x4xf32>
    %123 = vector.shape_cast %122 : vector<1x1x4xf32> to vector<1x4xf32>
    %c2_103 = arith.constant 2 : index
    %c6_104 = arith.constant 6 : index
    %c0_105 = arith.constant 0 : index
    %124 = vector.load %arg6[%c2_103, %c6_104, %c0_105] : memref<22x27x4xf32, #tpu.memory_space<vmem>>, vector<16x16x4xf32>
    %125 = vector.shape_cast %123 : vector<1x4xf32> to vector<1x1x4xf32>
    %126 = vector.broadcast %125 : vector<1x1x4xf32> to vector<16x16x4xf32>
    %127 = arith.mulf %124, %126 : vector<16x16x4xf32>
    %128 = arith.addf %121, %127 : vector<16x16x4xf32>
    %c16 = arith.constant 16 : index
    %c0_106 = arith.constant 0 : index
    %c0_107 = arith.constant 0 : index
    %129 = vector.load %arg3[%c16, %c0_106, %c0_107] : memref<49x1x4xf32, #tpu.memory_space<vmem>>, vector<1x1x4xf32>
    %130 = vector.shape_cast %129 : vector<1x1x4xf32> to vector<1x4xf32>
    %c2_108 = arith.constant 2 : index
    %c7_109 = arith.constant 7 : index
    %c0_110 = arith.constant 0 : index
    %131 = vector.load %arg6[%c2_108, %c7_109, %c0_110] : memref<22x27x4xf32, #tpu.memory_space<vmem>>, vector<16x16x4xf32>
    %132 = vector.shape_cast %130 : vector<1x4xf32> to vector<1x1x4xf32>
    %133 = vector.broadcast %132 : vector<1x1x4xf32> to vector<16x16x4xf32>
    %134 = arith.mulf %131, %133 : vector<16x16x4xf32>
    %135 = arith.addf %128, %134 : vector<16x16x4xf32>
    %c17 = arith.constant 17 : index
    %c0_111 = arith.constant 0 : index
    %c0_112 = arith.constant 0 : index
    %136 = vector.load %arg3[%c17, %c0_111, %c0_112] : memref<49x1x4xf32, #tpu.memory_space<vmem>>, vector<1x1x4xf32>
    %137 = vector.shape_cast %136 : vector<1x1x4xf32> to vector<1x4xf32>
    %c2_113 = arith.constant 2 : index
    %c8_114 = arith.constant 8 : index
    %c0_115 = arith.constant 0 : index
    %138 = vector.load %arg6[%c2_113, %c8_114, %c0_115] : memref<22x27x4xf32, #tpu.memory_space<vmem>>, vector<16x16x4xf32>
    %139 = vector.shape_cast %137 : vector<1x4xf32> to vector<1x1x4xf32>
    %140 = vector.broadcast %139 : vector<1x1x4xf32> to vector<16x16x4xf32>
    %141 = arith.mulf %138, %140 : vector<16x16x4xf32>
    %142 = arith.addf %135, %141 : vector<16x16x4xf32>
    %c18 = arith.constant 18 : index
    %c0_116 = arith.constant 0 : index
    %c0_117 = arith.constant 0 : index
    %143 = vector.load %arg3[%c18, %c0_116, %c0_117] : memref<49x1x4xf32, #tpu.memory_space<vmem>>, vector<1x1x4xf32>
    %144 = vector.shape_cast %143 : vector<1x1x4xf32> to vector<1x4xf32>
    %c2_118 = arith.constant 2 : index
    %c9_119 = arith.constant 9 : index
    %c0_120 = arith.constant 0 : index
    %145 = vector.load %arg6[%c2_118, %c9_119, %c0_120] : memref<22x27x4xf32, #tpu.memory_space<vmem>>, vector<16x16x4xf32>
    %146 = vector.shape_cast %144 : vector<1x4xf32> to vector<1x1x4xf32>
    %147 = vector.broadcast %146 : vector<1x1x4xf32> to vector<16x16x4xf32>
    %148 = arith.mulf %145, %147 : vector<16x16x4xf32>
    %149 = arith.addf %142, %148 : vector<16x16x4xf32>
    %c19_121 = arith.constant 19 : index
    %c0_122 = arith.constant 0 : index
    %c0_123 = arith.constant 0 : index
    %150 = vector.load %arg3[%c19_121, %c0_122, %c0_123] : memref<49x1x4xf32, #tpu.memory_space<vmem>>, vector<1x1x4xf32>
    %151 = vector.shape_cast %150 : vector<1x1x4xf32> to vector<1x4xf32>
    %c2_124 = arith.constant 2 : index
    %c10_125 = arith.constant 10 : index
    %c0_126 = arith.constant 0 : index
    %152 = vector.load %arg6[%c2_124, %c10_125, %c0_126] : memref<22x27x4xf32, #tpu.memory_space<vmem>>, vector<16x16x4xf32>
    %153 = vector.shape_cast %151 : vector<1x4xf32> to vector<1x1x4xf32>
    %154 = vector.broadcast %153 : vector<1x1x4xf32> to vector<16x16x4xf32>
    %155 = arith.mulf %152, %154 : vector<16x16x4xf32>
    %156 = arith.addf %149, %155 : vector<16x16x4xf32>
    %c20 = arith.constant 20 : index
    %c0_127 = arith.constant 0 : index
    %c0_128 = arith.constant 0 : index
    %157 = vector.load %arg3[%c20, %c0_127, %c0_128] : memref<49x1x4xf32, #tpu.memory_space<vmem>>, vector<1x1x4xf32>
    %158 = vector.shape_cast %157 : vector<1x1x4xf32> to vector<1x4xf32>
    %c2_129 = arith.constant 2 : index
    %c11_130 = arith.constant 11 : index
    %c0_131 = arith.constant 0 : index
    %159 = vector.load %arg6[%c2_129, %c11_130, %c0_131] : memref<22x27x4xf32, #tpu.memory_space<vmem>>, vector<16x16x4xf32>
    %160 = vector.shape_cast %158 : vector<1x4xf32> to vector<1x1x4xf32>
    %161 = vector.broadcast %160 : vector<1x1x4xf32> to vector<16x16x4xf32>
    %162 = arith.mulf %159, %161 : vector<16x16x4xf32>
    %163 = arith.addf %156, %162 : vector<16x16x4xf32>
    %c21 = arith.constant 21 : index
    %c0_132 = arith.constant 0 : index
    %c0_133 = arith.constant 0 : index
    %164 = vector.load %arg3[%c21, %c0_132, %c0_133] : memref<49x1x4xf32, #tpu.memory_space<vmem>>, vector<1x1x4xf32>
    %165 = vector.shape_cast %164 : vector<1x1x4xf32> to vector<1x4xf32>
    %c3_134 = arith.constant 3 : index
    %c5_135 = arith.constant 5 : index
    %c0_136 = arith.constant 0 : index
    %166 = vector.load %arg6[%c3_134, %c5_135, %c0_136] : memref<22x27x4xf32, #tpu.memory_space<vmem>>, vector<16x16x4xf32>
    %167 = vector.shape_cast %165 : vector<1x4xf32> to vector<1x1x4xf32>
    %168 = vector.broadcast %167 : vector<1x1x4xf32> to vector<16x16x4xf32>
    %169 = arith.mulf %166, %168 : vector<16x16x4xf32>
    %170 = arith.addf %163, %169 : vector<16x16x4xf32>
    %c22 = arith.constant 22 : index
    %c0_137 = arith.constant 0 : index
    %c0_138 = arith.constant 0 : index
    %171 = vector.load %arg3[%c22, %c0_137, %c0_138] : memref<49x1x4xf32, #tpu.memory_space<vmem>>, vector<1x1x4xf32>
    %172 = vector.shape_cast %171 : vector<1x1x4xf32> to vector<1x4xf32>
    %c3_139 = arith.constant 3 : index
    %c6_140 = arith.constant 6 : index
    %c0_141 = arith.constant 0 : index
    %173 = vector.load %arg6[%c3_139, %c6_140, %c0_141] : memref<22x27x4xf32, #tpu.memory_space<vmem>>, vector<16x16x4xf32>
    %174 = vector.shape_cast %172 : vector<1x4xf32> to vector<1x1x4xf32>
    %175 = vector.broadcast %174 : vector<1x1x4xf32> to vector<16x16x4xf32>
    %176 = arith.mulf %173, %175 : vector<16x16x4xf32>
    %177 = arith.addf %170, %176 : vector<16x16x4xf32>
    %c23 = arith.constant 23 : index
    %c0_142 = arith.constant 0 : index
    %c0_143 = arith.constant 0 : index
    %178 = vector.load %arg3[%c23, %c0_142, %c0_143] : memref<49x1x4xf32, #tpu.memory_space<vmem>>, vector<1x1x4xf32>
    %179 = vector.shape_cast %178 : vector<1x1x4xf32> to vector<1x4xf32>
    %c3_144 = arith.constant 3 : index
    %c7_145 = arith.constant 7 : index
    %c0_146 = arith.constant 0 : index
    %180 = vector.load %arg6[%c3_144, %c7_145, %c0_146] : memref<22x27x4xf32, #tpu.memory_space<vmem>>, vector<16x16x4xf32>
    %181 = vector.shape_cast %179 : vector<1x4xf32> to vector<1x1x4xf32>
    %182 = vector.broadcast %181 : vector<1x1x4xf32> to vector<16x16x4xf32>
    %183 = arith.mulf %180, %182 : vector<16x16x4xf32>
    %184 = arith.addf %177, %183 : vector<16x16x4xf32>
    %c24_147 = arith.constant 24 : index
    %c0_148 = arith.constant 0 : index
    %c0_149 = arith.constant 0 : index
    %185 = vector.load %arg3[%c24_147, %c0_148, %c0_149] : memref<49x1x4xf32, #tpu.memory_space<vmem>>, vector<1x1x4xf32>
    %186 = vector.shape_cast %185 : vector<1x1x4xf32> to vector<1x4xf32>
    %c3_150 = arith.constant 3 : index
    %c8_151 = arith.constant 8 : index
    %c0_152 = arith.constant 0 : index
    %187 = vector.load %arg6[%c3_150, %c8_151, %c0_152] : memref<22x27x4xf32, #tpu.memory_space<vmem>>, vector<16x16x4xf32>
    %188 = vector.shape_cast %186 : vector<1x4xf32> to vector<1x1x4xf32>
    %189 = vector.broadcast %188 : vector<1x1x4xf32> to vector<16x16x4xf32>
    %190 = arith.mulf %187, %189 : vector<16x16x4xf32>
    %191 = arith.addf %184, %190 : vector<16x16x4xf32>
    %c25 = arith.constant 25 : index
    %c0_153 = arith.constant 0 : index
    %c0_154 = arith.constant 0 : index
    %192 = vector.load %arg3[%c25, %c0_153, %c0_154] : memref<49x1x4xf32, #tpu.memory_space<vmem>>, vector<1x1x4xf32>
    %193 = vector.shape_cast %192 : vector<1x1x4xf32> to vector<1x4xf32>
    %c3_155 = arith.constant 3 : index
    %c9_156 = arith.constant 9 : index
    %c0_157 = arith.constant 0 : index
    %194 = vector.load %arg6[%c3_155, %c9_156, %c0_157] : memref<22x27x4xf32, #tpu.memory_space<vmem>>, vector<16x16x4xf32>
    %195 = vector.shape_cast %193 : vector<1x4xf32> to vector<1x1x4xf32>
    %196 = vector.broadcast %195 : vector<1x1x4xf32> to vector<16x16x4xf32>
    %197 = arith.mulf %194, %196 : vector<16x16x4xf32>
    %198 = arith.addf %191, %197 : vector<16x16x4xf32>
    %c26 = arith.constant 26 : index
    %c0_158 = arith.constant 0 : index
    %c0_159 = arith.constant 0 : index
    %199 = vector.load %arg3[%c26, %c0_158, %c0_159] : memref<49x1x4xf32, #tpu.memory_space<vmem>>, vector<1x1x4xf32>
    %200 = vector.shape_cast %199 : vector<1x1x4xf32> to vector<1x4xf32>
    %c3_160 = arith.constant 3 : index
    %c10_161 = arith.constant 10 : index
    %c0_162 = arith.constant 0 : index
    %201 = vector.load %arg6[%c3_160, %c10_161, %c0_162] : memref<22x27x4xf32, #tpu.memory_space<vmem>>, vector<16x16x4xf32>
    %202 = vector.shape_cast %200 : vector<1x4xf32> to vector<1x1x4xf32>
    %203 = vector.broadcast %202 : vector<1x1x4xf32> to vector<16x16x4xf32>
    %204 = arith.mulf %201, %203 : vector<16x16x4xf32>
    %205 = arith.addf %198, %204 : vector<16x16x4xf32>
    %c27 = arith.constant 27 : index
    %c0_163 = arith.constant 0 : index
    %c0_164 = arith.constant 0 : index
    %206 = vector.load %arg3[%c27, %c0_163, %c0_164] : memref<49x1x4xf32, #tpu.memory_space<vmem>>, vector<1x1x4xf32>
    %207 = vector.shape_cast %206 : vector<1x1x4xf32> to vector<1x4xf32>
    %c3_165 = arith.constant 3 : index
    %c11_166 = arith.constant 11 : index
    %c0_167 = arith.constant 0 : index
    %208 = vector.load %arg6[%c3_165, %c11_166, %c0_167] : memref<22x27x4xf32, #tpu.memory_space<vmem>>, vector<16x16x4xf32>
    %209 = vector.shape_cast %207 : vector<1x4xf32> to vector<1x1x4xf32>
    %210 = vector.broadcast %209 : vector<1x1x4xf32> to vector<16x16x4xf32>
    %211 = arith.mulf %208, %210 : vector<16x16x4xf32>
    %212 = arith.addf %205, %211 : vector<16x16x4xf32>
    %c28 = arith.constant 28 : index
    %c0_168 = arith.constant 0 : index
    %c0_169 = arith.constant 0 : index
    %213 = vector.load %arg3[%c28, %c0_168, %c0_169] : memref<49x1x4xf32, #tpu.memory_space<vmem>>, vector<1x1x4xf32>
    %214 = vector.shape_cast %213 : vector<1x1x4xf32> to vector<1x4xf32>
    %c4_170 = arith.constant 4 : index
    %c5_171 = arith.constant 5 : index
    %c0_172 = arith.constant 0 : index
    %215 = vector.load %arg6[%c4_170, %c5_171, %c0_172] : memref<22x27x4xf32, #tpu.memory_space<vmem>>, vector<16x16x4xf32>
    %216 = vector.shape_cast %214 : vector<1x4xf32> to vector<1x1x4xf32>
    %217 = vector.broadcast %216 : vector<1x1x4xf32> to vector<16x16x4xf32>
    %218 = arith.mulf %215, %217 : vector<16x16x4xf32>
    %219 = arith.addf %212, %218 : vector<16x16x4xf32>
    %c29 = arith.constant 29 : index
    %c0_173 = arith.constant 0 : index
    %c0_174 = arith.constant 0 : index
    %220 = vector.load %arg3[%c29, %c0_173, %c0_174] : memref<49x1x4xf32, #tpu.memory_space<vmem>>, vector<1x1x4xf32>
    %221 = vector.shape_cast %220 : vector<1x1x4xf32> to vector<1x4xf32>
    %c4_175 = arith.constant 4 : index
    %c6_176 = arith.constant 6 : index
    %c0_177 = arith.constant 0 : index
    %222 = vector.load %arg6[%c4_175, %c6_176, %c0_177] : memref<22x27x4xf32, #tpu.memory_space<vmem>>, vector<16x16x4xf32>
    %223 = vector.shape_cast %221 : vector<1x4xf32> to vector<1x1x4xf32>
    %224 = vector.broadcast %223 : vector<1x1x4xf32> to vector<16x16x4xf32>
    %225 = arith.mulf %222, %224 : vector<16x16x4xf32>
    %226 = arith.addf %219, %225 : vector<16x16x4xf32>
    %c30 = arith.constant 30 : index
    %c0_178 = arith.constant 0 : index
    %c0_179 = arith.constant 0 : index
    %227 = vector.load %arg3[%c30, %c0_178, %c0_179] : memref<49x1x4xf32, #tpu.memory_space<vmem>>, vector<1x1x4xf32>
    %228 = vector.shape_cast %227 : vector<1x1x4xf32> to vector<1x4xf32>
    %c4_180 = arith.constant 4 : index
    %c7_181 = arith.constant 7 : index
    %c0_182 = arith.constant 0 : index
    %229 = vector.load %arg6[%c4_180, %c7_181, %c0_182] : memref<22x27x4xf32, #tpu.memory_space<vmem>>, vector<16x16x4xf32>
    %230 = vector.shape_cast %228 : vector<1x4xf32> to vector<1x1x4xf32>
    %231 = vector.broadcast %230 : vector<1x1x4xf32> to vector<16x16x4xf32>
    %232 = arith.mulf %229, %231 : vector<16x16x4xf32>
    %233 = arith.addf %226, %232 : vector<16x16x4xf32>
    %c31 = arith.constant 31 : index
    %c0_183 = arith.constant 0 : index
    %c0_184 = arith.constant 0 : index
    %234 = vector.load %arg3[%c31, %c0_183, %c0_184] : memref<49x1x4xf32, #tpu.memory_space<vmem>>, vector<1x1x4xf32>
    %235 = vector.shape_cast %234 : vector<1x1x4xf32> to vector<1x4xf32>
    %c4_185 = arith.constant 4 : index
    %c8_186 = arith.constant 8 : index
    %c0_187 = arith.constant 0 : index
    %236 = vector.load %arg6[%c4_185, %c8_186, %c0_187] : memref<22x27x4xf32, #tpu.memory_space<vmem>>, vector<16x16x4xf32>
    %237 = vector.shape_cast %235 : vector<1x4xf32> to vector<1x1x4xf32>
    %238 = vector.broadcast %237 : vector<1x1x4xf32> to vector<16x16x4xf32>
    %239 = arith.mulf %236, %238 : vector<16x16x4xf32>
    %240 = arith.addf %233, %239 : vector<16x16x4xf32>
    %c32 = arith.constant 32 : index
    %c0_188 = arith.constant 0 : index
    %c0_189 = arith.constant 0 : index
    %241 = vector.load %arg3[%c32, %c0_188, %c0_189] : memref<49x1x4xf32, #tpu.memory_space<vmem>>, vector<1x1x4xf32>
    %242 = vector.shape_cast %241 : vector<1x1x4xf32> to vector<1x4xf32>
    %c4_190 = arith.constant 4 : index
    %c9_191 = arith.constant 9 : index
    %c0_192 = arith.constant 0 : index
    %243 = vector.load %arg6[%c4_190, %c9_191, %c0_192] : memref<22x27x4xf32, #tpu.memory_space<vmem>>, vector<16x16x4xf32>
    %244 = vector.shape_cast %242 : vector<1x4xf32> to vector<1x1x4xf32>
    %245 = vector.broadcast %244 : vector<1x1x4xf32> to vector<16x16x4xf32>
    %246 = arith.mulf %243, %245 : vector<16x16x4xf32>
    %247 = arith.addf %240, %246 : vector<16x16x4xf32>
    %c33 = arith.constant 33 : index
    %c0_193 = arith.constant 0 : index
    %c0_194 = arith.constant 0 : index
    %248 = vector.load %arg3[%c33, %c0_193, %c0_194] : memref<49x1x4xf32, #tpu.memory_space<vmem>>, vector<1x1x4xf32>
    %249 = vector.shape_cast %248 : vector<1x1x4xf32> to vector<1x4xf32>
    %c4_195 = arith.constant 4 : index
    %c10_196 = arith.constant 10 : index
    %c0_197 = arith.constant 0 : index
    %250 = vector.load %arg6[%c4_195, %c10_196, %c0_197] : memref<22x27x4xf32, #tpu.memory_space<vmem>>, vector<16x16x4xf32>
    %251 = vector.shape_cast %249 : vector<1x4xf32> to vector<1x1x4xf32>
    %252 = vector.broadcast %251 : vector<1x1x4xf32> to vector<16x16x4xf32>
    %253 = arith.mulf %250, %252 : vector<16x16x4xf32>
    %254 = arith.addf %247, %253 : vector<16x16x4xf32>
    %c34 = arith.constant 34 : index
    %c0_198 = arith.constant 0 : index
    %c0_199 = arith.constant 0 : index
    %255 = vector.load %arg3[%c34, %c0_198, %c0_199] : memref<49x1x4xf32, #tpu.memory_space<vmem>>, vector<1x1x4xf32>
    %256 = vector.shape_cast %255 : vector<1x1x4xf32> to vector<1x4xf32>
    %c4_200 = arith.constant 4 : index
    %c11_201 = arith.constant 11 : index
    %c0_202 = arith.constant 0 : index
    %257 = vector.load %arg6[%c4_200, %c11_201, %c0_202] : memref<22x27x4xf32, #tpu.memory_space<vmem>>, vector<16x16x4xf32>
    %258 = vector.shape_cast %256 : vector<1x4xf32> to vector<1x1x4xf32>
    %259 = vector.broadcast %258 : vector<1x1x4xf32> to vector<16x16x4xf32>
    %260 = arith.mulf %257, %259 : vector<16x16x4xf32>
    %261 = arith.addf %254, %260 : vector<16x16x4xf32>
    %c35 = arith.constant 35 : index
    %c0_203 = arith.constant 0 : index
    %c0_204 = arith.constant 0 : index
    %262 = vector.load %arg3[%c35, %c0_203, %c0_204] : memref<49x1x4xf32, #tpu.memory_space<vmem>>, vector<1x1x4xf32>
    %263 = vector.shape_cast %262 : vector<1x1x4xf32> to vector<1x4xf32>
    %c5_205 = arith.constant 5 : index
    %c5_206 = arith.constant 5 : index
    %c0_207 = arith.constant 0 : index
    %264 = vector.load %arg6[%c5_205, %c5_206, %c0_207] : memref<22x27x4xf32, #tpu.memory_space<vmem>>, vector<16x16x4xf32>
    %265 = vector.shape_cast %263 : vector<1x4xf32> to vector<1x1x4xf32>
    %266 = vector.broadcast %265 : vector<1x1x4xf32> to vector<16x16x4xf32>
    %267 = arith.mulf %264, %266 : vector<16x16x4xf32>
    %268 = arith.addf %261, %267 : vector<16x16x4xf32>
    %c36 = arith.constant 36 : index
    %c0_208 = arith.constant 0 : index
    %c0_209 = arith.constant 0 : index
    %269 = vector.load %arg3[%c36, %c0_208, %c0_209] : memref<49x1x4xf32, #tpu.memory_space<vmem>>, vector<1x1x4xf32>
    %270 = vector.shape_cast %269 : vector<1x1x4xf32> to vector<1x4xf32>
    %c5_210 = arith.constant 5 : index
    %c6_211 = arith.constant 6 : index
    %c0_212 = arith.constant 0 : index
    %271 = vector.load %arg6[%c5_210, %c6_211, %c0_212] : memref<22x27x4xf32, #tpu.memory_space<vmem>>, vector<16x16x4xf32>
    %272 = vector.shape_cast %270 : vector<1x4xf32> to vector<1x1x4xf32>
    %273 = vector.broadcast %272 : vector<1x1x4xf32> to vector<16x16x4xf32>
    %274 = arith.mulf %271, %273 : vector<16x16x4xf32>
    %275 = arith.addf %268, %274 : vector<16x16x4xf32>
    %c37 = arith.constant 37 : index
    %c0_213 = arith.constant 0 : index
    %c0_214 = arith.constant 0 : index
    %276 = vector.load %arg3[%c37, %c0_213, %c0_214] : memref<49x1x4xf32, #tpu.memory_space<vmem>>, vector<1x1x4xf32>
    %277 = vector.shape_cast %276 : vector<1x1x4xf32> to vector<1x4xf32>
    %c5_215 = arith.constant 5 : index
    %c7_216 = arith.constant 7 : index
    %c0_217 = arith.constant 0 : index
    %278 = vector.load %arg6[%c5_215, %c7_216, %c0_217] : memref<22x27x4xf32, #tpu.memory_space<vmem>>, vector<16x16x4xf32>
    %279 = vector.shape_cast %277 : vector<1x4xf32> to vector<1x1x4xf32>
    %280 = vector.broadcast %279 : vector<1x1x4xf32> to vector<16x16x4xf32>
    %281 = arith.mulf %278, %280 : vector<16x16x4xf32>
    %282 = arith.addf %275, %281 : vector<16x16x4xf32>
    %c38 = arith.constant 38 : index
    %c0_218 = arith.constant 0 : index
    %c0_219 = arith.constant 0 : index
    %283 = vector.load %arg3[%c38, %c0_218, %c0_219] : memref<49x1x4xf32, #tpu.memory_space<vmem>>, vector<1x1x4xf32>
    %284 = vector.shape_cast %283 : vector<1x1x4xf32> to vector<1x4xf32>
    %c5_220 = arith.constant 5 : index
    %c8_221 = arith.constant 8 : index
    %c0_222 = arith.constant 0 : index
    %285 = vector.load %arg6[%c5_220, %c8_221, %c0_222] : memref<22x27x4xf32, #tpu.memory_space<vmem>>, vector<16x16x4xf32>
    %286 = vector.shape_cast %284 : vector<1x4xf32> to vector<1x1x4xf32>
    %287 = vector.broadcast %286 : vector<1x1x4xf32> to vector<16x16x4xf32>
    %288 = arith.mulf %285, %287 : vector<16x16x4xf32>
    %289 = arith.addf %282, %288 : vector<16x16x4xf32>
    %c39 = arith.constant 39 : index
    %c0_223 = arith.constant 0 : index
    %c0_224 = arith.constant 0 : index
    %290 = vector.load %arg3[%c39, %c0_223, %c0_224] : memref<49x1x4xf32, #tpu.memory_space<vmem>>, vector<1x1x4xf32>
    %291 = vector.shape_cast %290 : vector<1x1x4xf32> to vector<1x4xf32>
    %c5_225 = arith.constant 5 : index
    %c9_226 = arith.constant 9 : index
    %c0_227 = arith.constant 0 : index
    %292 = vector.load %arg6[%c5_225, %c9_226, %c0_227] : memref<22x27x4xf32, #tpu.memory_space<vmem>>, vector<16x16x4xf32>
    %293 = vector.shape_cast %291 : vector<1x4xf32> to vector<1x1x4xf32>
    %294 = vector.broadcast %293 : vector<1x1x4xf32> to vector<16x16x4xf32>
    %295 = arith.mulf %292, %294 : vector<16x16x4xf32>
    %296 = arith.addf %289, %295 : vector<16x16x4xf32>
    %c40 = arith.constant 40 : index
    %c0_228 = arith.constant 0 : index
    %c0_229 = arith.constant 0 : index
    %297 = vector.load %arg3[%c40, %c0_228, %c0_229] : memref<49x1x4xf32, #tpu.memory_space<vmem>>, vector<1x1x4xf32>
    %298 = vector.shape_cast %297 : vector<1x1x4xf32> to vector<1x4xf32>
    %c5_230 = arith.constant 5 : index
    %c10_231 = arith.constant 10 : index
    %c0_232 = arith.constant 0 : index
    %299 = vector.load %arg6[%c5_230, %c10_231, %c0_232] : memref<22x27x4xf32, #tpu.memory_space<vmem>>, vector<16x16x4xf32>
    %300 = vector.shape_cast %298 : vector<1x4xf32> to vector<1x1x4xf32>
    %301 = vector.broadcast %300 : vector<1x1x4xf32> to vector<16x16x4xf32>
    %302 = arith.mulf %299, %301 : vector<16x16x4xf32>
    %303 = arith.addf %296, %302 : vector<16x16x4xf32>
    %c41 = arith.constant 41 : index
    %c0_233 = arith.constant 0 : index
    %c0_234 = arith.constant 0 : index
    %304 = vector.load %arg3[%c41, %c0_233, %c0_234] : memref<49x1x4xf32, #tpu.memory_space<vmem>>, vector<1x1x4xf32>
    %305 = vector.shape_cast %304 : vector<1x1x4xf32> to vector<1x4xf32>
    %c5_235 = arith.constant 5 : index
    %c11_236 = arith.constant 11 : index
    %c0_237 = arith.constant 0 : index
    %306 = vector.load %arg6[%c5_235, %c11_236, %c0_237] : memref<22x27x4xf32, #tpu.memory_space<vmem>>, vector<16x16x4xf32>
    %307 = vector.shape_cast %305 : vector<1x4xf32> to vector<1x1x4xf32>
    %308 = vector.broadcast %307 : vector<1x1x4xf32> to vector<16x16x4xf32>
    %309 = arith.mulf %306, %308 : vector<16x16x4xf32>
    %310 = arith.addf %303, %309 : vector<16x16x4xf32>
    %c42 = arith.constant 42 : index
    %c0_238 = arith.constant 0 : index
    %c0_239 = arith.constant 0 : index
    %311 = vector.load %arg3[%c42, %c0_238, %c0_239] : memref<49x1x4xf32, #tpu.memory_space<vmem>>, vector<1x1x4xf32>
    %312 = vector.shape_cast %311 : vector<1x1x4xf32> to vector<1x4xf32>
    %c6_240 = arith.constant 6 : index
    %c5_241 = arith.constant 5 : index
    %c0_242 = arith.constant 0 : index
    %313 = vector.load %arg6[%c6_240, %c5_241, %c0_242] : memref<22x27x4xf32, #tpu.memory_space<vmem>>, vector<16x16x4xf32>
    %314 = vector.shape_cast %312 : vector<1x4xf32> to vector<1x1x4xf32>
    %315 = vector.broadcast %314 : vector<1x1x4xf32> to vector<16x16x4xf32>
    %316 = arith.mulf %313, %315 : vector<16x16x4xf32>
    %317 = arith.addf %310, %316 : vector<16x16x4xf32>
    %c43 = arith.constant 43 : index
    %c0_243 = arith.constant 0 : index
    %c0_244 = arith.constant 0 : index
    %318 = vector.load %arg3[%c43, %c0_243, %c0_244] : memref<49x1x4xf32, #tpu.memory_space<vmem>>, vector<1x1x4xf32>
    %319 = vector.shape_cast %318 : vector<1x1x4xf32> to vector<1x4xf32>
    %c6_245 = arith.constant 6 : index
    %c6_246 = arith.constant 6 : index
    %c0_247 = arith.constant 0 : index
    %320 = vector.load %arg6[%c6_245, %c6_246, %c0_247] : memref<22x27x4xf32, #tpu.memory_space<vmem>>, vector<16x16x4xf32>
    %321 = vector.shape_cast %319 : vector<1x4xf32> to vector<1x1x4xf32>
    %322 = vector.broadcast %321 : vector<1x1x4xf32> to vector<16x16x4xf32>
    %323 = arith.mulf %320, %322 : vector<16x16x4xf32>
    %324 = arith.addf %317, %323 : vector<16x16x4xf32>
    %c44 = arith.constant 44 : index
    %c0_248 = arith.constant 0 : index
    %c0_249 = arith.constant 0 : index
    %325 = vector.load %arg3[%c44, %c0_248, %c0_249] : memref<49x1x4xf32, #tpu.memory_space<vmem>>, vector<1x1x4xf32>
    %326 = vector.shape_cast %325 : vector<1x1x4xf32> to vector<1x4xf32>
    %c6_250 = arith.constant 6 : index
    %c7_251 = arith.constant 7 : index
    %c0_252 = arith.constant 0 : index
    %327 = vector.load %arg6[%c6_250, %c7_251, %c0_252] : memref<22x27x4xf32, #tpu.memory_space<vmem>>, vector<16x16x4xf32>
    %328 = vector.shape_cast %326 : vector<1x4xf32> to vector<1x1x4xf32>
    %329 = vector.broadcast %328 : vector<1x1x4xf32> to vector<16x16x4xf32>
    %330 = arith.mulf %327, %329 : vector<16x16x4xf32>
    %331 = arith.addf %324, %330 : vector<16x16x4xf32>
    %c45 = arith.constant 45 : index
    %c0_253 = arith.constant 0 : index
    %c0_254 = arith.constant 0 : index
    %332 = vector.load %arg3[%c45, %c0_253, %c0_254] : memref<49x1x4xf32, #tpu.memory_space<vmem>>, vector<1x1x4xf32>
    %333 = vector.shape_cast %332 : vector<1x1x4xf32> to vector<1x4xf32>
    %c6_255 = arith.constant 6 : index
    %c8_256 = arith.constant 8 : index
    %c0_257 = arith.constant 0 : index
    %334 = vector.load %arg6[%c6_255, %c8_256, %c0_257] : memref<22x27x4xf32, #tpu.memory_space<vmem>>, vector<16x16x4xf32>
    %335 = vector.shape_cast %333 : vector<1x4xf32> to vector<1x1x4xf32>
    %336 = vector.broadcast %335 : vector<1x1x4xf32> to vector<16x16x4xf32>
    %337 = arith.mulf %334, %336 : vector<16x16x4xf32>
    %338 = arith.addf %331, %337 : vector<16x16x4xf32>
    %c46 = arith.constant 46 : index
    %c0_258 = arith.constant 0 : index
    %c0_259 = arith.constant 0 : index
    %339 = vector.load %arg3[%c46, %c0_258, %c0_259] : memref<49x1x4xf32, #tpu.memory_space<vmem>>, vector<1x1x4xf32>
    %340 = vector.shape_cast %339 : vector<1x1x4xf32> to vector<1x4xf32>
    %c6_260 = arith.constant 6 : index
    %c9_261 = arith.constant 9 : index
    %c0_262 = arith.constant 0 : index
    %341 = vector.load %arg6[%c6_260, %c9_261, %c0_262] : memref<22x27x4xf32, #tpu.memory_space<vmem>>, vector<16x16x4xf32>
    %342 = vector.shape_cast %340 : vector<1x4xf32> to vector<1x1x4xf32>
    %343 = vector.broadcast %342 : vector<1x1x4xf32> to vector<16x16x4xf32>
    %344 = arith.mulf %341, %343 : vector<16x16x4xf32>
    %345 = arith.addf %338, %344 : vector<16x16x4xf32>
    %c47 = arith.constant 47 : index
    %c0_263 = arith.constant 0 : index
    %c0_264 = arith.constant 0 : index
    %346 = vector.load %arg3[%c47, %c0_263, %c0_264] : memref<49x1x4xf32, #tpu.memory_space<vmem>>, vector<1x1x4xf32>
    %347 = vector.shape_cast %346 : vector<1x1x4xf32> to vector<1x4xf32>
    %c6_265 = arith.constant 6 : index
    %c10_266 = arith.constant 10 : index
    %c0_267 = arith.constant 0 : index
    %348 = vector.load %arg6[%c6_265, %c10_266, %c0_267] : memref<22x27x4xf32, #tpu.memory_space<vmem>>, vector<16x16x4xf32>
    %349 = vector.shape_cast %347 : vector<1x4xf32> to vector<1x1x4xf32>
    %350 = vector.broadcast %349 : vector<1x1x4xf32> to vector<16x16x4xf32>
    %351 = arith.mulf %348, %350 : vector<16x16x4xf32>
    %352 = arith.addf %345, %351 : vector<16x16x4xf32>
    %c48 = arith.constant 48 : index
    %c0_268 = arith.constant 0 : index
    %c0_269 = arith.constant 0 : index
    %353 = vector.load %arg3[%c48, %c0_268, %c0_269] : memref<49x1x4xf32, #tpu.memory_space<vmem>>, vector<1x1x4xf32>
    %354 = vector.shape_cast %353 : vector<1x1x4xf32> to vector<1x4xf32>
    %c6_270 = arith.constant 6 : index
    %c11_271 = arith.constant 11 : index
    %c0_272 = arith.constant 0 : index
    %355 = vector.load %arg6[%c6_270, %c11_271, %c0_272] : memref<22x27x4xf32, #tpu.memory_space<vmem>>, vector<16x16x4xf32>
    %356 = vector.shape_cast %354 : vector<1x4xf32> to vector<1x1x4xf32>
    %357 = vector.broadcast %356 : vector<1x1x4xf32> to vector<16x16x4xf32>
    %358 = arith.mulf %355, %357 : vector<16x16x4xf32>
    %359 = arith.addf %352, %358 : vector<16x16x4xf32>
    %c0_273 = arith.constant 0 : index
    %c0_274 = arith.constant 0 : index
    %c0_275 = arith.constant 0 : index
    %c0_276 = arith.constant 0 : index
    %360 = vector.load %arg5[%c0_273, %c0_274, %c0_275, %c0_276] : memref<1x16x16x4xf32, #tpu.memory_space<vmem>>, vector<1x16x16x4xf32>
    %361 = vector.shape_cast %360 : vector<1x16x16x4xf32> to vector<16x16x4xf32>
    %362 = vector.shape_cast %359 : vector<16x16x4xf32> to vector<1x16x16x4xf32>
    tpu.vector_store %arg5[%c0_273, %c0_274, %c0_275, %c0_276], %362 {strides = array<i32>} : memref<1x16x16x4xf32, #tpu.memory_space<vmem>>, vector<1x16x16x4xf32>,
    return
  }
  func.func @transform_0(%arg0: i32, %arg1: i32) -> (i32, i32, i32, i32) {
    %c0_i32 = arith.constant 0 : i32
    %c0_i32_0 = arith.constant 0 : i32
    %c0_i32_1 = arith.constant 0 : i32
    return %arg1, %c0_i32, %c0_i32_0, %arg0 : i32, i32, i32, i32
  }
  func.func @transform_1(%arg0: i32, %arg1: i32) -> (i32, i32, i32) {
    %c0_i32 = arith.constant 0 : i32
    %c0_i32_0 = arith.constant 0 : i32
    %c0_i32_1 = arith.constant 0 : i32
    return %c0_i32, %c0_i32_0, %arg0 : i32, i32, i32
  }
  func.func @transform_2(%arg0: i32, %arg1: i32) -> (i32, i32) {
    %c0_i32 = arith.constant 0 : i32
    %c0_i32_0 = arith.constant 0 : i32
    return %c0_i32, %arg0 : i32, i32
  }
  func.func @transform_3(%arg0: i32, %arg1: i32) -> (i32, i32, i32, i32) {
    %c0_i32 = arith.constant 0 : i32
    %c0_i32_0 = arith.constant 0 : i32
    %c0_i32_1 = arith.constant 0 : i32
    return %arg1, %c0_i32, %c0_i32_0, %arg0 : i32, i32, i32, i32
  }
}

</mosaic_0001>

<llo_original>
// kernel: tpu_custom_call.1
$region0: #{tpu_custom_call.1}
  #allocation0 [shape = 'u32[]', space=smem, size = 0x4, offset = 0x4, fixed_abs, tag = 'smem constant byte address 0x4 - core index']
  #allocation1 [shape = 'u32[144,128]{1,0:T(1,128)}', space=vmem, size = 0x12000, scoped, tag = 'internal scratch']
  #allocation2 [shape = 'f32[22,27,4]{2,1,0:T(8,128)}', space=vmem, size = 0x58000, scoped, tag = 'scratch operand']
  %s0 = inlined_call_operand.vmem [shape: f32[2,16,16,4], index: 0, kind: input, shape index: {}]
  %s1 = inlined_call_operand.vmem [shape: f32[49,1,4], index: 1, kind: input, shape index: {}]
  %s2 = inlined_call_operand.vmem [shape: f32[1,4], index: 2, kind: input, shape index: {}]
  %s3 = inlined_call_operand.vmem [shape: f32[2,16,16,4], index: 3, kind: output, shape index: {}]
  %s4 = sld [smem:[#allocation0]]
  $region45: #{tpu_custom_call.1} parent=0
    _
  %s6 = ssub.s32 1, %s4
  %s7 = scalar_select 0, %s6, %s4
  loop: start=0, step=1, limit=4
  $region2: #{tpu_custom_call.1} parent=0 // loop_pre_header
    _
  $region3: #{tpu_custom_call.1} parent=0 // loop_header
    %s9 = sphi 0, %s13
    %p10 = scmp.ge.s32.totalorder %s9, 4
    %s16 = sphi 0, %s28
    %s17 = sphi 0, %s24
    %s18 = sphi 0, %s16
    %s19 = sphi 0, %s17
    %s20 = sphi 0, %s18
    %s21 = sphi 0, %s19
    %s33 = sphi 0, %s35
    %s36 = sphi 0, %s33
    %s37 = sphi 0, %s36
    %s53 = sphi 0, %s37
    %s59 = sphi 0, %s61
    %s62 = sphi 0, %s59
    %s63 = sphi 0, %s62
    %s79 = sphi 0, %s63
    %s85 = sphi 0, %s87
    %s88 = sphi 0, %s85
    %s89 = sphi 0, %s88
    %s105 = sphi 0, %s89
    %s113 = sphi 0, %s115
    %s116 = sphi 0, %s113
    %s117 = sphi 0, %s116
    %s133 = sphi 0, %s117
  $region4: #{tpu_custom_call.1} parent=0 // loop_header_branch
    %12 = sbr.rel (%p10) target = $region8
  $region5: #{tpu_custom_call.1} parent=0 // loop_body
    %s14 = ssub.s32 %s9, 1
    %s15 = ssub.s32 %s9, 2
    %s22 = sadd.s32 1, %s17
    %p23 = scmp.ge.s32.totalorder %s22, 2
    %s24 = scalar_select %p23, 0, %s22
    %s25 = sadd.s32 1, %s16
    %s26 = scalar_select %p23, %s25, %s16
    %p27 = scmp.ge.s32.totalorder %s26, 1
    %s28 = scalar_select %p27, 0, %s26
    %s29 = ssub.s32 %s17, %s24
    %s30 = ssub.s32 %s16, %s28
    %s31 = sor.u32 %s29, %s30
    %p32 = scmp.eq.s32.totalorder %s31, 0
    %s34 = sadd.s32 %s33, 1
    %s35 = scalar_select %p32, %s33, %s34
    %p38 = pneg %p32
    %p39 = scmp.eq.s32.totalorder %s9, 1
    %p40 = por %p38, %p39
    %p41 = scmp.ne.s32.totalorder %s33, %s36
    %p42 = scmp.eq.s32.totalorder %s9, 0
    %p43 = por %p41, %p42
    %p44 = scmp.ne.s32.totalorder %s33, %s36
    %p45 = scmp.eq.s32.totalorder %s14, 1
    %p46 = por %p44, %p45
    %p47 = scmp.ne.s32.totalorder %s36, %s37
    %p48 = scmp.eq.s32.totalorder %s14, 0
    %p49 = por %p47, %p48
    %p50 = scmp.ne.s32.totalorder %s36, %s37
    %p51 = scmp.eq.s32.totalorder %s15, 1
    %p52 = por %p50, %p51
    %p54 = scmp.ne.s32.totalorder %s37, %s53
    %p55 = scmp.eq.s32.totalorder %s15, 0
    %p56 = por %p54, %p55
    %s57 = ssub.s32 %s16, %s28
    %p58 = scmp.eq.s32.totalorder %s57, 0
    %s60 = sadd.s32 %s59, 1
    %s61 = scalar_select %p58, %s59, %s60
    %p64 = pneg %p58
    %p65 = scmp.eq.s32.totalorder %s9, 1
    %p66 = por %p64, %p65
    %p67 = scmp.ne.s32.totalorder %s59, %s62
    %p68 = scmp.eq.s32.totalorder %s9, 0
    %p69 = por %p67, %p68
    %p70 = scmp.ne.s32.totalorder %s59, %s62
    %p71 = scmp.eq.s32.totalorder %s14, 1
    %p72 = por %p70, %p71
    %p73 = scmp.ne.s32.totalorder %s62, %s63
    %p74 = scmp.eq.s32.totalorder %s14, 0
    %p75 = por %p73, %p74
    %p76 = scmp.ne.s32.totalorder %s62, %s63
    %p77 = scmp.eq.s32.totalorder %s15, 1
    %p78 = por %p76, %p77
    %p80 = scmp.ne.s32.totalorder %s63, %s79
    %p81 = scmp.eq.s32.totalorder %s15, 0
    %p82 = por %p80, %p81
    %s83 = ssub.s32 %s16, %s28
    %p84 = scmp.eq.s32.totalorder %s83, 0
    %s86 = sadd.s32 %s85, 1
    %s87 = scalar_select %p84, %s85, %s86
    %p90 = pneg %p84
    %p91 = scmp.eq.s32.totalorder %s9, 1
    %p92 = por %p90, %p91
    %p93 = scmp.ne.s32.totalorder %s85, %s88
    %p94 = scmp.eq.s32.totalorder %s9, 0
    %p95 = por %p93, %p94
    %p96 = scmp.ne.s32.totalorder %s85, %s88
    %p97 = scmp.eq.s32.totalorder %s14, 1
    %p98 = por %p96, %p97
    %p99 = scmp.ne.s32.totalorder %s88, %s89
    %p100 = scmp.eq.s32.totalorder %s14, 0
    %p101 = por %p99, %p100
    %p102 = scmp.ne.s32.totalorder %s88, %s89
    %p103 = scmp.eq.s32.totalorder %s15, 1
    %p104 = por %p102, %p103
    %p106 = scmp.ne.s32.totalorder %s89, %s105
    %p107 = scmp.eq.s32.totalorder %s15, 0
    %p108 = por %p106, %p107
    %s109 = ssub.s32 %s17, %s24
    %s110 = ssub.s32 %s16, %s28
    %s111 = sor.u32 %s109, %s110
    %p112 = scmp.eq.s32.totalorder %s111, 0
    %s114 = sadd.s32 %s113, 1
    %s115 = scalar_select %p112, %s113, %s114
    %p118 = pneg %p112
    %p119 = scmp.eq.s32.totalorder %s9, 1
    %p120 = por %p118, %p119
    %p121 = scmp.ne.s32.totalorder %s113, %s116
    %p122 = scmp.eq.s32.totalorder %s9, 0
    %p123 = por %p121, %p122
    %p124 = scmp.ne.s32.totalorder %s113, %s116
    %p125 = scmp.eq.s32.totalorder %s14, 1
    %p126 = por %p124, %p125
    %p127 = scmp.ne.s32.totalorder %s116, %s117
    %p128 = scmp.eq.s32.totalorder %s14, 0
    %p129 = por %p127, %p128
    %p130 = scmp.ne.s32.totalorder %s116, %s117
    %p131 = scmp.eq.s32.totalorder %s15, 1
    %p132 = por %p130, %p131
    %p134 = scmp.ne.s32.totalorder %s117, %s133
    %p135 = scmp.eq.s32.totalorder %s15, 0
    %p136 = por %p134, %p135
    %p137 = scmp.le.s32.totalorder 1, %s9
    %p138 = scmp.lt.s32.totalorder %s9, 3
    %p139 = pnand %p137, %p138
    %p140 = pneg %p139
    // Predicated region
    $region9: #{tpu_custom_call.1} parent=5 // pred_check
      _
    $region10: #{tpu_custom_call.1} parent=5 // pred_check_branch
      %142 = sbr.rel (%p139) target = $region12
    $region11: #{tpu_custom_call.1} parent=5 // pred_region
      %s143 = ssub.s32 %s9, 1
      // Predicated region
      $region13: #{tpu_custom_call.1} parent=11 // pred_check
        %p144 = pneg %p75
      $region14: #{tpu_custom_call.1} parent=11 // pred_check_branch
        %146 = sbr.rel (%p144) target = $region16
      $region15: #{tpu_custom_call.1} parent=11 // pred_region
        %p147 = scmp.lt.s32.totalorder %s18, 0
        %s148 = scalar_select %p147, %s18, 0
        %s149 = scalar_lea.vmem %s1, %s148
      $region16: #{tpu_custom_call.1} parent=11 // pred_fallthru
        _
      // Predicated region
      $region17: #{tpu_custom_call.1} parent=11 // pred_check
        %p150 = pneg %p101
      $region18: #{tpu_custom_call.1} parent=11 // pred_check_branch
        %152 = sbr.rel (%p150) target = $region20
      $region19: #{tpu_custom_call.1} parent=11 // pred_region
        %p153 = scmp.lt.s32.totalorder %s18, 0
        %s154 = scalar_select %p153, %s18, 0
        %s155 = scalar_lea.vmem %s2, %s154
      $region20: #{tpu_custom_call.1} parent=11 // pred_fallthru
        _
    $region12: #{tpu_custom_call.1} parent=5 // pred_fallthru
      _
    %p156 = scmp.lt.s32.totalorder %s9, 2
    // Predicated region
    $region21: #{tpu_custom_call.1} parent=5 // pred_check
      %p157 = pneg %p156
    $region22: #{tpu_custom_call.1} parent=5 // pred_check_branch
      %159 = sbr.rel (%p157) target = $region24
    $region23: #{tpu_custom_call.1} parent=5 // pred_region
      // Predicated region
      $region25: #{tpu_custom_call.1} parent=23 // pred_check
        %p160 = pneg %p43
      $region26: #{tpu_custom_call.1} parent=23 // pred_check_branch
        %162 = sbr.rel (%p160) target = $region28
      $region27: #{tpu_custom_call.1} parent=23 // pred_region
        %p163 = scmp.lt.s32.totalorder %s17, 1
        %s164 = scalar_select %p163, %s17, 1
        %p165 = scmp.lt.s32.totalorder %s16, 0
        %s166 = scalar_select %p165, %s16, 0
        %s167 = smul.addr %s164, 32
        %s168 = sadd.s32 %s166, %s167
        %s169 = smul.addr %s168, 8
        %s170 = scalar_lea.vmem %s0, %s169
      $region28: #{tpu_custom_call.1} parent=23 // pred_fallthru
        _
    $region24: #{tpu_custom_call.1} parent=5 // pred_fallthru
      _
    %p171 = scmp.le.s32.totalorder 1, %s9
    %p172 = scmp.lt.s32.totalorder %s9, 3
    %p173 = pnand %p171, %p172
    %p174 = pneg %p173
    // Predicated region
    $region29: #{tpu_custom_call.1} parent=5 // pred_check
      _
    $region30: #{tpu_custom_call.1} parent=5 // pred_check_branch
      %176 = sbr.rel (%p173) target = $region32
    $region31: #{tpu_custom_call.1} parent=5 // pred_region
      %s177 = ssub.s32 %s9, 1
      %p178 = scmp.lt.s32.totalorder %s19, 1
      %s179 = scalar_select %p178, %s19, 1
      %p180 = scmp.lt.s32.totalorder %s18, 0
      %s181 = scalar_select %p180, %s18, 0
      %s182 = smul.addr %s179, 32
      %s183 = sadd.s32 %s181, %s182
      %s184 = smul.addr %s183, 8
      %s185 = scalar_lea.vmem %s0, %s184
      %p186 = pneg %p49
      %p187 = pneg %p46
      %p188 = scmp.lt.s32.totalorder %s18, 0
      %s189 = scalar_select %p188, %s18, 0
      %s190 = scalar_lea.vmem %s1, %s189
      %p191 = pneg %p75
      %p192 = pneg %p72
      %p193 = scmp.lt.s32.totalorder %s18, 0
      %s194 = scalar_select %p193, %s18, 0
      %s195 = scalar_lea.vmem %s2, %s194
      %p196 = pneg %p101
      %p197 = pneg %p98
      %p198 = pneg %p129
      %p199 = pneg %p126
      %p200 = scmp.lt.s32.totalorder %s19, 1
      %s201 = scalar_select %p200, %s19, 1
      %p202 = scmp.lt.s32.totalorder %s18, 0
      %s203 = scalar_select %p202, %s18, 0
      %s204 = smul.addr %s201, 32
      %s205 = sadd.s32 %s203, %s204
      %s206 = smul.addr %s205, 8
      %s207 = scalar_lea.vmem %s3, %s206
      %p208 = scmp.lt.s32.totalorder %s19, 1
      %s209 = scalar_select %p208, %s19, 1
      %p210 = scmp.lt.s32.totalorder %s18, 0
      %s211 = scalar_select %p210, %s18, 0
      %s212 = smul.addr %s209, 32
      %s213 = sadd.s32 %s211, %s212
      %s214 = smul.addr %s213, 8
      %s215 = scalar_lea.vmem %s0, %s214
      %p216 = scmp.lt.s32.totalorder %s18, 0
      %s217 = scalar_select %p216, %s18, 0
      %s218 = scalar_lea.vmem %s1, %s217
      %p219 = scmp.lt.s32.totalorder %s18, 0
      %s220 = scalar_select %p219, %s18, 0
      %s221 = scalar_lea.vmem %s2, %s220
      %p222 = scmp.lt.s32.totalorder %s19, 1
      %s223 = scalar_select %p222, %s19, 1
      %p224 = scmp.lt.s32.totalorder %s18, 0
      %s225 = scalar_select %p224, %s18, 0
      %s226 = smul.addr %s223, 32
      %s227 = sadd.s32 %s225, %s226
      %s228 = smul.addr %s227, 8
      %s229 = scalar_lea.vmem %s3, %s228
      %vm230 = vcmask 31744
      %231 = vst.msk [vmem:[#allocation2] sm:$0xff] %vm230, 0.0
      %232 = vst.msk [vmem:[#allocation2 + $0x8] sm:$0xff] %vm230, 0.0
      %233 = vst.msk [vmem:[#allocation2 + $0x10] sm:$0xff] %vm230, 0.0
      %vm234 = vcmask 26624
      %235 = vst.msk [vmem:[#allocation2 + $0x18] sm:$0x7] %vm234, 0.0
      %236 = vst.msk [vmem:[#allocation2 + $0x20] sm:$0xff] %vm230, 0.0
      %237 = vst.msk [vmem:[#allocation2 + $0x28] sm:$0xff] %vm230, 0.0
      %238 = vst.msk [vmem:[#allocation2 + $0x30] sm:$0xff] %vm230, 0.0
      %239 = vst.msk [vmem:[#allocation2 + $0x38] sm:$0x7] %vm234, 0.0
      %240 = vst.msk [vmem:[#allocation2 + $0x40] sm:$0xff] %vm230, 0.0
      %241 = vst.msk [vmem:[#allocation2 + $0x48] sm:$0xff] %vm230, 0.0
      %242 = vst.msk [vmem:[#allocation2 + $0x50] sm:$0xff] %vm230, 0.0
      %243 = vst.msk [vmem:[#allocation2 + $0x58] sm:$0x7] %vm234, 0.0
      %s244 = scalar_lea.vmem [#allocation2], 608
      %245 = vst.msk [vmem:[%s244] sm:$0xff] %vm230, 0.0
      %246 = vst.msk [vmem:[%s244 + $0x8] sm:$0xff] %vm230, 0.0
      %247 = vst.msk [vmem:[%s244 + $0x10] sm:$0xff] %vm230, 0.0
      %248 = vst.msk [vmem:[%s244 + $0x18] sm:$0x7] %vm234, 0.0
      %249 = vst.msk [vmem:[%s244 + $0x20] sm:$0xff] %vm230, 0.0
      %250 = vst.msk [vmem:[%s244 + $0x28] sm:$0xff] %vm230, 0.0
      %251 = vst.msk [vmem:[%s244 + $0x30] sm:$0xff] %vm230, 0.0
      %252 = vst.msk [vmem:[%s244 + $0x38] sm:$0x7] %vm234, 0.0
      %253 = vst.msk [vmem:[%s244 + $0x40] sm:$0xff] %vm230, 0.0
      %254 = vst.msk [vmem:[%s244 + $0x48] sm:$0xff] %vm230, 0.0
      %255 = vst.msk [vmem:[%s244 + $0x50] sm:$0xff] %vm230, 0.0
      %256 = vst.msk [vmem:[%s244 + $0x58] sm:$0x7] %vm234, 0.0
      %s257 = scalar_lea.vmem [#allocation2], 96
      %258 = vst.msk [vmem:[%s257] sm:$0xff] %vm230, 0.0
      %259 = vst.msk [vmem:[%s257 + $0x20] sm:$0xff] %vm230, 0.0
      %260 = vst.msk [vmem:[%s257 + $0x40] sm:$0xff] %vm230, 0.0
      %261 = vst.msk [vmem:[%s257 + $0x60] sm:$0xff] %vm230, 0.0
      %262 = vst.msk [vmem:[%s257 + $0x80] sm:$0xff] %vm230, 0.0
      %263 = vst.msk [vmem:[%s257 + $0xa0] sm:$0xff] %vm230, 0.0
      %264 = vst.msk [vmem:[%s257 + $0xc0] sm:$0xff] %vm230, 0.0
      %265 = vst.msk [vmem:[%s257 + $0xe0] sm:$0xff] %vm230, 0.0
      %266 = vst.msk [vmem:[%s257 + $0x100] sm:$0xff] %vm230, 0.0
      %267 = vst.msk [vmem:[%s257 + $0x120] sm:$0xff] %vm230, 0.0
      %268 = vst.msk [vmem:[%s257 + $0x140] sm:$0xff] %vm230, 0.0
      %269 = vst.msk [vmem:[%s257 + $0x160] sm:$0xff] %vm230, 0.0
      %270 = vst.msk [vmem:[%s257 + $0x180] sm:$0xff] %vm230, 0.0
      %271 = vst.msk [vmem:[%s257 + $0x1a0] sm:$0xff] %vm230, 0.0
      %272 = vst.msk [vmem:[%s257 + $0x1c0] sm:$0xff] %vm230, 0.0
      %273 = vst.msk [vmem:[%s257 + $0x1e0] sm:$0xff] %vm230, 0.0
      %274 = vst.msk [vmem:[%s257 + $0x18] sm:$0x7] %vm234, 0.0
      %275 = vst.msk [vmem:[%s257 + $0x38] sm:$0x7] %vm234, 0.0
      %276 = vst.msk [vmem:[%s257 + $0x58] sm:$0x7] %vm234, 0.0
      %277 = vst.msk [vmem:[%s257 + $0x78] sm:$0x7] %vm234, 0.0
      %278 = vst.msk [vmem:[%s257 + $0x98] sm:$0x7] %vm234, 0.0
      %279 = vst.msk [vmem:[%s257 + $0xb8] sm:$0x7] %vm234, 0.0
      %280 = vst.msk [vmem:[%s257 + $0xd8] sm:$0x7] %vm234, 0.0
      %281 = vst.msk [vmem:[%s257 + $0xf8] sm:$0x7] %vm234, 0.0
      %282 = vst.msk [vmem:[%s257 + $0x118] sm:$0x7] %vm234, 0.0
      %283 = vst.msk [vmem:[%s257 + $0x138] sm:$0x7] %vm234, 0.0
      %284 = vst.msk [vmem:[%s257 + $0x158] sm:$0x7] %vm234, 0.0
      %285 = vst.msk [vmem:[%s257 + $0x178] sm:$0x7] %vm234, 0.0
      %286 = vst.msk [vmem:[%s257 + $0x198] sm:$0x7] %vm234, 0.0
      %287 = vst.msk [vmem:[%s257 + $0x1b8] sm:$0x7] %vm234, 0.0
      %288 = vst.msk [vmem:[%s257 + $0x1d8] sm:$0x7] %vm234, 0.0
      %289 = vst.msk [vmem:[%s257 + $0x1f8] sm:$0x7] %vm234, 0.0
      %v290 = vld [vmem:[%s221] sm:$0x1]
      %v291 = vld [vmem:[%s215] sm:$0xff]
      %v292 = vld [vmem:[%s215 + $0x8] sm:$0xff]
      %v293 = vld [vmem:[%s215 + $0x10] sm:$0xff]
      %v294 = vld [vmem:[%s215 + $0x18] sm:$0xff]
      %v295 = vld [vmem:[%s215 + $0x20] sm:$0xff]
      %v296 = vld [vmem:[%s215 + $0x28] sm:$0xff]
      %v297 = vld [vmem:[%s215 + $0x30] sm:$0xff]
      %v298 = vld [vmem:[%s215 + $0x38] sm:$0xff]
      %v299 = vld [vmem:[%s215 + $0x40] sm:$0xff]
      %v300 = vld [vmem:[%s215 + $0x48] sm:$0xff]
      %v301 = vld [vmem:[%s215 + $0x50] sm:$0xff]
      %v302 = vld [vmem:[%s215 + $0x58] sm:$0xff]
      %v303 = vld [vmem:[%s215 + $0x60] sm:$0xff]
      %v304 = vld [vmem:[%s215 + $0x68] sm:$0xff]
      %v305 = vld [vmem:[%s215 + $0x70] sm:$0xff]
      %v306 = vld [vmem:[%s215 + $0x78] sm:$0xff]
      %v307 = vld [vmem:[%s215 + $0x80] sm:$0xff]
      %v308 = vld [vmem:[%s215 + $0x88] sm:$0xff]
      %v309 = vld [vmem:[%s215 + $0x90] sm:$0xff]
      %v310 = vld [vmem:[%s215 + $0x98] sm:$0xff]
      %v311 = vld [vmem:[%s215 + $0xa0] sm:$0xff]
      %v312 = vld [vmem:[%s215 + $0xa8] sm:$0xff]
      %v313 = vld [vmem:[%s215 + $0xb0] sm:$0xff]
      %v314 = vld [vmem:[%s215 + $0xb8] sm:$0xff]
      %v315 = vld [vmem:[%s215 + $0xc0] sm:$0xff]
      %v316 = vld [vmem:[%s215 + $0xc8] sm:$0xff]
      %v317 = vld [vmem:[%s215 + $0xd0] sm:$0xff]
      %v318 = vld [vmem:[%s215 + $0xd8] sm:$0xff]
      %v319 = vld [vmem:[%s215 + $0xe0] sm:$0xff]
      %v320 = vld [vmem:[%s215 + $0xe8] sm:$0xff]
      %v321 = vld [vmem:[%s215 + $0xf0] sm:$0xff]
      %v322 = vld [vmem:[%s215 + $0xf8] sm:$0xff]
      %323 = vst.msk [vmem:[%s257 + $0x8] sm:$0xff] %vm230, %v291
      %324 = vst.msk [vmem:[%s257 + $0x10] sm:$0xff] %vm230, %v292
      %325 = vst.msk [vmem:[%s257 + $0x28] sm:$0xff] %vm230, %v293
      %326 = vst.msk [vmem:[%s257 + $0x30] sm:$0xff] %vm230, %v294
      %327 = vst.msk [vmem:[%s257 + $0x48] sm:$0xff] %vm230, %v295
      %328 = vst.msk [vmem:[%s257 + $0x50] sm:$0xff] %vm230, %v296
      %329 = vst.msk [vmem:[%s257 + $0x68] sm:$0xff] %vm230, %v297
      %330 = vst.msk [vmem:[%s257 + $0x70] sm:$0xff] %vm230, %v298
      %331 = vst.msk [vmem:[%s257 + $0x88] sm:$0xff] %vm230, %v299
      %332 = vst.msk [vmem:[%s257 + $0x90] sm:$0xff] %vm230, %v300
      %333 = vst.msk [vmem:[%s257 + $0xa8] sm:$0xff] %vm230, %v301
      %334 = vst.msk [vmem:[%s257 + $0xb0] sm:$0xff] %vm230, %v302
      %335 = vst.msk [vmem:[%s257 + $0xc8] sm:$0xff] %vm230, %v303
      %336 = vst.msk [vmem:[%s257 + $0xd0] sm:$0xff] %vm230, %v304
      %337 = vst.msk [vmem:[%s257 + $0xe8] sm:$0xff] %vm230, %v305
      %338 = vst.msk [vmem:[%s257 + $0xf0] sm:$0xff] %vm230, %v306
      %339 = vst.msk [vmem:[%s257 + $0x108] sm:$0xff] %vm230, %v307
      %340 = vst.msk [vmem:[%s257 + $0x110] sm:$0xff] %vm230, %v308
      %341 = vst.msk [vmem:[%s257 + $0x128] sm:$0xff] %vm230, %v309
      %342 = vst.msk [vmem:[%s257 + $0x130] sm:$0xff] %vm230, %v310
      %343 = vst.msk [vmem:[%s257 + $0x148] sm:$0xff] %vm230, %v311
      %344 = vst.msk [vmem:[%s257 + $0x150] sm:$0xff] %vm230, %v312
      %345 = vst.msk [vmem:[%s257 + $0x168] sm:$0xff] %vm230, %v313
      %346 = vst.msk [vmem:[%s257 + $0x170] sm:$0xff] %vm230, %v314
      %347 = vst.msk [vmem:[%s257 + $0x188] sm:$0xff] %vm230, %v315
      %348 = vst.msk [vmem:[%s257 + $0x190] sm:$0xff] %vm230, %v316
      %349 = vst.msk [vmem:[%s257 + $0x1a8] sm:$0xff] %vm230, %v317
      %350 = vst.msk [vmem:[%s257 + $0x1b0] sm:$0xff] %vm230, %v318
      %351 = vst.msk [vmem:[%s257 + $0x1c8] sm:$0xff] %vm230, %v319
      %352 = vst.msk [vmem:[%s257 + $0x1d0] sm:$0xff] %vm230, %v320
      %353 = vst.msk [vmem:[%s257 + $0x1e8] sm:$0xff] %vm230, %v321
      %354 = vst.msk [vmem:[%s257 + $0x1f0] sm:$0xff] %vm230, %v322
      %v355 = vld [vmem:[%s215] sm:$0xff]
      %v356 = vld [vmem:[%s215 + $0x8] sm:$0xff]
      %v357 = vld [vmem:[%s215 + $0x10] sm:$0xff]
      %v358 = vld [vmem:[%s215 + $0x18] sm:$0xff]
      %v359 = vld [vmem:[%s215 + $0x20] sm:$0xff]
      %v360 = vld [vmem:[%s215 + $0x28] sm:$0xff]
      %v361 = vld [vmem:[%s215 + $0x30] sm:$0xff]
      %v362 = vld [vmem:[%s215 + $0x38] sm:$0xff]
      %v363 = vld [vmem:[%s215 + $0x40] sm:$0xff]
      %v364 = vld [vmem:[%s215 + $0x48] sm:$0xff]
      %v365 = vld [vmem:[%s215 + $0x50] sm:$0xff]
      %v366 = vld [vmem:[%s215 + $0x58] sm:$0xff]
      %v367 = vld [vmem:[%s215 + $0x60] sm:$0xff]
      %v368 = vld [vmem:[%s215 + $0x68] sm:$0xff]
      %v369 = vld [vmem:[%s215 + $0x70] sm:$0xff]
      %v370 = vld [vmem:[%s215 + $0x78] sm:$0xff]
      %v371 = vld [vmem:[%s215 + $0x80] sm:$0xff]
      %v372 = vld [vmem:[%s215 + $0x88] sm:$0xff]
      %v373 = vld [vmem:[%s215 + $0x90] sm:$0xff]
      %v374 = vld [vmem:[%s215 + $0x98] sm:$0xff]
      %v375 = vld [vmem:[%s215 + $0xa0] sm:$0xff]
      %v376 = vld [vmem:[%s215 + $0xa8] sm:$0xff]
      %v377 = vld [vmem:[%s215 + $0xb0] sm:$0xff]
      %v378 = vld [vmem:[%s215 + $0xb8] sm:$0xff]
      %v379 = vld [vmem:[%s215 + $0xc0] sm:$0xff]
      %v380 = vld [vmem:[%s215 + $0xc8] sm:$0xff]
      %v381 = vld [vmem:[%s215 + $0xd0] sm:$0xff]
      %v382 = vld [vmem:[%s215 + $0xd8] sm:$0xff]
      %v383 = vld [vmem:[%s215 + $0xe0] sm:$0xff]
      %v384 = vld [vmem:[%s215 + $0xe8] sm:$0xff]
      %v385 = vld [vmem:[%s215 + $0xf0] sm:$0xff]
      %v386 = vld [vmem:[%s215 + $0xf8] sm:$0xff]
      %v388 = vlaneseq
      %v389 = vshrl.u32 %v388, 7
      %v390 = vsub.s32 0, %v389
      %v391 = vrot.slane %v290, %v390
      %v393 = vadd.f32 %v355, %v391
      %v394 = vadd.f32 %v356, %v391
      %v395 = vadd.f32 %v357, %v391
      %v396 = vadd.f32 %v358, %v391
      %v397 = vadd.f32 %v359, %v391
      %v398 = vadd.f32 %v360, %v391
      %v399 = vadd.f32 %v361, %v391
      %v400 = vadd.f32 %v362, %v391
      %v401 = vadd.f32 %v363, %v391
      %v402 = vadd.f32 %v364, %v391
      %v403 = vadd.f32 %v365, %v391
      %v404 = vadd.f32 %v366, %v391
      %v405 = vadd.f32 %v367, %v391
      %v406 = vadd.f32 %v368, %v391
      %v407 = vadd.f32 %v369, %v391
      %v408 = vadd.f32 %v370, %v391
      %v409 = vadd.f32 %v371, %v391
      %v410 = vadd.f32 %v372, %v391
      %v411 = vadd.f32 %v373, %v391
      %v412 = vadd.f32 %v374, %v391
      %v413 = vadd.f32 %v375, %v391
      %v414 = vadd.f32 %v376, %v391
      %v415 = vadd.f32 %v377, %v391
      %v416 = vadd.f32 %v378, %v391
      %v417 = vadd.f32 %v379, %v391
      %v418 = vadd.f32 %v380, %v391
      %v419 = vadd.f32 %v381, %v391
      %v420 = vadd.f32 %v382, %v391
      %v421 = vadd.f32 %v383, %v391
      %v422 = vadd.f32 %v384, %v391
      %v423 = vadd.f32 %v385, %v391
      %v424 = vadd.f32 %v386, %v391
      %v425 = vld [vmem:[%s218] sm:$0x1]
      %v426 = vld [vmem:[#allocation2 + $0x5] sm:$0xff]
      %v427 = vld [vmem:[#allocation2 + $0xd] sm:$0xff]
      %v428 = vld [vmem:[#allocation2 + $0x25] sm:$0xff]
      %v429 = vld [vmem:[#allocation2 + $0x2d] sm:$0xff]
      %v430 = vld [vmem:[#allocation2 + $0x45] sm:$0xff]
      %v431 = vld [vmem:[#allocation2 + $0x4d] sm:$0xff]
      %v432 = vld [vmem:[#allocation2 + $0x65] sm:$0xff]
      %v433 = vld [vmem:[#allocation2 + $0x6d] sm:$0xff]
      %v434 = vld [vmem:[#allocation2 + $0x85] sm:$0xff]
      %v435 = vld [vmem:[#allocation2 + $0x8d] sm:$0xff]
      %v436 = vld [vmem:[#allocation2 + $0xa5] sm:$0xff]
      %v437 = vld [vmem:[#allocation2 + $0xad] sm:$0xff]
      %v438 = vld [vmem:[#allocation2 + $0xc5] sm:$0xff]
      %v439 = vld [vmem:[#allocation2 + $0xcd] sm:$0xff]
      %v440 = vld [vmem:[#allocation2 + $0xe5] sm:$0xff]
      %v441 = vld [vmem:[#allocation2 + $0xed] sm:$0xff]
      %v442 = vld [vmem:[#allocation2 + $0x105] sm:$0xff]
      %v443 = vld [vmem:[#allocation2 + $0x10d] sm:$0xff]
      %v444 = vld [vmem:[#allocation2 + $0x125] sm:$0xff]
      %v445 = vld [vmem:[#allocation2 + $0x12d] sm:$0xff]
      %v446 = vld [vmem:[#allocation2 + $0x145] sm:$0xff]
      %v447 = vld [vmem:[#allocation2 + $0x14d] sm:$0xff]
      %v448 = vld [vmem:[#allocation2 + $0x165] sm:$0xff]
      %v449 = vld [vmem:[#allocation2 + $0x16d] sm:$0xff]
      %v450 = vld [vmem:[#allocation2 + $0x185] sm:$0xff]
      %v451 = vld [vmem:[#allocation2 + $0x18d] sm:$0xff]
      %v452 = vld [vmem:[#allocation2 + $0x1a5] sm:$0xff]
      %v453 = vld [vmem:[#allocation2 + $0x1ad] sm:$0xff]
      %v454 = vld [vmem:[#allocation2 + $0x1c5] sm:$0xff]
      %v455 = vld [vmem:[#allocation2 + $0x1cd] sm:$0xff]
      %v456 = vld [vmem:[#allocation2 + $0x1e5] sm:$0xff]
      %v457 = vld [vmem:[#allocation2 + $0x1ed] sm:$0xff]
      %v459 = vlaneseq
      %v460 = vshrl.u32 %v459, 7
      %v461 = vsub.s32 0, %v460
      %v462 = vrot.slane %v425, %v461
      %v464 = vmul.f32 %v426, %v462
      %v465 = vmul.f32 %v427, %v462
      %v466 = vmul.f32 %v428, %v462
      %v467 = vmul.f32 %v429, %v462
      %v468 = vmul.f32 %v430, %v462
      %v469 = vmul.f32 %v431, %v462
      %v470 = vmul.f32 %v432, %v462
      %v471 = vmul.f32 %v433, %v462
      %v472 = vmul.f32 %v434, %v462
      %v473 = vmul.f32 %v435, %v462
      %v474 = vmul.f32 %v436, %v462
      %v475 = vmul.f32 %v437, %v462
      %v476 = vmul.f32 %v438, %v462
      %v477 = vmul.f32 %v439, %v462
      %v478 = vmul.f32 %v440, %v462
      %v479 = vmul.f32 %v441, %v462
      %v480 = vmul.f32 %v442, %v462
      %v481 = vmul.f32 %v443, %v462
      %v482 = vmul.f32 %v444, %v462
      %v483 = vmul.f32 %v445, %v462
      %v484 = vmul.f32 %v446, %v462
      %v485 = vmul.f32 %v447, %v462
      %v486 = vmul.f32 %v448, %v462
      %v487 = vmul.f32 %v449, %v462
      %v488 = vmul.f32 %v450, %v462
      %v489 = vmul.f32 %v451, %v462
      %v490 = vmul.f32 %v452, %v462
      %v491 = vmul.f32 %v453, %v462
      %v492 = vmul.f32 %v454, %v462
      %v493 = vmul.f32 %v455, %v462
      %v494 = vmul.f32 %v456, %v462
      %v495 = vmul.f32 %v457, %v462
      %v496 = vadd.f32 %v393, %v464
      %v497 = vadd.f32 %v394, %v465
      %v498 = vadd.f32 %v395, %v466
      %v499 = vadd.f32 %v396, %v467
      %v500 = vadd.f32 %v397, %v468
      %v501 = vadd.f32 %v398, %v469
      %v502 = vadd.f32 %v399, %v470
      %v503 = vadd.f32 %v400, %v471
      %v504 = vadd.f32 %v401, %v472
      %v505 = vadd.f32 %v402, %v473
      %v506 = vadd.f32 %v403, %v474
      %v507 = vadd.f32 %v404, %v475
      %v508 = vadd.f32 %v405, %v476
      %v509 = vadd.f32 %v406, %v477
      %v510 = vadd.f32 %v407, %v478
      %v511 = vadd.f32 %v408, %v479
      %v512 = vadd.f32 %v409, %v480
      %v513 = vadd.f32 %v410, %v481
      %v514 = vadd.f32 %v411, %v482
      %v515 = vadd.f32 %v412, %v483
      %v516 = vadd.f32 %v413, %v484
      %v517 = vadd.f32 %v414, %v485
      %v518 = vadd.f32 %v415, %v486
      %v519 = vadd.f32 %v416, %v487
      %v520 = vadd.f32 %v417, %v488
      %v521 = vadd.f32 %v418, %v489
      %v522 = vadd.f32 %v419, %v490
      %v523 = vadd.f32 %v420, %v491
      %v524 = vadd.f32 %v421, %v492
      %v525 = vadd.f32 %v422, %v493
      %v526 = vadd.f32 %v423, %v494
      %v527 = vadd.f32 %v424, %v495
      %s528 = scalar_lea.vmem %s218, 1
      %v529 = vld [vmem:[%s528] sm:$0x1]
      %v530 = vld [vmem:[#allocation2 + $0x6] sm:$0xff]
      %v531 = vld [vmem:[#allocation2 + $0xe] sm:$0xff]
      %v532 = vld [vmem:[#allocation2 + $0x26] sm:$0xff]
      %v533 = vld [vmem:[#allocation2 + $0x2e] sm:$0xff]
      %v534 = vld [vmem:[#allocation2 + $0x46] sm:$0xff]
      %v535 = vld [vmem:[#allocation2 + $0x4e] sm:$0xff]
      %v536 = vld [vmem:[#allocation2 + $0x66] sm:$0xff]
      %v537 = vld [vmem:[#allocation2 + $0x6e] sm:$0xff]
      %v538 = vld [vmem:[#allocation2 + $0x86] sm:$0xff]
      %v539 = vld [vmem:[#allocation2 + $0x8e] sm:$0xff]
      %v540 = vld [vmem:[#allocation2 + $0xa6] sm:$0xff]
      %v541 = vld [vmem:[#allocation2 + $0xae] sm:$0xff]
      %v542 = vld [vmem:[#allocation2 + $0xc6] sm:$0xff]
      %v543 = vld [vmem:[#allocation2 + $0xce] sm:$0xff]
      %v544 = vld [vmem:[#allocation2 + $0xe6] sm:$0xff]
      %v545 = vld [vmem:[#allocation2 + $0xee] sm:$0xff]
      %v546 = vld [vmem:[#allocation2 + $0x106] sm:$0xff]
      %v547 = vld [vmem:[#allocation2 + $0x10e] sm:$0xff]
      %v548 = vld [vmem:[#allocation2 + $0x126] sm:$0xff]
      %v549 = vld [vmem:[#allocation2 + $0x12e] sm:$0xff]
      %v550 = vld [vmem:[#allocation2 + $0x146] sm:$0xff]
      %v551 = vld [vmem:[#allocation2 + $0x14e] sm:$0xff]
      %v552 = vld [vmem:[#allocation2 + $0x166] sm:$0xff]
      %v553 = vld [vmem:[#allocation2 + $0x16e] sm:$0xff]
      %v554 = vld [vmem:[#allocation2 + $0x186] sm:$0xff]
      %v555 = vld [vmem:[#allocation2 + $0x18e] sm:$0xff]
      %v556 = vld [vmem:[#allocation2 + $0x1a6] sm:$0xff]
      %v557 = vld [vmem:[#allocation2 + $0x1ae] sm:$0xff]
      %v558 = vld [vmem:[#allocation2 + $0x1c6] sm:$0xff]
      %v559 = vld [vmem:[#allocation2 + $0x1ce] sm:$0xff]
      %v560 = vld [vmem:[#allocation2 + $0x1e6] sm:$0xff]
      %v561 = vld [vmem:[#allocation2 + $0x1ee] sm:$0xff]
      %v563 = vlaneseq
      %v564 = vshrl.u32 %v563, 7
      %v565 = vsub.s32 0, %v564
      %v566 = vrot.slane %v529, %v565
      %v568 = vmul.f32 %v530, %v566
      %v569 = vmul.f32 %v531, %v566
      %v570 = vmul.f32 %v532, %v566
      %v571 = vmul.f32 %v533, %v566
      %v572 = vmul.f32 %v534, %v566
      %v573 = vmul.f32 %v535, %v566
      %v574 = vmul.f32 %v536, %v566
      %v575 = vmul.f32 %v537, %v566
      %v576 = vmul.f32 %v538, %v566
      %v577 = vmul.f32 %v539, %v566
      %v578 = vmul.f32 %v540, %v566
      %v579 = vmul.f32 %v541, %v566
      %v580 = vmul.f32 %v542, %v566
      %v581 = vmul.f32 %v543, %v566
      %v582 = vmul.f32 %v544, %v566
      %v583 = vmul.f32 %v545, %v566
      %v584 = vmul.f32 %v546, %v566
      %v585 = vmul.f32 %v547, %v566
      %v586 = vmul.f32 %v548, %v566
      %v587 = vmul.f32 %v549, %v566
      %v588 = vmul.f32 %v550, %v566
      %v589 = vmul.f32 %v551, %v566
      %v590 = vmul.f32 %v552, %v566
      %v591 = vmul.f32 %v553, %v566
      %v592 = vmul.f32 %v554, %v566
      %v593 = vmul.f32 %v555, %v566
      %v594 = vmul.f32 %v556, %v566
      %v595 = vmul.f32 %v557, %v566
      %v596 = vmul.f32 %v558, %v566
      %v597 = vmul.f32 %v559, %v566
      %v598 = vmul.f32 %v560, %v566
      %v599 = vmul.f32 %v561, %v566
      %v600 = vadd.f32 %v496, %v568
      %v601 = vadd.f32 %v497, %v569
      %v602 = vadd.f32 %v498, %v570
      %v603 = vadd.f32 %v499, %v571
      %v604 = vadd.f32 %v500, %v572
      %v605 = vadd.f32 %v501, %v573
      %v606 = vadd.f32 %v502, %v574
      %v607 = vadd.f32 %v503, %v575
      %v608 = vadd.f32 %v504, %v576
      %v609 = vadd.f32 %v505, %v577
      %v610 = vadd.f32 %v506, %v578
      %v611 = vadd.f32 %v507, %v579
      %v612 = vadd.f32 %v508, %v580
      %v613 = vadd.f32 %v509, %v581
      %v614 = vadd.f32 %v510, %v582
      %v615 = vadd.f32 %v511, %v583
      %v616 = vadd.f32 %v512, %v584
      %v617 = vadd.f32 %v513, %v585
      %v618 = vadd.f32 %v514, %v586
      %v619 = vadd.f32 %v515, %v587
      %v620 = vadd.f32 %v516, %v588
      %v621 = vadd.f32 %v517, %v589
      %v622 = vadd.f32 %v518, %v590
      %v623 = vadd.f32 %v519, %v591
      %v624 = vadd.f32 %v520, %v592
      %v625 = vadd.f32 %v521, %v593
      %v626 = vadd.f32 %v522, %v594
      %v627 = vadd.f32 %v523, %v595
      %v628 = vadd.f32 %v524, %v596
      %v629 = vadd.f32 %v525, %v597
      %v630 = vadd.f32 %v526, %v598
      %v631 = vadd.f32 %v527, %v599
      %s632 = scalar_lea.vmem %s218, 2
      %v633 = vld [vmem:[%s632] sm:$0x1]
      %v634 = vld [vmem:[#allocation2 + $0x7] sm:$0xff]
      %v635 = vld [vmem:[#allocation2 + $0xf] sm:$0xff]
      %v636 = vld [vmem:[#allocation2 + $0x27] sm:$0xff]
      %v637 = vld [vmem:[#allocation2 + $0x2f] sm:$0xff]
      %v638 = vld [vmem:[#allocation2 + $0x47] sm:$0xff]
      %v639 = vld [vmem:[#allocation2 + $0x4f] sm:$0xff]
      %v640 = vld [vmem:[#allocation2 + $0x67] sm:$0xff]
      %v641 = vld [vmem:[#allocation2 + $0x6f] sm:$0xff]
      %v642 = vld [vmem:[#allocation2 + $0x87] sm:$0xff]
      %v643 = vld [vmem:[#allocation2 + $0x8f] sm:$0xff]
      %v644 = vld [vmem:[#allocation2 + $0xa7] sm:$0xff]
      %v645 = vld [vmem:[#allocation2 + $0xaf] sm:$0xff]
      %v646 = vld [vmem:[#allocation2 + $0xc7] sm:$0xff]
      %v647 = vld [vmem:[#allocation2 + $0xcf] sm:$0xff]
      %v648 = vld [vmem:[#allocation2 + $0xe7] sm:$0xff]
      %v649 = vld [vmem:[#allocation2 + $0xef] sm:$0xff]
      %v650 = vld [vmem:[#allocation2 + $0x107] sm:$0xff]
      %v651 = vld [vmem:[#allocation2 + $0x10f] sm:$0xff]
      %v652 = vld [vmem:[#allocation2 + $0x127] sm:$0xff]
      %v653 = vld [vmem:[#allocation2 + $0x12f] sm:$0xff]
      %v654 = vld [vmem:[#allocation2 + $0x147] sm:$0xff]
      %v655 = vld [vmem:[#allocation2 + $0x14f] sm:$0xff]
      %v656 = vld [vmem:[#allocation2 + $0x167] sm:$0xff]
      %v657 = vld [vmem:[#allocation2 + $0x16f] sm:$0xff]
      %v658 = vld [vmem:[#allocation2 + $0x187] sm:$0xff]
      %v659 = vld [vmem:[#allocation2 + $0x18f] sm:$0xff]
      %v660 = vld [vmem:[#allocation2 + $0x1a7] sm:$0xff]
      %v661 = vld [vmem:[#allocation2 + $0x1af] sm:$0xff]
      %v662 = vld [vmem:[#allocation2 + $0x1c7] sm:$0xff]
      %v663 = vld [vmem:[#allocation2 + $0x1cf] sm:$0xff]
      %v664 = vld [vmem:[#allocation2 + $0x1e7] sm:$0xff]
      %v665 = vld [vmem:[#allocation2 + $0x1ef] sm:$0xff]
      %v667 = vlaneseq
      %v668 = vshrl.u32 %v667, 7
      %v669 = vsub.s32 0, %v668
      %v670 = vrot.slane %v633, %v669
      %v672 = vmul.f32 %v634, %v670
      %v673 = vmul.f32 %v635, %v670
      %v674 = vmul.f32 %v636, %v670
      %v675 = vmul.f32 %v637, %v670
      %v676 = vmul.f32 %v638, %v670
      %v677 = vmul.f32 %v639, %v670
      %v678 = vmul.f32 %v640, %v670
      %v679 = vmul.f32 %v641, %v670
      %v680 = vmul.f32 %v642, %v670
      %v681 = vmul.f32 %v643, %v670
      %v682 = vmul.f32 %v644, %v670
      %v683 = vmul.f32 %v645, %v670
      %v684 = vmul.f32 %v646, %v670
      %v685 = vmul.f32 %v647, %v670
      %v686 = vmul.f32 %v648, %v670
      %v687 = vmul.f32 %v649, %v670
      %v688 = vmul.f32 %v650, %v670
      %v689 = vmul.f32 %v651, %v670
      %v690 = vmul.f32 %v652, %v670
      %v691 = vmul.f32 %v653, %v670
      %v692 = vmul.f32 %v654, %v670
      %v693 = vmul.f32 %v655, %v670
      %v694 = vmul.f32 %v656, %v670
      %v695 = vmul.f32 %v657, %v670
      %v696 = vmul.f32 %v658, %v670
      %v697 = vmul.f32 %v659, %v670
      %v698 = vmul.f32 %v660, %v670
      %v699 = vmul.f32 %v661, %v670
      %v700 = vmul.f32 %v662, %v670
      %v701 = vmul.f32 %v663, %v670
      %v702 = vmul.f32 %v664, %v670
      %v703 = vmul.f32 %v665, %v670
      %v704 = vadd.f32 %v600, %v672
      %v705 = vadd.f32 %v601, %v673
      %v706 = vadd.f32 %v602, %v674
      %v707 = vadd.f32 %v603, %v675
      %v708 = vadd.f32 %v604, %v676
      %v709 = vadd.f32 %v605, %v677
      %v710 = vadd.f32 %v606, %v678
      %v711 = vadd.f32 %v607, %v679
      %v712 = vadd.f32 %v608, %v680
      %v713 = vadd.f32 %v609, %v681
      %v714 = vadd.f32 %v610, %v682
      %v715 = vadd.f32 %v611, %v683
      %v716 = vadd.f32 %v612, %v684
      %v717 = vadd.f32 %v613, %v685
      %v718 = vadd.f32 %v614, %v686
      %v719 = vadd.f32 %v615, %v687
      %v720 = vadd.f32 %v616, %v688
      %v721 = vadd.f32 %v617, %v689
      %v722 = vadd.f32 %v618, %v690
      %v723 = vadd.f32 %v619, %v691
      %v724 = vadd.f32 %v620, %v692
      %v725 = vadd.f32 %v621, %v693
      %v726 = vadd.f32 %v622, %v694
      %v727 = vadd.f32 %v623, %v695
      %v728 = vadd.f32 %v624, %v696
      %v729 = vadd.f32 %v625, %v697
      %v730 = vadd.f32 %v626, %v698
      %v731 = vadd.f32 %v627, %v699
      %v732 = vadd.f32 %v628, %v700
      %v733 = vadd.f32 %v629, %v701
      %v734 = vadd.f32 %v630, %v702
      %v735 = vadd.f32 %v631, %v703
      %s736 = scalar_lea.vmem %s218, 3
      %v737 = vld [vmem:[%s736] sm:$0x1]
      %v738 = vld [vmem:[#allocation2 + $0x8] sm:$0xff]
      %v739 = vld [vmem:[#allocation2 + $0x10] sm:$0xff]
      %v740 = vld [vmem:[#allocation2 + $0x28] sm:$0xff]
      %v741 = vld [vmem:[#allocation2 + $0x30] sm:$0xff]
      %v742 = vld [vmem:[#allocation2 + $0x48] sm:$0xff]
      %v743 = vld [vmem:[#allocation2 + $0x50] sm:$0xff]
      %v744 = vld [vmem:[#allocation2 + $0x68] sm:$0xff]
      %v745 = vld [vmem:[#allocation2 + $0x70] sm:$0xff]
      %v746 = vld [vmem:[#allocation2 + $0x88] sm:$0xff]
      %v747 = vld [vmem:[#allocation2 + $0x90] sm:$0xff]
      %v748 = vld [vmem:[#allocation2 + $0xa8] sm:$0xff]
      %v749 = vld [vmem:[#allocation2 + $0xb0] sm:$0xff]
      %v750 = vld [vmem:[#allocation2 + $0xc8] sm:$0xff]
      %v751 = vld [vmem:[#allocation2 + $0xd0] sm:$0xff]
      %v752 = vld [vmem:[#allocation2 + $0xe8] sm:$0xff]
      %v753 = vld [vmem:[#allocation2 + $0xf0] sm:$0xff]
      %v754 = vld [vmem:[#allocation2 + $0x108] sm:$0xff]
      %v755 = vld [vmem:[#allocation2 + $0x110] sm:$0xff]
      %v756 = vld [vmem:[#allocation2 + $0x128] sm:$0xff]
      %v757 = vld [vmem:[#allocation2 + $0x130] sm:$0xff]
      %v758 = vld [vmem:[#allocation2 + $0x148] sm:$0xff]
      %v759 = vld [vmem:[#allocation2 + $0x150] sm:$0xff]
      %v760 = vld [vmem:[#allocation2 + $0x168] sm:$0xff]
      %v761 = vld [vmem:[#allocation2 + $0x170] sm:$0xff]
      %v762 = vld [vmem:[#allocation2 + $0x188] sm:$0xff]
      %v763 = vld [vmem:[#allocation2 + $0x190] sm:$0xff]
      %v764 = vld [vmem:[#allocation2 + $0x1a8] sm:$0xff]
      %v765 = vld [vmem:[#allocation2 + $0x1b0] sm:$0xff]
      %v766 = vld [vmem:[#allocation2 + $0x1c8] sm:$0xff]
      %v767 = vld [vmem:[#allocation2 + $0x1d0] sm:$0xff]
      %v768 = vld [vmem:[#allocation2 + $0x1e8] sm:$0xff]
      %v769 = vld [vmem:[#allocation2 + $0x1f0] sm:$0xff]
      %v771 = vlaneseq
      %v772 = vshrl.u32 %v771, 7
      %v773 = vsub.s32 0, %v772
      %v774 = vrot.slane %v737, %v773
      %v776 = vmul.f32 %v738, %v774
      %v777 = vmul.f32 %v739, %v774
      %v778 = vmul.f32 %v740, %v774
      %v779 = vmul.f32 %v741, %v774
      %v780 = vmul.f32 %v742, %v774
      %v781 = vmul.f32 %v743, %v774
      %v782 = vmul.f32 %v744, %v774
      %v783 = vmul.f32 %v745, %v774
      %v784 = vmul.f32 %v746, %v774
      %v785 = vmul.f32 %v747, %v774
      %v786 = vmul.f32 %v748, %v774
      %v787 = vmul.f32 %v749, %v774
      %v788 = vmul.f32 %v750, %v774
      %v789 = vmul.f32 %v751, %v774
      %v790 = vmul.f32 %v752, %v774
      %v791 = vmul.f32 %v753, %v774
      %v792 = vmul.f32 %v754, %v774
      %v793 = vmul.f32 %v755, %v774
      %v794 = vmul.f32 %v756, %v774
      %v795 = vmul.f32 %v757, %v774
      %v796 = vmul.f32 %v758, %v774
      %v797 = vmul.f32 %v759, %v774
      %v798 = vmul.f32 %v760, %v774
      %v799 = vmul.f32 %v761, %v774
      %v800 = vmul.f32 %v762, %v774
      %v801 = vmul.f32 %v763, %v774
      %v802 = vmul.f32 %v764, %v774
      %v803 = vmul.f32 %v765, %v774
      %v804 = vmul.f32 %v766, %v774
      %v805 = vmul.f32 %v767, %v774
      %v806 = vmul.f32 %v768, %v774
      %v807 = vmul.f32 %v769, %v774
      %v808 = vadd.f32 %v704, %v776
      %v809 = vadd.f32 %v705, %v777
      %v810 = vadd.f32 %v706, %v778
      %v811 = vadd.f32 %v707, %v779
      %v812 = vadd.f32 %v708, %v780
      %v813 = vadd.f32 %v709, %v781
      %v814 = vadd.f32 %v710, %v782
      %v815 = vadd.f32 %v711, %v783
      %v816 = vadd.f32 %v712, %v784
      %v817 = vadd.f32 %v713, %v785
      %v818 = vadd.f32 %v714, %v786
      %v819 = vadd.f32 %v715, %v787
      %v820 = vadd.f32 %v716, %v788
      %v821 = vadd.f32 %v717, %v789
      %v822 = vadd.f32 %v718, %v790
      %v823 = vadd.f32 %v719, %v791
      %v824 = vadd.f32 %v720, %v792
      %v825 = vadd.f32 %v721, %v793
      %v826 = vadd.f32 %v722, %v794
      %v827 = vadd.f32 %v723, %v795
      %v828 = vadd.f32 %v724, %v796
      %v829 = vadd.f32 %v725, %v797
      %v830 = vadd.f32 %v726, %v798
      %v831 = vadd.f32 %v727, %v799
      %v832 = vadd.f32 %v728, %v800
      %v833 = vadd.f32 %v729, %v801
      %v834 = vadd.f32 %v730, %v802
      %v835 = vadd.f32 %v731, %v803
      %v836 = vadd.f32 %v732, %v804
      %v837 = vadd.f32 %v733, %v805
      %v838 = vadd.f32 %v734, %v806
      %v839 = vadd.f32 %v735, %v807
      %s840 = scalar_lea.vmem %s218, 4
      %v841 = vld [vmem:[%s840] sm:$0x1]
      %v842 = vld [vmem:[#allocation2 + $0x9] sm:$0xff]
      %v843 = vld [vmem:[#allocation2 + $0x11] sm:$0xff]
      %v844 = vld [vmem:[#allocation2 + $0x29] sm:$0xff]
      %v845 = vld [vmem:[#allocation2 + $0x31] sm:$0xff]
      %v846 = vld [vmem:[#allocation2 + $0x49] sm:$0xff]
      %v847 = vld [vmem:[#allocation2 + $0x51] sm:$0xff]
      %v848 = vld [vmem:[#allocation2 + $0x69] sm:$0xff]
      %v849 = vld [vmem:[#allocation2 + $0x71] sm:$0xff]
      %v850 = vld [vmem:[#allocation2 + $0x89] sm:$0xff]
      %v851 = vld [vmem:[#allocation2 + $0x91] sm:$0xff]
      %v852 = vld [vmem:[#allocation2 + $0xa9] sm:$0xff]
      %v853 = vld [vmem:[#allocation2 + $0xb1] sm:$0xff]
      %v854 = vld [vmem:[#allocation2 + $0xc9] sm:$0xff]
      %v855 = vld [vmem:[#allocation2 + $0xd1] sm:$0xff]
      %v856 = vld [vmem:[#allocation2 + $0xe9] sm:$0xff]
      %v857 = vld [vmem:[#allocation2 + $0xf1] sm:$0xff]
      %v858 = vld [vmem:[#allocation2 + $0x109] sm:$0xff]
      %v859 = vld [vmem:[#allocation2 + $0x111] sm:$0xff]
      %v860 = vld [vmem:[#allocation2 + $0x129] sm:$0xff]
      %v861 = vld [vmem:[#allocation2 + $0x131] sm:$0xff]
      %v862 = vld [vmem:[#allocation2 + $0x149] sm:$0xff]
      %v863 = vld [vmem:[#allocation2 + $0x151] sm:$0xff]
      %v864 = vld [vmem:[#allocation2 + $0x169] sm:$0xff]
      %v865 = vld [vmem:[#allocation2 + $0x171] sm:$0xff]
      %v866 = vld [vmem:[#allocation2 + $0x189] sm:$0xff]
      %v867 = vld [vmem:[#allocation2 + $0x191] sm:$0xff]
      %v868 = vld [vmem:[#allocation2 + $0x1a9] sm:$0xff]
      %v869 = vld [vmem:[#allocation2 + $0x1b1] sm:$0xff]
      %v870 = vld [vmem:[#allocation2 + $0x1c9] sm:$0xff]
      %v871 = vld [vmem:[#allocation2 + $0x1d1] sm:$0xff]
      %v872 = vld [vmem:[#allocation2 + $0x1e9] sm:$0xff]
      %v873 = vld [vmem:[#allocation2 + $0x1f1] sm:$0xff]
      %v875 = vlaneseq
      %v876 = vshrl.u32 %v875, 7
      %v877 = vsub.s32 0, %v876
      %v878 = vrot.slane %v841, %v877
      %v880 = vmul.f32 %v842, %v878
      %v881 = vmul.f32 %v843, %v878
      %v882 = vmul.f32 %v844, %v878
      %v883 = vmul.f32 %v845, %v878
      %v884 = vmul.f32 %v846, %v878
      %v885 = vmul.f32 %v847, %v878
      %v886 = vmul.f32 %v848, %v878
      %v887 = vmul.f32 %v849, %v878
      %v888 = vmul.f32 %v850, %v878
      %v889 = vmul.f32 %v851, %v878
      %v890 = vmul.f32 %v852, %v878
      %v891 = vmul.f32 %v853, %v878
      %v892 = vmul.f32 %v854, %v878
      %v893 = vmul.f32 %v855, %v878
      %v894 = vmul.f32 %v856, %v878
      %v895 = vmul.f32 %v857, %v878
      %v896 = vmul.f32 %v858, %v878
      %v897 = vmul.f32 %v859, %v878
      %v898 = vmul.f32 %v860, %v878
      %v899 = vmul.f32 %v861, %v878
      %v900 = vmul.f32 %v862, %v878
      %v901 = vmul.f32 %v863, %v878
      %v902 = vmul.f32 %v864, %v878
      %v903 = vmul.f32 %v865, %v878
      %v904 = vmul.f32 %v866, %v878
      %v905 = vmul.f32 %v867, %v878
      %v906 = vmul.f32 %v868, %v878
      %v907 = vmul.f32 %v869, %v878
      %v908 = vmul.f32 %v870, %v878
      %v909 = vmul.f32 %v871, %v878
      %v910 = vmul.f32 %v872, %v878
      %v911 = vmul.f32 %v873, %v878
      %v912 = vadd.f32 %v808, %v880
      %v913 = vadd.f32 %v809, %v881
      %v914 = vadd.f32 %v810, %v882
      %v915 = vadd.f32 %v811, %v883
      %v916 = vadd.f32 %v812, %v884
      %v917 = vadd.f32 %v813, %v885
      %v918 = vadd.f32 %v814, %v886
      %v919 = vadd.f32 %v815, %v887
      %v920 = vadd.f32 %v816, %v888
      %v921 = vadd.f32 %v817, %v889
      %v922 = vadd.f32 %v818, %v890
      %v923 = vadd.f32 %v819, %v891
      %v924 = vadd.f32 %v820, %v892
      %v925 = vadd.f32 %v821, %v893
      %v926 = vadd.f32 %v822, %v894
      %v927 = vadd.f32 %v823, %v895
      %v928 = vadd.f32 %v824, %v896
      %v929 = vadd.f32 %v825, %v897
      %v930 = vadd.f32 %v826, %v898
      %v931 = vadd.f32 %v827, %v899
      %v932 = vadd.f32 %v828, %v900
      %v933 = vadd.f32 %v829, %v901
      %v934 = vadd.f32 %v830, %v902
      %v935 = vadd.f32 %v831, %v903
      %v936 = vadd.f32 %v832, %v904
      %v937 = vadd.f32 %v833, %v905
      %v938 = vadd.f32 %v834, %v906
      %v939 = vadd.f32 %v835, %v907
      %v940 = vadd.f32 %v836, %v908
      %v941 = vadd.f32 %v837, %v909
      %v942 = vadd.f32 %v838, %v910
      %v943 = vadd.f32 %v839, %v911
      %s944 = scalar_lea.vmem %s218, 5
      %v945 = vld [vmem:[%s944] sm:$0x1]
      %v946 = vld [vmem:[#allocation2 + $0xa] sm:$0xff]
      %v947 = vld [vmem:[#allocation2 + $0x12] sm:$0xff]
      %v948 = vld [vmem:[#allocation2 + $0x2a] sm:$0xff]
      %v949 = vld [vmem:[#allocation2 + $0x32] sm:$0xff]
      %v950 = vld [vmem:[#allocation2 + $0x4a] sm:$0xff]
      %v951 = vld [vmem:[#allocation2 + $0x52] sm:$0xff]
      %v952 = vld [vmem:[#allocation2 + $0x6a] sm:$0xff]
      %v953 = vld [vmem:[#allocation2 + $0x72] sm:$0xff]
      %v954 = vld [vmem:[#allocation2 + $0x8a] sm:$0xff]
      %v955 = vld [vmem:[#allocation2 + $0x92] sm:$0xff]
      %v956 = vld [vmem:[#allocation2 + $0xaa] sm:$0xff]
      %v957 = vld [vmem:[#allocation2 + $0xb2] sm:$0xff]
      %v958 = vld [vmem:[#allocation2 + $0xca] sm:$0xff]
      %v959 = vld [vmem:[#allocation2 + $0xd2] sm:$0xff]
      %v960 = vld [vmem:[#allocation2 + $0xea] sm:$0xff]
      %v961 = vld [vmem:[#allocation2 + $0xf2] sm:$0xff]
      %v962 = vld [vmem:[#allocation2 + $0x10a] sm:$0xff]
      %v963 = vld [vmem:[#allocation2 + $0x112] sm:$0xff]
      %v964 = vld [vmem:[#allocation2 + $0x12a] sm:$0xff]
      %v965 = vld [vmem:[#allocation2 + $0x132] sm:$0xff]
      %v966 = vld [vmem:[#allocation2 + $0x14a] sm:$0xff]
      %v967 = vld [vmem:[#allocation2 + $0x152] sm:$0xff]
      %v968 = vld [vmem:[#allocation2 + $0x16a] sm:$0xff]
      %v969 = vld [vmem:[#allocation2 + $0x172] sm:$0xff]
      %v970 = vld [vmem:[#allocation2 + $0x18a] sm:$0xff]
      %v971 = vld [vmem:[#allocation2 + $0x192] sm:$0xff]
      %v972 = vld [vmem:[#allocation2 + $0x1aa] sm:$0xff]
      %v973 = vld [vmem:[#allocation2 + $0x1b2] sm:$0xff]
      %v974 = vld [vmem:[#allocation2 + $0x1ca] sm:$0xff]
      %v975 = vld [vmem:[#allocation2 + $0x1d2] sm:$0xff]
      %v976 = vld [vmem:[#allocation2 + $0x1ea] sm:$0xff]
      %v977 = vld [vmem:[#allocation2 + $0x1f2] sm:$0xff]
      %v979 = vlaneseq
      %v980 = vshrl.u32 %v979, 7
      %v981 = vsub.s32 0, %v980
      %v982 = vrot.slane %v945, %v981
      %v984 = vmul.f32 %v946, %v982
      %v985 = vmul.f32 %v947, %v982
      %v986 = vmul.f32 %v948, %v982
      %v987 = vmul.f32 %v949, %v982
      %v988 = vmul.f32 %v950, %v982
      %v989 = vmul.f32 %v951, %v982
      %v990 = vmul.f32 %v952, %v982
      %v991 = vmul.f32 %v953, %v982
      %v992 = vmul.f32 %v954, %v982
      %v993 = vmul.f32 %v955, %v982
      %v994 = vmul.f32 %v956, %v982
      %v995 = vmul.f32 %v957, %v982
      %v996 = vmul.f32 %v958, %v982
      %v997 = vmul.f32 %v959, %v982
      %v998 = vmul.f32 %v960, %v982
      %v999 = vmul.f32 %v961, %v982
      %v1000 = vmul.f32 %v962, %v982
      %v1001 = vmul.f32 %v963, %v982
      %v1002 = vmul.f32 %v964, %v982
      %v1003 = vmul.f32 %v965, %v982
      %v1004 = vmul.f32 %v966, %v982
      %v1005 = vmul.f32 %v967, %v982
      %v1006 = vmul.f32 %v968, %v982
      %v1007 = vmul.f32 %v969, %v982
      %v1008 = vmul.f32 %v970, %v982
      %v1009 = vmul.f32 %v971, %v982
      %v1010 = vmul.f32 %v972, %v982
      %v1011 = vmul.f32 %v973, %v982
      %v1012 = vmul.f32 %v974, %v982
      %v1013 = vmul.f32 %v975, %v982
      %v1014 = vmul.f32 %v976, %v982
      %v1015 = vmul.f32 %v977, %v982
      %v1016 = vadd.f32 %v912, %v984
      %v1017 = vadd.f32 %v913, %v985
      %v1018 = vadd.f32 %v914, %v986
      %v1019 = vadd.f32 %v915, %v987
      %v1020 = vadd.f32 %v916, %v988
      %v1021 = vadd.f32 %v917, %v989
      %v1022 = vadd.f32 %v918, %v990
      %v1023 = vadd.f32 %v919, %v991
      %v1024 = vadd.f32 %v920, %v992
      %v1025 = vadd.f32 %v921, %v993
      %v1026 = vadd.f32 %v922, %v994
      %v1027 = vadd.f32 %v923, %v995
      %v1028 = vadd.f32 %v924, %v996
      %v1029 = vadd.f32 %v925, %v997
      %v1030 = vadd.f32 %v926, %v998
      %v1031 = vadd.f32 %v927, %v999
      %v1032 = vadd.f32 %v928, %v1000
      %v1033 = vadd.f32 %v929, %v1001
      %v1034 = vadd.f32 %v930, %v1002
      %v1035 = vadd.f32 %v931, %v1003
      %v1036 = vadd.f32 %v932, %v1004
      %v1037 = vadd.f32 %v933, %v1005
      %v1038 = vadd.f32 %v934, %v1006
      %v1039 = vadd.f32 %v935, %v1007
      %v1040 = vadd.f32 %v936, %v1008
      %v1041 = vadd.f32 %v937, %v1009
      %v1042 = vadd.f32 %v938, %v1010
      %v1043 = vadd.f32 %v939, %v1011
      %v1044 = vadd.f32 %v940, %v1012
      %v1045 = vadd.f32 %v941, %v1013
      %v1046 = vadd.f32 %v942, %v1014
      %v1047 = vadd.f32 %v943, %v1015
      %s1048 = scalar_lea.vmem %s218, 6
      %v1049 = vld [vmem:[%s1048] sm:$0x1]
      %v1050 = vld [vmem:[#allocation2 + $0xb] sm:$0xff]
      %v1051 = vld [vmem:[#allocation2 + $0x13] sm:$0xff]
      %v1052 = vld [vmem:[#allocation2 + $0x2b] sm:$0xff]
      %v1053 = vld [vmem:[#allocation2 + $0x33] sm:$0xff]
      %v1054 = vld [vmem:[#allocation2 + $0x4b] sm:$0xff]
      %v1055 = vld [vmem:[#allocation2 + $0x53] sm:$0xff]
      %v1056 = vld [vmem:[#allocation2 + $0x6b] sm:$0xff]
      %v1057 = vld [vmem:[#allocation2 + $0x73] sm:$0xff]
      %v1058 = vld [vmem:[#allocation2 + $0x8b] sm:$0xff]
      %v1059 = vld [vmem:[#allocation2 + $0x93] sm:$0xff]
      %v1060 = vld [vmem:[#allocation2 + $0xab] sm:$0xff]
      %v1061 = vld [vmem:[#allocation2 + $0xb3] sm:$0xff]
      %v1062 = vld [vmem:[#allocation2 + $0xcb] sm:$0xff]
      %v1063 = vld [vmem:[#allocation2 + $0xd3] sm:$0xff]
      %v1064 = vld [vmem:[#allocation2 + $0xeb] sm:$0xff]
      %v1065 = vld [vmem:[#allocation2 + $0xf3] sm:$0xff]
      %v1066 = vld [vmem:[#allocation2 + $0x10b] sm:$0xff]
      %v1067 = vld [vmem:[#allocation2 + $0x113] sm:$0xff]
      %v1068 = vld [vmem:[#allocation2 + $0x12b] sm:$0xff]
      %v1069 = vld [vmem:[#allocation2 + $0x133] sm:$0xff]
      %v1070 = vld [vmem:[#allocation2 + $0x14b] sm:$0xff]
      %v1071 = vld [vmem:[#allocation2 + $0x153] sm:$0xff]
      %v1072 = vld [vmem:[#allocation2 + $0x16b] sm:$0xff]
      %v1073 = vld [vmem:[#allocation2 + $0x173] sm:$0xff]
      %v1074 = vld [vmem:[#allocation2 + $0x18b] sm:$0xff]
      %v1075 = vld [vmem:[#allocation2 + $0x193] sm:$0xff]
      %v1076 = vld [vmem:[#allocation2 + $0x1ab] sm:$0xff]
      %v1077 = vld [vmem:[#allocation2 + $0x1b3] sm:$0xff]
      %v1078 = vld [vmem:[#allocation2 + $0x1cb] sm:$0xff]
      %v1079 = vld [vmem:[#allocation2 + $0x1d3] sm:$0xff]
      %v1080 = vld [vmem:[#allocation2 + $0x1eb] sm:$0xff]
      %v1081 = vld [vmem:[#allocation2 + $0x1f3] sm:$0xff]
      %v1083 = vlaneseq
      %v1084 = vshrl.u32 %v1083, 7
      %v1085 = vsub.s32 0, %v1084
      %v1086 = vrot.slane %v1049, %v1085
      %v1088 = vmul.f32 %v1050, %v1086
      %v1089 = vmul.f32 %v1051, %v1086
      %v1090 = vmul.f32 %v1052, %v1086
      %v1091 = vmul.f32 %v1053, %v1086
      %v1092 = vmul.f32 %v1054, %v1086
      %v1093 = vmul.f32 %v1055, %v1086
      %v1094 = vmul.f32 %v1056, %v1086
      %v1095 = vmul.f32 %v1057, %v1086
      %v1096 = vmul.f32 %v1058, %v1086
      %v1097 = vmul.f32 %v1059, %v1086
      %v1098 = vmul.f32 %v1060, %v1086
      %v1099 = vmul.f32 %v1061, %v1086
      %v1100 = vmul.f32 %v1062, %v1086
      %v1101 = vmul.f32 %v1063, %v1086
      %v1102 = vmul.f32 %v1064, %v1086
      %v1103 = vmul.f32 %v1065, %v1086
      %v1104 = vmul.f32 %v1066, %v1086
      %v1105 = vmul.f32 %v1067, %v1086
      %v1106 = vmul.f32 %v1068, %v1086
      %v1107 = vmul.f32 %v1069, %v1086
      %v1108 = vmul.f32 %v1070, %v1086
      %v1109 = vmul.f32 %v1071, %v1086
      %v1110 = vmul.f32 %v1072, %v1086
      %v1111 = vmul.f32 %v1073, %v1086
      %v1112 = vmul.f32 %v1074, %v1086
      %v1113 = vmul.f32 %v1075, %v1086
      %v1114 = vmul.f32 %v1076, %v1086
      %v1115 = vmul.f32 %v1077, %v1086
      %v1116 = vmul.f32 %v1078, %v1086
      %v1117 = vmul.f32 %v1079, %v1086
      %v1118 = vmul.f32 %v1080, %v1086
      %v1119 = vmul.f32 %v1081, %v1086
      %v1120 = vadd.f32 %v1016, %v1088
      %v1121 = vadd.f32 %v1017, %v1089
      %v1122 = vadd.f32 %v1018, %v1090
      %v1123 = vadd.f32 %v1019, %v1091
      %v1124 = vadd.f32 %v1020, %v1092
      %v1125 = vadd.f32 %v1021, %v1093
      %v1126 = vadd.f32 %v1022, %v1094
      %v1127 = vadd.f32 %v1023, %v1095
      %v1128 = vadd.f32 %v1024, %v1096
      %v1129 = vadd.f32 %v1025, %v1097
      %v1130 = vadd.f32 %v1026, %v1098
      %v1131 = vadd.f32 %v1027, %v1099
      %v1132 = vadd.f32 %v1028, %v1100
      %v1133 = vadd.f32 %v1029, %v1101
      %v1134 = vadd.f32 %v1030, %v1102
      %v1135 = vadd.f32 %v1031, %v1103
      %v1136 = vadd.f32 %v1032, %v1104
      %v1137 = vadd.f32 %v1033, %v1105
      %v1138 = vadd.f32 %v1034, %v1106
      %v1139 = vadd.f32 %v1035, %v1107
      %v1140 = vadd.f32 %v1036, %v1108
      %v1141 = vadd.f32 %v1037, %v1109
      %v1142 = vadd.f32 %v1038, %v1110
      %v1143 = vadd.f32 %v1039, %v1111
      %v1144 = vadd.f32 %v1040, %v1112
      %v1145 = vadd.f32 %v1041, %v1113
      %v1146 = vadd.f32 %v1042, %v1114
      %v1147 = vadd.f32 %v1043, %v1115
      %v1148 = vadd.f32 %v1044, %v1116
      %v1149 = vadd.f32 %v1045, %v1117
      %v1150 = vadd.f32 %v1046, %v1118
      %v1151 = vadd.f32 %v1047, %v1119
      %s1152 = scalar_lea.vmem %s218, 7
      %v1153 = vld [vmem:[%s1152] sm:$0x1]
      %s1154 = scalar_lea.vmem [#allocation2], 32
      %v1155 = vld [vmem:[%s1154 + $0x5] sm:$0xff]
      %v1156 = vld [vmem:[%s1154 + $0xd] sm:$0xff]
      %v1157 = vld [vmem:[%s1154 + $0x25] sm:$0xff]
      %v1158 = vld [vmem:[%s1154 + $0x2d] sm:$0xff]
      %v1159 = vld [vmem:[%s1154 + $0x45] sm:$0xff]
      %v1160 = vld [vmem:[%s1154 + $0x4d] sm:$0xff]
      %v1161 = vld [vmem:[%s1154 + $0x65] sm:$0xff]
      %v1162 = vld [vmem:[%s1154 + $0x6d] sm:$0xff]
      %v1163 = vld [vmem:[%s1154 + $0x85] sm:$0xff]
      %v1164 = vld [vmem:[%s1154 + $0x8d] sm:$0xff]
      %v1165 = vld [vmem:[%s1154 + $0xa5] sm:$0xff]
      %v1166 = vld [vmem:[%s1154 + $0xad] sm:$0xff]
      %v1167 = vld [vmem:[%s1154 + $0xc5] sm:$0xff]
      %v1168 = vld [vmem:[%s1154 + $0xcd] sm:$0xff]
      %v1169 = vld [vmem:[%s1154 + $0xe5] sm:$0xff]
      %v1170 = vld [vmem:[%s1154 + $0xed] sm:$0xff]
      %v1171 = vld [vmem:[%s1154 + $0x105] sm:$0xff]
      %v1172 = vld [vmem:[%s1154 + $0x10d] sm:$0xff]
      %v1173 = vld [vmem:[%s1154 + $0x125] sm:$0xff]
      %v1174 = vld [vmem:[%s1154 + $0x12d] sm:$0xff]
      %v1175 = vld [vmem:[%s1154 + $0x145] sm:$0xff]
      %v1176 = vld [vmem:[%s1154 + $0x14d] sm:$0xff]
      %v1177 = vld [vmem:[%s1154 + $0x165] sm:$0xff]
      %v1178 = vld [vmem:[%s1154 + $0x16d] sm:$0xff]
      %v1179 = vld [vmem:[%s1154 + $0x185] sm:$0xff]
      %v1180 = vld [vmem:[%s1154 + $0x18d] sm:$0xff]
      %v1181 = vld [vmem:[%s1154 + $0x1a5] sm:$0xff]
      %v1182 = vld [vmem:[%s1154 + $0x1ad] sm:$0xff]
      %v1183 = vld [vmem:[%s1154 + $0x1c5] sm:$0xff]
      %v1184 = vld [vmem:[%s1154 + $0x1cd] sm:$0xff]
      %v1185 = vld [vmem:[%s1154 + $0x1e5] sm:$0xff]
      %v1186 = vld [vmem:[%s1154 + $0x1ed] sm:$0xff]
      %v1188 = vlaneseq
      %v1189 = vshrl.u32 %v1188, 7
      %v1190 = vsub.s32 0, %v1189
      %v1191 = vrot.slane %v1153, %v1190
      %v1193 = vmul.f32 %v1155, %v1191
      %v1194 = vmul.f32 %v1156, %v1191
      %v1195 = vmul.f32 %v1157, %v1191
      %v1196 = vmul.f32 %v1158, %v1191
      %v1197 = vmul.f32 %v1159, %v1191
      %v1198 = vmul.f32 %v1160, %v1191
      %v1199 = vmul.f32 %v1161, %v1191
      %v1200 = vmul.f32 %v1162, %v1191
      %v1201 = vmul.f32 %v1163, %v1191
      %v1202 = vmul.f32 %v1164, %v1191
      %v1203 = vmul.f32 %v1165, %v1191
      %v1204 = vmul.f32 %v1166, %v1191
      %v1205 = vmul.f32 %v1167, %v1191
      %v1206 = vmul.f32 %v1168, %v1191
      %v1207 = vmul.f32 %v1169, %v1191
      %v1208 = vmul.f32 %v1170, %v1191
      %v1209 = vmul.f32 %v1171, %v1191
      %v1210 = vmul.f32 %v1172, %v1191
      %v1211 = vmul.f32 %v1173, %v1191
      %v1212 = vmul.f32 %v1174, %v1191
      %v1213 = vmul.f32 %v1175, %v1191
      %v1214 = vmul.f32 %v1176, %v1191
      %v1215 = vmul.f32 %v1177, %v1191
      %v1216 = vmul.f32 %v1178, %v1191
      %v1217 = vmul.f32 %v1179, %v1191
      %v1218 = vmul.f32 %v1180, %v1191
      %v1219 = vmul.f32 %v1181, %v1191
      %v1220 = vmul.f32 %v1182, %v1191
      %v1221 = vmul.f32 %v1183, %v1191
      %v1222 = vmul.f32 %v1184, %v1191
      %v1223 = vmul.f32 %v1185, %v1191
      %v1224 = vmul.f32 %v1186, %v1191
      %v1225 = vadd.f32 %v1120, %v1193
      %v1226 = vadd.f32 %v1121, %v1194
      %v1227 = vadd.f32 %v1122, %v1195
      %v1228 = vadd.f32 %v1123, %v1196
      %v1229 = vadd.f32 %v1124, %v1197
      %v1230 = vadd.f32 %v1125, %v1198
      %v1231 = vadd.f32 %v1126, %v1199
      %v1232 = vadd.f32 %v1127, %v1200
      %v1233 = vadd.f32 %v1128, %v1201
      %v1234 = vadd.f32 %v1129, %v1202
      %v1235 = vadd.f32 %v1130, %v1203
      %v1236 = vadd.f32 %v1131, %v1204
      %v1237 = vadd.f32 %v1132, %v1205
      %v1238 = vadd.f32 %v1133, %v1206
      %v1239 = vadd.f32 %v1134, %v1207
      %v1240 = vadd.f32 %v1135, %v1208
      %v1241 = vadd.f32 %v1136, %v1209
      %v1242 = vadd.f32 %v1137, %v1210
      %v1243 = vadd.f32 %v1138, %v1211
      %v1244 = vadd.f32 %v1139, %v1212
      %v1245 = vadd.f32 %v1140, %v1213
      %v1246 = vadd.f32 %v1141, %v1214
      %v1247 = vadd.f32 %v1142, %v1215
      %v1248 = vadd.f32 %v1143, %v1216
      %v1249 = vadd.f32 %v1144, %v1217
      %v1250 = vadd.f32 %v1145, %v1218
      %v1251 = vadd.f32 %v1146, %v1219
      %v1252 = vadd.f32 %v1147, %v1220
      %v1253 = vadd.f32 %v1148, %v1221
      %v1254 = vadd.f32 %v1149, %v1222
      %v1255 = vadd.f32 %v1150, %v1223
      %v1256 = vadd.f32 %v1151, %v1224
      %s1257 = scalar_lea.vmem %s218, 8
      %v1258 = vld [vmem:[%s1257] sm:$0x1]
      %v1259 = vld [vmem:[%s1154 + $0x6] sm:$0xff]
      %v1260 = vld [vmem:[%s1154 + $0xe] sm:$0xff]
      %v1261 = vld [vmem:[%s1154 + $0x26] sm:$0xff]
      %v1262 = vld [vmem:[%s1154 + $0x2e] sm:$0xff]
      %v1263 = vld [vmem:[%s1154 + $0x46] sm:$0xff]
      %v1264 = vld [vmem:[%s1154 + $0x4e] sm:$0xff]
      %v1265 = vld [vmem:[%s1154 + $0x66] sm:$0xff]
      %v1266 = vld [vmem:[%s1154 + $0x6e] sm:$0xff]
      %v1267 = vld [vmem:[%s1154 + $0x86] sm:$0xff]
      %v1268 = vld [vmem:[%s1154 + $0x8e] sm:$0xff]
      %v1269 = vld [vmem:[%s1154 + $0xa6] sm:$0xff]
      %v1270 = vld [vmem:[%s1154 + $0xae] sm:$0xff]
      %v1271 = vld [vmem:[%s1154 + $0xc6] sm:$0xff]
      %v1272 = vld [vmem:[%s1154 + $0xce] sm:$0xff]
      %v1273 = vld [vmem:[%s1154 + $0xe6] sm:$0xff]
      %v1274 = vld [vmem:[%s1154 + $0xee] sm:$0xff]
      %v1275 = vld [vmem:[%s1154 + $0x106] sm:$0xff]
      %v1276 = vld [vmem:[%s1154 + $0x10e] sm:$0xff]
      %v1277 = vld [vmem:[%s1154 + $0x126] sm:$0xff]
      %v1278 = vld [vmem:[%s1154 + $0x12e] sm:$0xff]
      %v1279 = vld [vmem:[%s1154 + $0x146] sm:$0xff]
      %v1280 = vld [vmem:[%s1154 + $0x14e] sm:$0xff]
      %v1281 = vld [vmem:[%s1154 + $0x166] sm:$0xff]
      %v1282 = vld [vmem:[%s1154 + $0x16e] sm:$0xff]
      %v1283 = vld [vmem:[%s1154 + $0x186] sm:$0xff]
      %v1284 = vld [vmem:[%s1154 + $0x18e] sm:$0xff]
      %v1285 = vld [vmem:[%s1154 + $0x1a6] sm:$0xff]
      %v1286 = vld [vmem:[%s1154 + $0x1ae] sm:$0xff]
      %v1287 = vld [vmem:[%s1154 + $0x1c6] sm:$0xff]
      %v1288 = vld [vmem:[%s1154 + $0x1ce] sm:$0xff]
      %v1289 = vld [vmem:[%s1154 + $0x1e6] sm:$0xff]
      %v1290 = vld [vmem:[%s1154 + $0x1ee] sm:$0xff]
      %v1292 = vlaneseq
      %v1293 = vshrl.u32 %v1292, 7
      %v1294 = vsub.s32 0, %v1293
      %v1295 = vrot.slane %v1258, %v1294
      %v1297 = vmul.f32 %v1259, %v1295
      %v1298 = vmul.f32 %v1260, %v1295
      %v1299 = vmul.f32 %v1261, %v1295
      %v1300 = vmul.f32 %v1262, %v1295
      %v1301 = vmul.f32 %v1263, %v1295
      %v1302 = vmul.f32 %v1264, %v1295
      %v1303 = vmul.f32 %v1265, %v1295
      %v1304 = vmul.f32 %v1266, %v1295
      %v1305 = vmul.f32 %v1267, %v1295
      %v1306 = vmul.f32 %v1268, %v1295
      %v1307 = vmul.f32 %v1269, %v1295
      %v1308 = vmul.f32 %v1270, %v1295
      %v1309 = vmul.f32 %v1271, %v1295
      %v1310 = vmul.f32 %v1272, %v1295
      %v1311 = vmul.f32 %v1273, %v1295
      %v1312 = vmul.f32 %v1274, %v1295
      %v1313 = vmul.f32 %v1275, %v1295
      %v1314 = vmul.f32 %v1276, %v1295
      %v1315 = vmul.f32 %v1277, %v1295
      %v1316 = vmul.f32 %v1278, %v1295
      %v1317 = vmul.f32 %v1279, %v1295
      %v1318 = vmul.f32 %v1280, %v1295
      %v1319 = vmul.f32 %v1281, %v1295
      %v1320 = vmul.f32 %v1282, %v1295
      %v1321 = vmul.f32 %v1283, %v1295
      %v1322 = vmul.f32 %v1284, %v1295
      %v1323 = vmul.f32 %v1285, %v1295
      %v1324 = vmul.f32 %v1286, %v1295
      %v1325 = vmul.f32 %v1287, %v1295
      %v1326 = vmul.f32 %v1288, %v1295
      %v1327 = vmul.f32 %v1289, %v1295
      %v1328 = vmul.f32 %v1290, %v1295
      %v1329 = vadd.f32 %v1225, %v1297
      %v1330 = vadd.f32 %v1226, %v1298
      %v1331 = vadd.f32 %v1227, %v1299
      %v1332 = vadd.f32 %v1228, %v1300
      %v1333 = vadd.f32 %v1229, %v1301
      %v1334 = vadd.f32 %v1230, %v1302
      %v1335 = vadd.f32 %v1231, %v1303
      %v1336 = vadd.f32 %v1232, %v1304
      %v1337 = vadd.f32 %v1233, %v1305
      %v1338 = vadd.f32 %v1234, %v1306
      %v1339 = vadd.f32 %v1235, %v1307
      %v1340 = vadd.f32 %v1236, %v1308
      %v1341 = vadd.f32 %v1237, %v1309
      %v1342 = vadd.f32 %v1238, %v1310
      %v1343 = vadd.f32 %v1239, %v1311
      %v1344 = vadd.f32 %v1240, %v1312
      %v1345 = vadd.f32 %v1241, %v1313
      %v1346 = vadd.f32 %v1242, %v1314
      %v1347 = vadd.f32 %v1243, %v1315
      %v1348 = vadd.f32 %v1244, %v1316
      %v1349 = vadd.f32 %v1245, %v1317
      %v1350 = vadd.f32 %v1246, %v1318
      %v1351 = vadd.f32 %v1247, %v1319
      %v1352 = vadd.f32 %v1248, %v1320
      %v1353 = vadd.f32 %v1249, %v1321
      %v1354 = vadd.f32 %v1250, %v1322
      %v1355 = vadd.f32 %v1251, %v1323
      %v1356 = vadd.f32 %v1252, %v1324
      %v1357 = vadd.f32 %v1253, %v1325
      %v1358 = vadd.f32 %v1254, %v1326
      %v1359 = vadd.f32 %v1255, %v1327
      %v1360 = vadd.f32 %v1256, %v1328
      %s1361 = scalar_lea.vmem %s218, 9
      %v1362 = vld [vmem:[%s1361] sm:$0x1]
      %v1363 = vld [vmem:[%s1154 + $0x7] sm:$0xff]
      %v1364 = vld [vmem:[%s1154 + $0xf] sm:$0xff]
      %v1365 = vld [vmem:[%s1154 + $0x27] sm:$0xff]
      %v1366 = vld [vmem:[%s1154 + $0x2f] sm:$0xff]
      %v1367 = vld [vmem:[%s1154 + $0x47] sm:$0xff]
      %v1368 = vld [vmem:[%s1154 + $0x4f] sm:$0xff]
      %v1369 = vld [vmem:[%s1154 + $0x67] sm:$0xff]
      %v1370 = vld [vmem:[%s1154 + $0x6f] sm:$0xff]
      %v1371 = vld [vmem:[%s1154 + $0x87] sm:$0xff]
      %v1372 = vld [vmem:[%s1154 + $0x8f] sm:$0xff]
      %v1373 = vld [vmem:[%s1154 + $0xa7] sm:$0xff]
      %v1374 = vld [vmem:[%s1154 + $0xaf] sm:$0xff]
      %v1375 = vld [vmem:[%s1154 + $0xc7] sm:$0xff]
      %v1376 = vld [vmem:[%s1154 + $0xcf] sm:$0xff]
      %v1377 = vld [vmem:[%s1154 + $0xe7] sm:$0xff]
      %v1378 = vld [vmem:[%s1154 + $0xef] sm:$0xff]
      %v1379 = vld [vmem:[%s1154 + $0x107] sm:$0xff]
      %v1380 = vld [vmem:[%s1154 + $0x10f] sm:$0xff]
      %v1381 = vld [vmem:[%s1154 + $0x127] sm:$0xff]
      %v1382 = vld [vmem:[%s1154 + $0x12f] sm:$0xff]
      %v1383 = vld [vmem:[%s1154 + $0x147] sm:$0xff]
      %v1384 = vld [vmem:[%s1154 + $0x14f] sm:$0xff]
      %v1385 = vld [vmem:[%s1154 + $0x167] sm:$0xff]
      %v1386 = vld [vmem:[%s1154 + $0x16f] sm:$0xff]
      %v1387 = vld [vmem:[%s1154 + $0x187] sm:$0xff]
      %v1388 = vld [vmem:[%s1154 + $0x18f] sm:$0xff]
      %v1389 = vld [vmem:[%s1154 + $0x1a7] sm:$0xff]
      %v1390 = vld [vmem:[%s1154 + $0x1af] sm:$0xff]
      %v1391 = vld [vmem:[%s1154 + $0x1c7] sm:$0xff]
      %v1392 = vld [vmem:[%s1154 + $0x1cf] sm:$0xff]
      %v1393 = vld [vmem:[%s1154 + $0x1e7] sm:$0xff]
      %v1394 = vld [vmem:[%s1154 + $0x1ef] sm:$0xff]
      %v1396 = vlaneseq
      %v1397 = vshrl.u32 %v1396, 7
      %v1398 = vsub.s32 0, %v1397
      %v1399 = vrot.slane %v1362, %v1398
      %v1401 = vmul.f32 %v1363, %v1399
      %v1402 = vmul.f32 %v1364, %v1399
      %v1403 = vmul.f32 %v1365, %v1399
      %v1404 = vmul.f32 %v1366, %v1399
      %v1405 = vmul.f32 %v1367, %v1399
      %v1406 = vmul.f32 %v1368, %v1399
      %v1407 = vmul.f32 %v1369, %v1399
      %v1408 = vmul.f32 %v1370, %v1399
      %v1409 = vmul.f32 %v1371, %v1399
      %v1410 = vmul.f32 %v1372, %v1399
      %v1411 = vmul.f32 %v1373, %v1399
      %v1412 = vmul.f32 %v1374, %v1399
      %v1413 = vmul.f32 %v1375, %v1399
      %v1414 = vmul.f32 %v1376, %v1399
      %v1415 = vmul.f32 %v1377, %v1399
      %v1416 = vmul.f32 %v1378, %v1399
      %v1417 = vmul.f32 %v1379, %v1399
      %v1418 = vmul.f32 %v1380, %v1399
      %v1419 = vmul.f32 %v1381, %v1399
      %v1420 = vmul.f32 %v1382, %v1399
      %v1421 = vmul.f32 %v1383, %v1399
      %v1422 = vmul.f32 %v1384, %v1399
      %v1423 = vmul.f32 %v1385, %v1399
      %v1424 = vmul.f32 %v1386, %v1399
      %v1425 = vmul.f32 %v1387, %v1399
      %v1426 = vmul.f32 %v1388, %v1399
      %v1427 = vmul.f32 %v1389, %v1399
      %v1428 = vmul.f32 %v1390, %v1399
      %v1429 = vmul.f32 %v1391, %v1399
      %v1430 = vmul.f32 %v1392, %v1399
      %v1431 = vmul.f32 %v1393, %v1399
      %v1432 = vmul.f32 %v1394, %v1399
      %v1433 = vadd.f32 %v1329, %v1401
      %v1434 = vadd.f32 %v1330, %v1402
      %v1435 = vadd.f32 %v1331, %v1403
      %v1436 = vadd.f32 %v1332, %v1404
      %v1437 = vadd.f32 %v1333, %v1405
      %v1438 = vadd.f32 %v1334, %v1406
      %v1439 = vadd.f32 %v1335, %v1407
      %v1440 = vadd.f32 %v1336, %v1408
      %v1441 = vadd.f32 %v1337, %v1409
      %v1442 = vadd.f32 %v1338, %v1410
      %v1443 = vadd.f32 %v1339, %v1411
      %v1444 = vadd.f32 %v1340, %v1412
      %v1445 = vadd.f32 %v1341, %v1413
      %v1446 = vadd.f32 %v1342, %v1414
      %v1447 = vadd.f32 %v1343, %v1415
      %v1448 = vadd.f32 %v1344, %v1416
      %v1449 = vadd.f32 %v1345, %v1417
      %v1450 = vadd.f32 %v1346, %v1418
      %v1451 = vadd.f32 %v1347, %v1419
      %v1452 = vadd.f32 %v1348, %v1420
      %v1453 = vadd.f32 %v1349, %v1421
      %v1454 = vadd.f32 %v1350, %v1422
      %v1455 = vadd.f32 %v1351, %v1423
      %v1456 = vadd.f32 %v1352, %v1424
      %v1457 = vadd.f32 %v1353, %v1425
      %v1458 = vadd.f32 %v1354, %v1426
      %v1459 = vadd.f32 %v1355, %v1427
      %v1460 = vadd.f32 %v1356, %v1428
      %v1461 = vadd.f32 %v1357, %v1429
      %v1462 = vadd.f32 %v1358, %v1430
      %v1463 = vadd.f32 %v1359, %v1431
      %v1464 = vadd.f32 %v1360, %v1432
      %s1465 = scalar_lea.vmem %s218, 10
      %v1466 = vld [vmem:[%s1465] sm:$0x1]
      %v1467 = vld [vmem:[%s1154 + $0x8] sm:$0xff]
      %v1468 = vld [vmem:[%s1154 + $0x10] sm:$0xff]
      %v1469 = vld [vmem:[%s1154 + $0x28] sm:$0xff]
      %v1470 = vld [vmem:[%s1154 + $0x30] sm:$0xff]
      %v1471 = vld [vmem:[%s1154 + $0x48] sm:$0xff]
      %v1472 = vld [vmem:[%s1154 + $0x50] sm:$0xff]
      %v1473 = vld [vmem:[%s1154 + $0x68] sm:$0xff]
      %v1474 = vld [vmem:[%s1154 + $0x70] sm:$0xff]
      %v1475 = vld [vmem:[%s1154 + $0x88] sm:$0xff]
      %v1476 = vld [vmem:[%s1154 + $0x90] sm:$0xff]
      %v1477 = vld [vmem:[%s1154 + $0xa8] sm:$0xff]
      %v1478 = vld [vmem:[%s1154 + $0xb0] sm:$0xff]
      %v1479 = vld [vmem:[%s1154 + $0xc8] sm:$0xff]
      %v1480 = vld [vmem:[%s1154 + $0xd0] sm:$0xff]
      %v1481 = vld [vmem:[%s1154 + $0xe8] sm:$0xff]
      %v1482 = vld [vmem:[%s1154 + $0xf0] sm:$0xff]
      %v1483 = vld [vmem:[%s1154 + $0x108] sm:$0xff]
      %v1484 = vld [vmem:[%s1154 + $0x110] sm:$0xff]
      %v1485 = vld [vmem:[%s1154 + $0x128] sm:$0xff]
      %v1486 = vld [vmem:[%s1154 + $0x130] sm:$0xff]
      %v1487 = vld [vmem:[%s1154 + $0x148] sm:$0xff]
      %v1488 = vld [vmem:[%s1154 + $0x150] sm:$0xff]
      %v1489 = vld [vmem:[%s1154 + $0x168] sm:$0xff]
      %v1490 = vld [vmem:[%s1154 + $0x170] sm:$0xff]
      %v1491 = vld [vmem:[%s1154 + $0x188] sm:$0xff]
      %v1492 = vld [vmem:[%s1154 + $0x190] sm:$0xff]
      %v1493 = vld [vmem:[%s1154 + $0x1a8] sm:$0xff]
      %v1494 = vld [vmem:[%s1154 + $0x1b0] sm:$0xff]
      %v1495 = vld [vmem:[%s1154 + $0x1c8] sm:$0xff]
      %v1496 = vld [vmem:[%s1154 + $0x1d0] sm:$0xff]
      %v1497 = vld [vmem:[%s1154 + $0x1e8] sm:$0xff]
      %v1498 = vld [vmem:[%s1154 + $0x1f0] sm:$0xff]
      %v1500 = vlaneseq
      %v1501 = vshrl.u32 %v1500, 7
      %v1502 = vsub.s32 0, %v1501
      %v1503 = vrot.slane %v1466, %v1502
      %v1505 = vmul.f32 %v1467, %v1503
      %v1506 = vmul.f32 %v1468, %v1503
      %v1507 = vmul.f32 %v1469, %v1503
      %v1508 = vmul.f32 %v1470, %v1503
      %v1509 = vmul.f32 %v1471, %v1503
      %v1510 = vmul.f32 %v1472, %v1503
      %v1511 = vmul.f32 %v1473, %v1503
      %v1512 = vmul.f32 %v1474, %v1503
      %v1513 = vmul.f32 %v1475, %v1503
      %v1514 = vmul.f32 %v1476, %v1503
      %v1515 = vmul.f32 %v1477, %v1503
      %v1516 = vmul.f32 %v1478, %v1503
      %v1517 = vmul.f32 %v1479, %v1503
      %v1518 = vmul.f32 %v1480, %v1503
      %v1519 = vmul.f32 %v1481, %v1503
      %v1520 = vmul.f32 %v1482, %v1503
      %v1521 = vmul.f32 %v1483, %v1503
      %v1522 = vmul.f32 %v1484, %v1503
      %v1523 = vmul.f32 %v1485, %v1503
      %v1524 = vmul.f32 %v1486, %v1503
      %v1525 = vmul.f32 %v1487, %v1503
      %v1526 = vmul.f32 %v1488, %v1503
      %v1527 = vmul.f32 %v1489, %v1503
      %v1528 = vmul.f32 %v1490, %v1503
      %v1529 = vmul.f32 %v1491, %v1503
      %v1530 = vmul.f32 %v1492, %v1503
      %v1531 = vmul.f32 %v1493, %v1503
      %v1532 = vmul.f32 %v1494, %v1503
      %v1533 = vmul.f32 %v1495, %v1503
      %v1534 = vmul.f32 %v1496, %v1503
      %v1535 = vmul.f32 %v1497, %v1503
      %v1536 = vmul.f32 %v1498, %v1503
      %v1537 = vadd.f32 %v1433, %v1505
      %v1538 = vadd.f32 %v1434, %v1506
      %v1539 = vadd.f32 %v1435, %v1507
      %v1540 = vadd.f32 %v1436, %v1508
      %v1541 = vadd.f32 %v1437, %v1509
      %v1542 = vadd.f32 %v1438, %v1510
      %v1543 = vadd.f32 %v1439, %v1511
      %v1544 = vadd.f32 %v1440, %v1512
      %v1545 = vadd.f32 %v1441, %v1513
      %v1546 = vadd.f32 %v1442, %v1514
      %v1547 = vadd.f32 %v1443, %v1515
      %v1548 = vadd.f32 %v1444, %v1516
      %v1549 = vadd.f32 %v1445, %v1517
      %v1550 = vadd.f32 %v1446, %v1518
      %v1551 = vadd.f32 %v1447, %v1519
      %v1552 = vadd.f32 %v1448, %v1520
      %v1553 = vadd.f32 %v1449, %v1521
      %v1554 = vadd.f32 %v1450, %v1522
      %v1555 = vadd.f32 %v1451, %v1523
      %v1556 = vadd.f32 %v1452, %v1524
      %v1557 = vadd.f32 %v1453, %v1525
      %v1558 = vadd.f32 %v1454, %v1526
      %v1559 = vadd.f32 %v1455, %v1527
      %v1560 = vadd.f32 %v1456, %v1528
      %v1561 = vadd.f32 %v1457, %v1529
      %v1562 = vadd.f32 %v1458, %v1530
      %v1563 = vadd.f32 %v1459, %v1531
      %v1564 = vadd.f32 %v1460, %v1532
      %v1565 = vadd.f32 %v1461, %v1533
      %v1566 = vadd.f32 %v1462, %v1534
      %v1567 = vadd.f32 %v1463, %v1535
      %v1568 = vadd.f32 %v1464, %v1536
      %s1569 = scalar_lea.vmem %s218, 11
      %v1570 = vld [vmem:[%s1569] sm:$0x1]
      %v1571 = vld [vmem:[%s1154 + $0x9] sm:$0xff]
      %v1572 = vld [vmem:[%s1154 + $0x11] sm:$0xff]
      %v1573 = vld [vmem:[%s1154 + $0x29] sm:$0xff]
      %v1574 = vld [vmem:[%s1154 + $0x31] sm:$0xff]
      %v1575 = vld [vmem:[%s1154 + $0x49] sm:$0xff]
      %v1576 = vld [vmem:[%s1154 + $0x51] sm:$0xff]
      %v1577 = vld [vmem:[%s1154 + $0x69] sm:$0xff]
      %v1578 = vld [vmem:[%s1154 + $0x71] sm:$0xff]
      %v1579 = vld [vmem:[%s1154 + $0x89] sm:$0xff]
      %v1580 = vld [vmem:[%s1154 + $0x91] sm:$0xff]
      %v1581 = vld [vmem:[%s1154 + $0xa9] sm:$0xff]
      %v1582 = vld [vmem:[%s1154 + $0xb1] sm:$0xff]
      %v1583 = vld [vmem:[%s1154 + $0xc9] sm:$0xff]
      %v1584 = vld [vmem:[%s1154 + $0xd1] sm:$0xff]
      %v1585 = vld [vmem:[%s1154 + $0xe9] sm:$0xff]
      %v1586 = vld [vmem:[%s1154 + $0xf1] sm:$0xff]
      %v1587 = vld [vmem:[%s1154 + $0x109] sm:$0xff]
      %v1588 = vld [vmem:[%s1154 + $0x111] sm:$0xff]
      %v1589 = vld [vmem:[%s1154 + $0x129] sm:$0xff]
      %v1590 = vld [vmem:[%s1154 + $0x131] sm:$0xff]
      %v1591 = vld [vmem:[%s1154 + $0x149] sm:$0xff]
      %v1592 = vld [vmem:[%s1154 + $0x151] sm:$0xff]
      %v1593 = vld [vmem:[%s1154 + $0x169] sm:$0xff]
      %v1594 = vld [vmem:[%s1154 + $0x171] sm:$0xff]
      %v1595 = vld [vmem:[%s1154 + $0x189] sm:$0xff]
      %v1596 = vld [vmem:[%s1154 + $0x191] sm:$0xff]
      %v1597 = vld [vmem:[%s1154 + $0x1a9] sm:$0xff]
      %v1598 = vld [vmem:[%s1154 + $0x1b1] sm:$0xff]
      %v1599 = vld [vmem:[%s1154 + $0x1c9] sm:$0xff]
      %v1600 = vld [vmem:[%s1154 + $0x1d1] sm:$0xff]
      %v1601 = vld [vmem:[%s1154 + $0x1e9] sm:$0xff]
      %v1602 = vld [vmem:[%s1154 + $0x1f1] sm:$0xff]
      %v1604 = vlaneseq
      %v1605 = vshrl.u32 %v1604, 7
      %v1606 = vsub.s32 0, %v1605
      %v1607 = vrot.slane %v1570, %v1606
      %v1609 = vmul.f32 %v1571, %v1607
      %v1610 = vmul.f32 %v1572, %v1607
      %v1611 = vmul.f32 %v1573, %v1607
      %v1612 = vmul.f32 %v1574, %v1607
      %v1613 = vmul.f32 %v1575, %v1607
      %v1614 = vmul.f32 %v1576, %v1607
      %v1615 = vmul.f32 %v1577, %v1607
      %v1616 = vmul.f32 %v1578, %v1607
      %v1617 = vmul.f32 %v1579, %v1607
      %v1618 = vmul.f32 %v1580, %v1607
      %v1619 = vmul.f32 %v1581, %v1607
      %v1620 = vmul.f32 %v1582, %v1607
      %v1621 = vmul.f32 %v1583, %v1607
      %v1622 = vmul.f32 %v1584, %v1607
      %v1623 = vmul.f32 %v1585, %v1607
      %v1624 = vmul.f32 %v1586, %v1607
      %v1625 = vmul.f32 %v1587, %v1607
      %v1626 = vmul.f32 %v1588, %v1607
      %v1627 = vmul.f32 %v1589, %v1607
      %v1628 = vmul.f32 %v1590, %v1607
      %v1629 = vmul.f32 %v1591, %v1607
      %v1630 = vmul.f32 %v1592, %v1607
      %v1631 = vmul.f32 %v1593, %v1607
      %v1632 = vmul.f32 %v1594, %v1607
      %v1633 = vmul.f32 %v1595, %v1607
      %v1634 = vmul.f32 %v1596, %v1607
      %v1635 = vmul.f32 %v1597, %v1607
      %v1636 = vmul.f32 %v1598, %v1607
      %v1637 = vmul.f32 %v1599, %v1607
      %v1638 = vmul.f32 %v1600, %v1607
      %v1639 = vmul.f32 %v1601, %v1607
      %v1640 = vmul.f32 %v1602, %v1607
      %v1641 = vadd.f32 %v1537, %v1609
      %v1642 = vadd.f32 %v1538, %v1610
      %v1643 = vadd.f32 %v1539, %v1611
      %v1644 = vadd.f32 %v1540, %v1612
      %v1645 = vadd.f32 %v1541, %v1613
      %v1646 = vadd.f32 %v1542, %v1614
      %v1647 = vadd.f32 %v1543, %v1615
      %v1648 = vadd.f32 %v1544, %v1616
      %v1649 = vadd.f32 %v1545, %v1617
      %v1650 = vadd.f32 %v1546, %v1618
      %v1651 = vadd.f32 %v1547, %v1619
      %v1652 = vadd.f32 %v1548, %v1620
      %v1653 = vadd.f32 %v1549, %v1621
      %v1654 = vadd.f32 %v1550, %v1622
      %v1655 = vadd.f32 %v1551, %v1623
      %v1656 = vadd.f32 %v1552, %v1624
      %v1657 = vadd.f32 %v1553, %v1625
      %v1658 = vadd.f32 %v1554, %v1626
      %v1659 = vadd.f32 %v1555, %v1627
      %v1660 = vadd.f32 %v1556, %v1628
      %v1661 = vadd.f32 %v1557, %v1629
      %v1662 = vadd.f32 %v1558, %v1630
      %v1663 = vadd.f32 %v1559, %v1631
      %v1664 = vadd.f32 %v1560, %v1632
      %v1665 = vadd.f32 %v1561, %v1633
      %v1666 = vadd.f32 %v1562, %v1634
      %v1667 = vadd.f32 %v1563, %v1635
      %v1668 = vadd.f32 %v1564, %v1636
      %v1669 = vadd.f32 %v1565, %v1637
      %v1670 = vadd.f32 %v1566, %v1638
      %v1671 = vadd.f32 %v1567, %v1639
      %v1672 = vadd.f32 %v1568, %v1640
      %s1673 = scalar_lea.vmem %s218, 12
      %v1674 = vld [vmem:[%s1673] sm:$0x1]
      %v1675 = vld [vmem:[%s1154 + $0xa] sm:$0xff]
      %v1676 = vld [vmem:[%s1154 + $0x12] sm:$0xff]
      %v1677 = vld [vmem:[%s1154 + $0x2a] sm:$0xff]
      %v1678 = vld [vmem:[%s1154 + $0x32] sm:$0xff]
      %v1679 = vld [vmem:[%s1154 + $0x4a] sm:$0xff]
      %v1680 = vld [vmem:[%s1154 + $0x52] sm:$0xff]
      %v1681 = vld [vmem:[%s1154 + $0x6a] sm:$0xff]
      %v1682 = vld [vmem:[%s1154 + $0x72] sm:$0xff]
      %v1683 = vld [vmem:[%s1154 + $0x8a] sm:$0xff]
      %v1684 = vld [vmem:[%s1154 + $0x92] sm:$0xff]
      %v1685 = vld [vmem:[%s1154 + $0xaa] sm:$0xff]
      %v1686 = vld [vmem:[%s1154 + $0xb2] sm:$0xff]
      %v1687 = vld [vmem:[%s1154 + $0xca] sm:$0xff]
      %v1688 = vld [vmem:[%s1154 + $0xd2] sm:$0xff]
      %v1689 = vld [vmem:[%s1154 + $0xea] sm:$0xff]
      %v1690 = vld [vmem:[%s1154 + $0xf2] sm:$0xff]
      %v1691 = vld [vmem:[%s1154 + $0x10a] sm:$0xff]
      %v1692 = vld [vmem:[%s1154 + $0x112] sm:$0xff]
      %v1693 = vld [vmem:[%s1154 + $0x12a] sm:$0xff]
      %v1694 = vld [vmem:[%s1154 + $0x132] sm:$0xff]
      %v1695 = vld [vmem:[%s1154 + $0x14a] sm:$0xff]
      %v1696 = vld [vmem:[%s1154 + $0x152] sm:$0xff]
      %v1697 = vld [vmem:[%s1154 + $0x16a] sm:$0xff]
      %v1698 = vld [vmem:[%s1154 + $0x172] sm:$0xff]
      %v1699 = vld [vmem:[%s1154 + $0x18a] sm:$0xff]
      %v1700 = vld [vmem:[%s1154 + $0x192] sm:$0xff]
      %v1701 = vld [vmem:[%s1154 + $0x1aa] sm:$0xff]
      %v1702 = vld [vmem:[%s1154 + $0x1b2] sm:$0xff]
      %v1703 = vld [vmem:[%s1154 + $0x1ca] sm:$0xff]
      %v1704 = vld [vmem:[%s1154 + $0x1d2] sm:$0xff]
      %v1705 = vld [vmem:[%s1154 + $0x1ea] sm:$0xff]
      %v1706 = vld [vmem:[%s1154 + $0x1f2] sm:$0xff]
      %v1708 = vlaneseq
      %v1709 = vshrl.u32 %v1708, 7
      %v1710 = vsub.s32 0, %v1709
      %v1711 = vrot.slane %v1674, %v1710
      %v1713 = vmul.f32 %v1675, %v1711
      %v1714 = vmul.f32 %v1676, %v1711
      %v1715 = vmul.f32 %v1677, %v1711
      %v1716 = vmul.f32 %v1678, %v1711
      %v1717 = vmul.f32 %v1679, %v1711
      %v1718 = vmul.f32 %v1680, %v1711
      %v1719 = vmul.f32 %v1681, %v1711
      %v1720 = vmul.f32 %v1682, %v1711
      %v1721 = vmul.f32 %v1683, %v1711
      %v1722 = vmul.f32 %v1684, %v1711
      %v1723 = vmul.f32 %v1685, %v1711
      %v1724 = vmul.f32 %v1686, %v1711
      %v1725 = vmul.f32 %v1687, %v1711
      %v1726 = vmul.f32 %v1688, %v1711
      %v1727 = vmul.f32 %v1689, %v1711
      %v1728 = vmul.f32 %v1690, %v1711
      %v1729 = vmul.f32 %v1691, %v1711
      %v1730 = vmul.f32 %v1692, %v1711
      %v1731 = vmul.f32 %v1693, %v1711
      %v1732 = vmul.f32 %v1694, %v1711
      %v1733 = vmul.f32 %v1695, %v1711
      %v1734 = vmul.f32 %v1696, %v1711
      %v1735 = vmul.f32 %v1697, %v1711
      %v1736 = vmul.f32 %v1698, %v1711
      %v1737 = vmul.f32 %v1699, %v1711
      %v1738 = vmul.f32 %v1700, %v1711
      %v1739 = vmul.f32 %v1701, %v1711
      %v1740 = vmul.f32 %v1702, %v1711
      %v1741 = vmul.f32 %v1703, %v1711
      %v1742 = vmul.f32 %v1704, %v1711
      %v1743 = vmul.f32 %v1705, %v1711
      %v1744 = vmul.f32 %v1706, %v1711
      %v1745 = vadd.f32 %v1641, %v1713
      %v1746 = vadd.f32 %v1642, %v1714
      %v1747 = vadd.f32 %v1643, %v1715
      %v1748 = vadd.f32 %v1644, %v1716
      %v1749 = vadd.f32 %v1645, %v1717
      %v1750 = vadd.f32 %v1646, %v1718
      %v1751 = vadd.f32 %v1647, %v1719
      %v1752 = vadd.f32 %v1648, %v1720
      %v1753 = vadd.f32 %v1649, %v1721
      %v1754 = vadd.f32 %v1650, %v1722
      %v1755 = vadd.f32 %v1651, %v1723
      %v1756 = vadd.f32 %v1652, %v1724
      %v1757 = vadd.f32 %v1653, %v1725
      %v1758 = vadd.f32 %v1654, %v1726
      %v1759 = vadd.f32 %v1655, %v1727
      %v1760 = vadd.f32 %v1656, %v1728
      %v1761 = vadd.f32 %v1657, %v1729
      %v1762 = vadd.f32 %v1658, %v1730
      %v1763 = vadd.f32 %v1659, %v1731
      %v1764 = vadd.f32 %v1660, %v1732
      %v1765 = vadd.f32 %v1661, %v1733
      %v1766 = vadd.f32 %v1662, %v1734
      %v1767 = vadd.f32 %v1663, %v1735
      %v1768 = vadd.f32 %v1664, %v1736
      %v1769 = vadd.f32 %v1665, %v1737
      %v1770 = vadd.f32 %v1666, %v1738
      %v1771 = vadd.f32 %v1667, %v1739
      %v1772 = vadd.f32 %v1668, %v1740
      %v1773 = vadd.f32 %v1669, %v1741
      %v1774 = vadd.f32 %v1670, %v1742
      %v1775 = vadd.f32 %v1671, %v1743
      %v1776 = vadd.f32 %v1672, %v1744
      %s1777 = scalar_lea.vmem %s218, 13
      %v1778 = vld [vmem:[%s1777] sm:$0x1]
      %v1779 = vld [vmem:[%s1154 + $0xb] sm:$0xff]
      %v1780 = vld [vmem:[%s1154 + $0x13] sm:$0xff]
      %v1781 = vld [vmem:[%s1154 + $0x2b] sm:$0xff]
      %v1782 = vld [vmem:[%s1154 + $0x33] sm:$0xff]
      %v1783 = vld [vmem:[%s1154 + $0x4b] sm:$0xff]
      %v1784 = vld [vmem:[%s1154 + $0x53] sm:$0xff]
      %v1785 = vld [vmem:[%s1154 + $0x6b] sm:$0xff]
      %v1786 = vld [vmem:[%s1154 + $0x73] sm:$0xff]
      %v1787 = vld [vmem:[%s1154 + $0x8b] sm:$0xff]
      %v1788 = vld [vmem:[%s1154 + $0x93] sm:$0xff]
      %v1789 = vld [vmem:[%s1154 + $0xab] sm:$0xff]
      %v1790 = vld [vmem:[%s1154 + $0xb3] sm:$0xff]
      %v1791 = vld [vmem:[%s1154 + $0xcb] sm:$0xff]
      %v1792 = vld [vmem:[%s1154 + $0xd3] sm:$0xff]
      %v1793 = vld [vmem:[%s1154 + $0xeb] sm:$0xff]
      %v1794 = vld [vmem:[%s1154 + $0xf3] sm:$0xff]
      %v1795 = vld [vmem:[%s1154 + $0x10b] sm:$0xff]
      %v1796 = vld [vmem:[%s1154 + $0x113] sm:$0xff]
      %v1797 = vld [vmem:[%s1154 + $0x12b] sm:$0xff]
      %v1798 = vld [vmem:[%s1154 + $0x133] sm:$0xff]
      %v1799 = vld [vmem:[%s1154 + $0x14b] sm:$0xff]
      %v1800 = vld [vmem:[%s1154 + $0x153] sm:$0xff]
      %v1801 = vld [vmem:[%s1154 + $0x16b] sm:$0xff]
      %v1802 = vld [vmem:[%s1154 + $0x173] sm:$0xff]
      %v1803 = vld [vmem:[%s1154 + $0x18b] sm:$0xff]
      %v1804 = vld [vmem:[%s1154 + $0x193] sm:$0xff]
      %v1805 = vld [vmem:[%s1154 + $0x1ab] sm:$0xff]
      %v1806 = vld [vmem:[%s1154 + $0x1b3] sm:$0xff]
      %v1807 = vld [vmem:[%s1154 + $0x1cb] sm:$0xff]
      %v1808 = vld [vmem:[%s1154 + $0x1d3] sm:$0xff]
      %v1809 = vld [vmem:[%s1154 + $0x1eb] sm:$0xff]
      %v1810 = vld [vmem:[%s1154 + $0x1f3] sm:$0xff]
      %v1812 = vlaneseq
      %v1813 = vshrl.u32 %v1812, 7
      %v1814 = vsub.s32 0, %v1813
      %v1815 = vrot.slane %v1778, %v1814
      %v1817 = vmul.f32 %v1779, %v1815
      %v1818 = vmul.f32 %v1780, %v1815
      %v1819 = vmul.f32 %v1781, %v1815
      %v1820 = vmul.f32 %v1782, %v1815
      %v1821 = vmul.f32 %v1783, %v1815
      %v1822 = vmul.f32 %v1784, %v1815
      %v1823 = vmul.f32 %v1785, %v1815
      %v1824 = vmul.f32 %v1786, %v1815
      %v1825 = vmul.f32 %v1787, %v1815
      %v1826 = vmul.f32 %v1788, %v1815
      %v1827 = vmul.f32 %v1789, %v1815
      %v1828 = vmul.f32 %v1790, %v1815
      %v1829 = vmul.f32 %v1791, %v1815
      %v1830 = vmul.f32 %v1792, %v1815
      %v1831 = vmul.f32 %v1793, %v1815
      %v1832 = vmul.f32 %v1794, %v1815
      %v1833 = vmul.f32 %v1795, %v1815
      %v1834 = vmul.f32 %v1796, %v1815
      %v1835 = vmul.f32 %v1797, %v1815
      %v1836 = vmul.f32 %v1798, %v1815
      %v1837 = vmul.f32 %v1799, %v1815
      %v1838 = vmul.f32 %v1800, %v1815
      %v1839 = vmul.f32 %v1801, %v1815
      %v1840 = vmul.f32 %v1802, %v1815
      %v1841 = vmul.f32 %v1803, %v1815
      %v1842 = vmul.f32 %v1804, %v1815
      %v1843 = vmul.f32 %v1805, %v1815
      %v1844 = vmul.f32 %v1806, %v1815
      %v1845 = vmul.f32 %v1807, %v1815
      %v1846 = vmul.f32 %v1808, %v1815
      %v1847 = vmul.f32 %v1809, %v1815
      %v1848 = vmul.f32 %v1810, %v1815
      %v1849 = vadd.f32 %v1745, %v1817
      %v1850 = vadd.f32 %v1746, %v1818
      %v1851 = vadd.f32 %v1747, %v1819
      %v1852 = vadd.f32 %v1748, %v1820
      %v1853 = vadd.f32 %v1749, %v1821
      %v1854 = vadd.f32 %v1750, %v1822
      %v1855 = vadd.f32 %v1751, %v1823
      %v1856 = vadd.f32 %v1752, %v1824
      %v1857 = vadd.f32 %v1753, %v1825
      %v1858 = vadd.f32 %v1754, %v1826
      %v1859 = vadd.f32 %v1755, %v1827
      %v1860 = vadd.f32 %v1756, %v1828
      %v1861 = vadd.f32 %v1757, %v1829
      %v1862 = vadd.f32 %v1758, %v1830
      %v1863 = vadd.f32 %v1759, %v1831
      %v1864 = vadd.f32 %v1760, %v1832
      %v1865 = vadd.f32 %v1761, %v1833
      %v1866 = vadd.f32 %v1762, %v1834
      %v1867 = vadd.f32 %v1763, %v1835
      %v1868 = vadd.f32 %v1764, %v1836
      %v1869 = vadd.f32 %v1765, %v1837
      %v1870 = vadd.f32 %v1766, %v1838
      %v1871 = vadd.f32 %v1767, %v1839
      %v1872 = vadd.f32 %v1768, %v1840
      %v1873 = vadd.f32 %v1769, %v1841
      %v1874 = vadd.f32 %v1770, %v1842
      %v1875 = vadd.f32 %v1771, %v1843
      %v1876 = vadd.f32 %v1772, %v1844
      %v1877 = vadd.f32 %v1773, %v1845
      %v1878 = vadd.f32 %v1774, %v1846
      %v1879 = vadd.f32 %v1775, %v1847
      %v1880 = vadd.f32 %v1776, %v1848
      %s1881 = scalar_lea.vmem %s218, 14
      %v1882 = vld [vmem:[%s1881] sm:$0x1]
      %s1883 = scalar_lea.vmem [#allocation2], 64
      %v1884 = vld [vmem:[%s1883 + $0x5] sm:$0xff]
      %v1885 = vld [vmem:[%s1883 + $0xd] sm:$0xff]
      %v1886 = vld [vmem:[%s1883 + $0x25] sm:$0xff]
      %v1887 = vld [vmem:[%s1883 + $0x2d] sm:$0xff]
      %v1888 = vld [vmem:[%s1883 + $0x45] sm:$0xff]
      %v1889 = vld [vmem:[%s1883 + $0x4d] sm:$0xff]
      %v1890 = vld [vmem:[%s1883 + $0x65] sm:$0xff]
      %v1891 = vld [vmem:[%s1883 + $0x6d] sm:$0xff]
      %v1892 = vld [vmem:[%s1883 + $0x85] sm:$0xff]
      %v1893 = vld [vmem:[%s1883 + $0x8d] sm:$0xff]
      %v1894 = vld [vmem:[%s1883 + $0xa5] sm:$0xff]
      %v1895 = vld [vmem:[%s1883 + $0xad] sm:$0xff]
      %v1896 = vld [vmem:[%s1883 + $0xc5] sm:$0xff]
      %v1897 = vld [vmem:[%s1883 + $0xcd] sm:$0xff]
      %v1898 = vld [vmem:[%s1883 + $0xe5] sm:$0xff]
      %v1899 = vld [vmem:[%s1883 + $0xed] sm:$0xff]
      %v1900 = vld [vmem:[%s1883 + $0x105] sm:$0xff]
      %v1901 = vld [vmem:[%s1883 + $0x10d] sm:$0xff]
      %v1902 = vld [vmem:[%s1883 + $0x125] sm:$0xff]
      %v1903 = vld [vmem:[%s1883 + $0x12d] sm:$0xff]
      %v1904 = vld [vmem:[%s1883 + $0x145] sm:$0xff]
      %v1905 = vld [vmem:[%s1883 + $0x14d] sm:$0xff]
      %v1906 = vld [vmem:[%s1883 + $0x165] sm:$0xff]
      %v1907 = vld [vmem:[%s1883 + $0x16d] sm:$0xff]
      %v1908 = vld [vmem:[%s1883 + $0x185] sm:$0xff]
      %v1909 = vld [vmem:[%s1883 + $0x18d] sm:$0xff]
      %v1910 = vld [vmem:[%s1883 + $0x1a5] sm:$0xff]
      %v1911 = vld [vmem:[%s1883 + $0x1ad] sm:$0xff]
      %v1912 = vld [vmem:[%s1883 + $0x1c5] sm:$0xff]
      %v1913 = vld [vmem:[%s1883 + $0x1cd] sm:$0xff]
      %v1914 = vld [vmem:[%s1883 + $0x1e5] sm:$0xff]
      %v1915 = vld [vmem:[%s1883 + $0x1ed] sm:$0xff]
      %v1917 = vlaneseq
      %v1918 = vshrl.u32 %v1917, 7
      %v1919 = vsub.s32 0, %v1918
      %v1920 = vrot.slane %v1882, %v1919
      %v1922 = vmul.f32 %v1884, %v1920
      %v1923 = vmul.f32 %v1885, %v1920
      %v1924 = vmul.f32 %v1886, %v1920
      %v1925 = vmul.f32 %v1887, %v1920
      %v1926 = vmul.f32 %v1888, %v1920
      %v1927 = vmul.f32 %v1889, %v1920
      %v1928 = vmul.f32 %v1890, %v1920
      %v1929 = vmul.f32 %v1891, %v1920
      %v1930 = vmul.f32 %v1892, %v1920
      %v1931 = vmul.f32 %v1893, %v1920
      %v1932 = vmul.f32 %v1894, %v1920
      %v1933 = vmul.f32 %v1895, %v1920
      %v1934 = vmul.f32 %v1896, %v1920
      %v1935 = vmul.f32 %v1897, %v1920
      %v1936 = vmul.f32 %v1898, %v1920
      %v1937 = vmul.f32 %v1899, %v1920
      %v1938 = vmul.f32 %v1900, %v1920
      %v1939 = vmul.f32 %v1901, %v1920
      %v1940 = vmul.f32 %v1902, %v1920
      %v1941 = vmul.f32 %v1903, %v1920
      %v1942 = vmul.f32 %v1904, %v1920
      %v1943 = vmul.f32 %v1905, %v1920
      %v1944 = vmul.f32 %v1906, %v1920
      %v1945 = vmul.f32 %v1907, %v1920
      %v1946 = vmul.f32 %v1908, %v1920
      %v1947 = vmul.f32 %v1909, %v1920
      %v1948 = vmul.f32 %v1910, %v1920
      %v1949 = vmul.f32 %v1911, %v1920
      %v1950 = vmul.f32 %v1912, %v1920
      %v1951 = vmul.f32 %v1913, %v1920
      %v1952 = vmul.f32 %v1914, %v1920
      %v1953 = vmul.f32 %v1915, %v1920
      %v1954 = vadd.f32 %v1849, %v1922
      %v1955 = vadd.f32 %v1850, %v1923
      %v1956 = vadd.f32 %v1851, %v1924
      %v1957 = vadd.f32 %v1852, %v1925
      %v1958 = vadd.f32 %v1853, %v1926
      %v1959 = vadd.f32 %v1854, %v1927
      %v1960 = vadd.f32 %v1855, %v1928
      %v1961 = vadd.f32 %v1856, %v1929
      %v1962 = vadd.f32 %v1857, %v1930
      %v1963 = vadd.f32 %v1858, %v1931
      %v1964 = vadd.f32 %v1859, %v1932
      %v1965 = vadd.f32 %v1860, %v1933
      %v1966 = vadd.f32 %v1861, %v1934
      %v1967 = vadd.f32 %v1862, %v1935
      %v1968 = vadd.f32 %v1863, %v1936
      %v1969 = vadd.f32 %v1864, %v1937
      %v1970 = vadd.f32 %v1865, %v1938
      %v1971 = vadd.f32 %v1866, %v1939
      %v1972 = vadd.f32 %v1867, %v1940
      %v1973 = vadd.f32 %v1868, %v1941
      %v1974 = vadd.f32 %v1869, %v1942
      %v1975 = vadd.f32 %v1870, %v1943
      %v1976 = vadd.f32 %v1871, %v1944
      %v1977 = vadd.f32 %v1872, %v1945
      %v1978 = vadd.f32 %v1873, %v1946
      %v1979 = vadd.f32 %v1874, %v1947
      %v1980 = vadd.f32 %v1875, %v1948
      %v1981 = vadd.f32 %v1876, %v1949
      %v1982 = vadd.f32 %v1877, %v1950
      %v1983 = vadd.f32 %v1878, %v1951
      %v1984 = vadd.f32 %v1879, %v1952
      %v1985 = vadd.f32 %v1880, %v1953
      %s1986 = scalar_lea.vmem %s218, 15
      %v1987 = vld [vmem:[%s1986] sm:$0x1]
      %v1988 = vld [vmem:[%s1883 + $0x6] sm:$0xff]
      %v1989 = vld [vmem:[%s1883 + $0xe] sm:$0xff]
      %v1990 = vld [vmem:[%s1883 + $0x26] sm:$0xff]
      %v1991 = vld [vmem:[%s1883 + $0x2e] sm:$0xff]
      %v1992 = vld [vmem:[%s1883 + $0x46] sm:$0xff]
      %v1993 = vld [vmem:[%s1883 + $0x4e] sm:$0xff]
      %v1994 = vld [vmem:[%s1883 + $0x66] sm:$0xff]
      %v1995 = vld [vmem:[%s1883 + $0x6e] sm:$0xff]
      %v1996 = vld [vmem:[%s1883 + $0x86] sm:$0xff]
      %v1997 = vld [vmem:[%s1883 + $0x8e] sm:$0xff]
      %v1998 = vld [vmem:[%s1883 + $0xa6] sm:$0xff]
      %v1999 = vld [vmem:[%s1883 + $0xae] sm:$0xff]
      %v2000 = vld [vmem:[%s1883 + $0xc6] sm:$0xff]
      %v2001 = vld [vmem:[%s1883 + $0xce] sm:$0xff]
      %v2002 = vld [vmem:[%s1883 + $0xe6] sm:$0xff]
      %v2003 = vld [vmem:[%s1883 + $0xee] sm:$0xff]
      %v2004 = vld [vmem:[%s1883 + $0x106] sm:$0xff]
      %v2005 = vld [vmem:[%s1883 + $0x10e] sm:$0xff]
      %v2006 = vld [vmem:[%s1883 + $0x126] sm:$0xff]
      %v2007 = vld [vmem:[%s1883 + $0x12e] sm:$0xff]
      %v2008 = vld [vmem:[%s1883 + $0x146] sm:$0xff]
      %v2009 = vld [vmem:[%s1883 + $0x14e] sm:$0xff]
      %v2010 = vld [vmem:[%s1883 + $0x166] sm:$0xff]
      %v2011 = vld [vmem:[%s1883 + $0x16e] sm:$0xff]
      %v2012 = vld [vmem:[%s1883 + $0x186] sm:$0xff]
      %v2013 = vld [vmem:[%s1883 + $0x18e] sm:$0xff]
      %v2014 = vld [vmem:[%s1883 + $0x1a6] sm:$0xff]
      %v2015 = vld [vmem:[%s1883 + $0x1ae] sm:$0xff]
      %v2016 = vld [vmem:[%s1883 + $0x1c6] sm:$0xff]
      %v2017 = vld [vmem:[%s1883 + $0x1ce] sm:$0xff]
      %v2018 = vld [vmem:[%s1883 + $0x1e6] sm:$0xff]
      %v2019 = vld [vmem:[%s1883 + $0x1ee] sm:$0xff]
      %v2021 = vlaneseq
      %v2022 = vshrl.u32 %v2021, 7
      %v2023 = vsub.s32 0, %v2022
      %v2024 = vrot.slane %v1987, %v2023
      %v2026 = vmul.f32 %v1988, %v2024
      %v2027 = vmul.f32 %v1989, %v2024
      %v2028 = vmul.f32 %v1990, %v2024
      %v2029 = vmul.f32 %v1991, %v2024
      %v2030 = vmul.f32 %v1992, %v2024
      %v2031 = vmul.f32 %v1993, %v2024
      %v2032 = vmul.f32 %v1994, %v2024
      %v2033 = vmul.f32 %v1995, %v2024
      %v2034 = vmul.f32 %v1996, %v2024
      %v2035 = vmul.f32 %v1997, %v2024
      %v2036 = vmul.f32 %v1998, %v2024
      %v2037 = vmul.f32 %v1999, %v2024
      %v2038 = vmul.f32 %v2000, %v2024
      %v2039 = vmul.f32 %v2001, %v2024
      %v2040 = vmul.f32 %v2002, %v2024
      %v2041 = vmul.f32 %v2003, %v2024
      %v2042 = vmul.f32 %v2004, %v2024
      %v2043 = vmul.f32 %v2005, %v2024
      %v2044 = vmul.f32 %v2006, %v2024
      %v2045 = vmul.f32 %v2007, %v2024
      %v2046 = vmul.f32 %v2008, %v2024
      %v2047 = vmul.f32 %v2009, %v2024
      %v2048 = vmul.f32 %v2010, %v2024
      %v2049 = vmul.f32 %v2011, %v2024
      %v2050 = vmul.f32 %v2012, %v2024
      %v2051 = vmul.f32 %v2013, %v2024
      %v2052 = vmul.f32 %v2014, %v2024
      %v2053 = vmul.f32 %v2015, %v2024
      %v2054 = vmul.f32 %v2016, %v2024
      %v2055 = vmul.f32 %v2017, %v2024
      %v2056 = vmul.f32 %v2018, %v2024
      %v2057 = vmul.f32 %v2019, %v2024
      %v2058 = vadd.f32 %v1954, %v2026
      %v2059 = vadd.f32 %v1955, %v2027
      %v2060 = vadd.f32 %v1956, %v2028
      %v2061 = vadd.f32 %v1957, %v2029
      %v2062 = vadd.f32 %v1958, %v2030
      %v2063 = vadd.f32 %v1959, %v2031
      %v2064 = vadd.f32 %v1960, %v2032
      %v2065 = vadd.f32 %v1961, %v2033
      %v2066 = vadd.f32 %v1962, %v2034
      %v2067 = vadd.f32 %v1963, %v2035
      %v2068 = vadd.f32 %v1964, %v2036
      %v2069 = vadd.f32 %v1965, %v2037
      %v2070 = vadd.f32 %v1966, %v2038
      %v2071 = vadd.f32 %v1967, %v2039
      %v2072 = vadd.f32 %v1968, %v2040
      %v2073 = vadd.f32 %v1969, %v2041
      %v2074 = vadd.f32 %v1970, %v2042
      %v2075 = vadd.f32 %v1971, %v2043
      %v2076 = vadd.f32 %v1972, %v2044
      %v2077 = vadd.f32 %v1973, %v2045
      %v2078 = vadd.f32 %v1974, %v2046
      %v2079 = vadd.f32 %v1975, %v2047
      %v2080 = vadd.f32 %v1976, %v2048
      %v2081 = vadd.f32 %v1977, %v2049
      %v2082 = vadd.f32 %v1978, %v2050
      %v2083 = vadd.f32 %v1979, %v2051
      %v2084 = vadd.f32 %v1980, %v2052
      %v2085 = vadd.f32 %v1981, %v2053
      %v2086 = vadd.f32 %v1982, %v2054
      %v2087 = vadd.f32 %v1983, %v2055
      %v2088 = vadd.f32 %v1984, %v2056
      %v2089 = vadd.f32 %v1985, %v2057
      %s2090 = scalar_lea.vmem %s218, 16
      %v2091 = vld [vmem:[%s2090] sm:$0x1]
      %v2092 = vld [vmem:[%s1883 + $0x7] sm:$0xff]
      %v2093 = vld [vmem:[%s1883 + $0xf] sm:$0xff]
      %v2094 = vld [vmem:[%s1883 + $0x27] sm:$0xff]
      %v2095 = vld [vmem:[%s1883 + $0x2f] sm:$0xff]
      %v2096 = vld [vmem:[%s1883 + $0x47] sm:$0xff]
      %v2097 = vld [vmem:[%s1883 + $0x4f] sm:$0xff]
      %v2098 = vld [vmem:[%s1883 + $0x67] sm:$0xff]
      %v2099 = vld [vmem:[%s1883 + $0x6f] sm:$0xff]
      %v2100 = vld [vmem:[%s1883 + $0x87] sm:$0xff]
      %v2101 = vld [vmem:[%s1883 + $0x8f] sm:$0xff]
      %v2102 = vld [vmem:[%s1883 + $0xa7] sm:$0xff]
      %v2103 = vld [vmem:[%s1883 + $0xaf] sm:$0xff]
      %v2104 = vld [vmem:[%s1883 + $0xc7] sm:$0xff]
      %v2105 = vld [vmem:[%s1883 + $0xcf] sm:$0xff]
      %v2106 = vld [vmem:[%s1883 + $0xe7] sm:$0xff]
      %v2107 = vld [vmem:[%s1883 + $0xef] sm:$0xff]
      %v2108 = vld [vmem:[%s1883 + $0x107] sm:$0xff]
      %v2109 = vld [vmem:[%s1883 + $0x10f] sm:$0xff]
      %v2110 = vld [vmem:[%s1883 + $0x127] sm:$0xff]
      %v2111 = vld [vmem:[%s1883 + $0x12f] sm:$0xff]
      %v2112 = vld [vmem:[%s1883 + $0x147] sm:$0xff]
      %v2113 = vld [vmem:[%s1883 + $0x14f] sm:$0xff]
      %v2114 = vld [vmem:[%s1883 + $0x167] sm:$0xff]
      %v2115 = vld [vmem:[%s1883 + $0x16f] sm:$0xff]
      %v2116 = vld [vmem:[%s1883 + $0x187] sm:$0xff]
      %v2117 = vld [vmem:[%s1883 + $0x18f] sm:$0xff]
      %v2118 = vld [vmem:[%s1883 + $0x1a7] sm:$0xff]
      %v2119 = vld [vmem:[%s1883 + $0x1af] sm:$0xff]
      %v2120 = vld [vmem:[%s1883 + $0x1c7] sm:$0xff]
      %v2121 = vld [vmem:[%s1883 + $0x1cf] sm:$0xff]
      %v2122 = vld [vmem:[%s1883 + $0x1e7] sm:$0xff]
      %v2123 = vld [vmem:[%s1883 + $0x1ef] sm:$0xff]
      %v2125 = vlaneseq
      %v2126 = vshrl.u32 %v2125, 7
      %v2127 = vsub.s32 0, %v2126
      %v2128 = vrot.slane %v2091, %v2127
      %v2130 = vmul.f32 %v2092, %v2128
      %v2131 = vmul.f32 %v2093, %v2128
      %v2132 = vmul.f32 %v2094, %v2128
      %v2133 = vmul.f32 %v2095, %v2128
      %v2134 = vmul.f32 %v2096, %v2128
      %v2135 = vmul.f32 %v2097, %v2128
      %v2136 = vmul.f32 %v2098, %v2128
      %v2137 = vmul.f32 %v2099, %v2128
      %v2138 = vmul.f32 %v2100, %v2128
      %v2139 = vmul.f32 %v2101, %v2128
      %v2140 = vmul.f32 %v2102, %v2128
      %v2141 = vmul.f32 %v2103, %v2128
      %v2142 = vmul.f32 %v2104, %v2128
      %v2143 = vmul.f32 %v2105, %v2128
      %v2144 = vmul.f32 %v2106, %v2128
      %v2145 = vmul.f32 %v2107, %v2128
      %v2146 = vmul.f32 %v2108, %v2128
      %v2147 = vmul.f32 %v2109, %v2128
      %v2148 = vmul.f32 %v2110, %v2128
      %v2149 = vmul.f32 %v2111, %v2128
      %v2150 = vmul.f32 %v2112, %v2128
      %v2151 = vmul.f32 %v2113, %v2128
      %v2152 = vmul.f32 %v2114, %v2128
      %v2153 = vmul.f32 %v2115, %v2128
      %v2154 = vmul.f32 %v2116, %v2128
      %v2155 = vmul.f32 %v2117, %v2128
      %v2156 = vmul.f32 %v2118, %v2128
      %v2157 = vmul.f32 %v2119, %v2128
      %v2158 = vmul.f32 %v2120, %v2128
      %v2159 = vmul.f32 %v2121, %v2128
      %v2160 = vmul.f32 %v2122, %v2128
      %v2161 = vmul.f32 %v2123, %v2128
      %v2162 = vadd.f32 %v2058, %v2130
      %v2163 = vadd.f32 %v2059, %v2131
      %v2164 = vadd.f32 %v2060, %v2132
      %v2165 = vadd.f32 %v2061, %v2133
      %v2166 = vadd.f32 %v2062, %v2134
      %v2167 = vadd.f32 %v2063, %v2135
      %v2168 = vadd.f32 %v2064, %v2136
      %v2169 = vadd.f32 %v2065, %v2137
      %v2170 = vadd.f32 %v2066, %v2138
      %v2171 = vadd.f32 %v2067, %v2139
      %v2172 = vadd.f32 %v2068, %v2140
      %v2173 = vadd.f32 %v2069, %v2141
      %v2174 = vadd.f32 %v2070, %v2142
      %v2175 = vadd.f32 %v2071, %v2143
      %v2176 = vadd.f32 %v2072, %v2144
      %v2177 = vadd.f32 %v2073, %v2145
      %v2178 = vadd.f32 %v2074, %v2146
      %v2179 = vadd.f32 %v2075, %v2147
      %v2180 = vadd.f32 %v2076, %v2148
      %v2181 = vadd.f32 %v2077, %v2149
      %v2182 = vadd.f32 %v2078, %v2150
      %v2183 = vadd.f32 %v2079, %v2151
      %v2184 = vadd.f32 %v2080, %v2152
      %v2185 = vadd.f32 %v2081, %v2153
      %v2186 = vadd.f32 %v2082, %v2154
      %v2187 = vadd.f32 %v2083, %v2155
      %v2188 = vadd.f32 %v2084, %v2156
      %v2189 = vadd.f32 %v2085, %v2157
      %v2190 = vadd.f32 %v2086, %v2158
      %v2191 = vadd.f32 %v2087, %v2159
      %v2192 = vadd.f32 %v2088, %v2160
      %v2193 = vadd.f32 %v2089, %v2161
      %s2194 = scalar_lea.vmem %s218, 17
      %v2195 = vld [vmem:[%s2194] sm:$0x1]
      %v2196 = vld [vmem:[%s1883 + $0x8] sm:$0xff]
      %v2197 = vld [vmem:[%s1883 + $0x10] sm:$0xff]
      %v2198 = vld [vmem:[%s1883 + $0x28] sm:$0xff]
      %v2199 = vld [vmem:[%s1883 + $0x30] sm:$0xff]
      %v2200 = vld [vmem:[%s1883 + $0x48] sm:$0xff]
      %v2201 = vld [vmem:[%s1883 + $0x50] sm:$0xff]
      %v2202 = vld [vmem:[%s1883 + $0x68] sm:$0xff]
      %v2203 = vld [vmem:[%s1883 + $0x70] sm:$0xff]
      %v2204 = vld [vmem:[%s1883 + $0x88] sm:$0xff]
      %v2205 = vld [vmem:[%s1883 + $0x90] sm:$0xff]
      %v2206 = vld [vmem:[%s1883 + $0xa8] sm:$0xff]
      %v2207 = vld [vmem:[%s1883 + $0xb0] sm:$0xff]
      %v2208 = vld [vmem:[%s1883 + $0xc8] sm:$0xff]
      %v2209 = vld [vmem:[%s1883 + $0xd0] sm:$0xff]
      %v2210 = vld [vmem:[%s1883 + $0xe8] sm:$0xff]
      %v2211 = vld [vmem:[%s1883 + $0xf0] sm:$0xff]
      %v2212 = vld [vmem:[%s1883 + $0x108] sm:$0xff]
      %v2213 = vld [vmem:[%s1883 + $0x110] sm:$0xff]
      %v2214 = vld [vmem:[%s1883 + $0x128] sm:$0xff]
      %v2215 = vld [vmem:[%s1883 + $0x130] sm:$0xff]
      %v2216 = vld [vmem:[%s1883 + $0x148] sm:$0xff]
      %v2217 = vld [vmem:[%s1883 + $0x150] sm:$0xff]
      %v2218 = vld [vmem:[%s1883 + $0x168] sm:$0xff]
      %v2219 = vld [vmem:[%s1883 + $0x170] sm:$0xff]
      %v2220 = vld [vmem:[%s1883 + $0x188] sm:$0xff]
      %v2221 = vld [vmem:[%s1883 + $0x190] sm:$0xff]
      %v2222 = vld [vmem:[%s1883 + $0x1a8] sm:$0xff]
      %v2223 = vld [vmem:[%s1883 + $0x1b0] sm:$0xff]
      %v2224 = vld [vmem:[%s1883 + $0x1c8] sm:$0xff]
      %v2225 = vld [vmem:[%s1883 + $0x1d0] sm:$0xff]
      %v2226 = vld [vmem:[%s1883 + $0x1e8] sm:$0xff]
      %v2227 = vld [vmem:[%s1883 + $0x1f0] sm:$0xff]
      %v2229 = vlaneseq
      %v2230 = vshrl.u32 %v2229, 7
      %v2231 = vsub.s32 0, %v2230
      %v2232 = vrot.slane %v2195, %v2231
      %v2234 = vmul.f32 %v2196, %v2232
      %v2235 = vmul.f32 %v2197, %v2232
      %v2236 = vmul.f32 %v2198, %v2232
      %v2237 = vmul.f32 %v2199, %v2232
      %v2238 = vmul.f32 %v2200, %v2232
      %v2239 = vmul.f32 %v2201, %v2232
      %v2240 = vmul.f32 %v2202, %v2232
      %v2241 = vmul.f32 %v2203, %v2232
      %v2242 = vmul.f32 %v2204, %v2232
      %v2243 = vmul.f32 %v2205, %v2232
      %v2244 = vmul.f32 %v2206, %v2232
      %v2245 = vmul.f32 %v2207, %v2232
      %v2246 = vmul.f32 %v2208, %v2232
      %v2247 = vmul.f32 %v2209, %v2232
      %v2248 = vmul.f32 %v2210, %v2232
      %v2249 = vmul.f32 %v2211, %v2232
      %v2250 = vmul.f32 %v2212, %v2232
      %v2251 = vmul.f32 %v2213, %v2232
      %v2252 = vmul.f32 %v2214, %v2232
      %v2253 = vmul.f32 %v2215, %v2232
      %v2254 = vmul.f32 %v2216, %v2232
      %v2255 = vmul.f32 %v2217, %v2232
      %v2256 = vmul.f32 %v2218, %v2232
      %v2257 = vmul.f32 %v2219, %v2232
      %v2258 = vmul.f32 %v2220, %v2232
      %v2259 = vmul.f32 %v2221, %v2232
      %v2260 = vmul.f32 %v2222, %v2232
      %v2261 = vmul.f32 %v2223, %v2232
      %v2262 = vmul.f32 %v2224, %v2232
      %v2263 = vmul.f32 %v2225, %v2232
      %v2264 = vmul.f32 %v2226, %v2232
      %v2265 = vmul.f32 %v2227, %v2232
      %v2266 = vadd.f32 %v2162, %v2234
      %v2267 = vadd.f32 %v2163, %v2235
      %v2268 = vadd.f32 %v2164, %v2236
      %v2269 = vadd.f32 %v2165, %v2237
      %v2270 = vadd.f32 %v2166, %v2238
      %v2271 = vadd.f32 %v2167, %v2239
      %v2272 = vadd.f32 %v2168, %v2240
      %v2273 = vadd.f32 %v2169, %v2241
      %v2274 = vadd.f32 %v2170, %v2242
      %v2275 = vadd.f32 %v2171, %v2243
      %v2276 = vadd.f32 %v2172, %v2244
      %v2277 = vadd.f32 %v2173, %v2245
      %v2278 = vadd.f32 %v2174, %v2246
      %v2279 = vadd.f32 %v2175, %v2247
      %v2280 = vadd.f32 %v2176, %v2248
      %v2281 = vadd.f32 %v2177, %v2249
      %v2282 = vadd.f32 %v2178, %v2250
      %v2283 = vadd.f32 %v2179, %v2251
      %v2284 = vadd.f32 %v2180, %v2252
      %v2285 = vadd.f32 %v2181, %v2253
      %v2286 = vadd.f32 %v2182, %v2254
      %v2287 = vadd.f32 %v2183, %v2255
      %v2288 = vadd.f32 %v2184, %v2256
      %v2289 = vadd.f32 %v2185, %v2257
      %v2290 = vadd.f32 %v2186, %v2258
      %v2291 = vadd.f32 %v2187, %v2259
      %v2292 = vadd.f32 %v2188, %v2260
      %v2293 = vadd.f32 %v2189, %v2261
      %v2294 = vadd.f32 %v2190, %v2262
      %v2295 = vadd.f32 %v2191, %v2263
      %v2296 = vadd.f32 %v2192, %v2264
      %v2297 = vadd.f32 %v2193, %v2265
      %s2298 = scalar_lea.vmem %s218, 18
      %v2299 = vld [vmem:[%s2298] sm:$0x1]
      %v2300 = vld [vmem:[%s1883 + $0x9] sm:$0xff]
      %v2301 = vld [vmem:[%s1883 + $0x11] sm:$0xff]
      %v2302 = vld [vmem:[%s1883 + $0x29] sm:$0xff]
      %v2303 = vld [vmem:[%s1883 + $0x31] sm:$0xff]
      %v2304 = vld [vmem:[%s1883 + $0x49] sm:$0xff]
      %v2305 = vld [vmem:[%s1883 + $0x51] sm:$0xff]
      %v2306 = vld [vmem:[%s1883 + $0x69] sm:$0xff]
      %v2307 = vld [vmem:[%s1883 + $0x71] sm:$0xff]
      %v2308 = vld [vmem:[%s1883 + $0x89] sm:$0xff]
      %v2309 = vld [vmem:[%s1883 + $0x91] sm:$0xff]
      %v2310 = vld [vmem:[%s1883 + $0xa9] sm:$0xff]
      %v2311 = vld [vmem:[%s1883 + $0xb1] sm:$0xff]
      %v2312 = vld [vmem:[%s1883 + $0xc9] sm:$0xff]
      %v2313 = vld [vmem:[%s1883 + $0xd1] sm:$0xff]
      %v2314 = vld [vmem:[%s1883 + $0xe9] sm:$0xff]
      %v2315 = vld [vmem:[%s1883 + $0xf1] sm:$0xff]
      %v2316 = vld [vmem:[%s1883 + $0x109] sm:$0xff]
      %v2317 = vld [vmem:[%s1883 + $0x111] sm:$0xff]
      %v2318 = vld [vmem:[%s1883 + $0x129] sm:$0xff]
      %v2319 = vld [vmem:[%s1883 + $0x131] sm:$0xff]
      %v2320 = vld [vmem:[%s1883 + $0x149] sm:$0xff]
      %v2321 = vld [vmem:[%s1883 + $0x151] sm:$0xff]
      %v2322 = vld [vmem:[%s1883 + $0x169] sm:$0xff]
      %v2323 = vld [vmem:[%s1883 + $0x171] sm:$0xff]
      %v2324 = vld [vmem:[%s1883 + $0x189] sm:$0xff]
      %v2325 = vld [vmem:[%s1883 + $0x191] sm:$0xff]
      %v2326 = vld [vmem:[%s1883 + $0x1a9] sm:$0xff]
      %v2327 = vld [vmem:[%s1883 + $0x1b1] sm:$0xff]
      %v2328 = vld [vmem:[%s1883 + $0x1c9] sm:$0xff]
      %v2329 = vld [vmem:[%s1883 + $0x1d1] sm:$0xff]
      %v2330 = vld [vmem:[%s1883 + $0x1e9] sm:$0xff]
      %v2331 = vld [vmem:[%s1883 + $0x1f1] sm:$0xff]
      %v2333 = vlaneseq
      %v2334 = vshrl.u32 %v2333, 7
      %v2335 = vsub.s32 0, %v2334
      %v2336 = vrot.slane %v2299, %v2335
      %v2338 = vmul.f32 %v2300, %v2336
      %v2339 = vmul.f32 %v2301, %v2336
      %v2340 = vmul.f32 %v2302, %v2336
      %v2341 = vmul.f32 %v2303, %v2336
      %v2342 = vmul.f32 %v2304, %v2336
      %v2343 = vmul.f32 %v2305, %v2336
      %v2344 = vmul.f32 %v2306, %v2336
      %v2345 = vmul.f32 %v2307, %v2336
      %v2346 = vmul.f32 %v2308, %v2336
      %v2347 = vmul.f32 %v2309, %v2336
      %v2348 = vmul.f32 %v2310, %v2336
      %v2349 = vmul.f32 %v2311, %v2336
      %v2350 = vmul.f32 %v2312, %v2336
      %v2351 = vmul.f32 %v2313, %v2336
      %v2352 = vmul.f32 %v2314, %v2336
      %v2353 = vmul.f32 %v2315, %v2336
      %v2354 = vmul.f32 %v2316, %v2336
      %v2355 = vmul.f32 %v2317, %v2336
      %v2356 = vmul.f32 %v2318, %v2336
      %v2357 = vmul.f32 %v2319, %v2336
      %v2358 = vmul.f32 %v2320, %v2336
      %v2359 = vmul.f32 %v2321, %v2336
      %v2360 = vmul.f32 %v2322, %v2336
      %v2361 = vmul.f32 %v2323, %v2336
      %v2362 = vmul.f32 %v2324, %v2336
      %v2363 = vmul.f32 %v2325, %v2336
      %v2364 = vmul.f32 %v2326, %v2336
      %v2365 = vmul.f32 %v2327, %v2336
      %v2366 = vmul.f32 %v2328, %v2336
      %v2367 = vmul.f32 %v2329, %v2336
      %v2368 = vmul.f32 %v2330, %v2336
      %v2369 = vmul.f32 %v2331, %v2336
      %v2370 = vadd.f32 %v2266, %v2338
      %v2371 = vadd.f32 %v2267, %v2339
      %v2372 = vadd.f32 %v2268, %v2340
      %v2373 = vadd.f32 %v2269, %v2341
      %v2374 = vadd.f32 %v2270, %v2342
      %v2375 = vadd.f32 %v2271, %v2343
      %v2376 = vadd.f32 %v2272, %v2344
      %v2377 = vadd.f32 %v2273, %v2345
      %v2378 = vadd.f32 %v2274, %v2346
      %v2379 = vadd.f32 %v2275, %v2347
      %v2380 = vadd.f32 %v2276, %v2348
      %v2381 = vadd.f32 %v2277, %v2349
      %v2382 = vadd.f32 %v2278, %v2350
      %v2383 = vadd.f32 %v2279, %v2351
      %v2384 = vadd.f32 %v2280, %v2352
      %v2385 = vadd.f32 %v2281, %v2353
      %v2386 = vadd.f32 %v2282, %v2354
      %v2387 = vadd.f32 %v2283, %v2355
      %v2388 = vadd.f32 %v2284, %v2356
      %v2389 = vadd.f32 %v2285, %v2357
      %v2390 = vadd.f32 %v2286, %v2358
      %v2391 = vadd.f32 %v2287, %v2359
      %v2392 = vadd.f32 %v2288, %v2360
      %v2393 = vadd.f32 %v2289, %v2361
      %v2394 = vadd.f32 %v2290, %v2362
      %v2395 = vadd.f32 %v2291, %v2363
      %v2396 = vadd.f32 %v2292, %v2364
      %v2397 = vadd.f32 %v2293, %v2365
      %v2398 = vadd.f32 %v2294, %v2366
      %v2399 = vadd.f32 %v2295, %v2367
      %v2400 = vadd.f32 %v2296, %v2368
      %v2401 = vadd.f32 %v2297, %v2369
      %s2402 = scalar_lea.vmem %s218, 19
      %v2403 = vld [vmem:[%s2402] sm:$0x1]
      %v2404 = vld [vmem:[%s1883 + $0xa] sm:$0xff]
      %v2405 = vld [vmem:[%s1883 + $0x12] sm:$0xff]
      %v2406 = vld [vmem:[%s1883 + $0x2a] sm:$0xff]
      %v2407 = vld [vmem:[%s1883 + $0x32] sm:$0xff]
      %v2408 = vld [vmem:[%s1883 + $0x4a] sm:$0xff]
      %v2409 = vld [vmem:[%s1883 + $0x52] sm:$0xff]
      %v2410 = vld [vmem:[%s1883 + $0x6a] sm:$0xff]
      %v2411 = vld [vmem:[%s1883 + $0x72] sm:$0xff]
      %v2412 = vld [vmem:[%s1883 + $0x8a] sm:$0xff]
      %v2413 = vld [vmem:[%s1883 + $0x92] sm:$0xff]
      %v2414 = vld [vmem:[%s1883 + $0xaa] sm:$0xff]
      %v2415 = vld [vmem:[%s1883 + $0xb2] sm:$0xff]
      %v2416 = vld [vmem:[%s1883 + $0xca] sm:$0xff]
      %v2417 = vld [vmem:[%s1883 + $0xd2] sm:$0xff]
      %v2418 = vld [vmem:[%s1883 + $0xea] sm:$0xff]
      %v2419 = vld [vmem:[%s1883 + $0xf2] sm:$0xff]
      %v2420 = vld [vmem:[%s1883 + $0x10a] sm:$0xff]
      %v2421 = vld [vmem:[%s1883 + $0x112] sm:$0xff]
      %v2422 = vld [vmem:[%s1883 + $0x12a] sm:$0xff]
      %v2423 = vld [vmem:[%s1883 + $0x132] sm:$0xff]
      %v2424 = vld [vmem:[%s1883 + $0x14a] sm:$0xff]
      %v2425 = vld [vmem:[%s1883 + $0x152] sm:$0xff]
      %v2426 = vld [vmem:[%s1883 + $0x16a] sm:$0xff]
      %v2427 = vld [vmem:[%s1883 + $0x172] sm:$0xff]
      %v2428 = vld [vmem:[%s1883 + $0x18a] sm:$0xff]
      %v2429 = vld [vmem:[%s1883 + $0x192] sm:$0xff]
      %v2430 = vld [vmem:[%s1883 + $0x1aa] sm:$0xff]
      %v2431 = vld [vmem:[%s1883 + $0x1b2] sm:$0xff]
      %v2432 = vld [vmem:[%s1883 + $0x1ca] sm:$0xff]
      %v2433 = vld [vmem:[%s1883 + $0x1d2] sm:$0xff]
      %v2434 = vld [vmem:[%s1883 + $0x1ea] sm:$0xff]
      %v2435 = vld [vmem:[%s1883 + $0x1f2] sm:$0xff]
      %v2437 = vlaneseq
      %v2438 = vshrl.u32 %v2437, 7
      %v2439 = vsub.s32 0, %v2438
      %v2440 = vrot.slane %v2403, %v2439
      %v2442 = vmul.f32 %v2404, %v2440
      %v2443 = vmul.f32 %v2405, %v2440
      %v2444 = vmul.f32 %v2406, %v2440
      %v2445 = vmul.f32 %v2407, %v2440
      %v2446 = vmul.f32 %v2408, %v2440
      %v2447 = vmul.f32 %v2409, %v2440
      %v2448 = vmul.f32 %v2410, %v2440
      %v2449 = vmul.f32 %v2411, %v2440
      %v2450 = vmul.f32 %v2412, %v2440
      %v2451 = vmul.f32 %v2413, %v2440
      %v2452 = vmul.f32 %v2414, %v2440
      %v2453 = vmul.f32 %v2415, %v2440
      %v2454 = vmul.f32 %v2416, %v2440
      %v2455 = vmul.f32 %v2417, %v2440
      %v2456 = vmul.f32 %v2418, %v2440
      %v2457 = vmul.f32 %v2419, %v2440
      %v2458 = vmul.f32 %v2420, %v2440
      %v2459 = vmul.f32 %v2421, %v2440
      %v2460 = vmul.f32 %v2422, %v2440
      %v2461 = vmul.f32 %v2423, %v2440
      %v2462 = vmul.f32 %v2424, %v2440
      %v2463 = vmul.f32 %v2425, %v2440
      %v2464 = vmul.f32 %v2426, %v2440
      %v2465 = vmul.f32 %v2427, %v2440
      %v2466 = vmul.f32 %v2428, %v2440
      %v2467 = vmul.f32 %v2429, %v2440
      %v2468 = vmul.f32 %v2430, %v2440
      %v2469 = vmul.f32 %v2431, %v2440
      %v2470 = vmul.f32 %v2432, %v2440
      %v2471 = vmul.f32 %v2433, %v2440
      %v2472 = vmul.f32 %v2434, %v2440
      %v2473 = vmul.f32 %v2435, %v2440
      %v2474 = vadd.f32 %v2370, %v2442
      %v2475 = vadd.f32 %v2371, %v2443
      %v2476 = vadd.f32 %v2372, %v2444
      %v2477 = vadd.f32 %v2373, %v2445
      %v2478 = vadd.f32 %v2374, %v2446
      %v2479 = vadd.f32 %v2375, %v2447
      %v2480 = vadd.f32 %v2376, %v2448
      %v2481 = vadd.f32 %v2377, %v2449
      %v2482 = vadd.f32 %v2378, %v2450
      %v2483 = vadd.f32 %v2379, %v2451
      %v2484 = vadd.f32 %v2380, %v2452
      %v2485 = vadd.f32 %v2381, %v2453
      %v2486 = vadd.f32 %v2382, %v2454
      %v2487 = vadd.f32 %v2383, %v2455
      %v2488 = vadd.f32 %v2384, %v2456
      %v2489 = vadd.f32 %v2385, %v2457
      %v2490 = vadd.f32 %v2386, %v2458
      %v2491 = vadd.f32 %v2387, %v2459
      %v2492 = vadd.f32 %v2388, %v2460
      %v2493 = vadd.f32 %v2389, %v2461
      %v2494 = vadd.f32 %v2390, %v2462
      %v2495 = vadd.f32 %v2391, %v2463
      %v2496 = vadd.f32 %v2392, %v2464
      %v2497 = vadd.f32 %v2393, %v2465
      %v2498 = vadd.f32 %v2394, %v2466
      %v2499 = vadd.f32 %v2395, %v2467
      %v2500 = vadd.f32 %v2396, %v2468
      %v2501 = vadd.f32 %v2397, %v2469
      %v2502 = vadd.f32 %v2398, %v2470
      %v2503 = vadd.f32 %v2399, %v2471
      %v2504 = vadd.f32 %v2400, %v2472
      %v2505 = vadd.f32 %v2401, %v2473
      %s2506 = scalar_lea.vmem %s218, 20
      %v2507 = vld [vmem:[%s2506] sm:$0x1]
      %v2508 = vld [vmem:[%s1883 + $0xb] sm:$0xff]
      %v2509 = vld [vmem:[%s1883 + $0x13] sm:$0xff]
      %v2510 = vld [vmem:[%s1883 + $0x2b] sm:$0xff]
      %v2511 = vld [vmem:[%s1883 + $0x33] sm:$0xff]
      %v2512 = vld [vmem:[%s1883 + $0x4b] sm:$0xff]
      %v2513 = vld [vmem:[%s1883 + $0x53] sm:$0xff]
      %v2514 = vld [vmem:[%s1883 + $0x6b] sm:$0xff]
      %v2515 = vld [vmem:[%s1883 + $0x73] sm:$0xff]
      %v2516 = vld [vmem:[%s1883 + $0x8b] sm:$0xff]
      %v2517 = vld [vmem:[%s1883 + $0x93] sm:$0xff]
      %v2518 = vld [vmem:[%s1883 + $0xab] sm:$0xff]
      %v2519 = vld [vmem:[%s1883 + $0xb3] sm:$0xff]
      %v2520 = vld [vmem:[%s1883 + $0xcb] sm:$0xff]
      %v2521 = vld [vmem:[%s1883 + $0xd3] sm:$0xff]
      %v2522 = vld [vmem:[%s1883 + $0xeb] sm:$0xff]
      %v2523 = vld [vmem:[%s1883 + $0xf3] sm:$0xff]
      %v2524 = vld [vmem:[%s1883 + $0x10b] sm:$0xff]
      %v2525 = vld [vmem:[%s1883 + $0x113] sm:$0xff]
      %v2526 = vld [vmem:[%s1883 + $0x12b] sm:$0xff]
      %v2527 = vld [vmem:[%s1883 + $0x133] sm:$0xff]
      %v2528 = vld [vmem:[%s1883 + $0x14b] sm:$0xff]
      %v2529 = vld [vmem:[%s1883 + $0x153] sm:$0xff]
      %v2530 = vld [vmem:[%s1883 + $0x16b] sm:$0xff]
      %v2531 = vld [vmem:[%s1883 + $0x173] sm:$0xff]
      %v2532 = vld [vmem:[%s1883 + $0x18b] sm:$0xff]
      %v2533 = vld [vmem:[%s1883 + $0x193] sm:$0xff]
      %v2534 = vld [vmem:[%s1883 + $0x1ab] sm:$0xff]
      %v2535 = vld [vmem:[%s1883 + $0x1b3] sm:$0xff]
      %v2536 = vld [vmem:[%s1883 + $0x1cb] sm:$0xff]
      %v2537 = vld [vmem:[%s1883 + $0x1d3] sm:$0xff]
      %v2538 = vld [vmem:[%s1883 + $0x1eb] sm:$0xff]
      %v2539 = vld [vmem:[%s1883 + $0x1f3] sm:$0xff]
      %v2541 = vlaneseq
      %v2542 = vshrl.u32 %v2541, 7
      %v2543 = vsub.s32 0, %v2542
      %v2544 = vrot.slane %v2507, %v2543
      %v2546 = vmul.f32 %v2508, %v2544
      %v2547 = vmul.f32 %v2509, %v2544
      %v2548 = vmul.f32 %v2510, %v2544
      %v2549 = vmul.f32 %v2511, %v2544
      %v2550 = vmul.f32 %v2512, %v2544
      %v2551 = vmul.f32 %v2513, %v2544
      %v2552 = vmul.f32 %v2514, %v2544
      %v2553 = vmul.f32 %v2515, %v2544
      %v2554 = vmul.f32 %v2516, %v2544
      %v2555 = vmul.f32 %v2517, %v2544
      %v2556 = vmul.f32 %v2518, %v2544
      %v2557 = vmul.f32 %v2519, %v2544
      %v2558 = vmul.f32 %v2520, %v2544
      %v2559 = vmul.f32 %v2521, %v2544
      %v2560 = vmul.f32 %v2522, %v2544
      %v2561 = vmul.f32 %v2523, %v2544
      %v2562 = vmul.f32 %v2524, %v2544
      %v2563 = vmul.f32 %v2525, %v2544
      %v2564 = vmul.f32 %v2526, %v2544
      %v2565 = vmul.f32 %v2527, %v2544
      %v2566 = vmul.f32 %v2528, %v2544
      %v2567 = vmul.f32 %v2529, %v2544
      %v2568 = vmul.f32 %v2530, %v2544
      %v2569 = vmul.f32 %v2531, %v2544
      %v2570 = vmul.f32 %v2532, %v2544
      %v2571 = vmul.f32 %v2533, %v2544
      %v2572 = vmul.f32 %v2534, %v2544
      %v2573 = vmul.f32 %v2535, %v2544
      %v2574 = vmul.f32 %v2536, %v2544
      %v2575 = vmul.f32 %v2537, %v2544
      %v2576 = vmul.f32 %v2538, %v2544
      %v2577 = vmul.f32 %v2539, %v2544
      %v2578 = vadd.f32 %v2474, %v2546
      %v2579 = vadd.f32 %v2475, %v2547
      %v2580 = vadd.f32 %v2476, %v2548
      %v2581 = vadd.f32 %v2477, %v2549
      %v2582 = vadd.f32 %v2478, %v2550
      %v2583 = vadd.f32 %v2479, %v2551
      %v2584 = vadd.f32 %v2480, %v2552
      %v2585 = vadd.f32 %v2481, %v2553
      %v2586 = vadd.f32 %v2482, %v2554
      %v2587 = vadd.f32 %v2483, %v2555
      %v2588 = vadd.f32 %v2484, %v2556
      %v2589 = vadd.f32 %v2485, %v2557
      %v2590 = vadd.f32 %v2486, %v2558
      %v2591 = vadd.f32 %v2487, %v2559
      %v2592 = vadd.f32 %v2488, %v2560
      %v2593 = vadd.f32 %v2489, %v2561
      %v2594 = vadd.f32 %v2490, %v2562
      %v2595 = vadd.f32 %v2491, %v2563
      %v2596 = vadd.f32 %v2492, %v2564
      %v2597 = vadd.f32 %v2493, %v2565
      %v2598 = vadd.f32 %v2494, %v2566
      %v2599 = vadd.f32 %v2495, %v2567
      %v2600 = vadd.f32 %v2496, %v2568
      %v2601 = vadd.f32 %v2497, %v2569
      %v2602 = vadd.f32 %v2498, %v2570
      %v2603 = vadd.f32 %v2499, %v2571
      %v2604 = vadd.f32 %v2500, %v2572
      %v2605 = vadd.f32 %v2501, %v2573
      %v2606 = vadd.f32 %v2502, %v2574
      %v2607 = vadd.f32 %v2503, %v2575
      %v2608 = vadd.f32 %v2504, %v2576
      %v2609 = vadd.f32 %v2505, %v2577
      %s2610 = scalar_lea.vmem %s218, 21
      %v2611 = vld [vmem:[%s2610] sm:$0x1]
      %v2612 = vld [vmem:[%s257 + $0x5] sm:$0xff]
      %v2613 = vld [vmem:[%s257 + $0xd] sm:$0xff]
      %v2614 = vld [vmem:[%s257 + $0x25] sm:$0xff]
      %v2615 = vld [vmem:[%s257 + $0x2d] sm:$0xff]
      %v2616 = vld [vmem:[%s257 + $0x45] sm:$0xff]
      %v2617 = vld [vmem:[%s257 + $0x4d] sm:$0xff]
      %v2618 = vld [vmem:[%s257 + $0x65] sm:$0xff]
      %v2619 = vld [vmem:[%s257 + $0x6d] sm:$0xff]
      %v2620 = vld [vmem:[%s257 + $0x85] sm:$0xff]
      %v2621 = vld [vmem:[%s257 + $0x8d] sm:$0xff]
      %v2622 = vld [vmem:[%s257 + $0xa5] sm:$0xff]
      %v2623 = vld [vmem:[%s257 + $0xad] sm:$0xff]
      %v2624 = vld [vmem:[%s257 + $0xc5] sm:$0xff]
      %v2625 = vld [vmem:[%s257 + $0xcd] sm:$0xff]
      %v2626 = vld [vmem:[%s257 + $0xe5] sm:$0xff]
      %v2627 = vld [vmem:[%s257 + $0xed] sm:$0xff]
      %v2628 = vld [vmem:[%s257 + $0x105] sm:$0xff]
      %v2629 = vld [vmem:[%s257 + $0x10d] sm:$0xff]
      %v2630 = vld [vmem:[%s257 + $0x125] sm:$0xff]
      %v2631 = vld [vmem:[%s257 + $0x12d] sm:$0xff]
      %v2632 = vld [vmem:[%s257 + $0x145] sm:$0xff]
      %v2633 = vld [vmem:[%s257 + $0x14d] sm:$0xff]
      %v2634 = vld [vmem:[%s257 + $0x165] sm:$0xff]
      %v2635 = vld [vmem:[%s257 + $0x16d] sm:$0xff]
      %v2636 = vld [vmem:[%s257 + $0x185] sm:$0xff]
      %v2637 = vld [vmem:[%s257 + $0x18d] sm:$0xff]
      %v2638 = vld [vmem:[%s257 + $0x1a5] sm:$0xff]
      %v2639 = vld [vmem:[%s257 + $0x1ad] sm:$0xff]
      %v2640 = vld [vmem:[%s257 + $0x1c5] sm:$0xff]
      %v2641 = vld [vmem:[%s257 + $0x1cd] sm:$0xff]
      %v2642 = vld [vmem:[%s257 + $0x1e5] sm:$0xff]
      %v2643 = vld [vmem:[%s257 + $0x1ed] sm:$0xff]
      %v2645 = vlaneseq
      %v2646 = vshrl.u32 %v2645, 7
      %v2647 = vsub.s32 0, %v2646
      %v2648 = vrot.slane %v2611, %v2647
      %v2650 = vmul.f32 %v2612, %v2648
      %v2651 = vmul.f32 %v2613, %v2648
      %v2652 = vmul.f32 %v2614, %v2648
      %v2653 = vmul.f32 %v2615, %v2648
      %v2654 = vmul.f32 %v2616, %v2648
      %v2655 = vmul.f32 %v2617, %v2648
      %v2656 = vmul.f32 %v2618, %v2648
      %v2657 = vmul.f32 %v2619, %v2648
      %v2658 = vmul.f32 %v2620, %v2648
      %v2659 = vmul.f32 %v2621, %v2648
      %v2660 = vmul.f32 %v2622, %v2648
      %v2661 = vmul.f32 %v2623, %v2648
      %v2662 = vmul.f32 %v2624, %v2648
      %v2663 = vmul.f32 %v2625, %v2648
      %v2664 = vmul.f32 %v2626, %v2648
      %v2665 = vmul.f32 %v2627, %v2648
      %v2666 = vmul.f32 %v2628, %v2648
      %v2667 = vmul.f32 %v2629, %v2648
      %v2668 = vmul.f32 %v2630, %v2648
      %v2669 = vmul.f32 %v2631, %v2648
      %v2670 = vmul.f32 %v2632, %v2648
      %v2671 = vmul.f32 %v2633, %v2648
      %v2672 = vmul.f32 %v2634, %v2648
      %v2673 = vmul.f32 %v2635, %v2648
      %v2674 = vmul.f32 %v2636, %v2648
      %v2675 = vmul.f32 %v2637, %v2648
      %v2676 = vmul.f32 %v2638, %v2648
      %v2677 = vmul.f32 %v2639, %v2648
      %v2678 = vmul.f32 %v2640, %v2648
      %v2679 = vmul.f32 %v2641, %v2648
      %v2680 = vmul.f32 %v2642, %v2648
      %v2681 = vmul.f32 %v2643, %v2648
      %v2682 = vadd.f32 %v2578, %v2650
      %v2683 = vadd.f32 %v2579, %v2651
      %v2684 = vadd.f32 %v2580, %v2652
      %v2685 = vadd.f32 %v2581, %v2653
      %v2686 = vadd.f32 %v2582, %v2654
      %v2687 = vadd.f32 %v2583, %v2655
      %v2688 = vadd.f32 %v2584, %v2656
      %v2689 = vadd.f32 %v2585, %v2657
      %v2690 = vadd.f32 %v2586, %v2658
      %v2691 = vadd.f32 %v2587, %v2659
      %v2692 = vadd.f32 %v2588, %v2660
      %v2693 = vadd.f32 %v2589, %v2661
      %v2694 = vadd.f32 %v2590, %v2662
      %v2695 = vadd.f32 %v2591, %v2663
      %v2696 = vadd.f32 %v2592, %v2664
      %v2697 = vadd.f32 %v2593, %v2665
      %v2698 = vadd.f32 %v2594, %v2666
      %v2699 = vadd.f32 %v2595, %v2667
      %v2700 = vadd.f32 %v2596, %v2668
      %v2701 = vadd.f32 %v2597, %v2669
      %v2702 = vadd.f32 %v2598, %v2670
      %v2703 = vadd.f32 %v2599, %v2671
      %v2704 = vadd.f32 %v2600, %v2672
      %v2705 = vadd.f32 %v2601, %v2673
      %v2706 = vadd.f32 %v2602, %v2674
      %v2707 = vadd.f32 %v2603, %v2675
      %v2708 = vadd.f32 %v2604, %v2676
      %v2709 = vadd.f32 %v2605, %v2677
      %v2710 = vadd.f32 %v2606, %v2678
      %v2711 = vadd.f32 %v2607, %v2679
      %v2712 = vadd.f32 %v2608, %v2680
      %v2713 = vadd.f32 %v2609, %v2681
      %s2714 = scalar_lea.vmem %s218, 22
      %v2715 = vld [vmem:[%s2714] sm:$0x1]
      %v2716 = vld [vmem:[%s257 + $0x6] sm:$0xff]
      %v2717 = vld [vmem:[%s257 + $0xe] sm:$0xff]
      %v2718 = vld [vmem:[%s257 + $0x26] sm:$0xff]
      %v2719 = vld [vmem:[%s257 + $0x2e] sm:$0xff]
      %v2720 = vld [vmem:[%s257 + $0x46] sm:$0xff]
      %v2721 = vld [vmem:[%s257 + $0x4e] sm:$0xff]
      %v2722 = vld [vmem:[%s257 + $0x66] sm:$0xff]
      %v2723 = vld [vmem:[%s257 + $0x6e] sm:$0xff]
      %v2724 = vld [vmem:[%s257 + $0x86] sm:$0xff]
      %v2725 = vld [vmem:[%s257 + $0x8e] sm:$0xff]
      %v2726 = vld [vmem:[%s257 + $0xa6] sm:$0xff]
      %v2727 = vld [vmem:[%s257 + $0xae] sm:$0xff]
      %v2728 = vld [vmem:[%s257 + $0xc6] sm:$0xff]
      %v2729 = vld [vmem:[%s257 + $0xce] sm:$0xff]
      %v2730 = vld [vmem:[%s257 + $0xe6] sm:$0xff]
      %v2731 = vld [vmem:[%s257 + $0xee] sm:$0xff]
      %v2732 = vld [vmem:[%s257 + $0x106] sm:$0xff]
      %v2733 = vld [vmem:[%s257 + $0x10e] sm:$0xff]
      %v2734 = vld [vmem:[%s257 + $0x126] sm:$0xff]
      %v2735 = vld [vmem:[%s257 + $0x12e] sm:$0xff]
      %v2736 = vld [vmem:[%s257 + $0x146] sm:$0xff]
      %v2737 = vld [vmem:[%s257 + $0x14e] sm:$0xff]
      %v2738 = vld [vmem:[%s257 + $0x166] sm:$0xff]
      %v2739 = vld [vmem:[%s257 + $0x16e] sm:$0xff]
      %v2740 = vld [vmem:[%s257 + $0x186] sm:$0xff]
      %v2741 = vld [vmem:[%s257 + $0x18e] sm:$0xff]
      %v2742 = vld [vmem:[%s257 + $0x1a6] sm:$0xff]
      %v2743 = vld [vmem:[%s257 + $0x1ae] sm:$0xff]
      %v2744 = vld [vmem:[%s257 + $0x1c6] sm:$0xff]
      %v2745 = vld [vmem:[%s257 + $0x1ce] sm:$0xff]
      %v2746 = vld [vmem:[%s257 + $0x1e6] sm:$0xff]
      %v2747 = vld [vmem:[%s257 + $0x1ee] sm:$0xff]
      %v2749 = vlaneseq
      %v2750 = vshrl.u32 %v2749, 7
      %v2751 = vsub.s32 0, %v2750
      %v2752 = vrot.slane %v2715, %v2751
      %v2754 = vmul.f32 %v2716, %v2752
      %v2755 = vmul.f32 %v2717, %v2752
      %v2756 = vmul.f32 %v2718, %v2752
      %v2757 = vmul.f32 %v2719, %v2752
      %v2758 = vmul.f32 %v2720, %v2752
      %v2759 = vmul.f32 %v2721, %v2752
      %v2760 = vmul.f32 %v2722, %v2752
      %v2761 = vmul.f32 %v2723, %v2752
      %v2762 = vmul.f32 %v2724, %v2752
      %v2763 = vmul.f32 %v2725, %v2752
      %v2764 = vmul.f32 %v2726, %v2752
      %v2765 = vmul.f32 %v2727, %v2752
      %v2766 = vmul.f32 %v2728, %v2752
      %v2767 = vmul.f32 %v2729, %v2752
      %v2768 = vmul.f32 %v2730, %v2752
      %v2769 = vmul.f32 %v2731, %v2752
      %v2770 = vmul.f32 %v2732, %v2752
      %v2771 = vmul.f32 %v2733, %v2752
      %v2772 = vmul.f32 %v2734, %v2752
      %v2773 = vmul.f32 %v2735, %v2752
      %v2774 = vmul.f32 %v2736, %v2752
      %v2775 = vmul.f32 %v2737, %v2752
      %v2776 = vmul.f32 %v2738, %v2752
      %v2777 = vmul.f32 %v2739, %v2752
      %v2778 = vmul.f32 %v2740, %v2752
      %v2779 = vmul.f32 %v2741, %v2752
      %v2780 = vmul.f32 %v2742, %v2752
      %v2781 = vmul.f32 %v2743, %v2752
      %v2782 = vmul.f32 %v2744, %v2752
      %v2783 = vmul.f32 %v2745, %v2752
      %v2784 = vmul.f32 %v2746, %v2752
      %v2785 = vmul.f32 %v2747, %v2752
      %v2786 = vadd.f32 %v2682, %v2754
      %v2787 = vadd.f32 %v2683, %v2755
      %v2788 = vadd.f32 %v2684, %v2756
      %v2789 = vadd.f32 %v2685, %v2757
      %v2790 = vadd.f32 %v2686, %v2758
      %v2791 = vadd.f32 %v2687, %v2759
      %v2792 = vadd.f32 %v2688, %v2760
      %v2793 = vadd.f32 %v2689, %v2761
      %v2794 = vadd.f32 %v2690, %v2762
      %v2795 = vadd.f32 %v2691, %v2763
      %v2796 = vadd.f32 %v2692, %v2764
      %v2797 = vadd.f32 %v2693, %v2765
      %v2798 = vadd.f32 %v2694, %v2766
      %v2799 = vadd.f32 %v2695, %v2767
      %v2800 = vadd.f32 %v2696, %v2768
      %v2801 = vadd.f32 %v2697, %v2769
      %v2802 = vadd.f32 %v2698, %v2770
      %v2803 = vadd.f32 %v2699, %v2771
      %v2804 = vadd.f32 %v2700, %v2772
      %v2805 = vadd.f32 %v2701, %v2773
      %v2806 = vadd.f32 %v2702, %v2774
      %v2807 = vadd.f32 %v2703, %v2775
      %v2808 = vadd.f32 %v2704, %v2776
      %v2809 = vadd.f32 %v2705, %v2777
      %v2810 = vadd.f32 %v2706, %v2778
      %v2811 = vadd.f32 %v2707, %v2779
      %v2812 = vadd.f32 %v2708, %v2780
      %v2813 = vadd.f32 %v2709, %v2781
      %v2814 = vadd.f32 %v2710, %v2782
      %v2815 = vadd.f32 %v2711, %v2783
      %v2816 = vadd.f32 %v2712, %v2784
      %v2817 = vadd.f32 %v2713, %v2785
      %s2818 = scalar_lea.vmem %s218, 23
      %v2819 = vld [vmem:[%s2818] sm:$0x1]
      %v2820 = vld [vmem:[%s257 + $0x7] sm:$0xff]
      %v2821 = vld [vmem:[%s257 + $0xf] sm:$0xff]
      %v2822 = vld [vmem:[%s257 + $0x27] sm:$0xff]
      %v2823 = vld [vmem:[%s257 + $0x2f] sm:$0xff]
      %v2824 = vld [vmem:[%s257 + $0x47] sm:$0xff]
      %v2825 = vld [vmem:[%s257 + $0x4f] sm:$0xff]
      %v2826 = vld [vmem:[%s257 + $0x67] sm:$0xff]
      %v2827 = vld [vmem:[%s257 + $0x6f] sm:$0xff]
      %v2828 = vld [vmem:[%s257 + $0x87] sm:$0xff]
      %v2829 = vld [vmem:[%s257 + $0x8f] sm:$0xff]
      %v2830 = vld [vmem:[%s257 + $0xa7] sm:$0xff]
      %v2831 = vld [vmem:[%s257 + $0xaf] sm:$0xff]
      %v2832 = vld [vmem:[%s257 + $0xc7] sm:$0xff]
      %v2833 = vld [vmem:[%s257 + $0xcf] sm:$0xff]
      %v2834 = vld [vmem:[%s257 + $0xe7] sm:$0xff]
      %v2835 = vld [vmem:[%s257 + $0xef] sm:$0xff]
      %v2836 = vld [vmem:[%s257 + $0x107] sm:$0xff]
      %v2837 = vld [vmem:[%s257 + $0x10f] sm:$0xff]
      %v2838 = vld [vmem:[%s257 + $0x127] sm:$0xff]
      %v2839 = vld [vmem:[%s257 + $0x12f] sm:$0xff]
      %v2840 = vld [vmem:[%s257 + $0x147] sm:$0xff]
      %v2841 = vld [vmem:[%s257 + $0x14f] sm:$0xff]
      %v2842 = vld [vmem:[%s257 + $0x167] sm:$0xff]
      %v2843 = vld [vmem:[%s257 + $0x16f] sm:$0xff]
      %v2844 = vld [vmem:[%s257 + $0x187] sm:$0xff]
      %v2845 = vld [vmem:[%s257 + $0x18f] sm:$0xff]
      %v2846 = vld [vmem:[%s257 + $0x1a7] sm:$0xff]
      %v2847 = vld [vmem:[%s257 + $0x1af] sm:$0xff]
      %v2848 = vld [vmem:[%s257 + $0x1c7] sm:$0xff]
      %v2849 = vld [vmem:[%s257 + $0x1cf] sm:$0xff]
      %v2850 = vld [vmem:[%s257 + $0x1e7] sm:$0xff]
      %v2851 = vld [vmem:[%s257 + $0x1ef] sm:$0xff]
      %v2853 = vlaneseq
      %v2854 = vshrl.u32 %v2853, 7
      %v2855 = vsub.s32 0, %v2854
      %v2856 = vrot.slane %v2819, %v2855
      %v2858 = vmul.f32 %v2820, %v2856
      %v2859 = vmul.f32 %v2821, %v2856
      %v2860 = vmul.f32 %v2822, %v2856
      %v2861 = vmul.f32 %v2823, %v2856
      %v2862 = vmul.f32 %v2824, %v2856
      %v2863 = vmul.f32 %v2825, %v2856
      %v2864 = vmul.f32 %v2826, %v2856
      %v2865 = vmul.f32 %v2827, %v2856
      %v2866 = vmul.f32 %v2828, %v2856
      %v2867 = vmul.f32 %v2829, %v2856
      %v2868 = vmul.f32 %v2830, %v2856
      %v2869 = vmul.f32 %v2831, %v2856
      %v2870 = vmul.f32 %v2832, %v2856
      %v2871 = vmul.f32 %v2833, %v2856
      %v2872 = vmul.f32 %v2834, %v2856
      %v2873 = vmul.f32 %v2835, %v2856
      %v2874 = vmul.f32 %v2836, %v2856
      %v2875 = vmul.f32 %v2837, %v2856
      %v2876 = vmul.f32 %v2838, %v2856
      %v2877 = vmul.f32 %v2839, %v2856
      %v2878 = vmul.f32 %v2840, %v2856
      %v2879 = vmul.f32 %v2841, %v2856
      %v2880 = vmul.f32 %v2842, %v2856
      %v2881 = vmul.f32 %v2843, %v2856
      %v2882 = vmul.f32 %v2844, %v2856
      %v2883 = vmul.f32 %v2845, %v2856
      %v2884 = vmul.f32 %v2846, %v2856
      %v2885 = vmul.f32 %v2847, %v2856
      %v2886 = vmul.f32 %v2848, %v2856
      %v2887 = vmul.f32 %v2849, %v2856
      %v2888 = vmul.f32 %v2850, %v2856
      %v2889 = vmul.f32 %v2851, %v2856
      %v2890 = vadd.f32 %v2786, %v2858
      %v2891 = vadd.f32 %v2787, %v2859
      %v2892 = vadd.f32 %v2788, %v2860
      %v2893 = vadd.f32 %v2789, %v2861
      %v2894 = vadd.f32 %v2790, %v2862
      %v2895 = vadd.f32 %v2791, %v2863
      %v2896 = vadd.f32 %v2792, %v2864
      %v2897 = vadd.f32 %v2793, %v2865
      %v2898 = vadd.f32 %v2794, %v2866
      %v2899 = vadd.f32 %v2795, %v2867
      %v2900 = vadd.f32 %v2796, %v2868
      %v2901 = vadd.f32 %v2797, %v2869
      %v2902 = vadd.f32 %v2798, %v2870
      %v2903 = vadd.f32 %v2799, %v2871
      %v2904 = vadd.f32 %v2800, %v2872
      %v2905 = vadd.f32 %v2801, %v2873
      %v2906 = vadd.f32 %v2802, %v2874
      %v2907 = vadd.f32 %v2803, %v2875
      %v2908 = vadd.f32 %v2804, %v2876
      %v2909 = vadd.f32 %v2805, %v2877
      %v2910 = vadd.f32 %v2806, %v2878
      %v2911 = vadd.f32 %v2807, %v2879
      %v2912 = vadd.f32 %v2808, %v2880
      %v2913 = vadd.f32 %v2809, %v2881
      %v2914 = vadd.f32 %v2810, %v2882
      %v2915 = vadd.f32 %v2811, %v2883
      %v2916 = vadd.f32 %v2812, %v2884
      %v2917 = vadd.f32 %v2813, %v2885
      %v2918 = vadd.f32 %v2814, %v2886
      %v2919 = vadd.f32 %v2815, %v2887
      %v2920 = vadd.f32 %v2816, %v2888
      %v2921 = vadd.f32 %v2817, %v2889
      %s2922 = scalar_lea.vmem %s218, 24
      %v2923 = vld [vmem:[%s2922] sm:$0x1]
      %v2924 = vld [vmem:[%s257 + $0x8] sm:$0xff]
      %v2925 = vld [vmem:[%s257 + $0x10] sm:$0xff]
      %v2926 = vld [vmem:[%s257 + $0x28] sm:$0xff]
      %v2927 = vld [vmem:[%s257 + $0x30] sm:$0xff]
      %v2928 = vld [vmem:[%s257 + $0x48] sm:$0xff]
      %v2929 = vld [vmem:[%s257 + $0x50] sm:$0xff]
      %v2930 = vld [vmem:[%s257 + $0x68] sm:$0xff]
      %v2931 = vld [vmem:[%s257 + $0x70] sm:$0xff]
      %v2932 = vld [vmem:[%s257 + $0x88] sm:$0xff]
      %v2933 = vld [vmem:[%s257 + $0x90] sm:$0xff]
      %v2934 = vld [vmem:[%s257 + $0xa8] sm:$0xff]
      %v2935 = vld [vmem:[%s257 + $0xb0] sm:$0xff]
      %v2936 = vld [vmem:[%s257 + $0xc8] sm:$0xff]
      %v2937 = vld [vmem:[%s257 + $0xd0] sm:$0xff]
      %v2938 = vld [vmem:[%s257 + $0xe8] sm:$0xff]
      %v2939 = vld [vmem:[%s257 + $0xf0] sm:$0xff]
      %v2940 = vld [vmem:[%s257 + $0x108] sm:$0xff]
      %v2941 = vld [vmem:[%s257 + $0x110] sm:$0xff]
      %v2942 = vld [vmem:[%s257 + $0x128] sm:$0xff]
      %v2943 = vld [vmem:[%s257 + $0x130] sm:$0xff]
      %v2944 = vld [vmem:[%s257 + $0x148] sm:$0xff]
      %v2945 = vld [vmem:[%s257 + $0x150] sm:$0xff]
      %v2946 = vld [vmem:[%s257 + $0x168] sm:$0xff]
      %v2947 = vld [vmem:[%s257 + $0x170] sm:$0xff]
      %v2948 = vld [vmem:[%s257 + $0x188] sm:$0xff]
      %v2949 = vld [vmem:[%s257 + $0x190] sm:$0xff]
      %v2950 = vld [vmem:[%s257 + $0x1a8] sm:$0xff]
      %v2951 = vld [vmem:[%s257 + $0x1b0] sm:$0xff]
      %v2952 = vld [vmem:[%s257 + $0x1c8] sm:$0xff]
      %v2953 = vld [vmem:[%s257 + $0x1d0] sm:$0xff]
      %v2954 = vld [vmem:[%s257 + $0x1e8] sm:$0xff]
      %v2955 = vld [vmem:[%s257 + $0x1f0] sm:$0xff]
      %v2957 = vlaneseq
      %v2958 = vshrl.u32 %v2957, 7
      %v2959 = vsub.s32 0, %v2958
      %v2960 = vrot.slane %v2923, %v2959
      %v2962 = vmul.f32 %v2924, %v2960
      %v2963 = vmul.f32 %v2925, %v2960
      %v2964 = vmul.f32 %v2926, %v2960
      %v2965 = vmul.f32 %v2927, %v2960
      %v2966 = vmul.f32 %v2928, %v2960
      %v2967 = vmul.f32 %v2929, %v2960
      %v2968 = vmul.f32 %v2930, %v2960
      %v2969 = vmul.f32 %v2931, %v2960
      %v2970 = vmul.f32 %v2932, %v2960
      %v2971 = vmul.f32 %v2933, %v2960
      %v2972 = vmul.f32 %v2934, %v2960
      %v2973 = vmul.f32 %v2935, %v2960
      %v2974 = vmul.f32 %v2936, %v2960
      %v2975 = vmul.f32 %v2937, %v2960
      %v2976 = vmul.f32 %v2938, %v2960
      %v2977 = vmul.f32 %v2939, %v2960
      %v2978 = vmul.f32 %v2940, %v2960
      %v2979 = vmul.f32 %v2941, %v2960
      %v2980 = vmul.f32 %v2942, %v2960
      %v2981 = vmul.f32 %v2943, %v2960
      %v2982 = vmul.f32 %v2944, %v2960
      %v2983 = vmul.f32 %v2945, %v2960
      %v2984 = vmul.f32 %v2946, %v2960
      %v2985 = vmul.f32 %v2947, %v2960
      %v2986 = vmul.f32 %v2948, %v2960
      %v2987 = vmul.f32 %v2949, %v2960
      %v2988 = vmul.f32 %v2950, %v2960
      %v2989 = vmul.f32 %v2951, %v2960
      %v2990 = vmul.f32 %v2952, %v2960
      %v2991 = vmul.f32 %v2953, %v2960
      %v2992 = vmul.f32 %v2954, %v2960
      %v2993 = vmul.f32 %v2955, %v2960
      %v2994 = vadd.f32 %v2890, %v2962
      %v2995 = vadd.f32 %v2891, %v2963
      %v2996 = vadd.f32 %v2892, %v2964
      %v2997 = vadd.f32 %v2893, %v2965
      %v2998 = vadd.f32 %v2894, %v2966
      %v2999 = vadd.f32 %v2895, %v2967
      %v3000 = vadd.f32 %v2896, %v2968
      %v3001 = vadd.f32 %v2897, %v2969
      %v3002 = vadd.f32 %v2898, %v2970
      %v3003 = vadd.f32 %v2899, %v2971
      %v3004 = vadd.f32 %v2900, %v2972
      %v3005 = vadd.f32 %v2901, %v2973
      %v3006 = vadd.f32 %v2902, %v2974
      %v3007 = vadd.f32 %v2903, %v2975
      %v3008 = vadd.f32 %v2904, %v2976
      %v3009 = vadd.f32 %v2905, %v2977
      %v3010 = vadd.f32 %v2906, %v2978
      %v3011 = vadd.f32 %v2907, %v2979
      %v3012 = vadd.f32 %v2908, %v2980
      %v3013 = vadd.f32 %v2909, %v2981
      %v3014 = vadd.f32 %v2910, %v2982
      %v3015 = vadd.f32 %v2911, %v2983
      %v3016 = vadd.f32 %v2912, %v2984
      %v3017 = vadd.f32 %v2913, %v2985
      %v3018 = vadd.f32 %v2914, %v2986
      %v3019 = vadd.f32 %v2915, %v2987
      %v3020 = vadd.f32 %v2916, %v2988
      %v3021 = vadd.f32 %v2917, %v2989
      %v3022 = vadd.f32 %v2918, %v2990
      %v3023 = vadd.f32 %v2919, %v2991
      %v3024 = vadd.f32 %v2920, %v2992
      %v3025 = vadd.f32 %v2921, %v2993
      %s3026 = scalar_lea.vmem %s218, 25
      %v3027 = vld [vmem:[%s3026] sm:$0x1]
      %v3028 = vld [vmem:[%s257 + $0x9] sm:$0xff]
      %v3029 = vld [vmem:[%s257 + $0x11] sm:$0xff]
      %v3030 = vld [vmem:[%s257 + $0x29] sm:$0xff]
      %v3031 = vld [vmem:[%s257 + $0x31] sm:$0xff]
      %v3032 = vld [vmem:[%s257 + $0x49] sm:$0xff]
      %v3033 = vld [vmem:[%s257 + $0x51] sm:$0xff]
      %v3034 = vld [vmem:[%s257 + $0x69] sm:$0xff]
      %v3035 = vld [vmem:[%s257 + $0x71] sm:$0xff]
      %v3036 = vld [vmem:[%s257 + $0x89] sm:$0xff]
      %v3037 = vld [vmem:[%s257 + $0x91] sm:$0xff]
      %v3038 = vld [vmem:[%s257 + $0xa9] sm:$0xff]
      %v3039 = vld [vmem:[%s257 + $0xb1] sm:$0xff]
      %v3040 = vld [vmem:[%s257 + $0xc9] sm:$0xff]
      %v3041 = vld [vmem:[%s257 + $0xd1] sm:$0xff]
      %v3042 = vld [vmem:[%s257 + $0xe9] sm:$0xff]
      %v3043 = vld [vmem:[%s257 + $0xf1] sm:$0xff]
      %v3044 = vld [vmem:[%s257 + $0x109] sm:$0xff]
      %v3045 = vld [vmem:[%s257 + $0x111] sm:$0xff]
      %v3046 = vld [vmem:[%s257 + $0x129] sm:$0xff]
      %v3047 = vld [vmem:[%s257 + $0x131] sm:$0xff]
      %v3048 = vld [vmem:[%s257 + $0x149] sm:$0xff]
      %v3049 = vld [vmem:[%s257 + $0x151] sm:$0xff]
      %v3050 = vld [vmem:[%s257 + $0x169] sm:$0xff]
      %v3051 = vld [vmem:[%s257 + $0x171] sm:$0xff]
      %v3052 = vld [vmem:[%s257 + $0x189] sm:$0xff]
      %v3053 = vld [vmem:[%s257 + $0x191] sm:$0xff]
      %v3054 = vld [vmem:[%s257 + $0x1a9] sm:$0xff]
      %v3055 = vld [vmem:[%s257 + $0x1b1] sm:$0xff]
      %v3056 = vld [vmem:[%s257 + $0x1c9] sm:$0xff]
      %v3057 = vld [vmem:[%s257 + $0x1d1] sm:$0xff]
      %v3058 = vld [vmem:[%s257 + $0x1e9] sm:$0xff]
      %v3059 = vld [vmem:[%s257 + $0x1f1] sm:$0xff]
      %v3061 = vlaneseq
      %v3062 = vshrl.u32 %v3061, 7
      %v3063 = vsub.s32 0, %v3062
      %v3064 = vrot.slane %v3027, %v3063
      %v3066 = vmul.f32 %v3028, %v3064
      %v3067 = vmul.f32 %v3029, %v3064
      %v3068 = vmul.f32 %v3030, %v3064
      %v3069 = vmul.f32 %v3031, %v3064
      %v3070 = vmul.f32 %v3032, %v3064
      %v3071 = vmul.f32 %v3033, %v3064
      %v3072 = vmul.f32 %v3034, %v3064
      %v3073 = vmul.f32 %v3035, %v3064
      %v3074 = vmul.f32 %v3036, %v3064
      %v3075 = vmul.f32 %v3037, %v3064
      %v3076 = vmul.f32 %v3038, %v3064
      %v3077 = vmul.f32 %v3039, %v3064
      %v3078 = vmul.f32 %v3040, %v3064
      %v3079 = vmul.f32 %v3041, %v3064
      %v3080 = vmul.f32 %v3042, %v3064
      %v3081 = vmul.f32 %v3043, %v3064
      %v3082 = vmul.f32 %v3044, %v3064
      %v3083 = vmul.f32 %v3045, %v3064
      %v3084 = vmul.f32 %v3046, %v3064
      %v3085 = vmul.f32 %v3047, %v3064
      %v3086 = vmul.f32 %v3048, %v3064
      %v3087 = vmul.f32 %v3049, %v3064
      %v3088 = vmul.f32 %v3050, %v3064
      %v3089 = vmul.f32 %v3051, %v3064
      %v3090 = vmul.f32 %v3052, %v3064
      %v3091 = vmul.f32 %v3053, %v3064
      %v3092 = vmul.f32 %v3054, %v3064
      %v3093 = vmul.f32 %v3055, %v3064
      %v3094 = vmul.f32 %v3056, %v3064
      %v3095 = vmul.f32 %v3057, %v3064
      %v3096 = vmul.f32 %v3058, %v3064
      %v3097 = vmul.f32 %v3059, %v3064
      %v3098 = vadd.f32 %v2994, %v3066
      %v3099 = vadd.f32 %v2995, %v3067
      %v3100 = vadd.f32 %v2996, %v3068
      %v3101 = vadd.f32 %v2997, %v3069
      %v3102 = vadd.f32 %v2998, %v3070
      %v3103 = vadd.f32 %v2999, %v3071
      %v3104 = vadd.f32 %v3000, %v3072
      %v3105 = vadd.f32 %v3001, %v3073
      %v3106 = vadd.f32 %v3002, %v3074
      %v3107 = vadd.f32 %v3003, %v3075
      %v3108 = vadd.f32 %v3004, %v3076
      %v3109 = vadd.f32 %v3005, %v3077
      %v3110 = vadd.f32 %v3006, %v3078
      %v3111 = vadd.f32 %v3007, %v3079
      %v3112 = vadd.f32 %v3008, %v3080
      %v3113 = vadd.f32 %v3009, %v3081
      %v3114 = vadd.f32 %v3010, %v3082
      %v3115 = vadd.f32 %v3011, %v3083
      %v3116 = vadd.f32 %v3012, %v3084
      %v3117 = vadd.f32 %v3013, %v3085
      %v3118 = vadd.f32 %v3014, %v3086
      %v3119 = vadd.f32 %v3015, %v3087
      %v3120 = vadd.f32 %v3016, %v3088
      %v3121 = vadd.f32 %v3017, %v3089
      %v3122 = vadd.f32 %v3018, %v3090
      %v3123 = vadd.f32 %v3019, %v3091
      %v3124 = vadd.f32 %v3020, %v3092
      %v3125 = vadd.f32 %v3021, %v3093
      %v3126 = vadd.f32 %v3022, %v3094
      %v3127 = vadd.f32 %v3023, %v3095
      %v3128 = vadd.f32 %v3024, %v3096
      %v3129 = vadd.f32 %v3025, %v3097
      %s3130 = scalar_lea.vmem %s218, 26
      %v3131 = vld [vmem:[%s3130] sm:$0x1]
      %v3132 = vld [vmem:[%s257 + $0xa] sm:$0xff]
      %v3133 = vld [vmem:[%s257 + $0x12] sm:$0xff]
      %v3134 = vld [vmem:[%s257 + $0x2a] sm:$0xff]
      %v3135 = vld [vmem:[%s257 + $0x32] sm:$0xff]
      %v3136 = vld [vmem:[%s257 + $0x4a] sm:$0xff]
      %v3137 = vld [vmem:[%s257 + $0x52] sm:$0xff]
      %v3138 = vld [vmem:[%s257 + $0x6a] sm:$0xff]
      %v3139 = vld [vmem:[%s257 + $0x72] sm:$0xff]
      %v3140 = vld [vmem:[%s257 + $0x8a] sm:$0xff]
      %v3141 = vld [vmem:[%s257 + $0x92] sm:$0xff]
      %v3142 = vld [vmem:[%s257 + $0xaa] sm:$0xff]
      %v3143 = vld [vmem:[%s257 + $0xb2] sm:$0xff]
      %v3144 = vld [vmem:[%s257 + $0xca] sm:$0xff]
      %v3145 = vld [vmem:[%s257 + $0xd2] sm:$0xff]
      %v3146 = vld [vmem:[%s257 + $0xea] sm:$0xff]
      %v3147 = vld [vmem:[%s257 + $0xf2] sm:$0xff]
      %v3148 = vld [vmem:[%s257 + $0x10a] sm:$0xff]
      %v3149 = vld [vmem:[%s257 + $0x112] sm:$0xff]
      %v3150 = vld [vmem:[%s257 + $0x12a] sm:$0xff]
      %v3151 = vld [vmem:[%s257 + $0x132] sm:$0xff]
      %v3152 = vld [vmem:[%s257 + $0x14a] sm:$0xff]
      %v3153 = vld [vmem:[%s257 + $0x152] sm:$0xff]
      %v3154 = vld [vmem:[%s257 + $0x16a] sm:$0xff]
      %v3155 = vld [vmem:[%s257 + $0x172] sm:$0xff]
      %v3156 = vld [vmem:[%s257 + $0x18a] sm:$0xff]
      %v3157 = vld [vmem:[%s257 + $0x192] sm:$0xff]
      %v3158 = vld [vmem:[%s257 + $0x1aa] sm:$0xff]
      %v3159 = vld [vmem:[%s257 + $0x1b2] sm:$0xff]
      %v3160 = vld [vmem:[%s257 + $0x1ca] sm:$0xff]
      %v3161 = vld [vmem:[%s257 + $0x1d2] sm:$0xff]
      %v3162 = vld [vmem:[%s257 + $0x1ea] sm:$0xff]
      %v3163 = vld [vmem:[%s257 + $0x1f2] sm:$0xff]
      %v3165 = vlaneseq
      %v3166 = vshrl.u32 %v3165, 7
      %v3167 = vsub.s32 0, %v3166
      %v3168 = vrot.slane %v3131, %v3167
      %v3170 = vmul.f32 %v3132, %v3168
      %v3171 = vmul.f32 %v3133, %v3168
      %v3172 = vmul.f32 %v3134, %v3168
      %v3173 = vmul.f32 %v3135, %v3168
      %v3174 = vmul.f32 %v3136, %v3168
      %v3175 = vmul.f32 %v3137, %v3168
      %v3176 = vmul.f32 %v3138, %v3168
      %v3177 = vmul.f32 %v3139, %v3168
      %v3178 = vmul.f32 %v3140, %v3168
      %v3179 = vmul.f32 %v3141, %v3168
      %v3180 = vmul.f32 %v3142, %v3168
      %v3181 = vmul.f32 %v3143, %v3168
      %v3182 = vmul.f32 %v3144, %v3168
      %v3183 = vmul.f32 %v3145, %v3168
      %v3184 = vmul.f32 %v3146, %v3168
      %v3185 = vmul.f32 %v3147, %v3168
      %v3186 = vmul.f32 %v3148, %v3168
      %v3187 = vmul.f32 %v3149, %v3168
      %v3188 = vmul.f32 %v3150, %v3168
      %v3189 = vmul.f32 %v3151, %v3168
      %v3190 = vmul.f32 %v3152, %v3168
      %v3191 = vmul.f32 %v3153, %v3168
      %v3192 = vmul.f32 %v3154, %v3168
      %v3193 = vmul.f32 %v3155, %v3168
      %v3194 = vmul.f32 %v3156, %v3168
      %v3195 = vmul.f32 %v3157, %v3168
      %v3196 = vmul.f32 %v3158, %v3168
      %v3197 = vmul.f32 %v3159, %v3168
      %v3198 = vmul.f32 %v3160, %v3168
      %v3199 = vmul.f32 %v3161, %v3168
      %v3200 = vmul.f32 %v3162, %v3168
      %v3201 = vmul.f32 %v3163, %v3168
      %v3202 = vadd.f32 %v3098, %v3170
      %v3203 = vadd.f32 %v3099, %v3171
      %v3204 = vadd.f32 %v3100, %v3172
      %v3205 = vadd.f32 %v3101, %v3173
      %v3206 = vadd.f32 %v3102, %v3174
      %v3207 = vadd.f32 %v3103, %v3175
      %v3208 = vadd.f32 %v3104, %v3176
      %v3209 = vadd.f32 %v3105, %v3177
      %v3210 = vadd.f32 %v3106, %v3178
      %v3211 = vadd.f32 %v3107, %v3179
      %v3212 = vadd.f32 %v3108, %v3180
      %v3213 = vadd.f32 %v3109, %v3181
      %v3214 = vadd.f32 %v3110, %v3182
      %v3215 = vadd.f32 %v3111, %v3183
      %v3216 = vadd.f32 %v3112, %v3184
      %v3217 = vadd.f32 %v3113, %v3185
      %v3218 = vadd.f32 %v3114, %v3186
      %v3219 = vadd.f32 %v3115, %v3187
      %v3220 = vadd.f32 %v3116, %v3188
      %v3221 = vadd.f32 %v3117, %v3189
      %v3222 = vadd.f32 %v3118, %v3190
      %v3223 = vadd.f32 %v3119, %v3191
      %v3224 = vadd.f32 %v3120, %v3192
      %v3225 = vadd.f32 %v3121, %v3193
      %v3226 = vadd.f32 %v3122, %v3194
      %v3227 = vadd.f32 %v3123, %v3195
      %v3228 = vadd.f32 %v3124, %v3196
      %v3229 = vadd.f32 %v3125, %v3197
      %v3230 = vadd.f32 %v3126, %v3198
      %v3231 = vadd.f32 %v3127, %v3199
      %v3232 = vadd.f32 %v3128, %v3200
      %v3233 = vadd.f32 %v3129, %v3201
      %s3234 = scalar_lea.vmem %s218, 27
      %v3235 = vld [vmem:[%s3234] sm:$0x1]
      %v3236 = vld [vmem:[%s257 + $0xb] sm:$0xff]
      %v3237 = vld [vmem:[%s257 + $0x13] sm:$0xff]
      %v3238 = vld [vmem:[%s257 + $0x2b] sm:$0xff]
      %v3239 = vld [vmem:[%s257 + $0x33] sm:$0xff]
      %v3240 = vld [vmem:[%s257 + $0x4b] sm:$0xff]
      %v3241 = vld [vmem:[%s257 + $0x53] sm:$0xff]
      %v3242 = vld [vmem:[%s257 + $0x6b] sm:$0xff]
      %v3243 = vld [vmem:[%s257 + $0x73] sm:$0xff]
      %v3244 = vld [vmem:[%s257 + $0x8b] sm:$0xff]
      %v3245 = vld [vmem:[%s257 + $0x93] sm:$0xff]
      %v3246 = vld [vmem:[%s257 + $0xab] sm:$0xff]
      %v3247 = vld [vmem:[%s257 + $0xb3] sm:$0xff]
      %v3248 = vld [vmem:[%s257 + $0xcb] sm:$0xff]
      %v3249 = vld [vmem:[%s257 + $0xd3] sm:$0xff]
      %v3250 = vld [vmem:[%s257 + $0xeb] sm:$0xff]
      %v3251 = vld [vmem:[%s257 + $0xf3] sm:$0xff]
      %v3252 = vld [vmem:[%s257 + $0x10b] sm:$0xff]
      %v3253 = vld [vmem:[%s257 + $0x113] sm:$0xff]
      %v3254 = vld [vmem:[%s257 + $0x12b] sm:$0xff]
      %v3255 = vld [vmem:[%s257 + $0x133] sm:$0xff]
      %v3256 = vld [vmem:[%s257 + $0x14b] sm:$0xff]
      %v3257 = vld [vmem:[%s257 + $0x153] sm:$0xff]
      %v3258 = vld [vmem:[%s257 + $0x16b] sm:$0xff]
      %v3259 = vld [vmem:[%s257 + $0x173] sm:$0xff]
      %v3260 = vld [vmem:[%s257 + $0x18b] sm:$0xff]
      %v3261 = vld [vmem:[%s257 + $0x193] sm:$0xff]
      %v3262 = vld [vmem:[%s257 + $0x1ab] sm:$0xff]
      %v3263 = vld [vmem:[%s257 + $0x1b3] sm:$0xff]
      %v3264 = vld [vmem:[%s257 + $0x1cb] sm:$0xff]
      %v3265 = vld [vmem:[%s257 + $0x1d3] sm:$0xff]
      %v3266 = vld [vmem:[%s257 + $0x1eb] sm:$0xff]
      %v3267 = vld [vmem:[%s257 + $0x1f3] sm:$0xff]
      %v3269 = vlaneseq
      %v3270 = vshrl.u32 %v3269, 7
      %v3271 = vsub.s32 0, %v3270
      %v3272 = vrot.slane %v3235, %v3271
      %v3274 = vmul.f32 %v3236, %v3272
      %v3275 = vmul.f32 %v3237, %v3272
      %v3276 = vmul.f32 %v3238, %v3272
      %v3277 = vmul.f32 %v3239, %v3272
      %v3278 = vmul.f32 %v3240, %v3272
      %v3279 = vmul.f32 %v3241, %v3272
      %v3280 = vmul.f32 %v3242, %v3272
      %v3281 = vmul.f32 %v3243, %v3272
      %v3282 = vmul.f32 %v3244, %v3272
      %v3283 = vmul.f32 %v3245, %v3272
      %v3284 = vmul.f32 %v3246, %v3272
      %v3285 = vmul.f32 %v3247, %v3272
      %v3286 = vmul.f32 %v3248, %v3272
      %v3287 = vmul.f32 %v3249, %v3272
      %v3288 = vmul.f32 %v3250, %v3272
      %v3289 = vmul.f32 %v3251, %v3272
      %v3290 = vmul.f32 %v3252, %v3272
      %v3291 = vmul.f32 %v3253, %v3272
      %v3292 = vmul.f32 %v3254, %v3272
      %v3293 = vmul.f32 %v3255, %v3272
      %v3294 = vmul.f32 %v3256, %v3272
      %v3295 = vmul.f32 %v3257, %v3272
      %v3296 = vmul.f32 %v3258, %v3272
      %v3297 = vmul.f32 %v3259, %v3272
      %v3298 = vmul.f32 %v3260, %v3272
      %v3299 = vmul.f32 %v3261, %v3272
      %v3300 = vmul.f32 %v3262, %v3272
      %v3301 = vmul.f32 %v3263, %v3272
      %v3302 = vmul.f32 %v3264, %v3272
      %v3303 = vmul.f32 %v3265, %v3272
      %v3304 = vmul.f32 %v3266, %v3272
      %v3305 = vmul.f32 %v3267, %v3272
      %v3306 = vadd.f32 %v3202, %v3274
      %v3307 = vadd.f32 %v3203, %v3275
      %v3308 = vadd.f32 %v3204, %v3276
      %v3309 = vadd.f32 %v3205, %v3277
      %v3310 = vadd.f32 %v3206, %v3278
      %v3311 = vadd.f32 %v3207, %v3279
      %v3312 = vadd.f32 %v3208, %v3280
      %v3313 = vadd.f32 %v3209, %v3281
      %v3314 = vadd.f32 %v3210, %v3282
      %v3315 = vadd.f32 %v3211, %v3283
      %v3316 = vadd.f32 %v3212, %v3284
      %v3317 = vadd.f32 %v3213, %v3285
      %v3318 = vadd.f32 %v3214, %v3286
      %v3319 = vadd.f32 %v3215, %v3287
      %v3320 = vadd.f32 %v3216, %v3288
      %v3321 = vadd.f32 %v3217, %v3289
      %v3322 = vadd.f32 %v3218, %v3290
      %v3323 = vadd.f32 %v3219, %v3291
      %v3324 = vadd.f32 %v3220, %v3292
      %v3325 = vadd.f32 %v3221, %v3293
      %v3326 = vadd.f32 %v3222, %v3294
      %v3327 = vadd.f32 %v3223, %v3295
      %v3328 = vadd.f32 %v3224, %v3296
      %v3329 = vadd.f32 %v3225, %v3297
      %v3330 = vadd.f32 %v3226, %v3298
      %v3331 = vadd.f32 %v3227, %v3299
      %v3332 = vadd.f32 %v3228, %v3300
      %v3333 = vadd.f32 %v3229, %v3301
      %v3334 = vadd.f32 %v3230, %v3302
      %v3335 = vadd.f32 %v3231, %v3303
      %v3336 = vadd.f32 %v3232, %v3304
      %v3337 = vadd.f32 %v3233, %v3305
      %s3338 = scalar_lea.vmem %s218, 28
      %v3339 = vld [vmem:[%s3338] sm:$0x1]
      %s3340 = scalar_lea.vmem [#allocation2], 128
      %v3341 = vld [vmem:[%s3340 + $0x5] sm:$0xff]
      %v3342 = vld [vmem:[%s3340 + $0xd] sm:$0xff]
      %v3343 = vld [vmem:[%s3340 + $0x25] sm:$0xff]
      %v3344 = vld [vmem:[%s3340 + $0x2d] sm:$0xff]
      %v3345 = vld [vmem:[%s3340 + $0x45] sm:$0xff]
      %v3346 = vld [vmem:[%s3340 + $0x4d] sm:$0xff]
      %v3347 = vld [vmem:[%s3340 + $0x65] sm:$0xff]
      %v3348 = vld [vmem:[%s3340 + $0x6d] sm:$0xff]
      %v3349 = vld [vmem:[%s3340 + $0x85] sm:$0xff]
      %v3350 = vld [vmem:[%s3340 + $0x8d] sm:$0xff]
      %v3351 = vld [vmem:[%s3340 + $0xa5] sm:$0xff]
      %v3352 = vld [vmem:[%s3340 + $0xad] sm:$0xff]
      %v3353 = vld [vmem:[%s3340 + $0xc5] sm:$0xff]
      %v3354 = vld [vmem:[%s3340 + $0xcd] sm:$0xff]
      %v3355 = vld [vmem:[%s3340 + $0xe5] sm:$0xff]
      %v3356 = vld [vmem:[%s3340 + $0xed] sm:$0xff]
      %v3357 = vld [vmem:[%s3340 + $0x105] sm:$0xff]
      %v3358 = vld [vmem:[%s3340 + $0x10d] sm:$0xff]
      %v3359 = vld [vmem:[%s3340 + $0x125] sm:$0xff]
      %v3360 = vld [vmem:[%s3340 + $0x12d] sm:$0xff]
      %v3361 = vld [vmem:[%s3340 + $0x145] sm:$0xff]
      %v3362 = vld [vmem:[%s3340 + $0x14d] sm:$0xff]
      %v3363 = vld [vmem:[%s3340 + $0x165] sm:$0xff]
      %v3364 = vld [vmem:[%s3340 + $0x16d] sm:$0xff]
      %v3365 = vld [vmem:[%s3340 + $0x185] sm:$0xff]
      %v3366 = vld [vmem:[%s3340 + $0x18d] sm:$0xff]
      %v3367 = vld [vmem:[%s3340 + $0x1a5] sm:$0xff]
      %v3368 = vld [vmem:[%s3340 + $0x1ad] sm:$0xff]
      %v3369 = vld [vmem:[%s3340 + $0x1c5] sm:$0xff]
      %v3370 = vld [vmem:[%s3340 + $0x1cd] sm:$0xff]
      %v3371 = vld [vmem:[%s3340 + $0x1e5] sm:$0xff]
      %v3372 = vld [vmem:[%s3340 + $0x1ed] sm:$0xff]
      %v3374 = vlaneseq
      %v3375 = vshrl.u32 %v3374, 7
      %v3376 = vsub.s32 0, %v3375
      %v3377 = vrot.slane %v3339, %v3376
      %v3379 = vmul.f32 %v3341, %v3377
      %v3380 = vmul.f32 %v3342, %v3377
      %v3381 = vmul.f32 %v3343, %v3377
      %v3382 = vmul.f32 %v3344, %v3377
      %v3383 = vmul.f32 %v3345, %v3377
      %v3384 = vmul.f32 %v3346, %v3377
      %v3385 = vmul.f32 %v3347, %v3377
      %v3386 = vmul.f32 %v3348, %v3377
      %v3387 = vmul.f32 %v3349, %v3377
      %v3388 = vmul.f32 %v3350, %v3377
      %v3389 = vmul.f32 %v3351, %v3377
      %v3390 = vmul.f32 %v3352, %v3377
      %v3391 = vmul.f32 %v3353, %v3377
      %v3392 = vmul.f32 %v3354, %v3377
      %v3393 = vmul.f32 %v3355, %v3377
      %v3394 = vmul.f32 %v3356, %v3377
      %v3395 = vmul.f32 %v3357, %v3377
      %v3396 = vmul.f32 %v3358, %v3377
      %v3397 = vmul.f32 %v3359, %v3377
      %v3398 = vmul.f32 %v3360, %v3377
      %v3399 = vmul.f32 %v3361, %v3377
      %v3400 = vmul.f32 %v3362, %v3377
      %v3401 = vmul.f32 %v3363, %v3377
      %v3402 = vmul.f32 %v3364, %v3377
      %v3403 = vmul.f32 %v3365, %v3377
      %v3404 = vmul.f32 %v3366, %v3377
      %v3405 = vmul.f32 %v3367, %v3377
      %v3406 = vmul.f32 %v3368, %v3377
      %v3407 = vmul.f32 %v3369, %v3377
      %v3408 = vmul.f32 %v3370, %v3377
      %v3409 = vmul.f32 %v3371, %v3377
      %v3410 = vmul.f32 %v3372, %v3377
      %v3411 = vadd.f32 %v3306, %v3379
      %v3412 = vadd.f32 %v3307, %v3380
      %v3413 = vadd.f32 %v3308, %v3381
      %v3414 = vadd.f32 %v3309, %v3382
      %v3415 = vadd.f32 %v3310, %v3383
      %v3416 = vadd.f32 %v3311, %v3384
      %v3417 = vadd.f32 %v3312, %v3385
      %v3418 = vadd.f32 %v3313, %v3386
      %v3419 = vadd.f32 %v3314, %v3387
      %v3420 = vadd.f32 %v3315, %v3388
      %v3421 = vadd.f32 %v3316, %v3389
      %v3422 = vadd.f32 %v3317, %v3390
      %v3423 = vadd.f32 %v3318, %v3391
      %v3424 = vadd.f32 %v3319, %v3392
      %v3425 = vadd.f32 %v3320, %v3393
      %v3426 = vadd.f32 %v3321, %v3394
      %v3427 = vadd.f32 %v3322, %v3395
      %v3428 = vadd.f32 %v3323, %v3396
      %v3429 = vadd.f32 %v3324, %v3397
      %v3430 = vadd.f32 %v3325, %v3398
      %v3431 = vadd.f32 %v3326, %v3399
      %v3432 = vadd.f32 %v3327, %v3400
      %v3433 = vadd.f32 %v3328, %v3401
      %v3434 = vadd.f32 %v3329, %v3402
      %v3435 = vadd.f32 %v3330, %v3403
      %v3436 = vadd.f32 %v3331, %v3404
      %v3437 = vadd.f32 %v3332, %v3405
      %v3438 = vadd.f32 %v3333, %v3406
      %v3439 = vadd.f32 %v3334, %v3407
      %v3440 = vadd.f32 %v3335, %v3408
      %v3441 = vadd.f32 %v3336, %v3409
      %v3442 = vadd.f32 %v3337, %v3410
      %s3443 = scalar_lea.vmem %s218, 29
      %v3444 = vld [vmem:[%s3443] sm:$0x1]
      %v3445 = vld [vmem:[%s3340 + $0x6] sm:$0xff]
      %v3446 = vld [vmem:[%s3340 + $0xe] sm:$0xff]
      %v3447 = vld [vmem:[%s3340 + $0x26] sm:$0xff]
      %v3448 = vld [vmem:[%s3340 + $0x2e] sm:$0xff]
      %v3449 = vld [vmem:[%s3340 + $0x46] sm:$0xff]
      %v3450 = vld [vmem:[%s3340 + $0x4e] sm:$0xff]
      %v3451 = vld [vmem:[%s3340 + $0x66] sm:$0xff]
      %v3452 = vld [vmem:[%s3340 + $0x6e] sm:$0xff]
      %v3453 = vld [vmem:[%s3340 + $0x86] sm:$0xff]
      %v3454 = vld [vmem:[%s3340 + $0x8e] sm:$0xff]
      %v3455 = vld [vmem:[%s3340 + $0xa6] sm:$0xff]
      %v3456 = vld [vmem:[%s3340 + $0xae] sm:$0xff]
      %v3457 = vld [vmem:[%s3340 + $0xc6] sm:$0xff]
      %v3458 = vld [vmem:[%s3340 + $0xce] sm:$0xff]
      %v3459 = vld [vmem:[%s3340 + $0xe6] sm:$0xff]
      %v3460 = vld [vmem:[%s3340 + $0xee] sm:$0xff]
      %v3461 = vld [vmem:[%s3340 + $0x106] sm:$0xff]
      %v3462 = vld [vmem:[%s3340 + $0x10e] sm:$0xff]
      %v3463 = vld [vmem:[%s3340 + $0x126] sm:$0xff]
      %v3464 = vld [vmem:[%s3340 + $0x12e] sm:$0xff]
      %v3465 = vld [vmem:[%s3340 + $0x146] sm:$0xff]
      %v3466 = vld [vmem:[%s3340 + $0x14e] sm:$0xff]
      %v3467 = vld [vmem:[%s3340 + $0x166] sm:$0xff]
      %v3468 = vld [vmem:[%s3340 + $0x16e] sm:$0xff]
      %v3469 = vld [vmem:[%s3340 + $0x186] sm:$0xff]
      %v3470 = vld [vmem:[%s3340 + $0x18e] sm:$0xff]
      %v3471 = vld [vmem:[%s3340 + $0x1a6] sm:$0xff]
      %v3472 = vld [vmem:[%s3340 + $0x1ae] sm:$0xff]
      %v3473 = vld [vmem:[%s3340 + $0x1c6] sm:$0xff]
      %v3474 = vld [vmem:[%s3340 + $0x1ce] sm:$0xff]
      %v3475 = vld [vmem:[%s3340 + $0x1e6] sm:$0xff]
      %v3476 = vld [vmem:[%s3340 + $0x1ee] sm:$0xff]
      %v3478 = vlaneseq
      %v3479 = vshrl.u32 %v3478, 7
      %v3480 = vsub.s32 0, %v3479
      %v3481 = vrot.slane %v3444, %v3480
      %v3483 = vmul.f32 %v3445, %v3481
      %v3484 = vmul.f32 %v3446, %v3481
      %v3485 = vmul.f32 %v3447, %v3481
      %v3486 = vmul.f32 %v3448, %v3481
      %v3487 = vmul.f32 %v3449, %v3481
      %v3488 = vmul.f32 %v3450, %v3481
      %v3489 = vmul.f32 %v3451, %v3481
      %v3490 = vmul.f32 %v3452, %v3481
      %v3491 = vmul.f32 %v3453, %v3481
      %v3492 = vmul.f32 %v3454, %v3481
      %v3493 = vmul.f32 %v3455, %v3481
      %v3494 = vmul.f32 %v3456, %v3481
      %v3495 = vmul.f32 %v3457, %v3481
      %v3496 = vmul.f32 %v3458, %v3481
      %v3497 = vmul.f32 %v3459, %v3481
      %v3498 = vmul.f32 %v3460, %v3481
      %v3499 = vmul.f32 %v3461, %v3481
      %v3500 = vmul.f32 %v3462, %v3481
      %v3501 = vmul.f32 %v3463, %v3481
      %v3502 = vmul.f32 %v3464, %v3481
      %v3503 = vmul.f32 %v3465, %v3481
      %v3504 = vmul.f32 %v3466, %v3481
      %v3505 = vmul.f32 %v3467, %v3481
      %v3506 = vmul.f32 %v3468, %v3481
      %v3507 = vmul.f32 %v3469, %v3481
      %v3508 = vmul.f32 %v3470, %v3481
      %v3509 = vmul.f32 %v3471, %v3481
      %v3510 = vmul.f32 %v3472, %v3481
      %v3511 = vmul.f32 %v3473, %v3481
      %v3512 = vmul.f32 %v3474, %v3481
      %v3513 = vmul.f32 %v3475, %v3481
      %v3514 = vmul.f32 %v3476, %v3481
      %v3515 = vadd.f32 %v3411, %v3483
      %v3516 = vadd.f32 %v3412, %v3484
      %v3517 = vadd.f32 %v3413, %v3485
      %v3518 = vadd.f32 %v3414, %v3486
      %v3519 = vadd.f32 %v3415, %v3487
      %v3520 = vadd.f32 %v3416, %v3488
      %v3521 = vadd.f32 %v3417, %v3489
      %v3522 = vadd.f32 %v3418, %v3490
      %v3523 = vadd.f32 %v3419, %v3491
      %v3524 = vadd.f32 %v3420, %v3492
      %v3525 = vadd.f32 %v3421, %v3493
      %v3526 = vadd.f32 %v3422, %v3494
      %v3527 = vadd.f32 %v3423, %v3495
      %v3528 = vadd.f32 %v3424, %v3496
      %v3529 = vadd.f32 %v3425, %v3497
      %v3530 = vadd.f32 %v3426, %v3498
      %v3531 = vadd.f32 %v3427, %v3499
      %v3532 = vadd.f32 %v3428, %v3500
      %v3533 = vadd.f32 %v3429, %v3501
      %v3534 = vadd.f32 %v3430, %v3502
      %v3535 = vadd.f32 %v3431, %v3503
      %v3536 = vadd.f32 %v3432, %v3504
      %v3537 = vadd.f32 %v3433, %v3505
      %v3538 = vadd.f32 %v3434, %v3506
      %v3539 = vadd.f32 %v3435, %v3507
      %v3540 = vadd.f32 %v3436, %v3508
      %v3541 = vadd.f32 %v3437, %v3509
      %v3542 = vadd.f32 %v3438, %v3510
      %v3543 = vadd.f32 %v3439, %v3511
      %v3544 = vadd.f32 %v3440, %v3512
      %v3545 = vadd.f32 %v3441, %v3513
      %v3546 = vadd.f32 %v3442, %v3514
      %s3547 = scalar_lea.vmem %s218, 30
      %v3548 = vld [vmem:[%s3547] sm:$0x1]
      %v3549 = vld [vmem:[%s3340 + $0x7] sm:$0xff]
      %v3550 = vld [vmem:[%s3340 + $0xf] sm:$0xff]
      %v3551 = vld [vmem:[%s3340 + $0x27] sm:$0xff]
      %v3552 = vld [vmem:[%s3340 + $0x2f] sm:$0xff]
      %v3553 = vld [vmem:[%s3340 + $0x47] sm:$0xff]
      %v3554 = vld [vmem:[%s3340 + $0x4f] sm:$0xff]
      %v3555 = vld [vmem:[%s3340 + $0x67] sm:$0xff]
      %v3556 = vld [vmem:[%s3340 + $0x6f] sm:$0xff]
      %v3557 = vld [vmem:[%s3340 + $0x87] sm:$0xff]
      %v3558 = vld [vmem:[%s3340 + $0x8f] sm:$0xff]
      %v3559 = vld [vmem:[%s3340 + $0xa7] sm:$0xff]
      %v3560 = vld [vmem:[%s3340 + $0xaf] sm:$0xff]
      %v3561 = vld [vmem:[%s3340 + $0xc7] sm:$0xff]
      %v3562 = vld [vmem:[%s3340 + $0xcf] sm:$0xff]
      %v3563 = vld [vmem:[%s3340 + $0xe7] sm:$0xff]
      %v3564 = vld [vmem:[%s3340 + $0xef] sm:$0xff]
      %v3565 = vld [vmem:[%s3340 + $0x107] sm:$0xff]
      %v3566 = vld [vmem:[%s3340 + $0x10f] sm:$0xff]
      %v3567 = vld [vmem:[%s3340 + $0x127] sm:$0xff]
      %v3568 = vld [vmem:[%s3340 + $0x12f] sm:$0xff]
      %v3569 = vld [vmem:[%s3340 + $0x147] sm:$0xff]
      %v3570 = vld [vmem:[%s3340 + $0x14f] sm:$0xff]
      %v3571 = vld [vmem:[%s3340 + $0x167] sm:$0xff]
      %v3572 = vld [vmem:[%s3340 + $0x16f] sm:$0xff]
      %v3573 = vld [vmem:[%s3340 + $0x187] sm:$0xff]
      %v3574 = vld [vmem:[%s3340 + $0x18f] sm:$0xff]
      %v3575 = vld [vmem:[%s3340 + $0x1a7] sm:$0xff]
      %v3576 = vld [vmem:[%s3340 + $0x1af] sm:$0xff]
      %v3577 = vld [vmem:[%s3340 + $0x1c7] sm:$0xff]
      %v3578 = vld [vmem:[%s3340 + $0x1cf] sm:$0xff]
      %v3579 = vld [vmem:[%s3340 + $0x1e7] sm:$0xff]
      %v3580 = vld [vmem:[%s3340 + $0x1ef] sm:$0xff]
      %v3582 = vlaneseq
      %v3583 = vshrl.u32 %v3582, 7
      %v3584 = vsub.s32 0, %v3583
      %v3585 = vrot.slane %v3548, %v3584
      %v3587 = vmul.f32 %v3549, %v3585
      %v3588 = vmul.f32 %v3550, %v3585
      %v3589 = vmul.f32 %v3551, %v3585
      %v3590 = vmul.f32 %v3552, %v3585
      %v3591 = vmul.f32 %v3553, %v3585
      %v3592 = vmul.f32 %v3554, %v3585
      %v3593 = vmul.f32 %v3555, %v3585
      %v3594 = vmul.f32 %v3556, %v3585
      %v3595 = vmul.f32 %v3557, %v3585
      %v3596 = vmul.f32 %v3558, %v3585
      %v3597 = vmul.f32 %v3559, %v3585
      %v3598 = vmul.f32 %v3560, %v3585
      %v3599 = vmul.f32 %v3561, %v3585
      %v3600 = vmul.f32 %v3562, %v3585
      %v3601 = vmul.f32 %v3563, %v3585
      %v3602 = vmul.f32 %v3564, %v3585
      %v3603 = vmul.f32 %v3565, %v3585
      %v3604 = vmul.f32 %v3566, %v3585
      %v3605 = vmul.f32 %v3567, %v3585
      %v3606 = vmul.f32 %v3568, %v3585
      %v3607 = vmul.f32 %v3569, %v3585
      %v3608 = vmul.f32 %v3570, %v3585
      %v3609 = vmul.f32 %v3571, %v3585
      %v3610 = vmul.f32 %v3572, %v3585
      %v3611 = vmul.f32 %v3573, %v3585
      %v3612 = vmul.f32 %v3574, %v3585
      %v3613 = vmul.f32 %v3575, %v3585
      %v3614 = vmul.f32 %v3576, %v3585
      %v3615 = vmul.f32 %v3577, %v3585
      %v3616 = vmul.f32 %v3578, %v3585
      %v3617 = vmul.f32 %v3579, %v3585
      %v3618 = vmul.f32 %v3580, %v3585
      %v3619 = vadd.f32 %v3515, %v3587
      %v3620 = vadd.f32 %v3516, %v3588
      %v3621 = vadd.f32 %v3517, %v3589
      %v3622 = vadd.f32 %v3518, %v3590
      %v3623 = vadd.f32 %v3519, %v3591
      %v3624 = vadd.f32 %v3520, %v3592
      %v3625 = vadd.f32 %v3521, %v3593
      %v3626 = vadd.f32 %v3522, %v3594
      %v3627 = vadd.f32 %v3523, %v3595
      %v3628 = vadd.f32 %v3524, %v3596
      %v3629 = vadd.f32 %v3525, %v3597
      %v3630 = vadd.f32 %v3526, %v3598
      %v3631 = vadd.f32 %v3527, %v3599
      %v3632 = vadd.f32 %v3528, %v3600
      %v3633 = vadd.f32 %v3529, %v3601
      %v3634 = vadd.f32 %v3530, %v3602
      %v3635 = vadd.f32 %v3531, %v3603
      %v3636 = vadd.f32 %v3532, %v3604
      %v3637 = vadd.f32 %v3533, %v3605
      %v3638 = vadd.f32 %v3534, %v3606
      %v3639 = vadd.f32 %v3535, %v3607
      %v3640 = vadd.f32 %v3536, %v3608
      %v3641 = vadd.f32 %v3537, %v3609
      %v3642 = vadd.f32 %v3538, %v3610
      %v3643 = vadd.f32 %v3539, %v3611
      %v3644 = vadd.f32 %v3540, %v3612
      %v3645 = vadd.f32 %v3541, %v3613
      %v3646 = vadd.f32 %v3542, %v3614
      %v3647 = vadd.f32 %v3543, %v3615
      %v3648 = vadd.f32 %v3544, %v3616
      %v3649 = vadd.f32 %v3545, %v3617
      %v3650 = vadd.f32 %v3546, %v3618
      %s3651 = scalar_lea.vmem %s218, 31
      %v3652 = vld [vmem:[%s3651] sm:$0x1]
      %v3653 = vld [vmem:[%s3340 + $0x8] sm:$0xff]
      %v3654 = vld [vmem:[%s3340 + $0x10] sm:$0xff]
      %v3655 = vld [vmem:[%s3340 + $0x28] sm:$0xff]
      %v3656 = vld [vmem:[%s3340 + $0x30] sm:$0xff]
      %v3657 = vld [vmem:[%s3340 + $0x48] sm:$0xff]
      %v3658 = vld [vmem:[%s3340 + $0x50] sm:$0xff]
      %v3659 = vld [vmem:[%s3340 + $0x68] sm:$0xff]
      %v3660 = vld [vmem:[%s3340 + $0x70] sm:$0xff]
      %v3661 = vld [vmem:[%s3340 + $0x88] sm:$0xff]
      %v3662 = vld [vmem:[%s3340 + $0x90] sm:$0xff]
      %v3663 = vld [vmem:[%s3340 + $0xa8] sm:$0xff]
      %v3664 = vld [vmem:[%s3340 + $0xb0] sm:$0xff]
      %v3665 = vld [vmem:[%s3340 + $0xc8] sm:$0xff]
      %v3666 = vld [vmem:[%s3340 + $0xd0] sm:$0xff]
      %v3667 = vld [vmem:[%s3340 + $0xe8] sm:$0xff]
      %v3668 = vld [vmem:[%s3340 + $0xf0] sm:$0xff]
      %v3669 = vld [vmem:[%s3340 + $0x108] sm:$0xff]
      %v3670 = vld [vmem:[%s3340 + $0x110] sm:$0xff]
      %v3671 = vld [vmem:[%s3340 + $0x128] sm:$0xff]
      %v3672 = vld [vmem:[%s3340 + $0x130] sm:$0xff]
      %v3673 = vld [vmem:[%s3340 + $0x148] sm:$0xff]
      %v3674 = vld [vmem:[%s3340 + $0x150] sm:$0xff]
      %v3675 = vld [vmem:[%s3340 + $0x168] sm:$0xff]
      %v3676 = vld [vmem:[%s3340 + $0x170] sm:$0xff]
      %v3677 = vld [vmem:[%s3340 + $0x188] sm:$0xff]
      %v3678 = vld [vmem:[%s3340 + $0x190] sm:$0xff]
      %v3679 = vld [vmem:[%s3340 + $0x1a8] sm:$0xff]
      %v3680 = vld [vmem:[%s3340 + $0x1b0] sm:$0xff]
      %v3681 = vld [vmem:[%s3340 + $0x1c8] sm:$0xff]
      %v3682 = vld [vmem:[%s3340 + $0x1d0] sm:$0xff]
      %v3683 = vld [vmem:[%s3340 + $0x1e8] sm:$0xff]
      %v3684 = vld [vmem:[%s3340 + $0x1f0] sm:$0xff]
      %v3686 = vlaneseq
      %v3687 = vshrl.u32 %v3686, 7
      %v3688 = vsub.s32 0, %v3687
      %v3689 = vrot.slane %v3652, %v3688
      %v3691 = vmul.f32 %v3653, %v3689
      %v3692 = vmul.f32 %v3654, %v3689
      %v3693 = vmul.f32 %v3655, %v3689
      %v3694 = vmul.f32 %v3656, %v3689
      %v3695 = vmul.f32 %v3657, %v3689
      %v3696 = vmul.f32 %v3658, %v3689
      %v3697 = vmul.f32 %v3659, %v3689
      %v3698 = vmul.f32 %v3660, %v3689
      %v3699 = vmul.f32 %v3661, %v3689
      %v3700 = vmul.f32 %v3662, %v3689
      %v3701 = vmul.f32 %v3663, %v3689
      %v3702 = vmul.f32 %v3664, %v3689
      %v3703 = vmul.f32 %v3665, %v3689
      %v3704 = vmul.f32 %v3666, %v3689
      %v3705 = vmul.f32 %v3667, %v3689
      %v3706 = vmul.f32 %v3668, %v3689
      %v3707 = vmul.f32 %v3669, %v3689
      %v3708 = vmul.f32 %v3670, %v3689
      %v3709 = vmul.f32 %v3671, %v3689
      %v3710 = vmul.f32 %v3672, %v3689
      %v3711 = vmul.f32 %v3673, %v3689
      %v3712 = vmul.f32 %v3674, %v3689
      %v3713 = vmul.f32 %v3675, %v3689
      %v3714 = vmul.f32 %v3676, %v3689
      %v3715 = vmul.f32 %v3677, %v3689
      %v3716 = vmul.f32 %v3678, %v3689
      %v3717 = vmul.f32 %v3679, %v3689
      %v3718 = vmul.f32 %v3680, %v3689
      %v3719 = vmul.f32 %v3681, %v3689
      %v3720 = vmul.f32 %v3682, %v3689
      %v3721 = vmul.f32 %v3683, %v3689
      %v3722 = vmul.f32 %v3684, %v3689
      %v3723 = vadd.f32 %v3619, %v3691
      %v3724 = vadd.f32 %v3620, %v3692
      %v3725 = vadd.f32 %v3621, %v3693
      %v3726 = vadd.f32 %v3622, %v3694
      %v3727 = vadd.f32 %v3623, %v3695
      %v3728 = vadd.f32 %v3624, %v3696
      %v3729 = vadd.f32 %v3625, %v3697
      %v3730 = vadd.f32 %v3626, %v3698
      %v3731 = vadd.f32 %v3627, %v3699
      %v3732 = vadd.f32 %v3628, %v3700
      %v3733 = vadd.f32 %v3629, %v3701
      %v3734 = vadd.f32 %v3630, %v3702
      %v3735 = vadd.f32 %v3631, %v3703
      %v3736 = vadd.f32 %v3632, %v3704
      %v3737 = vadd.f32 %v3633, %v3705
      %v3738 = vadd.f32 %v3634, %v3706
      %v3739 = vadd.f32 %v3635, %v3707
      %v3740 = vadd.f32 %v3636, %v3708
      %v3741 = vadd.f32 %v3637, %v3709
      %v3742 = vadd.f32 %v3638, %v3710
      %v3743 = vadd.f32 %v3639, %v3711
      %v3744 = vadd.f32 %v3640, %v3712
      %v3745 = vadd.f32 %v3641, %v3713
      %v3746 = vadd.f32 %v3642, %v3714
      %v3747 = vadd.f32 %v3643, %v3715
      %v3748 = vadd.f32 %v3644, %v3716
      %v3749 = vadd.f32 %v3645, %v3717
      %v3750 = vadd.f32 %v3646, %v3718
      %v3751 = vadd.f32 %v3647, %v3719
      %v3752 = vadd.f32 %v3648, %v3720
      %v3753 = vadd.f32 %v3649, %v3721
      %v3754 = vadd.f32 %v3650, %v3722
      %s3755 = scalar_lea.vmem %s218, 32
      %v3756 = vld [vmem:[%s3755] sm:$0x1]
      %v3757 = vld [vmem:[%s3340 + $0x9] sm:$0xff]
      %v3758 = vld [vmem:[%s3340 + $0x11] sm:$0xff]
      %v3759 = vld [vmem:[%s3340 + $0x29] sm:$0xff]
      %v3760 = vld [vmem:[%s3340 + $0x31] sm:$0xff]
      %v3761 = vld [vmem:[%s3340 + $0x49] sm:$0xff]
      %v3762 = vld [vmem:[%s3340 + $0x51] sm:$0xff]
      %v3763 = vld [vmem:[%s3340 + $0x69] sm:$0xff]
      %v3764 = vld [vmem:[%s3340 + $0x71] sm:$0xff]
      %v3765 = vld [vmem:[%s3340 + $0x89] sm:$0xff]
      %v3766 = vld [vmem:[%s3340 + $0x91] sm:$0xff]
      %v3767 = vld [vmem:[%s3340 + $0xa9] sm:$0xff]
      %v3768 = vld [vmem:[%s3340 + $0xb1] sm:$0xff]
      %v3769 = vld [vmem:[%s3340 + $0xc9] sm:$0xff]
      %v3770 = vld [vmem:[%s3340 + $0xd1] sm:$0xff]
      %v3771 = vld [vmem:[%s3340 + $0xe9] sm:$0xff]
      %v3772 = vld [vmem:[%s3340 + $0xf1] sm:$0xff]
      %v3773 = vld [vmem:[%s3340 + $0x109] sm:$0xff]
      %v3774 = vld [vmem:[%s3340 + $0x111] sm:$0xff]
      %v3775 = vld [vmem:[%s3340 + $0x129] sm:$0xff]
      %v3776 = vld [vmem:[%s3340 + $0x131] sm:$0xff]
      %v3777 = vld [vmem:[%s3340 + $0x149] sm:$0xff]
      %v3778 = vld [vmem:[%s3340 + $0x151] sm:$0xff]
      %v3779 = vld [vmem:[%s3340 + $0x169] sm:$0xff]
      %v3780 = vld [vmem:[%s3340 + $0x171] sm:$0xff]
      %v3781 = vld [vmem:[%s3340 + $0x189] sm:$0xff]
      %v3782 = vld [vmem:[%s3340 + $0x191] sm:$0xff]
      %v3783 = vld [vmem:[%s3340 + $0x1a9] sm:$0xff]
      %v3784 = vld [vmem:[%s3340 + $0x1b1] sm:$0xff]
      %v3785 = vld [vmem:[%s3340 + $0x1c9] sm:$0xff]
      %v3786 = vld [vmem:[%s3340 + $0x1d1] sm:$0xff]
      %v3787 = vld [vmem:[%s3340 + $0x1e9] sm:$0xff]
      %v3788 = vld [vmem:[%s3340 + $0x1f1] sm:$0xff]
      %v3790 = vlaneseq
      %v3791 = vshrl.u32 %v3790, 7
      %v3792 = vsub.s32 0, %v3791
      %v3793 = vrot.slane %v3756, %v3792
      %v3795 = vmul.f32 %v3757, %v3793
      %v3796 = vmul.f32 %v3758, %v3793
      %v3797 = vmul.f32 %v3759, %v3793
      %v3798 = vmul.f32 %v3760, %v3793
      %v3799 = vmul.f32 %v3761, %v3793
      %v3800 = vmul.f32 %v3762, %v3793
      %v3801 = vmul.f32 %v3763, %v3793
      %v3802 = vmul.f32 %v3764, %v3793
      %v3803 = vmul.f32 %v3765, %v3793
      %v3804 = vmul.f32 %v3766, %v3793
      %v3805 = vmul.f32 %v3767, %v3793
      %v3806 = vmul.f32 %v3768, %v3793
      %v3807 = vmul.f32 %v3769, %v3793
      %v3808 = vmul.f32 %v3770, %v3793
      %v3809 = vmul.f32 %v3771, %v3793
      %v3810 = vmul.f32 %v3772, %v3793
      %v3811 = vmul.f32 %v3773, %v3793
      %v3812 = vmul.f32 %v3774, %v3793
      %v3813 = vmul.f32 %v3775, %v3793
      %v3814 = vmul.f32 %v3776, %v3793
      %v3815 = vmul.f32 %v3777, %v3793
      %v3816 = vmul.f32 %v3778, %v3793
      %v3817 = vmul.f32 %v3779, %v3793
      %v3818 = vmul.f32 %v3780, %v3793
      %v3819 = vmul.f32 %v3781, %v3793
      %v3820 = vmul.f32 %v3782, %v3793
      %v3821 = vmul.f32 %v3783, %v3793
      %v3822 = vmul.f32 %v3784, %v3793
      %v3823 = vmul.f32 %v3785, %v3793
      %v3824 = vmul.f32 %v3786, %v3793
      %v3825 = vmul.f32 %v3787, %v3793
      %v3826 = vmul.f32 %v3788, %v3793
      %v3827 = vadd.f32 %v3723, %v3795
      %v3828 = vadd.f32 %v3724, %v3796
      %v3829 = vadd.f32 %v3725, %v3797
      %v3830 = vadd.f32 %v3726, %v3798
      %v3831 = vadd.f32 %v3727, %v3799
      %v3832 = vadd.f32 %v3728, %v3800
      %v3833 = vadd.f32 %v3729, %v3801
      %v3834 = vadd.f32 %v3730, %v3802
      %v3835 = vadd.f32 %v3731, %v3803
      %v3836 = vadd.f32 %v3732, %v3804
      %v3837 = vadd.f32 %v3733, %v3805
      %v3838 = vadd.f32 %v3734, %v3806
      %v3839 = vadd.f32 %v3735, %v3807
      %v3840 = vadd.f32 %v3736, %v3808
      %v3841 = vadd.f32 %v3737, %v3809
      %v3842 = vadd.f32 %v3738, %v3810
      %v3843 = vadd.f32 %v3739, %v3811
      %v3844 = vadd.f32 %v3740, %v3812
      %v3845 = vadd.f32 %v3741, %v3813
      %v3846 = vadd.f32 %v3742, %v3814
      %v3847 = vadd.f32 %v3743, %v3815
      %v3848 = vadd.f32 %v3744, %v3816
      %v3849 = vadd.f32 %v3745, %v3817
      %v3850 = vadd.f32 %v3746, %v3818
      %v3851 = vadd.f32 %v3747, %v3819
      %v3852 = vadd.f32 %v3748, %v3820
      %v3853 = vadd.f32 %v3749, %v3821
      %v3854 = vadd.f32 %v3750, %v3822
      %v3855 = vadd.f32 %v3751, %v3823
      %v3856 = vadd.f32 %v3752, %v3824
      %v3857 = vadd.f32 %v3753, %v3825
      %v3858 = vadd.f32 %v3754, %v3826
      %s3859 = scalar_lea.vmem %s218, 33
      %v3860 = vld [vmem:[%s3859] sm:$0x1]
      %v3861 = vld [vmem:[%s3340 + $0xa] sm:$0xff]
      %v3862 = vld [vmem:[%s3340 + $0x12] sm:$0xff]
      %v3863 = vld [vmem:[%s3340 + $0x2a] sm:$0xff]
      %v3864 = vld [vmem:[%s3340 + $0x32] sm:$0xff]
      %v3865 = vld [vmem:[%s3340 + $0x4a] sm:$0xff]
      %v3866 = vld [vmem:[%s3340 + $0x52] sm:$0xff]
      %v3867 = vld [vmem:[%s3340 + $0x6a] sm:$0xff]
      %v3868 = vld [vmem:[%s3340 + $0x72] sm:$0xff]
      %v3869 = vld [vmem:[%s3340 + $0x8a] sm:$0xff]
      %v3870 = vld [vmem:[%s3340 + $0x92] sm:$0xff]
      %v3871 = vld [vmem:[%s3340 + $0xaa] sm:$0xff]
      %v3872 = vld [vmem:[%s3340 + $0xb2] sm:$0xff]
      %v3873 = vld [vmem:[%s3340 + $0xca] sm:$0xff]
      %v3874 = vld [vmem:[%s3340 + $0xd2] sm:$0xff]
      %v3875 = vld [vmem:[%s3340 + $0xea] sm:$0xff]
      %v3876 = vld [vmem:[%s3340 + $0xf2] sm:$0xff]
      %v3877 = vld [vmem:[%s3340 + $0x10a] sm:$0xff]
      %v3878 = vld [vmem:[%s3340 + $0x112] sm:$0xff]
      %v3879 = vld [vmem:[%s3340 + $0x12a] sm:$0xff]
      %v3880 = vld [vmem:[%s3340 + $0x132] sm:$0xff]
      %v3881 = vld [vmem:[%s3340 + $0x14a] sm:$0xff]
      %v3882 = vld [vmem:[%s3340 + $0x152] sm:$0xff]
      %v3883 = vld [vmem:[%s3340 + $0x16a] sm:$0xff]
      %v3884 = vld [vmem:[%s3340 + $0x172] sm:$0xff]
      %v3885 = vld [vmem:[%s3340 + $0x18a] sm:$0xff]
      %v3886 = vld [vmem:[%s3340 + $0x192] sm:$0xff]
      %v3887 = vld [vmem:[%s3340 + $0x1aa] sm:$0xff]
      %v3888 = vld [vmem:[%s3340 + $0x1b2] sm:$0xff]
      %v3889 = vld [vmem:[%s3340 + $0x1ca] sm:$0xff]
      %v3890 = vld [vmem:[%s3340 + $0x1d2] sm:$0xff]
      %v3891 = vld [vmem:[%s3340 + $0x1ea] sm:$0xff]
      %v3892 = vld [vmem:[%s3340 + $0x1f2] sm:$0xff]
      %v3894 = vlaneseq
      %v3895 = vshrl.u32 %v3894, 7
      %v3896 = vsub.s32 0, %v3895
      %v3897 = vrot.slane %v3860, %v3896
      %v3899 = vmul.f32 %v3861, %v3897
      %v3900 = vmul.f32 %v3862, %v3897
      %v3901 = vmul.f32 %v3863, %v3897
      %v3902 = vmul.f32 %v3864, %v3897
      %v3903 = vmul.f32 %v3865, %v3897
      %v3904 = vmul.f32 %v3866, %v3897
      %v3905 = vmul.f32 %v3867, %v3897
      %v3906 = vmul.f32 %v3868, %v3897
      %v3907 = vmul.f32 %v3869, %v3897
      %v3908 = vmul.f32 %v3870, %v3897
      %v3909 = vmul.f32 %v3871, %v3897
      %v3910 = vmul.f32 %v3872, %v3897
      %v3911 = vmul.f32 %v3873, %v3897
      %v3912 = vmul.f32 %v3874, %v3897
      %v3913 = vmul.f32 %v3875, %v3897
      %v3914 = vmul.f32 %v3876, %v3897
      %v3915 = vmul.f32 %v3877, %v3897
      %v3916 = vmul.f32 %v3878, %v3897
      %v3917 = vmul.f32 %v3879, %v3897
      %v3918 = vmul.f32 %v3880, %v3897
      %v3919 = vmul.f32 %v3881, %v3897
      %v3920 = vmul.f32 %v3882, %v3897
      %v3921 = vmul.f32 %v3883, %v3897
      %v3922 = vmul.f32 %v3884, %v3897
      %v3923 = vmul.f32 %v3885, %v3897
      %v3924 = vmul.f32 %v3886, %v3897
      %v3925 = vmul.f32 %v3887, %v3897
      %v3926 = vmul.f32 %v3888, %v3897
      %v3927 = vmul.f32 %v3889, %v3897
      %v3928 = vmul.f32 %v3890, %v3897
      %v3929 = vmul.f32 %v3891, %v3897
      %v3930 = vmul.f32 %v3892, %v3897
      %v3931 = vadd.f32 %v3827, %v3899
      %v3932 = vadd.f32 %v3828, %v3900
      %v3933 = vadd.f32 %v3829, %v3901
      %v3934 = vadd.f32 %v3830, %v3902
      %v3935 = vadd.f32 %v3831, %v3903
      %v3936 = vadd.f32 %v3832, %v3904
      %v3937 = vadd.f32 %v3833, %v3905
      %v3938 = vadd.f32 %v3834, %v3906
      %v3939 = vadd.f32 %v3835, %v3907
      %v3940 = vadd.f32 %v3836, %v3908
      %v3941 = vadd.f32 %v3837, %v3909
      %v3942 = vadd.f32 %v3838, %v3910
      %v3943 = vadd.f32 %v3839, %v3911
      %v3944 = vadd.f32 %v3840, %v3912
      %v3945 = vadd.f32 %v3841, %v3913
      %v3946 = vadd.f32 %v3842, %v3914
      %v3947 = vadd.f32 %v3843, %v3915
      %v3948 = vadd.f32 %v3844, %v3916
      %v3949 = vadd.f32 %v3845, %v3917
      %v3950 = vadd.f32 %v3846, %v3918
      %v3951 = vadd.f32 %v3847, %v3919
      %v3952 = vadd.f32 %v3848, %v3920
      %v3953 = vadd.f32 %v3849, %v3921
      %v3954 = vadd.f32 %v3850, %v3922
      %v3955 = vadd.f32 %v3851, %v3923
      %v3956 = vadd.f32 %v3852, %v3924
      %v3957 = vadd.f32 %v3853, %v3925
      %v3958 = vadd.f32 %v3854, %v3926
      %v3959 = vadd.f32 %v3855, %v3927
      %v3960 = vadd.f32 %v3856, %v3928
      %v3961 = vadd.f32 %v3857, %v3929
      %v3962 = vadd.f32 %v3858, %v3930
      %s3963 = scalar_lea.vmem %s218, 34
      %v3964 = vld [vmem:[%s3963] sm:$0x1]
      %v3965 = vld [vmem:[%s3340 + $0xb] sm:$0xff]
      %v3966 = vld [vmem:[%s3340 + $0x13] sm:$0xff]
      %v3967 = vld [vmem:[%s3340 + $0x2b] sm:$0xff]
      %v3968 = vld [vmem:[%s3340 + $0x33] sm:$0xff]
      %v3969 = vld [vmem:[%s3340 + $0x4b] sm:$0xff]
      %v3970 = vld [vmem:[%s3340 + $0x53] sm:$0xff]
      %v3971 = vld [vmem:[%s3340 + $0x6b] sm:$0xff]
      %v3972 = vld [vmem:[%s3340 + $0x73] sm:$0xff]
      %v3973 = vld [vmem:[%s3340 + $0x8b] sm:$0xff]
      %v3974 = vld [vmem:[%s3340 + $0x93] sm:$0xff]
      %v3975 = vld [vmem:[%s3340 + $0xab] sm:$0xff]
      %v3976 = vld [vmem:[%s3340 + $0xb3] sm:$0xff]
      %v3977 = vld [vmem:[%s3340 + $0xcb] sm:$0xff]
      %v3978 = vld [vmem:[%s3340 + $0xd3] sm:$0xff]
      %v3979 = vld [vmem:[%s3340 + $0xeb] sm:$0xff]
      %v3980 = vld [vmem:[%s3340 + $0xf3] sm:$0xff]
      %v3981 = vld [vmem:[%s3340 + $0x10b] sm:$0xff]
      %v3982 = vld [vmem:[%s3340 + $0x113] sm:$0xff]
      %v3983 = vld [vmem:[%s3340 + $0x12b] sm:$0xff]
      %v3984 = vld [vmem:[%s3340 + $0x133] sm:$0xff]
      %v3985 = vld [vmem:[%s3340 + $0x14b] sm:$0xff]
      %v3986 = vld [vmem:[%s3340 + $0x153] sm:$0xff]
      %v3987 = vld [vmem:[%s3340 + $0x16b] sm:$0xff]
      %v3988 = vld [vmem:[%s3340 + $0x173] sm:$0xff]
      %v3989 = vld [vmem:[%s3340 + $0x18b] sm:$0xff]
      %v3990 = vld [vmem:[%s3340 + $0x193] sm:$0xff]
      %v3991 = vld [vmem:[%s3340 + $0x1ab] sm:$0xff]
      %v3992 = vld [vmem:[%s3340 + $0x1b3] sm:$0xff]
      %v3993 = vld [vmem:[%s3340 + $0x1cb] sm:$0xff]
      %v3994 = vld [vmem:[%s3340 + $0x1d3] sm:$0xff]
      %v3995 = vld [vmem:[%s3340 + $0x1eb] sm:$0xff]
      %v3996 = vld [vmem:[%s3340 + $0x1f3] sm:$0xff]
      %v3998 = vlaneseq
      %v3999 = vshrl.u32 %v3998, 7
      %v4000 = vsub.s32 0, %v3999
      %v4001 = vrot.slane %v3964, %v4000
      %v4003 = vmul.f32 %v3965, %v4001
      %v4004 = vmul.f32 %v3966, %v4001
      %v4005 = vmul.f32 %v3967, %v4001
      %v4006 = vmul.f32 %v3968, %v4001
      %v4007 = vmul.f32 %v3969, %v4001
      %v4008 = vmul.f32 %v3970, %v4001
      %v4009 = vmul.f32 %v3971, %v4001
      %v4010 = vmul.f32 %v3972, %v4001
      %v4011 = vmul.f32 %v3973, %v4001
      %v4012 = vmul.f32 %v3974, %v4001
      %v4013 = vmul.f32 %v3975, %v4001
      %v4014 = vmul.f32 %v3976, %v4001
      %v4015 = vmul.f32 %v3977, %v4001
      %v4016 = vmul.f32 %v3978, %v4001
      %v4017 = vmul.f32 %v3979, %v4001
      %v4018 = vmul.f32 %v3980, %v4001
      %v4019 = vmul.f32 %v3981, %v4001
      %v4020 = vmul.f32 %v3982, %v4001
      %v4021 = vmul.f32 %v3983, %v4001
      %v4022 = vmul.f32 %v3984, %v4001
      %v4023 = vmul.f32 %v3985, %v4001
      %v4024 = vmul.f32 %v3986, %v4001
      %v4025 = vmul.f32 %v3987, %v4001
      %v4026 = vmul.f32 %v3988, %v4001
      %v4027 = vmul.f32 %v3989, %v4001
      %v4028 = vmul.f32 %v3990, %v4001
      %v4029 = vmul.f32 %v3991, %v4001
      %v4030 = vmul.f32 %v3992, %v4001
      %v4031 = vmul.f32 %v3993, %v4001
      %v4032 = vmul.f32 %v3994, %v4001
      %v4033 = vmul.f32 %v3995, %v4001
      %v4034 = vmul.f32 %v3996, %v4001
      %v4035 = vadd.f32 %v3931, %v4003
      %v4036 = vadd.f32 %v3932, %v4004
      %v4037 = vadd.f32 %v3933, %v4005
      %v4038 = vadd.f32 %v3934, %v4006
      %v4039 = vadd.f32 %v3935, %v4007
      %v4040 = vadd.f32 %v3936, %v4008
      %v4041 = vadd.f32 %v3937, %v4009
      %v4042 = vadd.f32 %v3938, %v4010
      %v4043 = vadd.f32 %v3939, %v4011
      %v4044 = vadd.f32 %v3940, %v4012
      %v4045 = vadd.f32 %v3941, %v4013
      %v4046 = vadd.f32 %v3942, %v4014
      %v4047 = vadd.f32 %v3943, %v4015
      %v4048 = vadd.f32 %v3944, %v4016
      %v4049 = vadd.f32 %v3945, %v4017
      %v4050 = vadd.f32 %v3946, %v4018
      %v4051 = vadd.f32 %v3947, %v4019
      %v4052 = vadd.f32 %v3948, %v4020
      %v4053 = vadd.f32 %v3949, %v4021
      %v4054 = vadd.f32 %v3950, %v4022
      %v4055 = vadd.f32 %v3951, %v4023
      %v4056 = vadd.f32 %v3952, %v4024
      %v4057 = vadd.f32 %v3953, %v4025
      %v4058 = vadd.f32 %v3954, %v4026
      %v4059 = vadd.f32 %v3955, %v4027
      %v4060 = vadd.f32 %v3956, %v4028
      %v4061 = vadd.f32 %v3957, %v4029
      %v4062 = vadd.f32 %v3958, %v4030
      %v4063 = vadd.f32 %v3959, %v4031
      %v4064 = vadd.f32 %v3960, %v4032
      %v4065 = vadd.f32 %v3961, %v4033
      %v4066 = vadd.f32 %v3962, %v4034
      %s4067 = scalar_lea.vmem %s218, 35
      %v4068 = vld [vmem:[%s4067] sm:$0x1]
      %s4069 = scalar_lea.vmem [#allocation2], 160
      %v4070 = vld [vmem:[%s4069 + $0x5] sm:$0xff]
      %v4071 = vld [vmem:[%s4069 + $0xd] sm:$0xff]
      %v4072 = vld [vmem:[%s4069 + $0x25] sm:$0xff]
      %v4073 = vld [vmem:[%s4069 + $0x2d] sm:$0xff]
      %v4074 = vld [vmem:[%s4069 + $0x45] sm:$0xff]
      %v4075 = vld [vmem:[%s4069 + $0x4d] sm:$0xff]
      %v4076 = vld [vmem:[%s4069 + $0x65] sm:$0xff]
      %v4077 = vld [vmem:[%s4069 + $0x6d] sm:$0xff]
      %v4078 = vld [vmem:[%s4069 + $0x85] sm:$0xff]
      %v4079 = vld [vmem:[%s4069 + $0x8d] sm:$0xff]
      %v4080 = vld [vmem:[%s4069 + $0xa5] sm:$0xff]
      %v4081 = vld [vmem:[%s4069 + $0xad] sm:$0xff]
      %v4082 = vld [vmem:[%s4069 + $0xc5] sm:$0xff]
      %v4083 = vld [vmem:[%s4069 + $0xcd] sm:$0xff]
      %v4084 = vld [vmem:[%s4069 + $0xe5] sm:$0xff]
      %v4085 = vld [vmem:[%s4069 + $0xed] sm:$0xff]
      %v4086 = vld [vmem:[%s4069 + $0x105] sm:$0xff]
      %v4087 = vld [vmem:[%s4069 + $0x10d] sm:$0xff]
      %v4088 = vld [vmem:[%s4069 + $0x125] sm:$0xff]
      %v4089 = vld [vmem:[%s4069 + $0x12d] sm:$0xff]
      %v4090 = vld [vmem:[%s4069 + $0x145] sm:$0xff]
      %v4091 = vld [vmem:[%s4069 + $0x14d] sm:$0xff]
      %v4092 = vld [vmem:[%s4069 + $0x165] sm:$0xff]
      %v4093 = vld [vmem:[%s4069 + $0x16d] sm:$0xff]
      %v4094 = vld [vmem:[%s4069 + $0x185] sm:$0xff]
      %v4095 = vld [vmem:[%s4069 + $0x18d] sm:$0xff]
      %v4096 = vld [vmem:[%s4069 + $0x1a5] sm:$0xff]
      %v4097 = vld [vmem:[%s4069 + $0x1ad] sm:$0xff]
      %v4098 = vld [vmem:[%s4069 + $0x1c5] sm:$0xff]
      %v4099 = vld [vmem:[%s4069 + $0x1cd] sm:$0xff]
      %v4100 = vld [vmem:[%s4069 + $0x1e5] sm:$0xff]
      %v4101 = vld [vmem:[%s4069 + $0x1ed] sm:$0xff]
      %v4103 = vlaneseq
      %v4104 = vshrl.u32 %v4103, 7
      %v4105 = vsub.s32 0, %v4104
      %v4106 = vrot.slane %v4068, %v4105
      %v4108 = vmul.f32 %v4070, %v4106
      %v4109 = vmul.f32 %v4071, %v4106
      %v4110 = vmul.f32 %v4072, %v4106
      %v4111 = vmul.f32 %v4073, %v4106
      %v4112 = vmul.f32 %v4074, %v4106
      %v4113 = vmul.f32 %v4075, %v4106
      %v4114 = vmul.f32 %v4076, %v4106
      %v4115 = vmul.f32 %v4077, %v4106
      %v4116 = vmul.f32 %v4078, %v4106
      %v4117 = vmul.f32 %v4079, %v4106
      %v4118 = vmul.f32 %v4080, %v4106
      %v4119 = vmul.f32 %v4081, %v4106
      %v4120 = vmul.f32 %v4082, %v4106
      %v4121 = vmul.f32 %v4083, %v4106
      %v4122 = vmul.f32 %v4084, %v4106
      %v4123 = vmul.f32 %v4085, %v4106
      %v4124 = vmul.f32 %v4086, %v4106
      %v4125 = vmul.f32 %v4087, %v4106
      %v4126 = vmul.f32 %v4088, %v4106
      %v4127 = vmul.f32 %v4089, %v4106
      %v4128 = vmul.f32 %v4090, %v4106
      %v4129 = vmul.f32 %v4091, %v4106
      %v4130 = vmul.f32 %v4092, %v4106
      %v4131 = vmul.f32 %v4093, %v4106
      %v4132 = vmul.f32 %v4094, %v4106
      %v4133 = vmul.f32 %v4095, %v4106
      %v4134 = vmul.f32 %v4096, %v4106
      %v4135 = vmul.f32 %v4097, %v4106
      %v4136 = vmul.f32 %v4098, %v4106
      %v4137 = vmul.f32 %v4099, %v4106
      %v4138 = vmul.f32 %v4100, %v4106
      %v4139 = vmul.f32 %v4101, %v4106
      %v4140 = vadd.f32 %v4035, %v4108
      %v4141 = vadd.f32 %v4036, %v4109
      %v4142 = vadd.f32 %v4037, %v4110
      %v4143 = vadd.f32 %v4038, %v4111
      %v4144 = vadd.f32 %v4039, %v4112
      %v4145 = vadd.f32 %v4040, %v4113
      %v4146 = vadd.f32 %v4041, %v4114
      %v4147 = vadd.f32 %v4042, %v4115
      %v4148 = vadd.f32 %v4043, %v4116
      %v4149 = vadd.f32 %v4044, %v4117
      %v4150 = vadd.f32 %v4045, %v4118
      %v4151 = vadd.f32 %v4046, %v4119
      %v4152 = vadd.f32 %v4047, %v4120
      %v4153 = vadd.f32 %v4048, %v4121
      %v4154 = vadd.f32 %v4049, %v4122
      %v4155 = vadd.f32 %v4050, %v4123
      %v4156 = vadd.f32 %v4051, %v4124
      %v4157 = vadd.f32 %v4052, %v4125
      %v4158 = vadd.f32 %v4053, %v4126
      %v4159 = vadd.f32 %v4054, %v4127
      %v4160 = vadd.f32 %v4055, %v4128
      %v4161 = vadd.f32 %v4056, %v4129
      %v4162 = vadd.f32 %v4057, %v4130
      %v4163 = vadd.f32 %v4058, %v4131
      %v4164 = vadd.f32 %v4059, %v4132
      %v4165 = vadd.f32 %v4060, %v4133
      %v4166 = vadd.f32 %v4061, %v4134
      %v4167 = vadd.f32 %v4062, %v4135
      %v4168 = vadd.f32 %v4063, %v4136
      %v4169 = vadd.f32 %v4064, %v4137
      %v4170 = vadd.f32 %v4065, %v4138
      %v4171 = vadd.f32 %v4066, %v4139
      %s4172 = scalar_lea.vmem %s218, 36
      %v4173 = vld [vmem:[%s4172] sm:$0x1]
      %v4174 = vld [vmem:[%s4069 + $0x6] sm:$0xff]
      %v4175 = vld [vmem:[%s4069 + $0xe] sm:$0xff]
      %v4176 = vld [vmem:[%s4069 + $0x26] sm:$0xff]
      %v4177 = vld [vmem:[%s4069 + $0x2e] sm:$0xff]
      %v4178 = vld [vmem:[%s4069 + $0x46] sm:$0xff]
      %v4179 = vld [vmem:[%s4069 + $0x4e] sm:$0xff]
      %v4180 = vld [vmem:[%s4069 + $0x66] sm:$0xff]
      %v4181 = vld [vmem:[%s4069 + $0x6e] sm:$0xff]
      %v4182 = vld [vmem:[%s4069 + $0x86] sm:$0xff]
      %v4183 = vld [vmem:[%s4069 + $0x8e] sm:$0xff]
      %v4184 = vld [vmem:[%s4069 + $0xa6] sm:$0xff]
      %v4185 = vld [vmem:[%s4069 + $0xae] sm:$0xff]
      %v4186 = vld [vmem:[%s4069 + $0xc6] sm:$0xff]
      %v4187 = vld [vmem:[%s4069 + $0xce] sm:$0xff]
      %v4188 = vld [vmem:[%s4069 + $0xe6] sm:$0xff]
      %v4189 = vld [vmem:[%s4069 + $0xee] sm:$0xff]
      %v4190 = vld [vmem:[%s4069 + $0x106] sm:$0xff]
      %v4191 = vld [vmem:[%s4069 + $0x10e] sm:$0xff]
      %v4192 = vld [vmem:[%s4069 + $0x126] sm:$0xff]
      %v4193 = vld [vmem:[%s4069 + $0x12e] sm:$0xff]
      %v4194 = vld [vmem:[%s4069 + $0x146] sm:$0xff]
      %v4195 = vld [vmem:[%s4069 + $0x14e] sm:$0xff]
      %v4196 = vld [vmem:[%s4069 + $0x166] sm:$0xff]
      %v4197 = vld [vmem:[%s4069 + $0x16e] sm:$0xff]
      %v4198 = vld [vmem:[%s4069 + $0x186] sm:$0xff]
      %v4199 = vld [vmem:[%s4069 + $0x18e] sm:$0xff]
      %v4200 = vld [vmem:[%s4069 + $0x1a6] sm:$0xff]
      %v4201 = vld [vmem:[%s4069 + $0x1ae] sm:$0xff]
      %v4202 = vld [vmem:[%s4069 + $0x1c6] sm:$0xff]
      %v4203 = vld [vmem:[%s4069 + $0x1ce] sm:$0xff]
      %v4204 = vld [vmem:[%s4069 + $0x1e6] sm:$0xff]
      %v4205 = vld [vmem:[%s4069 + $0x1ee] sm:$0xff]
      %v4207 = vlaneseq
      %v4208 = vshrl.u32 %v4207, 7
      %v4209 = vsub.s32 0, %v4208
      %v4210 = vrot.slane %v4173, %v4209
      %v4212 = vmul.f32 %v4174, %v4210
      %v4213 = vmul.f32 %v4175, %v4210
      %v4214 = vmul.f32 %v4176, %v4210
      %v4215 = vmul.f32 %v4177, %v4210
      %v4216 = vmul.f32 %v4178, %v4210
      %v4217 = vmul.f32 %v4179, %v4210
      %v4218 = vmul.f32 %v4180, %v4210
      %v4219 = vmul.f32 %v4181, %v4210
      %v4220 = vmul.f32 %v4182, %v4210
      %v4221 = vmul.f32 %v4183, %v4210
      %v4222 = vmul.f32 %v4184, %v4210
      %v4223 = vmul.f32 %v4185, %v4210
      %v4224 = vmul.f32 %v4186, %v4210
      %v4225 = vmul.f32 %v4187, %v4210
      %v4226 = vmul.f32 %v4188, %v4210
      %v4227 = vmul.f32 %v4189, %v4210
      %v4228 = vmul.f32 %v4190, %v4210
      %v4229 = vmul.f32 %v4191, %v4210
      %v4230 = vmul.f32 %v4192, %v4210
      %v4231 = vmul.f32 %v4193, %v4210
      %v4232 = vmul.f32 %v4194, %v4210
      %v4233 = vmul.f32 %v4195, %v4210
      %v4234 = vmul.f32 %v4196, %v4210
      %v4235 = vmul.f32 %v4197, %v4210
      %v4236 = vmul.f32 %v4198, %v4210
      %v4237 = vmul.f32 %v4199, %v4210
      %v4238 = vmul.f32 %v4200, %v4210
      %v4239 = vmul.f32 %v4201, %v4210
      %v4240 = vmul.f32 %v4202, %v4210
      %v4241 = vmul.f32 %v4203, %v4210
      %v4242 = vmul.f32 %v4204, %v4210
      %v4243 = vmul.f32 %v4205, %v4210
      %v4244 = vadd.f32 %v4140, %v4212
      %v4245 = vadd.f32 %v4141, %v4213
      %v4246 = vadd.f32 %v4142, %v4214
      %v4247 = vadd.f32 %v4143, %v4215
      %v4248 = vadd.f32 %v4144, %v4216
      %v4249 = vadd.f32 %v4145, %v4217
      %v4250 = vadd.f32 %v4146, %v4218
      %v4251 = vadd.f32 %v4147, %v4219
      %v4252 = vadd.f32 %v4148, %v4220
      %v4253 = vadd.f32 %v4149, %v4221
      %v4254 = vadd.f32 %v4150, %v4222
      %v4255 = vadd.f32 %v4151, %v4223
      %v4256 = vadd.f32 %v4152, %v4224
      %v4257 = vadd.f32 %v4153, %v4225
      %v4258 = vadd.f32 %v4154, %v4226
      %v4259 = vadd.f32 %v4155, %v4227
      %v4260 = vadd.f32 %v4156, %v4228
      %v4261 = vadd.f32 %v4157, %v4229
      %v4262 = vadd.f32 %v4158, %v4230
      %v4263 = vadd.f32 %v4159, %v4231
      %v4264 = vadd.f32 %v4160, %v4232
      %v4265 = vadd.f32 %v4161, %v4233
      %v4266 = vadd.f32 %v4162, %v4234
      %v4267 = vadd.f32 %v4163, %v4235
      %v4268 = vadd.f32 %v4164, %v4236
      %v4269 = vadd.f32 %v4165, %v4237
      %v4270 = vadd.f32 %v4166, %v4238
      %v4271 = vadd.f32 %v4167, %v4239
      %v4272 = vadd.f32 %v4168, %v4240
      %v4273 = vadd.f32 %v4169, %v4241
      %v4274 = vadd.f32 %v4170, %v4242
      %v4275 = vadd.f32 %v4171, %v4243
      %s4276 = scalar_lea.vmem %s218, 37
      %v4277 = vld [vmem:[%s4276] sm:$0x1]
      %v4278 = vld [vmem:[%s4069 + $0x7] sm:$0xff]
      %v4279 = vld [vmem:[%s4069 + $0xf] sm:$0xff]
      %v4280 = vld [vmem:[%s4069 + $0x27] sm:$0xff]
      %v4281 = vld [vmem:[%s4069 + $0x2f] sm:$0xff]
      %v4282 = vld [vmem:[%s4069 + $0x47] sm:$0xff]
      %v4283 = vld [vmem:[%s4069 + $0x4f] sm:$0xff]
      %v4284 = vld [vmem:[%s4069 + $0x67] sm:$0xff]
      %v4285 = vld [vmem:[%s4069 + $0x6f] sm:$0xff]
      %v4286 = vld [vmem:[%s4069 + $0x87] sm:$0xff]
      %v4287 = vld [vmem:[%s4069 + $0x8f] sm:$0xff]
      %v4288 = vld [vmem:[%s4069 + $0xa7] sm:$0xff]
      %v4289 = vld [vmem:[%s4069 + $0xaf] sm:$0xff]
      %v4290 = vld [vmem:[%s4069 + $0xc7] sm:$0xff]
      %v4291 = vld [vmem:[%s4069 + $0xcf] sm:$0xff]
      %v4292 = vld [vmem:[%s4069 + $0xe7] sm:$0xff]
      %v4293 = vld [vmem:[%s4069 + $0xef] sm:$0xff]
      %v4294 = vld [vmem:[%s4069 + $0x107] sm:$0xff]
      %v4295 = vld [vmem:[%s4069 + $0x10f] sm:$0xff]
      %v4296 = vld [vmem:[%s4069 + $0x127] sm:$0xff]
      %v4297 = vld [vmem:[%s4069 + $0x12f] sm:$0xff]
      %v4298 = vld [vmem:[%s4069 + $0x147] sm:$0xff]
      %v4299 = vld [vmem:[%s4069 + $0x14f] sm:$0xff]
      %v4300 = vld [vmem:[%s4069 + $0x167] sm:$0xff]
      %v4301 = vld [vmem:[%s4069 + $0x16f] sm:$0xff]
      %v4302 = vld [vmem:[%s4069 + $0x187] sm:$0xff]
      %v4303 = vld [vmem:[%s4069 + $0x18f] sm:$0xff]
      %v4304 = vld [vmem:[%s4069 + $0x1a7] sm:$0xff]
      %v4305 = vld [vmem:[%s4069 + $0x1af] sm:$0xff]
      %v4306 = vld [vmem:[%s4069 + $0x1c7] sm:$0xff]
      %v4307 = vld [vmem:[%s4069 + $0x1cf] sm:$0xff]
      %v4308 = vld [vmem:[%s4069 + $0x1e7] sm:$0xff]
      %v4309 = vld [vmem:[%s4069 + $0x1ef] sm:$0xff]
      %v4311 = vlaneseq
      %v4312 = vshrl.u32 %v4311, 7
      %v4313 = vsub.s32 0, %v4312
      %v4314 = vrot.slane %v4277, %v4313
      %v4316 = vmul.f32 %v4278, %v4314
      %v4317 = vmul.f32 %v4279, %v4314
      %v4318 = vmul.f32 %v4280, %v4314
      %v4319 = vmul.f32 %v4281, %v4314
      %v4320 = vmul.f32 %v4282, %v4314
      %v4321 = vmul.f32 %v4283, %v4314
      %v4322 = vmul.f32 %v4284, %v4314
      %v4323 = vmul.f32 %v4285, %v4314
      %v4324 = vmul.f32 %v4286, %v4314
      %v4325 = vmul.f32 %v4287, %v4314
      %v4326 = vmul.f32 %v4288, %v4314
      %v4327 = vmul.f32 %v4289, %v4314
      %v4328 = vmul.f32 %v4290, %v4314
      %v4329 = vmul.f32 %v4291, %v4314
      %v4330 = vmul.f32 %v4292, %v4314
      %v4331 = vmul.f32 %v4293, %v4314
      %v4332 = vmul.f32 %v4294, %v4314
      %v4333 = vmul.f32 %v4295, %v4314
      %v4334 = vmul.f32 %v4296, %v4314
      %v4335 = vmul.f32 %v4297, %v4314
      %v4336 = vmul.f32 %v4298, %v4314
      %v4337 = vmul.f32 %v4299, %v4314
      %v4338 = vmul.f32 %v4300, %v4314
      %v4339 = vmul.f32 %v4301, %v4314
      %v4340 = vmul.f32 %v4302, %v4314
      %v4341 = vmul.f32 %v4303, %v4314
      %v4342 = vmul.f32 %v4304, %v4314
      %v4343 = vmul.f32 %v4305, %v4314
      %v4344 = vmul.f32 %v4306, %v4314
      %v4345 = vmul.f32 %v4307, %v4314
      %v4346 = vmul.f32 %v4308, %v4314
      %v4347 = vmul.f32 %v4309, %v4314
      %v4348 = vadd.f32 %v4244, %v4316
      %v4349 = vadd.f32 %v4245, %v4317
      %v4350 = vadd.f32 %v4246, %v4318
      %v4351 = vadd.f32 %v4247, %v4319
      %v4352 = vadd.f32 %v4248, %v4320
      %v4353 = vadd.f32 %v4249, %v4321
      %v4354 = vadd.f32 %v4250, %v4322
      %v4355 = vadd.f32 %v4251, %v4323
      %v4356 = vadd.f32 %v4252, %v4324
      %v4357 = vadd.f32 %v4253, %v4325
      %v4358 = vadd.f32 %v4254, %v4326
      %v4359 = vadd.f32 %v4255, %v4327
      %v4360 = vadd.f32 %v4256, %v4328
      %v4361 = vadd.f32 %v4257, %v4329
      %v4362 = vadd.f32 %v4258, %v4330
      %v4363 = vadd.f32 %v4259, %v4331
      %v4364 = vadd.f32 %v4260, %v4332
      %v4365 = vadd.f32 %v4261, %v4333
      %v4366 = vadd.f32 %v4262, %v4334
      %v4367 = vadd.f32 %v4263, %v4335
      %v4368 = vadd.f32 %v4264, %v4336
      %v4369 = vadd.f32 %v4265, %v4337
      %v4370 = vadd.f32 %v4266, %v4338
      %v4371 = vadd.f32 %v4267, %v4339
      %v4372 = vadd.f32 %v4268, %v4340
      %v4373 = vadd.f32 %v4269, %v4341
      %v4374 = vadd.f32 %v4270, %v4342
      %v4375 = vadd.f32 %v4271, %v4343
      %v4376 = vadd.f32 %v4272, %v4344
      %v4377 = vadd.f32 %v4273, %v4345
      %v4378 = vadd.f32 %v4274, %v4346
      %v4379 = vadd.f32 %v4275, %v4347
      %s4380 = scalar_lea.vmem %s218, 38
      %v4381 = vld [vmem:[%s4380] sm:$0x1]
      %v4382 = vld [vmem:[%s4069 + $0x8] sm:$0xff]
      %v4383 = vld [vmem:[%s4069 + $0x10] sm:$0xff]
      %v4384 = vld [vmem:[%s4069 + $0x28] sm:$0xff]
      %v4385 = vld [vmem:[%s4069 + $0x30] sm:$0xff]
      %v4386 = vld [vmem:[%s4069 + $0x48] sm:$0xff]
      %v4387 = vld [vmem:[%s4069 + $0x50] sm:$0xff]
      %v4388 = vld [vmem:[%s4069 + $0x68] sm:$0xff]
      %v4389 = vld [vmem:[%s4069 + $0x70] sm:$0xff]
      %v4390 = vld [vmem:[%s4069 + $0x88] sm:$0xff]
      %v4391 = vld [vmem:[%s4069 + $0x90] sm:$0xff]
      %v4392 = vld [vmem:[%s4069 + $0xa8] sm:$0xff]
      %v4393 = vld [vmem:[%s4069 + $0xb0] sm:$0xff]
      %v4394 = vld [vmem:[%s4069 + $0xc8] sm:$0xff]
      %v4395 = vld [vmem:[%s4069 + $0xd0] sm:$0xff]
      %v4396 = vld [vmem:[%s4069 + $0xe8] sm:$0xff]
      %v4397 = vld [vmem:[%s4069 + $0xf0] sm:$0xff]
      %v4398 = vld [vmem:[%s4069 + $0x108] sm:$0xff]
      %v4399 = vld [vmem:[%s4069 + $0x110] sm:$0xff]
      %v4400 = vld [vmem:[%s4069 + $0x128] sm:$0xff]
      %v4401 = vld [vmem:[%s4069 + $0x130] sm:$0xff]
      %v4402 = vld [vmem:[%s4069 + $0x148] sm:$0xff]
      %v4403 = vld [vmem:[%s4069 + $0x150] sm:$0xff]
      %v4404 = vld [vmem:[%s4069 + $0x168] sm:$0xff]
      %v4405 = vld [vmem:[%s4069 + $0x170] sm:$0xff]
      %v4406 = vld [vmem:[%s4069 + $0x188] sm:$0xff]
      %v4407 = vld [vmem:[%s4069 + $0x190] sm:$0xff]
      %v4408 = vld [vmem:[%s4069 + $0x1a8] sm:$0xff]
      %v4409 = vld [vmem:[%s4069 + $0x1b0] sm:$0xff]
      %v4410 = vld [vmem:[%s4069 + $0x1c8] sm:$0xff]
      %v4411 = vld [vmem:[%s4069 + $0x1d0] sm:$0xff]
      %v4412 = vld [vmem:[%s4069 + $0x1e8] sm:$0xff]
      %v4413 = vld [vmem:[%s4069 + $0x1f0] sm:$0xff]
      %v4415 = vlaneseq
      %v4416 = vshrl.u32 %v4415, 7
      %v4417 = vsub.s32 0, %v4416
      %v4418 = vrot.slane %v4381, %v4417
      %v4420 = vmul.f32 %v4382, %v4418
      %v4421 = vmul.f32 %v4383, %v4418
      %v4422 = vmul.f32 %v4384, %v4418
      %v4423 = vmul.f32 %v4385, %v4418
      %v4424 = vmul.f32 %v4386, %v4418
      %v4425 = vmul.f32 %v4387, %v4418
      %v4426 = vmul.f32 %v4388, %v4418
      %v4427 = vmul.f32 %v4389, %v4418
      %v4428 = vmul.f32 %v4390, %v4418
      %v4429 = vmul.f32 %v4391, %v4418
      %v4430 = vmul.f32 %v4392, %v4418
      %v4431 = vmul.f32 %v4393, %v4418
      %v4432 = vmul.f32 %v4394, %v4418
      %v4433 = vmul.f32 %v4395, %v4418
      %v4434 = vmul.f32 %v4396, %v4418
      %v4435 = vmul.f32 %v4397, %v4418
      %v4436 = vmul.f32 %v4398, %v4418
      %v4437 = vmul.f32 %v4399, %v4418
      %v4438 = vmul.f32 %v4400, %v4418
      %v4439 = vmul.f32 %v4401, %v4418
      %v4440 = vmul.f32 %v4402, %v4418
      %v4441 = vmul.f32 %v4403, %v4418
      %v4442 = vmul.f32 %v4404, %v4418
      %v4443 = vmul.f32 %v4405, %v4418
      %v4444 = vmul.f32 %v4406, %v4418
      %v4445 = vmul.f32 %v4407, %v4418
      %v4446 = vmul.f32 %v4408, %v4418
      %v4447 = vmul.f32 %v4409, %v4418
      %v4448 = vmul.f32 %v4410, %v4418
      %v4449 = vmul.f32 %v4411, %v4418
      %v4450 = vmul.f32 %v4412, %v4418
      %v4451 = vmul.f32 %v4413, %v4418
      %v4452 = vadd.f32 %v4348, %v4420
      %v4453 = vadd.f32 %v4349, %v4421
      %v4454 = vadd.f32 %v4350, %v4422
      %v4455 = vadd.f32 %v4351, %v4423
      %v4456 = vadd.f32 %v4352, %v4424
      %v4457 = vadd.f32 %v4353, %v4425
      %v4458 = vadd.f32 %v4354, %v4426
      %v4459 = vadd.f32 %v4355, %v4427
      %v4460 = vadd.f32 %v4356, %v4428
      %v4461 = vadd.f32 %v4357, %v4429
      %v4462 = vadd.f32 %v4358, %v4430
      %v4463 = vadd.f32 %v4359, %v4431
      %v4464 = vadd.f32 %v4360, %v4432
      %v4465 = vadd.f32 %v4361, %v4433
      %v4466 = vadd.f32 %v4362, %v4434
      %v4467 = vadd.f32 %v4363, %v4435
      %v4468 = vadd.f32 %v4364, %v4436
      %v4469 = vadd.f32 %v4365, %v4437
      %v4470 = vadd.f32 %v4366, %v4438
      %v4471 = vadd.f32 %v4367, %v4439
      %v4472 = vadd.f32 %v4368, %v4440
      %v4473 = vadd.f32 %v4369, %v4441
      %v4474 = vadd.f32 %v4370, %v4442
      %v4475 = vadd.f32 %v4371, %v4443
      %v4476 = vadd.f32 %v4372, %v4444
      %v4477 = vadd.f32 %v4373, %v4445
      %v4478 = vadd.f32 %v4374, %v4446
      %v4479 = vadd.f32 %v4375, %v4447
      %v4480 = vadd.f32 %v4376, %v4448
      %v4481 = vadd.f32 %v4377, %v4449
      %v4482 = vadd.f32 %v4378, %v4450
      %v4483 = vadd.f32 %v4379, %v4451
      %s4484 = scalar_lea.vmem %s218, 39
      %v4485 = vld [vmem:[%s4484] sm:$0x1]
      %v4486 = vld [vmem:[%s4069 + $0x9] sm:$0xff]
      %v4487 = vld [vmem:[%s4069 + $0x11] sm:$0xff]
      %v4488 = vld [vmem:[%s4069 + $0x29] sm:$0xff]
      %v4489 = vld [vmem:[%s4069 + $0x31] sm:$0xff]
      %v4490 = vld [vmem:[%s4069 + $0x49] sm:$0xff]
      %v4491 = vld [vmem:[%s4069 + $0x51] sm:$0xff]
      %v4492 = vld [vmem:[%s4069 + $0x69] sm:$0xff]
      %v4493 = vld [vmem:[%s4069 + $0x71] sm:$0xff]
      %v4494 = vld [vmem:[%s4069 + $0x89] sm:$0xff]
      %v4495 = vld [vmem:[%s4069 + $0x91] sm:$0xff]
      %v4496 = vld [vmem:[%s4069 + $0xa9] sm:$0xff]
      %v4497 = vld [vmem:[%s4069 + $0xb1] sm:$0xff]
      %v4498 = vld [vmem:[%s4069 + $0xc9] sm:$0xff]
      %v4499 = vld [vmem:[%s4069 + $0xd1] sm:$0xff]
      %v4500 = vld [vmem:[%s4069 + $0xe9] sm:$0xff]
      %v4501 = vld [vmem:[%s4069 + $0xf1] sm:$0xff]
      %v4502 = vld [vmem:[%s4069 + $0x109] sm:$0xff]
      %v4503 = vld [vmem:[%s4069 + $0x111] sm:$0xff]
      %v4504 = vld [vmem:[%s4069 + $0x129] sm:$0xff]
      %v4505 = vld [vmem:[%s4069 + $0x131] sm:$0xff]
      %v4506 = vld [vmem:[%s4069 + $0x149] sm:$0xff]
      %v4507 = vld [vmem:[%s4069 + $0x151] sm:$0xff]
      %v4508 = vld [vmem:[%s4069 + $0x169] sm:$0xff]
      %v4509 = vld [vmem:[%s4069 + $0x171] sm:$0xff]
      %v4510 = vld [vmem:[%s4069 + $0x189] sm:$0xff]
      %v4511 = vld [vmem:[%s4069 + $0x191] sm:$0xff]
      %v4512 = vld [vmem:[%s4069 + $0x1a9] sm:$0xff]
      %v4513 = vld [vmem:[%s4069 + $0x1b1] sm:$0xff]
      %v4514 = vld [vmem:[%s4069 + $0x1c9] sm:$0xff]
      %v4515 = vld [vmem:[%s4069 + $0x1d1] sm:$0xff]
      %v4516 = vld [vmem:[%s4069 + $0x1e9] sm:$0xff]
      %v4517 = vld [vmem:[%s4069 + $0x1f1] sm:$0xff]
      %v4519 = vlaneseq
      %v4520 = vshrl.u32 %v4519, 7
      %v4521 = vsub.s32 0, %v4520
      %v4522 = vrot.slane %v4485, %v4521
      %v4524 = vmul.f32 %v4486, %v4522
      %v4525 = vmul.f32 %v4487, %v4522
      %v4526 = vmul.f32 %v4488, %v4522
      %v4527 = vmul.f32 %v4489, %v4522
      %v4528 = vmul.f32 %v4490, %v4522
      %v4529 = vmul.f32 %v4491, %v4522
      %v4530 = vmul.f32 %v4492, %v4522
      %v4531 = vmul.f32 %v4493, %v4522
      %v4532 = vmul.f32 %v4494, %v4522
      %v4533 = vmul.f32 %v4495, %v4522
      %v4534 = vmul.f32 %v4496, %v4522
      %v4535 = vmul.f32 %v4497, %v4522
      %v4536 = vmul.f32 %v4498, %v4522
      %v4537 = vmul.f32 %v4499, %v4522
      %v4538 = vmul.f32 %v4500, %v4522
      %v4539 = vmul.f32 %v4501, %v4522
      %v4540 = vmul.f32 %v4502, %v4522
      %v4541 = vmul.f32 %v4503, %v4522
      %v4542 = vmul.f32 %v4504, %v4522
      %v4543 = vmul.f32 %v4505, %v4522
      %v4544 = vmul.f32 %v4506, %v4522
      %v4545 = vmul.f32 %v4507, %v4522
      %v4546 = vmul.f32 %v4508, %v4522
      %v4547 = vmul.f32 %v4509, %v4522
      %v4548 = vmul.f32 %v4510, %v4522
      %v4549 = vmul.f32 %v4511, %v4522
      %v4550 = vmul.f32 %v4512, %v4522
      %v4551 = vmul.f32 %v4513, %v4522
      %v4552 = vmul.f32 %v4514, %v4522
      %v4553 = vmul.f32 %v4515, %v4522
      %v4554 = vmul.f32 %v4516, %v4522
      %v4555 = vmul.f32 %v4517, %v4522
      %v4556 = vadd.f32 %v4452, %v4524
      %v4557 = vadd.f32 %v4453, %v4525
      %v4558 = vadd.f32 %v4454, %v4526
      %v4559 = vadd.f32 %v4455, %v4527
      %v4560 = vadd.f32 %v4456, %v4528
      %v4561 = vadd.f32 %v4457, %v4529
      %v4562 = vadd.f32 %v4458, %v4530
      %v4563 = vadd.f32 %v4459, %v4531
      %v4564 = vadd.f32 %v4460, %v4532
      %v4565 = vadd.f32 %v4461, %v4533
      %v4566 = vadd.f32 %v4462, %v4534
      %v4567 = vadd.f32 %v4463, %v4535
      %v4568 = vadd.f32 %v4464, %v4536
      %v4569 = vadd.f32 %v4465, %v4537
      %v4570 = vadd.f32 %v4466, %v4538
      %v4571 = vadd.f32 %v4467, %v4539
      %v4572 = vadd.f32 %v4468, %v4540
      %v4573 = vadd.f32 %v4469, %v4541
      %v4574 = vadd.f32 %v4470, %v4542
      %v4575 = vadd.f32 %v4471, %v4543
      %v4576 = vadd.f32 %v4472, %v4544
      %v4577 = vadd.f32 %v4473, %v4545
      %v4578 = vadd.f32 %v4474, %v4546
      %v4579 = vadd.f32 %v4475, %v4547
      %v4580 = vadd.f32 %v4476, %v4548
      %v4581 = vadd.f32 %v4477, %v4549
      %v4582 = vadd.f32 %v4478, %v4550
      %v4583 = vadd.f32 %v4479, %v4551
      %v4584 = vadd.f32 %v4480, %v4552
      %v4585 = vadd.f32 %v4481, %v4553
      %v4586 = vadd.f32 %v4482, %v4554
      %v4587 = vadd.f32 %v4483, %v4555
      %s4588 = scalar_lea.vmem %s218, 40
      %v4589 = vld [vmem:[%s4588] sm:$0x1]
      %v4590 = vld [vmem:[%s4069 + $0xa] sm:$0xff]
      %v4591 = vld [vmem:[%s4069 + $0x12] sm:$0xff]
      %v4592 = vld [vmem:[%s4069 + $0x2a] sm:$0xff]
      %v4593 = vld [vmem:[%s4069 + $0x32] sm:$0xff]
      %v4594 = vld [vmem:[%s4069 + $0x4a] sm:$0xff]
      %v4595 = vld [vmem:[%s4069 + $0x52] sm:$0xff]
      %v4596 = vld [vmem:[%s4069 + $0x6a] sm:$0xff]
      %v4597 = vld [vmem:[%s4069 + $0x72] sm:$0xff]
      %v4598 = vld [vmem:[%s4069 + $0x8a] sm:$0xff]
      %v4599 = vld [vmem:[%s4069 + $0x92] sm:$0xff]
      %v4600 = vld [vmem:[%s4069 + $0xaa] sm:$0xff]
      %v4601 = vld [vmem:[%s4069 + $0xb2] sm:$0xff]
      %v4602 = vld [vmem:[%s4069 + $0xca] sm:$0xff]
      %v4603 = vld [vmem:[%s4069 + $0xd2] sm:$0xff]
      %v4604 = vld [vmem:[%s4069 + $0xea] sm:$0xff]
      %v4605 = vld [vmem:[%s4069 + $0xf2] sm:$0xff]
      %v4606 = vld [vmem:[%s4069 + $0x10a] sm:$0xff]
      %v4607 = vld [vmem:[%s4069 + $0x112] sm:$0xff]
      %v4608 = vld [vmem:[%s4069 + $0x12a] sm:$0xff]
      %v4609 = vld [vmem:[%s4069 + $0x132] sm:$0xff]
      %v4610 = vld [vmem:[%s4069 + $0x14a] sm:$0xff]
      %v4611 = vld [vmem:[%s4069 + $0x152] sm:$0xff]
      %v4612 = vld [vmem:[%s4069 + $0x16a] sm:$0xff]
      %v4613 = vld [vmem:[%s4069 + $0x172] sm:$0xff]
      %v4614 = vld [vmem:[%s4069 + $0x18a] sm:$0xff]
      %v4615 = vld [vmem:[%s4069 + $0x192] sm:$0xff]
      %v4616 = vld [vmem:[%s4069 + $0x1aa] sm:$0xff]
      %v4617 = vld [vmem:[%s4069 + $0x1b2] sm:$0xff]
      %v4618 = vld [vmem:[%s4069 + $0x1ca] sm:$0xff]
      %v4619 = vld [vmem:[%s4069 + $0x1d2] sm:$0xff]
      %v4620 = vld [vmem:[%s4069 + $0x1ea] sm:$0xff]
      %v4621 = vld [vmem:[%s4069 + $0x1f2] sm:$0xff]
      %v4623 = vlaneseq
      %v4624 = vshrl.u32 %v4623, 7
      %v4625 = vsub.s32 0, %v4624
      %v4626 = vrot.slane %v4589, %v4625
      %v4628 = vmul.f32 %v4590, %v4626
      %v4629 = vmul.f32 %v4591, %v4626
      %v4630 = vmul.f32 %v4592, %v4626
      %v4631 = vmul.f32 %v4593, %v4626
      %v4632 = vmul.f32 %v4594, %v4626
      %v4633 = vmul.f32 %v4595, %v4626
      %v4634 = vmul.f32 %v4596, %v4626
      %v4635 = vmul.f32 %v4597, %v4626
      %v4636 = vmul.f32 %v4598, %v4626
      %v4637 = vmul.f32 %v4599, %v4626
      %v4638 = vmul.f32 %v4600, %v4626
      %v4639 = vmul.f32 %v4601, %v4626
      %v4640 = vmul.f32 %v4602, %v4626
      %v4641 = vmul.f32 %v4603, %v4626
      %v4642 = vmul.f32 %v4604, %v4626
      %v4643 = vmul.f32 %v4605, %v4626
      %v4644 = vmul.f32 %v4606, %v4626
      %v4645 = vmul.f32 %v4607, %v4626
      %v4646 = vmul.f32 %v4608, %v4626
      %v4647 = vmul.f32 %v4609, %v4626
      %v4648 = vmul.f32 %v4610, %v4626
      %v4649 = vmul.f32 %v4611, %v4626
      %v4650 = vmul.f32 %v4612, %v4626
      %v4651 = vmul.f32 %v4613, %v4626
      %v4652 = vmul.f32 %v4614, %v4626
      %v4653 = vmul.f32 %v4615, %v4626
      %v4654 = vmul.f32 %v4616, %v4626
      %v4655 = vmul.f32 %v4617, %v4626
      %v4656 = vmul.f32 %v4618, %v4626
      %v4657 = vmul.f32 %v4619, %v4626
      %v4658 = vmul.f32 %v4620, %v4626
      %v4659 = vmul.f32 %v4621, %v4626
      %v4660 = vadd.f32 %v4556, %v4628
      %v4661 = vadd.f32 %v4557, %v4629
      %v4662 = vadd.f32 %v4558, %v4630
      %v4663 = vadd.f32 %v4559, %v4631
      %v4664 = vadd.f32 %v4560, %v4632
      %v4665 = vadd.f32 %v4561, %v4633
      %v4666 = vadd.f32 %v4562, %v4634
      %v4667 = vadd.f32 %v4563, %v4635
      %v4668 = vadd.f32 %v4564, %v4636
      %v4669 = vadd.f32 %v4565, %v4637
      %v4670 = vadd.f32 %v4566, %v4638
      %v4671 = vadd.f32 %v4567, %v4639
      %v4672 = vadd.f32 %v4568, %v4640
      %v4673 = vadd.f32 %v4569, %v4641
      %v4674 = vadd.f32 %v4570, %v4642
      %v4675 = vadd.f32 %v4571, %v4643
      %v4676 = vadd.f32 %v4572, %v4644
      %v4677 = vadd.f32 %v4573, %v4645
      %v4678 = vadd.f32 %v4574, %v4646
      %v4679 = vadd.f32 %v4575, %v4647
      %v4680 = vadd.f32 %v4576, %v4648
      %v4681 = vadd.f32 %v4577, %v4649
      %v4682 = vadd.f32 %v4578, %v4650
      %v4683 = vadd.f32 %v4579, %v4651
      %v4684 = vadd.f32 %v4580, %v4652
      %v4685 = vadd.f32 %v4581, %v4653
      %v4686 = vadd.f32 %v4582, %v4654
      %v4687 = vadd.f32 %v4583, %v4655
      %v4688 = vadd.f32 %v4584, %v4656
      %v4689 = vadd.f32 %v4585, %v4657
      %v4690 = vadd.f32 %v4586, %v4658
      %v4691 = vadd.f32 %v4587, %v4659
      %s4692 = scalar_lea.vmem %s218, 41
      %v4693 = vld [vmem:[%s4692] sm:$0x1]
      %v4694 = vld [vmem:[%s4069 + $0xb] sm:$0xff]
      %v4695 = vld [vmem:[%s4069 + $0x13] sm:$0xff]
      %v4696 = vld [vmem:[%s4069 + $0x2b] sm:$0xff]
      %v4697 = vld [vmem:[%s4069 + $0x33] sm:$0xff]
      %v4698 = vld [vmem:[%s4069 + $0x4b] sm:$0xff]
      %v4699 = vld [vmem:[%s4069 + $0x53] sm:$0xff]
      %v4700 = vld [vmem:[%s4069 + $0x6b] sm:$0xff]
      %v4701 = vld [vmem:[%s4069 + $0x73] sm:$0xff]
      %v4702 = vld [vmem:[%s4069 + $0x8b] sm:$0xff]
      %v4703 = vld [vmem:[%s4069 + $0x93] sm:$0xff]
      %v4704 = vld [vmem:[%s4069 + $0xab] sm:$0xff]
      %v4705 = vld [vmem:[%s4069 + $0xb3] sm:$0xff]
      %v4706 = vld [vmem:[%s4069 + $0xcb] sm:$0xff]
      %v4707 = vld [vmem:[%s4069 + $0xd3] sm:$0xff]
      %v4708 = vld [vmem:[%s4069 + $0xeb] sm:$0xff]
      %v4709 = vld [vmem:[%s4069 + $0xf3] sm:$0xff]
      %v4710 = vld [vmem:[%s4069 + $0x10b] sm:$0xff]
      %v4711 = vld [vmem:[%s4069 + $0x113] sm:$0xff]
      %v4712 = vld [vmem:[%s4069 + $0x12b] sm:$0xff]
      %v4713 = vld [vmem:[%s4069 + $0x133] sm:$0xff]
      %v4714 = vld [vmem:[%s4069 + $0x14b] sm:$0xff]
      %v4715 = vld [vmem:[%s4069 + $0x153] sm:$0xff]
      %v4716 = vld [vmem:[%s4069 + $0x16b] sm:$0xff]
      %v4717 = vld [vmem:[%s4069 + $0x173] sm:$0xff]
      %v4718 = vld [vmem:[%s4069 + $0x18b] sm:$0xff]
      %v4719 = vld [vmem:[%s4069 + $0x193] sm:$0xff]
      %v4720 = vld [vmem:[%s4069 + $0x1ab] sm:$0xff]
      %v4721 = vld [vmem:[%s4069 + $0x1b3] sm:$0xff]
      %v4722 = vld [vmem:[%s4069 + $0x1cb] sm:$0xff]
      %v4723 = vld [vmem:[%s4069 + $0x1d3] sm:$0xff]
      %v4724 = vld [vmem:[%s4069 + $0x1eb] sm:$0xff]
      %v4725 = vld [vmem:[%s4069 + $0x1f3] sm:$0xff]
      %v4727 = vlaneseq
      %v4728 = vshrl.u32 %v4727, 7
      %v4729 = vsub.s32 0, %v4728
      %v4730 = vrot.slane %v4693, %v4729
      %v4732 = vmul.f32 %v4694, %v4730
      %v4733 = vmul.f32 %v4695, %v4730
      %v4734 = vmul.f32 %v4696, %v4730
      %v4735 = vmul.f32 %v4697, %v4730
      %v4736 = vmul.f32 %v4698, %v4730
      %v4737 = vmul.f32 %v4699, %v4730
      %v4738 = vmul.f32 %v4700, %v4730
      %v4739 = vmul.f32 %v4701, %v4730
      %v4740 = vmul.f32 %v4702, %v4730
      %v4741 = vmul.f32 %v4703, %v4730
      %v4742 = vmul.f32 %v4704, %v4730
      %v4743 = vmul.f32 %v4705, %v4730
      %v4744 = vmul.f32 %v4706, %v4730
      %v4745 = vmul.f32 %v4707, %v4730
      %v4746 = vmul.f32 %v4708, %v4730
      %v4747 = vmul.f32 %v4709, %v4730
      %v4748 = vmul.f32 %v4710, %v4730
      %v4749 = vmul.f32 %v4711, %v4730
      %v4750 = vmul.f32 %v4712, %v4730
      %v4751 = vmul.f32 %v4713, %v4730
      %v4752 = vmul.f32 %v4714, %v4730
      %v4753 = vmul.f32 %v4715, %v4730
      %v4754 = vmul.f32 %v4716, %v4730
      %v4755 = vmul.f32 %v4717, %v4730
      %v4756 = vmul.f32 %v4718, %v4730
      %v4757 = vmul.f32 %v4719, %v4730
      %v4758 = vmul.f32 %v4720, %v4730
      %v4759 = vmul.f32 %v4721, %v4730
      %v4760 = vmul.f32 %v4722, %v4730
      %v4761 = vmul.f32 %v4723, %v4730
      %v4762 = vmul.f32 %v4724, %v4730
      %v4763 = vmul.f32 %v4725, %v4730
      %v4764 = vadd.f32 %v4660, %v4732
      %v4765 = vadd.f32 %v4661, %v4733
      %v4766 = vadd.f32 %v4662, %v4734
      %v4767 = vadd.f32 %v4663, %v4735
      %v4768 = vadd.f32 %v4664, %v4736
      %v4769 = vadd.f32 %v4665, %v4737
      %v4770 = vadd.f32 %v4666, %v4738
      %v4771 = vadd.f32 %v4667, %v4739
      %v4772 = vadd.f32 %v4668, %v4740
      %v4773 = vadd.f32 %v4669, %v4741
      %v4774 = vadd.f32 %v4670, %v4742
      %v4775 = vadd.f32 %v4671, %v4743
      %v4776 = vadd.f32 %v4672, %v4744
      %v4777 = vadd.f32 %v4673, %v4745
      %v4778 = vadd.f32 %v4674, %v4746
      %v4779 = vadd.f32 %v4675, %v4747
      %v4780 = vadd.f32 %v4676, %v4748
      %v4781 = vadd.f32 %v4677, %v4749
      %v4782 = vadd.f32 %v4678, %v4750
      %v4783 = vadd.f32 %v4679, %v4751
      %v4784 = vadd.f32 %v4680, %v4752
      %v4785 = vadd.f32 %v4681, %v4753
      %v4786 = vadd.f32 %v4682, %v4754
      %v4787 = vadd.f32 %v4683, %v4755
      %v4788 = vadd.f32 %v4684, %v4756
      %v4789 = vadd.f32 %v4685, %v4757
      %v4790 = vadd.f32 %v4686, %v4758
      %v4791 = vadd.f32 %v4687, %v4759
      %v4792 = vadd.f32 %v4688, %v4760
      %v4793 = vadd.f32 %v4689, %v4761
      %v4794 = vadd.f32 %v4690, %v4762
      %v4795 = vadd.f32 %v4691, %v4763
      %s4796 = scalar_lea.vmem %s218, 42
      %v4797 = vld [vmem:[%s4796] sm:$0x1]
      %s4798 = scalar_lea.vmem [#allocation2], 192
      %v4799 = vld [vmem:[%s4798 + $0x5] sm:$0xff]
      %v4800 = vld [vmem:[%s4798 + $0xd] sm:$0xff]
      %v4801 = vld [vmem:[%s4798 + $0x25] sm:$0xff]
      %v4802 = vld [vmem:[%s4798 + $0x2d] sm:$0xff]
      %v4803 = vld [vmem:[%s4798 + $0x45] sm:$0xff]
      %v4804 = vld [vmem:[%s4798 + $0x4d] sm:$0xff]
      %v4805 = vld [vmem:[%s4798 + $0x65] sm:$0xff]
      %v4806 = vld [vmem:[%s4798 + $0x6d] sm:$0xff]
      %v4807 = vld [vmem:[%s4798 + $0x85] sm:$0xff]
      %v4808 = vld [vmem:[%s4798 + $0x8d] sm:$0xff]
      %v4809 = vld [vmem:[%s4798 + $0xa5] sm:$0xff]
      %v4810 = vld [vmem:[%s4798 + $0xad] sm:$0xff]
      %v4811 = vld [vmem:[%s4798 + $0xc5] sm:$0xff]
      %v4812 = vld [vmem:[%s4798 + $0xcd] sm:$0xff]
      %v4813 = vld [vmem:[%s4798 + $0xe5] sm:$0xff]
      %v4814 = vld [vmem:[%s4798 + $0xed] sm:$0xff]
      %v4815 = vld [vmem:[%s4798 + $0x105] sm:$0xff]
      %v4816 = vld [vmem:[%s4798 + $0x10d] sm:$0xff]
      %v4817 = vld [vmem:[%s4798 + $0x125] sm:$0xff]
      %v4818 = vld [vmem:[%s4798 + $0x12d] sm:$0xff]
      %v4819 = vld [vmem:[%s4798 + $0x145] sm:$0xff]
      %v4820 = vld [vmem:[%s4798 + $0x14d] sm:$0xff]
      %v4821 = vld [vmem:[%s4798 + $0x165] sm:$0xff]
      %v4822 = vld [vmem:[%s4798 + $0x16d] sm:$0xff]
      %v4823 = vld [vmem:[%s4798 + $0x185] sm:$0xff]
      %v4824 = vld [vmem:[%s4798 + $0x18d] sm:$0xff]
      %v4825 = vld [vmem:[%s4798 + $0x1a5] sm:$0xff]
      %v4826 = vld [vmem:[%s4798 + $0x1ad] sm:$0xff]
      %v4827 = vld [vmem:[%s4798 + $0x1c5] sm:$0xff]
      %v4828 = vld [vmem:[%s4798 + $0x1cd] sm:$0xff]
      %v4829 = vld [vmem:[%s4798 + $0x1e5] sm:$0xff]
      %v4830 = vld [vmem:[%s4798 + $0x1ed] sm:$0xff]
      %v4832 = vlaneseq
      %v4833 = vshrl.u32 %v4832, 7
      %v4834 = vsub.s32 0, %v4833
      %v4835 = vrot.slane %v4797, %v4834
      %v4837 = vmul.f32 %v4799, %v4835
      %v4838 = vmul.f32 %v4800, %v4835
      %v4839 = vmul.f32 %v4801, %v4835
      %v4840 = vmul.f32 %v4802, %v4835
      %v4841 = vmul.f32 %v4803, %v4835
      %v4842 = vmul.f32 %v4804, %v4835
      %v4843 = vmul.f32 %v4805, %v4835
      %v4844 = vmul.f32 %v4806, %v4835
      %v4845 = vmul.f32 %v4807, %v4835
      %v4846 = vmul.f32 %v4808, %v4835
      %v4847 = vmul.f32 %v4809, %v4835
      %v4848 = vmul.f32 %v4810, %v4835
      %v4849 = vmul.f32 %v4811, %v4835
      %v4850 = vmul.f32 %v4812, %v4835
      %v4851 = vmul.f32 %v4813, %v4835
      %v4852 = vmul.f32 %v4814, %v4835
      %v4853 = vmul.f32 %v4815, %v4835
      %v4854 = vmul.f32 %v4816, %v4835
      %v4855 = vmul.f32 %v4817, %v4835
      %v4856 = vmul.f32 %v4818, %v4835
      %v4857 = vmul.f32 %v4819, %v4835
      %v4858 = vmul.f32 %v4820, %v4835
      %v4859 = vmul.f32 %v4821, %v4835
      %v4860 = vmul.f32 %v4822, %v4835
      %v4861 = vmul.f32 %v4823, %v4835
      %v4862 = vmul.f32 %v4824, %v4835
      %v4863 = vmul.f32 %v4825, %v4835
      %v4864 = vmul.f32 %v4826, %v4835
      %v4865 = vmul.f32 %v4827, %v4835
      %v4866 = vmul.f32 %v4828, %v4835
      %v4867 = vmul.f32 %v4829, %v4835
      %v4868 = vmul.f32 %v4830, %v4835
      %v4869 = vadd.f32 %v4764, %v4837
      %v4870 = vadd.f32 %v4765, %v4838
      %v4871 = vadd.f32 %v4766, %v4839
      %v4872 = vadd.f32 %v4767, %v4840
      %v4873 = vadd.f32 %v4768, %v4841
      %v4874 = vadd.f32 %v4769, %v4842
      %v4875 = vadd.f32 %v4770, %v4843
      %v4876 = vadd.f32 %v4771, %v4844
      %v4877 = vadd.f32 %v4772, %v4845
      %v4878 = vadd.f32 %v4773, %v4846
      %v4879 = vadd.f32 %v4774, %v4847
      %v4880 = vadd.f32 %v4775, %v4848
      %v4881 = vadd.f32 %v4776, %v4849
      %v4882 = vadd.f32 %v4777, %v4850
      %v4883 = vadd.f32 %v4778, %v4851
      %v4884 = vadd.f32 %v4779, %v4852
      %v4885 = vadd.f32 %v4780, %v4853
      %v4886 = vadd.f32 %v4781, %v4854
      %v4887 = vadd.f32 %v4782, %v4855
      %v4888 = vadd.f32 %v4783, %v4856
      %v4889 = vadd.f32 %v4784, %v4857
      %v4890 = vadd.f32 %v4785, %v4858
      %v4891 = vadd.f32 %v4786, %v4859
      %v4892 = vadd.f32 %v4787, %v4860
      %v4893 = vadd.f32 %v4788, %v4861
      %v4894 = vadd.f32 %v4789, %v4862
      %v4895 = vadd.f32 %v4790, %v4863
      %v4896 = vadd.f32 %v4791, %v4864
      %v4897 = vadd.f32 %v4792, %v4865
      %v4898 = vadd.f32 %v4793, %v4866
      %v4899 = vadd.f32 %v4794, %v4867
      %v4900 = vadd.f32 %v4795, %v4868
      %s4901 = scalar_lea.vmem %s218, 43
      %v4902 = vld [vmem:[%s4901] sm:$0x1]
      %v4903 = vld [vmem:[%s4798 + $0x6] sm:$0xff]
      %v4904 = vld [vmem:[%s4798 + $0xe] sm:$0xff]
      %v4905 = vld [vmem:[%s4798 + $0x26] sm:$0xff]
      %v4906 = vld [vmem:[%s4798 + $0x2e] sm:$0xff]
      %v4907 = vld [vmem:[%s4798 + $0x46] sm:$0xff]
      %v4908 = vld [vmem:[%s4798 + $0x4e] sm:$0xff]
      %v4909 = vld [vmem:[%s4798 + $0x66] sm:$0xff]
      %v4910 = vld [vmem:[%s4798 + $0x6e] sm:$0xff]
      %v4911 = vld [vmem:[%s4798 + $0x86] sm:$0xff]
      %v4912 = vld [vmem:[%s4798 + $0x8e] sm:$0xff]
      %v4913 = vld [vmem:[%s4798 + $0xa6] sm:$0xff]
      %v4914 = vld [vmem:[%s4798 + $0xae] sm:$0xff]
      %v4915 = vld [vmem:[%s4798 + $0xc6] sm:$0xff]
      %v4916 = vld [vmem:[%s4798 + $0xce] sm:$0xff]
      %v4917 = vld [vmem:[%s4798 + $0xe6] sm:$0xff]
      %v4918 = vld [vmem:[%s4798 + $0xee] sm:$0xff]
      %v4919 = vld [vmem:[%s4798 + $0x106] sm:$0xff]
      %v4920 = vld [vmem:[%s4798 + $0x10e] sm:$0xff]
      %v4921 = vld [vmem:[%s4798 + $0x126] sm:$0xff]
      %v4922 = vld [vmem:[%s4798 + $0x12e] sm:$0xff]
      %v4923 = vld [vmem:[%s4798 + $0x146] sm:$0xff]
      %v4924 = vld [vmem:[%s4798 + $0x14e] sm:$0xff]
      %v4925 = vld [vmem:[%s4798 + $0x166] sm:$0xff]
      %v4926 = vld [vmem:[%s4798 + $0x16e] sm:$0xff]
      %v4927 = vld [vmem:[%s4798 + $0x186] sm:$0xff]
      %v4928 = vld [vmem:[%s4798 + $0x18e] sm:$0xff]
      %v4929 = vld [vmem:[%s4798 + $0x1a6] sm:$0xff]
      %v4930 = vld [vmem:[%s4798 + $0x1ae] sm:$0xff]
      %v4931 = vld [vmem:[%s4798 + $0x1c6] sm:$0xff]
      %v4932 = vld [vmem:[%s4798 + $0x1ce] sm:$0xff]
      %v4933 = vld [vmem:[%s4798 + $0x1e6] sm:$0xff]
      %v4934 = vld [vmem:[%s4798 + $0x1ee] sm:$0xff]
      %v4936 = vlaneseq
      %v4937 = vshrl.u32 %v4936, 7
      %v4938 = vsub.s32 0, %v4937
      %v4939 = vrot.slane %v4902, %v4938
      %v4941 = vmul.f32 %v4903, %v4939
      %v4942 = vmul.f32 %v4904, %v4939
      %v4943 = vmul.f32 %v4905, %v4939
      %v4944 = vmul.f32 %v4906, %v4939
      %v4945 = vmul.f32 %v4907, %v4939
      %v4946 = vmul.f32 %v4908, %v4939
      %v4947 = vmul.f32 %v4909, %v4939
      %v4948 = vmul.f32 %v4910, %v4939
      %v4949 = vmul.f32 %v4911, %v4939
      %v4950 = vmul.f32 %v4912, %v4939
      %v4951 = vmul.f32 %v4913, %v4939
      %v4952 = vmul.f32 %v4914, %v4939
      %v4953 = vmul.f32 %v4915, %v4939
      %v4954 = vmul.f32 %v4916, %v4939
      %v4955 = vmul.f32 %v4917, %v4939
      %v4956 = vmul.f32 %v4918, %v4939
      %v4957 = vmul.f32 %v4919, %v4939
      %v4958 = vmul.f32 %v4920, %v4939
      %v4959 = vmul.f32 %v4921, %v4939
      %v4960 = vmul.f32 %v4922, %v4939
      %v4961 = vmul.f32 %v4923, %v4939
      %v4962 = vmul.f32 %v4924, %v4939
      %v4963 = vmul.f32 %v4925, %v4939
      %v4964 = vmul.f32 %v4926, %v4939
      %v4965 = vmul.f32 %v4927, %v4939
      %v4966 = vmul.f32 %v4928, %v4939
      %v4967 = vmul.f32 %v4929, %v4939
      %v4968 = vmul.f32 %v4930, %v4939
      %v4969 = vmul.f32 %v4931, %v4939
      %v4970 = vmul.f32 %v4932, %v4939
      %v4971 = vmul.f32 %v4933, %v4939
      %v4972 = vmul.f32 %v4934, %v4939
      %v4973 = vadd.f32 %v4869, %v4941
      %v4974 = vadd.f32 %v4870, %v4942
      %v4975 = vadd.f32 %v4871, %v4943
      %v4976 = vadd.f32 %v4872, %v4944
      %v4977 = vadd.f32 %v4873, %v4945
      %v4978 = vadd.f32 %v4874, %v4946
      %v4979 = vadd.f32 %v4875, %v4947
      %v4980 = vadd.f32 %v4876, %v4948
      %v4981 = vadd.f32 %v4877, %v4949
      %v4982 = vadd.f32 %v4878, %v4950
      %v4983 = vadd.f32 %v4879, %v4951
      %v4984 = vadd.f32 %v4880, %v4952
      %v4985 = vadd.f32 %v4881, %v4953
      %v4986 = vadd.f32 %v4882, %v4954
      %v4987 = vadd.f32 %v4883, %v4955
      %v4988 = vadd.f32 %v4884, %v4956
      %v4989 = vadd.f32 %v4885, %v4957
      %v4990 = vadd.f32 %v4886, %v4958
      %v4991 = vadd.f32 %v4887, %v4959
      %v4992 = vadd.f32 %v4888, %v4960
      %v4993 = vadd.f32 %v4889, %v4961
      %v4994 = vadd.f32 %v4890, %v4962
      %v4995 = vadd.f32 %v4891, %v4963
      %v4996 = vadd.f32 %v4892, %v4964
      %v4997 = vadd.f32 %v4893, %v4965
      %v4998 = vadd.f32 %v4894, %v4966
      %v4999 = vadd.f32 %v4895, %v4967
      %v5000 = vadd.f32 %v4896, %v4968
      %v5001 = vadd.f32 %v4897, %v4969
      %v5002 = vadd.f32 %v4898, %v4970
      %v5003 = vadd.f32 %v4899, %v4971
      %v5004 = vadd.f32 %v4900, %v4972
      %s5005 = scalar_lea.vmem %s218, 44
      %v5006 = vld [vmem:[%s5005] sm:$0x1]
      %v5007 = vld [vmem:[%s4798 + $0x7] sm:$0xff]
      %v5008 = vld [vmem:[%s4798 + $0xf] sm:$0xff]
      %v5009 = vld [vmem:[%s4798 + $0x27] sm:$0xff]
      %v5010 = vld [vmem:[%s4798 + $0x2f] sm:$0xff]
      %v5011 = vld [vmem:[%s4798 + $0x47] sm:$0xff]
      %v5012 = vld [vmem:[%s4798 + $0x4f] sm:$0xff]
      %v5013 = vld [vmem:[%s4798 + $0x67] sm:$0xff]
      %v5014 = vld [vmem:[%s4798 + $0x6f] sm:$0xff]
      %v5015 = vld [vmem:[%s4798 + $0x87] sm:$0xff]
      %v5016 = vld [vmem:[%s4798 + $0x8f] sm:$0xff]
      %v5017 = vld [vmem:[%s4798 + $0xa7] sm:$0xff]
      %v5018 = vld [vmem:[%s4798 + $0xaf] sm:$0xff]
      %v5019 = vld [vmem:[%s4798 + $0xc7] sm:$0xff]
      %v5020 = vld [vmem:[%s4798 + $0xcf] sm:$0xff]
      %v5021 = vld [vmem:[%s4798 + $0xe7] sm:$0xff]
      %v5022 = vld [vmem:[%s4798 + $0xef] sm:$0xff]
      %v5023 = vld [vmem:[%s4798 + $0x107] sm:$0xff]
      %v5024 = vld [vmem:[%s4798 + $0x10f] sm:$0xff]
      %v5025 = vld [vmem:[%s4798 + $0x127] sm:$0xff]
      %v5026 = vld [vmem:[%s4798 + $0x12f] sm:$0xff]
      %v5027 = vld [vmem:[%s4798 + $0x147] sm:$0xff]
      %v5028 = vld [vmem:[%s4798 + $0x14f] sm:$0xff]
      %v5029 = vld [vmem:[%s4798 + $0x167] sm:$0xff]
      %v5030 = vld [vmem:[%s4798 + $0x16f] sm:$0xff]
      %v5031 = vld [vmem:[%s4798 + $0x187] sm:$0xff]
      %v5032 = vld [vmem:[%s4798 + $0x18f] sm:$0xff]
      %v5033 = vld [vmem:[%s4798 + $0x1a7] sm:$0xff]
      %v5034 = vld [vmem:[%s4798 + $0x1af] sm:$0xff]
      %v5035 = vld [vmem:[%s4798 + $0x1c7] sm:$0xff]
      %v5036 = vld [vmem:[%s4798 + $0x1cf] sm:$0xff]
      %v5037 = vld [vmem:[%s4798 + $0x1e7] sm:$0xff]
      %v5038 = vld [vmem:[%s4798 + $0x1ef] sm:$0xff]
      %v5040 = vlaneseq
      %v5041 = vshrl.u32 %v5040, 7
      %v5042 = vsub.s32 0, %v5041
      %v5043 = vrot.slane %v5006, %v5042
      %v5045 = vmul.f32 %v5007, %v5043
      %v5046 = vmul.f32 %v5008, %v5043
      %v5047 = vmul.f32 %v5009, %v5043
      %v5048 = vmul.f32 %v5010, %v5043
      %v5049 = vmul.f32 %v5011, %v5043
      %v5050 = vmul.f32 %v5012, %v5043
      %v5051 = vmul.f32 %v5013, %v5043
      %v5052 = vmul.f32 %v5014, %v5043
      %v5053 = vmul.f32 %v5015, %v5043
      %v5054 = vmul.f32 %v5016, %v5043
      %v5055 = vmul.f32 %v5017, %v5043
      %v5056 = vmul.f32 %v5018, %v5043
      %v5057 = vmul.f32 %v5019, %v5043
      %v5058 = vmul.f32 %v5020, %v5043
      %v5059 = vmul.f32 %v5021, %v5043
      %v5060 = vmul.f32 %v5022, %v5043
      %v5061 = vmul.f32 %v5023, %v5043
      %v5062 = vmul.f32 %v5024, %v5043
      %v5063 = vmul.f32 %v5025, %v5043
      %v5064 = vmul.f32 %v5026, %v5043
      %v5065 = vmul.f32 %v5027, %v5043
      %v5066 = vmul.f32 %v5028, %v5043
      %v5067 = vmul.f32 %v5029, %v5043
      %v5068 = vmul.f32 %v5030, %v5043
      %v5069 = vmul.f32 %v5031, %v5043
      %v5070 = vmul.f32 %v5032, %v5043
      %v5071 = vmul.f32 %v5033, %v5043
      %v5072 = vmul.f32 %v5034, %v5043
      %v5073 = vmul.f32 %v5035, %v5043
      %v5074 = vmul.f32 %v5036, %v5043
      %v5075 = vmul.f32 %v5037, %v5043
      %v5076 = vmul.f32 %v5038, %v5043
      %v5077 = vadd.f32 %v4973, %v5045
      %v5078 = vadd.f32 %v4974, %v5046
      %v5079 = vadd.f32 %v4975, %v5047
      %v5080 = vadd.f32 %v4976, %v5048
      %v5081 = vadd.f32 %v4977, %v5049
      %v5082 = vadd.f32 %v4978, %v5050
      %v5083 = vadd.f32 %v4979, %v5051
      %v5084 = vadd.f32 %v4980, %v5052
      %v5085 = vadd.f32 %v4981, %v5053
      %v5086 = vadd.f32 %v4982, %v5054
      %v5087 = vadd.f32 %v4983, %v5055
      %v5088 = vadd.f32 %v4984, %v5056
      %v5089 = vadd.f32 %v4985, %v5057
      %v5090 = vadd.f32 %v4986, %v5058
      %v5091 = vadd.f32 %v4987, %v5059
      %v5092 = vadd.f32 %v4988, %v5060
      %v5093 = vadd.f32 %v4989, %v5061
      %v5094 = vadd.f32 %v4990, %v5062
      %v5095 = vadd.f32 %v4991, %v5063
      %v5096 = vadd.f32 %v4992, %v5064
      %v5097 = vadd.f32 %v4993, %v5065
      %v5098 = vadd.f32 %v4994, %v5066
      %v5099 = vadd.f32 %v4995, %v5067
      %v5100 = vadd.f32 %v4996, %v5068
      %v5101 = vadd.f32 %v4997, %v5069
      %v5102 = vadd.f32 %v4998, %v5070
      %v5103 = vadd.f32 %v4999, %v5071
      %v5104 = vadd.f32 %v5000, %v5072
      %v5105 = vadd.f32 %v5001, %v5073
      %v5106 = vadd.f32 %v5002, %v5074
      %v5107 = vadd.f32 %v5003, %v5075
      %v5108 = vadd.f32 %v5004, %v5076
      %s5109 = scalar_lea.vmem %s218, 45
      %v5110 = vld [vmem:[%s5109] sm:$0x1]
      %v5111 = vld [vmem:[%s4798 + $0x8] sm:$0xff]
      %v5112 = vld [vmem:[%s4798 + $0x10] sm:$0xff]
      %v5113 = vld [vmem:[%s4798 + $0x28] sm:$0xff]
      %v5114 = vld [vmem:[%s4798 + $0x30] sm:$0xff]
      %v5115 = vld [vmem:[%s4798 + $0x48] sm:$0xff]
      %v5116 = vld [vmem:[%s4798 + $0x50] sm:$0xff]
      %v5117 = vld [vmem:[%s4798 + $0x68] sm:$0xff]
      %v5118 = vld [vmem:[%s4798 + $0x70] sm:$0xff]
      %v5119 = vld [vmem:[%s4798 + $0x88] sm:$0xff]
      %v5120 = vld [vmem:[%s4798 + $0x90] sm:$0xff]
      %v5121 = vld [vmem:[%s4798 + $0xa8] sm:$0xff]
      %v5122 = vld [vmem:[%s4798 + $0xb0] sm:$0xff]
      %v5123 = vld [vmem:[%s4798 + $0xc8] sm:$0xff]
      %v5124 = vld [vmem:[%s4798 + $0xd0] sm:$0xff]
      %v5125 = vld [vmem:[%s4798 + $0xe8] sm:$0xff]
      %v5126 = vld [vmem:[%s4798 + $0xf0] sm:$0xff]
      %v5127 = vld [vmem:[%s4798 + $0x108] sm:$0xff]
      %v5128 = vld [vmem:[%s4798 + $0x110] sm:$0xff]
      %v5129 = vld [vmem:[%s4798 + $0x128] sm:$0xff]
      %v5130 = vld [vmem:[%s4798 + $0x130] sm:$0xff]
      %v5131 = vld [vmem:[%s4798 + $0x148] sm:$0xff]
      %v5132 = vld [vmem:[%s4798 + $0x150] sm:$0xff]
      %v5133 = vld [vmem:[%s4798 + $0x168] sm:$0xff]
      %v5134 = vld [vmem:[%s4798 + $0x170] sm:$0xff]
      %v5135 = vld [vmem:[%s4798 + $0x188] sm:$0xff]
      %v5136 = vld [vmem:[%s4798 + $0x190] sm:$0xff]
      %v5137 = vld [vmem:[%s4798 + $0x1a8] sm:$0xff]
      %v5138 = vld [vmem:[%s4798 + $0x1b0] sm:$0xff]
      %v5139 = vld [vmem:[%s4798 + $0x1c8] sm:$0xff]
      %v5140 = vld [vmem:[%s4798 + $0x1d0] sm:$0xff]
      %v5141 = vld [vmem:[%s4798 + $0x1e8] sm:$0xff]
      %v5142 = vld [vmem:[%s4798 + $0x1f0] sm:$0xff]
      %v5144 = vlaneseq
      %v5145 = vshrl.u32 %v5144, 7
      %v5146 = vsub.s32 0, %v5145
      %v5147 = vrot.slane %v5110, %v5146
      %v5149 = vmul.f32 %v5111, %v5147
      %v5150 = vmul.f32 %v5112, %v5147
      %v5151 = vmul.f32 %v5113, %v5147
      %v5152 = vmul.f32 %v5114, %v5147
      %v5153 = vmul.f32 %v5115, %v5147
      %v5154 = vmul.f32 %v5116, %v5147
      %v5155 = vmul.f32 %v5117, %v5147
      %v5156 = vmul.f32 %v5118, %v5147
      %v5157 = vmul.f32 %v5119, %v5147
      %v5158 = vmul.f32 %v5120, %v5147
      %v5159 = vmul.f32 %v5121, %v5147
      %v5160 = vmul.f32 %v5122, %v5147
      %v5161 = vmul.f32 %v5123, %v5147
      %v5162 = vmul.f32 %v5124, %v5147
      %v5163 = vmul.f32 %v5125, %v5147
      %v5164 = vmul.f32 %v5126, %v5147
      %v5165 = vmul.f32 %v5127, %v5147
      %v5166 = vmul.f32 %v5128, %v5147
      %v5167 = vmul.f32 %v5129, %v5147
      %v5168 = vmul.f32 %v5130, %v5147
      %v5169 = vmul.f32 %v5131, %v5147
      %v5170 = vmul.f32 %v5132, %v5147
      %v5171 = vmul.f32 %v5133, %v5147
      %v5172 = vmul.f32 %v5134, %v5147
      %v5173 = vmul.f32 %v5135, %v5147
      %v5174 = vmul.f32 %v5136, %v5147
      %v5175 = vmul.f32 %v5137, %v5147
      %v5176 = vmul.f32 %v5138, %v5147
      %v5177 = vmul.f32 %v5139, %v5147
      %v5178 = vmul.f32 %v5140, %v5147
      %v5179 = vmul.f32 %v5141, %v5147
      %v5180 = vmul.f32 %v5142, %v5147
      %v5181 = vadd.f32 %v5077, %v5149
      %v5182 = vadd.f32 %v5078, %v5150
      %v5183 = vadd.f32 %v5079, %v5151
      %v5184 = vadd.f32 %v5080, %v5152
      %v5185 = vadd.f32 %v5081, %v5153
      %v5186 = vadd.f32 %v5082, %v5154
      %v5187 = vadd.f32 %v5083, %v5155
      %v5188 = vadd.f32 %v5084, %v5156
      %v5189 = vadd.f32 %v5085, %v5157
      %v5190 = vadd.f32 %v5086, %v5158
      %v5191 = vadd.f32 %v5087, %v5159
      %v5192 = vadd.f32 %v5088, %v5160
      %v5193 = vadd.f32 %v5089, %v5161
      %v5194 = vadd.f32 %v5090, %v5162
      %v5195 = vadd.f32 %v5091, %v5163
      %v5196 = vadd.f32 %v5092, %v5164
      %v5197 = vadd.f32 %v5093, %v5165
      %v5198 = vadd.f32 %v5094, %v5166
      %v5199 = vadd.f32 %v5095, %v5167
      %v5200 = vadd.f32 %v5096, %v5168
      %v5201 = vadd.f32 %v5097, %v5169
      %v5202 = vadd.f32 %v5098, %v5170
      %v5203 = vadd.f32 %v5099, %v5171
      %v5204 = vadd.f32 %v5100, %v5172
      %v5205 = vadd.f32 %v5101, %v5173
      %v5206 = vadd.f32 %v5102, %v5174
      %v5207 = vadd.f32 %v5103, %v5175
      %v5208 = vadd.f32 %v5104, %v5176
      %v5209 = vadd.f32 %v5105, %v5177
      %v5210 = vadd.f32 %v5106, %v5178
      %v5211 = vadd.f32 %v5107, %v5179
      %v5212 = vadd.f32 %v5108, %v5180
      %s5213 = scalar_lea.vmem %s218, 46
      %v5214 = vld [vmem:[%s5213] sm:$0x1]
      %v5215 = vld [vmem:[%s4798 + $0x9] sm:$0xff]
      %v5216 = vld [vmem:[%s4798 + $0x11] sm:$0xff]
      %v5217 = vld [vmem:[%s4798 + $0x29] sm:$0xff]
      %v5218 = vld [vmem:[%s4798 + $0x31] sm:$0xff]
      %v5219 = vld [vmem:[%s4798 + $0x49] sm:$0xff]
      %v5220 = vld [vmem:[%s4798 + $0x51] sm:$0xff]
      %v5221 = vld [vmem:[%s4798 + $0x69] sm:$0xff]
      %v5222 = vld [vmem:[%s4798 + $0x71] sm:$0xff]
      %v5223 = vld [vmem:[%s4798 + $0x89] sm:$0xff]
      %v5224 = vld [vmem:[%s4798 + $0x91] sm:$0xff]
      %v5225 = vld [vmem:[%s4798 + $0xa9] sm:$0xff]
      %v5226 = vld [vmem:[%s4798 + $0xb1] sm:$0xff]
      %v5227 = vld [vmem:[%s4798 + $0xc9] sm:$0xff]
      %v5228 = vld [vmem:[%s4798 + $0xd1] sm:$0xff]
      %v5229 = vld [vmem:[%s4798 + $0xe9] sm:$0xff]
      %v5230 = vld [vmem:[%s4798 + $0xf1] sm:$0xff]
      %v5231 = vld [vmem:[%s4798 + $0x109] sm:$0xff]
      %v5232 = vld [vmem:[%s4798 + $0x111] sm:$0xff]
      %v5233 = vld [vmem:[%s4798 + $0x129] sm:$0xff]
      %v5234 = vld [vmem:[%s4798 + $0x131] sm:$0xff]
      %v5235 = vld [vmem:[%s4798 + $0x149] sm:$0xff]
      %v5236 = vld [vmem:[%s4798 + $0x151] sm:$0xff]
      %v5237 = vld [vmem:[%s4798 + $0x169] sm:$0xff]
      %v5238 = vld [vmem:[%s4798 + $0x171] sm:$0xff]
      %v5239 = vld [vmem:[%s4798 + $0x189] sm:$0xff]
      %v5240 = vld [vmem:[%s4798 + $0x191] sm:$0xff]
      %v5241 = vld [vmem:[%s4798 + $0x1a9] sm:$0xff]
      %v5242 = vld [vmem:[%s4798 + $0x1b1] sm:$0xff]
      %v5243 = vld [vmem:[%s4798 + $0x1c9] sm:$0xff]
      %v5244 = vld [vmem:[%s4798 + $0x1d1] sm:$0xff]
      %v5245 = vld [vmem:[%s4798 + $0x1e9] sm:$0xff]
      %v5246 = vld [vmem:[%s4798 + $0x1f1] sm:$0xff]
      %v5248 = vlaneseq
      %v5249 = vshrl.u32 %v5248, 7
      %v5250 = vsub.s32 0, %v5249
      %v5251 = vrot.slane %v5214, %v5250
      %v5253 = vmul.f32 %v5215, %v5251
      %v5254 = vmul.f32 %v5216, %v5251
      %v5255 = vmul.f32 %v5217, %v5251
      %v5256 = vmul.f32 %v5218, %v5251
      %v5257 = vmul.f32 %v5219, %v5251
      %v5258 = vmul.f32 %v5220, %v5251
      %v5259 = vmul.f32 %v5221, %v5251
      %v5260 = vmul.f32 %v5222, %v5251
      %v5261 = vmul.f32 %v5223, %v5251
      %v5262 = vmul.f32 %v5224, %v5251
      %v5263 = vmul.f32 %v5225, %v5251
      %v5264 = vmul.f32 %v5226, %v5251
      %v5265 = vmul.f32 %v5227, %v5251
      %v5266 = vmul.f32 %v5228, %v5251
      %v5267 = vmul.f32 %v5229, %v5251
      %v5268 = vmul.f32 %v5230, %v5251
      %v5269 = vmul.f32 %v5231, %v5251
      %v5270 = vmul.f32 %v5232, %v5251
      %v5271 = vmul.f32 %v5233, %v5251
      %v5272 = vmul.f32 %v5234, %v5251
      %v5273 = vmul.f32 %v5235, %v5251
      %v5274 = vmul.f32 %v5236, %v5251
      %v5275 = vmul.f32 %v5237, %v5251
      %v5276 = vmul.f32 %v5238, %v5251
      %v5277 = vmul.f32 %v5239, %v5251
      %v5278 = vmul.f32 %v5240, %v5251
      %v5279 = vmul.f32 %v5241, %v5251
      %v5280 = vmul.f32 %v5242, %v5251
      %v5281 = vmul.f32 %v5243, %v5251
      %v5282 = vmul.f32 %v5244, %v5251
      %v5283 = vmul.f32 %v5245, %v5251
      %v5284 = vmul.f32 %v5246, %v5251
      %v5285 = vadd.f32 %v5181, %v5253
      %v5286 = vadd.f32 %v5182, %v5254
      %v5287 = vadd.f32 %v5183, %v5255
      %v5288 = vadd.f32 %v5184, %v5256
      %v5289 = vadd.f32 %v5185, %v5257
      %v5290 = vadd.f32 %v5186, %v5258
      %v5291 = vadd.f32 %v5187, %v5259
      %v5292 = vadd.f32 %v5188, %v5260
      %v5293 = vadd.f32 %v5189, %v5261
      %v5294 = vadd.f32 %v5190, %v5262
      %v5295 = vadd.f32 %v5191, %v5263
      %v5296 = vadd.f32 %v5192, %v5264
      %v5297 = vadd.f32 %v5193, %v5265
      %v5298 = vadd.f32 %v5194, %v5266
      %v5299 = vadd.f32 %v5195, %v5267
      %v5300 = vadd.f32 %v5196, %v5268
      %v5301 = vadd.f32 %v5197, %v5269
      %v5302 = vadd.f32 %v5198, %v5270
      %v5303 = vadd.f32 %v5199, %v5271
      %v5304 = vadd.f32 %v5200, %v5272
      %v5305 = vadd.f32 %v5201, %v5273
      %v5306 = vadd.f32 %v5202, %v5274
      %v5307 = vadd.f32 %v5203, %v5275
      %v5308 = vadd.f32 %v5204, %v5276
      %v5309 = vadd.f32 %v5205, %v5277
      %v5310 = vadd.f32 %v5206, %v5278
      %v5311 = vadd.f32 %v5207, %v5279
      %v5312 = vadd.f32 %v5208, %v5280
      %v5313 = vadd.f32 %v5209, %v5281
      %v5314 = vadd.f32 %v5210, %v5282
      %v5315 = vadd.f32 %v5211, %v5283
      %v5316 = vadd.f32 %v5212, %v5284
      %s5317 = scalar_lea.vmem %s218, 47
      %v5318 = vld [vmem:[%s5317] sm:$0x1]
      %v5319 = vld [vmem:[%s4798 + $0xa] sm:$0xff]
      %v5320 = vld [vmem:[%s4798 + $0x12] sm:$0xff]
      %v5321 = vld [vmem:[%s4798 + $0x2a] sm:$0xff]
      %v5322 = vld [vmem:[%s4798 + $0x32] sm:$0xff]
      %v5323 = vld [vmem:[%s4798 + $0x4a] sm:$0xff]
      %v5324 = vld [vmem:[%s4798 + $0x52] sm:$0xff]
      %v5325 = vld [vmem:[%s4798 + $0x6a] sm:$0xff]
      %v5326 = vld [vmem:[%s4798 + $0x72] sm:$0xff]
      %v5327 = vld [vmem:[%s4798 + $0x8a] sm:$0xff]
      %v5328 = vld [vmem:[%s4798 + $0x92] sm:$0xff]
      %v5329 = vld [vmem:[%s4798 + $0xaa] sm:$0xff]
      %v5330 = vld [vmem:[%s4798 + $0xb2] sm:$0xff]
      %v5331 = vld [vmem:[%s4798 + $0xca] sm:$0xff]
      %v5332 = vld [vmem:[%s4798 + $0xd2] sm:$0xff]
      %v5333 = vld [vmem:[%s4798 + $0xea] sm:$0xff]
      %v5334 = vld [vmem:[%s4798 + $0xf2] sm:$0xff]
      %v5335 = vld [vmem:[%s4798 + $0x10a] sm:$0xff]
      %v5336 = vld [vmem:[%s4798 + $0x112] sm:$0xff]
      %v5337 = vld [vmem:[%s4798 + $0x12a] sm:$0xff]
      %v5338 = vld [vmem:[%s4798 + $0x132] sm:$0xff]
      %v5339 = vld [vmem:[%s4798 + $0x14a] sm:$0xff]
      %v5340 = vld [vmem:[%s4798 + $0x152] sm:$0xff]
      %v5341 = vld [vmem:[%s4798 + $0x16a] sm:$0xff]
      %v5342 = vld [vmem:[%s4798 + $0x172] sm:$0xff]
      %v5343 = vld [vmem:[%s4798 + $0x18a] sm:$0xff]
      %v5344 = vld [vmem:[%s4798 + $0x192] sm:$0xff]
      %v5345 = vld [vmem:[%s4798 + $0x1aa] sm:$0xff]
      %v5346 = vld [vmem:[%s4798 + $0x1b2] sm:$0xff]
      %v5347 = vld [vmem:[%s4798 + $0x1ca] sm:$0xff]
      %v5348 = vld [vmem:[%s4798 + $0x1d2] sm:$0xff]
      %v5349 = vld [vmem:[%s4798 + $0x1ea] sm:$0xff]
      %v5350 = vld [vmem:[%s4798 + $0x1f2] sm:$0xff]
      %v5352 = vlaneseq
      %v5353 = vshrl.u32 %v5352, 7
      %v5354 = vsub.s32 0, %v5353
      %v5355 = vrot.slane %v5318, %v5354
      %v5357 = vmul.f32 %v5319, %v5355
      %v5358 = vmul.f32 %v5320, %v5355
      %v5359 = vmul.f32 %v5321, %v5355
      %v5360 = vmul.f32 %v5322, %v5355
      %v5361 = vmul.f32 %v5323, %v5355
      %v5362 = vmul.f32 %v5324, %v5355
      %v5363 = vmul.f32 %v5325, %v5355
      %v5364 = vmul.f32 %v5326, %v5355
      %v5365 = vmul.f32 %v5327, %v5355
      %v5366 = vmul.f32 %v5328, %v5355
      %v5367 = vmul.f32 %v5329, %v5355
      %v5368 = vmul.f32 %v5330, %v5355
      %v5369 = vmul.f32 %v5331, %v5355
      %v5370 = vmul.f32 %v5332, %v5355
      %v5371 = vmul.f32 %v5333, %v5355
      %v5372 = vmul.f32 %v5334, %v5355
      %v5373 = vmul.f32 %v5335, %v5355
      %v5374 = vmul.f32 %v5336, %v5355
      %v5375 = vmul.f32 %v5337, %v5355
      %v5376 = vmul.f32 %v5338, %v5355
      %v5377 = vmul.f32 %v5339, %v5355
      %v5378 = vmul.f32 %v5340, %v5355
      %v5379 = vmul.f32 %v5341, %v5355
      %v5380 = vmul.f32 %v5342, %v5355
      %v5381 = vmul.f32 %v5343, %v5355
      %v5382 = vmul.f32 %v5344, %v5355
      %v5383 = vmul.f32 %v5345, %v5355
      %v5384 = vmul.f32 %v5346, %v5355
      %v5385 = vmul.f32 %v5347, %v5355
      %v5386 = vmul.f32 %v5348, %v5355
      %v5387 = vmul.f32 %v5349, %v5355
      %v5388 = vmul.f32 %v5350, %v5355
      %v5389 = vadd.f32 %v5285, %v5357
      %v5390 = vadd.f32 %v5286, %v5358
      %v5391 = vadd.f32 %v5287, %v5359
      %v5392 = vadd.f32 %v5288, %v5360
      %v5393 = vadd.f32 %v5289, %v5361
      %v5394 = vadd.f32 %v5290, %v5362
      %v5395 = vadd.f32 %v5291, %v5363
      %v5396 = vadd.f32 %v5292, %v5364
      %v5397 = vadd.f32 %v5293, %v5365
      %v5398 = vadd.f32 %v5294, %v5366
      %v5399 = vadd.f32 %v5295, %v5367
      %v5400 = vadd.f32 %v5296, %v5368
      %v5401 = vadd.f32 %v5297, %v5369
      %v5402 = vadd.f32 %v5298, %v5370
      %v5403 = vadd.f32 %v5299, %v5371
      %v5404 = vadd.f32 %v5300, %v5372
      %v5405 = vadd.f32 %v5301, %v5373
      %v5406 = vadd.f32 %v5302, %v5374
      %v5407 = vadd.f32 %v5303, %v5375
      %v5408 = vadd.f32 %v5304, %v5376
      %v5409 = vadd.f32 %v5305, %v5377
      %v5410 = vadd.f32 %v5306, %v5378
      %v5411 = vadd.f32 %v5307, %v5379
      %v5412 = vadd.f32 %v5308, %v5380
      %v5413 = vadd.f32 %v5309, %v5381
      %v5414 = vadd.f32 %v5310, %v5382
      %v5415 = vadd.f32 %v5311, %v5383
      %v5416 = vadd.f32 %v5312, %v5384
      %v5417 = vadd.f32 %v5313, %v5385
      %v5418 = vadd.f32 %v5314, %v5386
      %v5419 = vadd.f32 %v5315, %v5387
      %v5420 = vadd.f32 %v5316, %v5388
      %s5421 = scalar_lea.vmem %s218, 48
      %v5422 = vld [vmem:[%s5421] sm:$0x1]
      %v5423 = vld [vmem:[%s4798 + $0xb] sm:$0xff]
      %v5424 = vld [vmem:[%s4798 + $0x13] sm:$0xff]
      %v5425 = vld [vmem:[%s4798 + $0x2b] sm:$0xff]
      %v5426 = vld [vmem:[%s4798 + $0x33] sm:$0xff]
      %v5427 = vld [vmem:[%s4798 + $0x4b] sm:$0xff]
      %v5428 = vld [vmem:[%s4798 + $0x53] sm:$0xff]
      %v5429 = vld [vmem:[%s4798 + $0x6b] sm:$0xff]
      %v5430 = vld [vmem:[%s4798 + $0x73] sm:$0xff]
      %v5431 = vld [vmem:[%s4798 + $0x8b] sm:$0xff]
      %v5432 = vld [vmem:[%s4798 + $0x93] sm:$0xff]
      %v5433 = vld [vmem:[%s4798 + $0xab] sm:$0xff]
      %v5434 = vld [vmem:[%s4798 + $0xb3] sm:$0xff]
      %v5435 = vld [vmem:[%s4798 + $0xcb] sm:$0xff]
      %v5436 = vld [vmem:[%s4798 + $0xd3] sm:$0xff]
      %v5437 = vld [vmem:[%s4798 + $0xeb] sm:$0xff]
      %v5438 = vld [vmem:[%s4798 + $0xf3] sm:$0xff]
      %v5439 = vld [vmem:[%s4798 + $0x10b] sm:$0xff]
      %v5440 = vld [vmem:[%s4798 + $0x113] sm:$0xff]
      %v5441 = vld [vmem:[%s4798 + $0x12b] sm:$0xff]
      %v5442 = vld [vmem:[%s4798 + $0x133] sm:$0xff]
      %v5443 = vld [vmem:[%s4798 + $0x14b] sm:$0xff]
      %v5444 = vld [vmem:[%s4798 + $0x153] sm:$0xff]
      %v5445 = vld [vmem:[%s4798 + $0x16b] sm:$0xff]
      %v5446 = vld [vmem:[%s4798 + $0x173] sm:$0xff]
      %v5447 = vld [vmem:[%s4798 + $0x18b] sm:$0xff]
      %v5448 = vld [vmem:[%s4798 + $0x193] sm:$0xff]
      %v5449 = vld [vmem:[%s4798 + $0x1ab] sm:$0xff]
      %v5450 = vld [vmem:[%s4798 + $0x1b3] sm:$0xff]
      %v5451 = vld [vmem:[%s4798 + $0x1cb] sm:$0xff]
      %v5452 = vld [vmem:[%s4798 + $0x1d3] sm:$0xff]
      %v5453 = vld [vmem:[%s4798 + $0x1eb] sm:$0xff]
      %v5454 = vld [vmem:[%s4798 + $0x1f3] sm:$0xff]
      %v5456 = vlaneseq
      %v5457 = vshrl.u32 %v5456, 7
      %v5458 = vsub.s32 0, %v5457
      %v5459 = vrot.slane %v5422, %v5458
      %v5461 = vmul.f32 %v5423, %v5459
      %v5462 = vmul.f32 %v5424, %v5459
      %v5463 = vmul.f32 %v5425, %v5459
      %v5464 = vmul.f32 %v5426, %v5459
      %v5465 = vmul.f32 %v5427, %v5459
      %v5466 = vmul.f32 %v5428, %v5459
      %v5467 = vmul.f32 %v5429, %v5459
      %v5468 = vmul.f32 %v5430, %v5459
      %v5469 = vmul.f32 %v5431, %v5459
      %v5470 = vmul.f32 %v5432, %v5459
      %v5471 = vmul.f32 %v5433, %v5459
      %v5472 = vmul.f32 %v5434, %v5459
      %v5473 = vmul.f32 %v5435, %v5459
      %v5474 = vmul.f32 %v5436, %v5459
      %v5475 = vmul.f32 %v5437, %v5459
      %v5476 = vmul.f32 %v5438, %v5459
      %v5477 = vmul.f32 %v5439, %v5459
      %v5478 = vmul.f32 %v5440, %v5459
      %v5479 = vmul.f32 %v5441, %v5459
      %v5480 = vmul.f32 %v5442, %v5459
      %v5481 = vmul.f32 %v5443, %v5459
      %v5482 = vmul.f32 %v5444, %v5459
      %v5483 = vmul.f32 %v5445, %v5459
      %v5484 = vmul.f32 %v5446, %v5459
      %v5485 = vmul.f32 %v5447, %v5459
      %v5486 = vmul.f32 %v5448, %v5459
      %v5487 = vmul.f32 %v5449, %v5459
      %v5488 = vmul.f32 %v5450, %v5459
      %v5489 = vmul.f32 %v5451, %v5459
      %v5490 = vmul.f32 %v5452, %v5459
      %v5491 = vmul.f32 %v5453, %v5459
      %v5492 = vmul.f32 %v5454, %v5459
      %v5493 = vadd.f32 %v5389, %v5461
      %v5494 = vadd.f32 %v5390, %v5462
      %v5495 = vadd.f32 %v5391, %v5463
      %v5496 = vadd.f32 %v5392, %v5464
      %v5497 = vadd.f32 %v5393, %v5465
      %v5498 = vadd.f32 %v5394, %v5466
      %v5499 = vadd.f32 %v5395, %v5467
      %v5500 = vadd.f32 %v5396, %v5468
      %v5501 = vadd.f32 %v5397, %v5469
      %v5502 = vadd.f32 %v5398, %v5470
      %v5503 = vadd.f32 %v5399, %v5471
      %v5504 = vadd.f32 %v5400, %v5472
      %v5505 = vadd.f32 %v5401, %v5473
      %v5506 = vadd.f32 %v5402, %v5474
      %v5507 = vadd.f32 %v5403, %v5475
      %v5508 = vadd.f32 %v5404, %v5476
      %v5509 = vadd.f32 %v5405, %v5477
      %v5510 = vadd.f32 %v5406, %v5478
      %v5511 = vadd.f32 %v5407, %v5479
      %v5512 = vadd.f32 %v5408, %v5480
      %v5513 = vadd.f32 %v5409, %v5481
      %v5514 = vadd.f32 %v5410, %v5482
      %v5515 = vadd.f32 %v5411, %v5483
      %v5516 = vadd.f32 %v5412, %v5484
      %v5517 = vadd.f32 %v5413, %v5485
      %v5518 = vadd.f32 %v5414, %v5486
      %v5519 = vadd.f32 %v5415, %v5487
      %v5520 = vadd.f32 %v5416, %v5488
      %v5521 = vadd.f32 %v5417, %v5489
      %v5522 = vadd.f32 %v5418, %v5490
      %v5523 = vadd.f32 %v5419, %v5491
      %v5524 = vadd.f32 %v5420, %v5492
      %5525 = vst.msk [vmem:[%s229] sm:$0xff] %vm230, %v5493
      %5526 = vst.msk [vmem:[%s229 + $0x8] sm:$0xff] %vm230, %v5494
      %5527 = vst.msk [vmem:[%s229 + $0x10] sm:$0xff] %vm230, %v5495
      %5528 = vst.msk [vmem:[%s229 + $0x18] sm:$0xff] %vm230, %v5496
      %5529 = vst.msk [vmem:[%s229 + $0x20] sm:$0xff] %vm230, %v5497
      %5530 = vst.msk [vmem:[%s229 + $0x28] sm:$0xff] %vm230, %v5498
      %5531 = vst.msk [vmem:[%s229 + $0x30] sm:$0xff] %vm230, %v5499
      %5532 = vst.msk [vmem:[%s229 + $0x38] sm:$0xff] %vm230, %v5500
      %5533 = vst.msk [vmem:[%s229 + $0x40] sm:$0xff] %vm230, %v5501
      %5534 = vst.msk [vmem:[%s229 + $0x48] sm:$0xff] %vm230, %v5502
      %5535 = vst.msk [vmem:[%s229 + $0x50] sm:$0xff] %vm230, %v5503
      %5536 = vst.msk [vmem:[%s229 + $0x58] sm:$0xff] %vm230, %v5504
      %5537 = vst.msk [vmem:[%s229 + $0x60] sm:$0xff] %vm230, %v5505
      %5538 = vst.msk [vmem:[%s229 + $0x68] sm:$0xff] %vm230, %v5506
      %5539 = vst.msk [vmem:[%s229 + $0x70] sm:$0xff] %vm230, %v5507
      %5540 = vst.msk [vmem:[%s229 + $0x78] sm:$0xff] %vm230, %v5508
      %5541 = vst.msk [vmem:[%s229 + $0x80] sm:$0xff] %vm230, %v5509
      %5542 = vst.msk [vmem:[%s229 + $0x88] sm:$0xff] %vm230, %v5510
      %5543 = vst.msk [vmem:[%s229 + $0x90] sm:$0xff] %vm230, %v5511
      %5544 = vst.msk [vmem:[%s229 + $0x98] sm:$0xff] %vm230, %v5512
      %5545 = vst.msk [vmem:[%s229 + $0xa0] sm:$0xff] %vm230, %v5513
      %5546 = vst.msk [vmem:[%s229 + $0xa8] sm:$0xff] %vm230, %v5514
      %5547 = vst.msk [vmem:[%s229 + $0xb0] sm:$0xff] %vm230, %v5515
      %5548 = vst.msk [vmem:[%s229 + $0xb8] sm:$0xff] %vm230, %v5516
      %5549 = vst.msk [vmem:[%s229 + $0xc0] sm:$0xff] %vm230, %v5517
      %5550 = vst.msk [vmem:[%s229 + $0xc8] sm:$0xff] %vm230, %v5518
      %5551 = vst.msk [vmem:[%s229 + $0xd0] sm:$0xff] %vm230, %v5519
      %5552 = vst.msk [vmem:[%s229 + $0xd8] sm:$0xff] %vm230, %v5520
      %5553 = vst.msk [vmem:[%s229 + $0xe0] sm:$0xff] %vm230, %v5521
      %5554 = vst.msk [vmem:[%s229 + $0xe8] sm:$0xff] %vm230, %v5522
      %5555 = vst.msk [vmem:[%s229 + $0xf0] sm:$0xff] %vm230, %v5523
      %5556 = vst.msk [vmem:[%s229 + $0xf8] sm:$0xff] %vm230, %v5524
      %p5557 = scmp.lt.s32.totalorder %s19, 1
      %s5558 = scalar_select %p5557, %s19, 1
      %p5559 = scmp.lt.s32.totalorder %s18, 0
      %s5560 = scalar_select %p5559, %s18, 0
      %s5561 = smul.addr %s5558, 32
      %s5562 = sadd.s32 %s5560, %s5561
      %s5563 = smul.addr %s5562, 8
      %s5564 = scalar_lea.vmem %s3, %s5563
      // Predicated region
      $region33: #{tpu_custom_call.1} parent=31 // pred_check
        %p5565 = pneg %p126
      $region34: #{tpu_custom_call.1} parent=31 // pred_check_branch
        %5567 = sbr.rel (%p5565) target = $region36
      $region35: #{tpu_custom_call.1} parent=31 // pred_region
        _
      $region36: #{tpu_custom_call.1} parent=31 // pred_fallthru
        _
    $region32: #{tpu_custom_call.1} parent=5 // pred_fallthru
      _
    %p5568 = scmp.le.s32.totalorder 2, %s9
    // Predicated region
    $region37: #{tpu_custom_call.1} parent=5 // pred_check
      %p5569 = pneg %p5568
    $region38: #{tpu_custom_call.1} parent=5 // pred_check_branch
      %5571 = sbr.rel (%p5569) target = $region40
    $region39: #{tpu_custom_call.1} parent=5 // pred_region
      %s5572 = ssub.s32 %s9, 2
      // Predicated region
      $region41: #{tpu_custom_call.1} parent=39 // pred_check
        %p5573 = pneg %p132
      $region42: #{tpu_custom_call.1} parent=39 // pred_check_branch
        %5575 = sbr.rel (%p5573) target = $region44
      $region43: #{tpu_custom_call.1} parent=39 // pred_region
        %p5576 = scmp.lt.s32.totalorder %s21, 1
        %s5577 = scalar_select %p5576, %s21, 1
        %p5578 = scmp.lt.s32.totalorder %s20, 0
        %s5579 = scalar_select %p5578, %s20, 0
        %s5580 = smul.addr %s5577, 32
        %s5581 = sadd.s32 %s5579, %s5580
        %s5582 = smul.addr %s5581, 8
        %s5583 = scalar_lea.vmem %s3, %s5582
      $region44: #{tpu_custom_call.1} parent=39 // pred_fallthru
        _
    $region40: #{tpu_custom_call.1} parent=5 // pred_fallthru
      _
  $region6: #{tpu_custom_call.1} parent=0 // loop_footer
    %s13 = sadd.s32 1, %s9
  $region7: #{tpu_custom_call.1} parent=0 // loop_footer_branch
    %8 = sbr.rel target = $region3
  $region8: #{tpu_custom_call.1} parent=0 // loop_exit
    _

</llo_original>
